<compile_context>
chip_gen: v7x
topology: tpu7x:2x2x1
jax: 0.10.0
libtpu: 0.0.40
codegen_flags: <defaults>
</compile_context>

<pallas_src>
import jax
import jax.numpy as jnp
import numpy as np
from jax.experimental import pallas as pl
from jax.experimental.pallas import tpu as pltpu

EPS = 1e-5
_WIN_BASE = 16  # sublane-aligned base offset of the image window inside the scratch


def _round_up(x, m):
    return ((x + m - 1) // m) * m


def _vmem_limit_bytes():
    # 128 MiB physical parts (v5e/v6e) can afford a higher scoped limit; keep headroom
    # on 64 MiB parts (v7x-class) and anything unknown.
    try:
        kind = jax.devices()[0].device_kind.lower()
    except Exception:
        kind = ""
    if "v5" in kind or "v6" in kind:
        return 96 * 1024 * 1024
    return 48 * 1024 * 1024


# ----------------------------- Pallas kernels --------------------------------
def _conv_bn_stats_kernel(xm_ref, h0_ref, h1_ref, w_ref, mask_ref,
                          y_ref, stats_ref, win_ref, acc_ref, sacc_ref):
    """3x3 conv as 9 shifted MXU matmuls over a flat halo'd row window + BN sum/sumsq."""
    tm = xm_ref.shape[0]          # rows per tile  = th * (W+2)
    wp2 = h0_ref.shape[1]         # padded row width = W + 2
    j = pl.program_id(1)
    b0 = _WIN_BASE

    @pl.when(j == 0)
    def _():
        sacc_ref[...] = jnp.zeros_like(sacc_ref)

    # Assemble the halo'd window: main tile rows followed by the two halo image rows.
    win_ref[b0:b0 + tm, :] = xm_ref[...]
    win_ref[b0 + tm:b0 + tm + wp2, :] = h0_ref[0]
    win_ref[b0 + tm + wp2:b0 + tm + 2 * wp2, :] = h1_ref[0]

    # 9 shifted accumulating matmuls (bf16 operands, f32 accumulation on the MXU).
    acc_ref[...] = jnp.zeros_like(acc_ref)
    for dy in range(3):
        for dx in range(3):
            start = b0 + dy * wp2 + dx - 1
            xs = win_ref[start:start + tm, :]
            acc_ref[...] += jnp.dot(xs, w_ref[dy * 3 + dx],
                                    preferred_element_type=jnp.float32)

    # Zero the two pad columns of every image row.  This keeps the BN stats exact and
    # makes the stored activation directly reusable as the next conv's width padding.
    # (The window's two "fudge" rows are uninitialized but only ever feed pad columns,
    #  which are selected away here -- jnp.where, not multiply, so NaN garbage is safe.)
    acc = jnp.where(mask_ref[...] > 0.0, acc_ref[...], 0.0)
    y_ref[...] = acc.astype(y_ref.dtype)
    sacc_ref[0:1, :] += jnp.sum(acc, axis=0, keepdims=True)
    sacc_ref[1:2, :] += jnp.sum(acc * acc, axis=0, keepdims=True)

    @pl.when(j == pl.num_programs(1) - 1)
    def _():
        stats_ref[...] = sacc_ref[...]


def _bn_relu_kernel(y_ref, scale_ref, shift_ref, mask_ref, o_ref):
    z = y_ref[...].astype(jnp.float32) * scale_ref[...] + shift_ref[...]
    z = jnp.where(mask_ref[...] > 0.0, jnp.maximum(z, 0.0), 0.0)
    o_ref[...] = z.astype(o_ref.dtype)


def _bn_relu_res_kernel(y_ref, scale_ref, shift_ref, r_ref, o_ref):
    z = y_ref[...].astype(jnp.float32) * scale_ref[...] + shift_ref[...]
    z = jnp.maximum(z, 0.0) + r_ref[...].astype(jnp.float32)
    o_ref[...] = z.astype(o_ref.dtype)    # pad columns are discarded downstream


# ----------------------------- pallas_call wrappers ---------------------------
def _conv_bn_stats_call(x_flat, x_img, wk, mask, *, n, h, wp2, cp, th, vmem_limit):
    tm = th * wp2
    win_rows = _round_up(_WIN_BASE + tm + 2 * wp2 + 1, 16)
    return pl.pallas_call(
        _conv_bn_stats_kernel,
        out_shape=(jax.ShapeDtypeStruct((n, h * wp2, cp), jnp.bfloat16),   # wide conv out
                   jax.ShapeDtypeStruct((n, 2, cp), jnp.float32)),         # per-batch [sum; sumsq]
        grid=(n, h // th),
        in_specs=[
            pl.BlockSpec((None, tm, cp), lambda b, j: (b, j, 0)),                     # main rows
            pl.BlockSpec((None, 1, wp2, cp), lambda b, j: (b, (j + 1) * th, 0, 0)),   # halo row 0
            pl.BlockSpec((None, 1, wp2, cp), lambda b, j: (b, (j + 1) * th + 1, 0, 0)),  # halo row 1
            pl.BlockSpec((9, cp, cp), lambda b, j: (0, 0, 0)),                        # 3x3 weights
            pl.BlockSpec((tm, 1), lambda b, j: (0, 0)),                               # column mask
        ],
        out_specs=(pl.BlockSpec((None, tm, cp), lambda b, j: (b, j, 0)),
                   pl.BlockSpec((None, 2, cp), lambda b, j: (b, 0, 0))),
        scratch_shapes=[pltpu.VMEM((win_rows, cp), jnp.bfloat16),   # halo'd window
                        pltpu.VMEM((tm, cp), jnp.float32),          # f32 conv accumulator
                        pltpu.VMEM((2, cp), jnp.float32)],          # BN stats accumulator
        compiler_params=pltpu.CompilerParams(
            dimension_semantics=("parallel", "arbitrary"),
            vmem_limit_bytes=vmem_limit),
    )(x_flat, x_img, x_img, wk, mask)


def _bn_relu_call(y, scale, shift, tb, vmem_limit, *, mask=None, residual=None,
                  out_dtype=jnp.float32):
    mw, cp = y.shape
    row = pl.BlockSpec((tb, cp), lambda i: (i, 0))
    vec = pl.BlockSpec((1, cp), lambda i: (0, 0))
    if residual is None:
        kernel = _bn_relu_kernel
        args = (y, scale, shift, mask)
        specs = [row, vec, vec, pl.BlockSpec((tb, 1), lambda i: (0, 0))]
    else:
        kernel = _bn_relu_res_kernel
        args = (y, scale, shift, residual)
        specs = [row, vec, vec, row]
    return pl.pallas_call(
        kernel,
        out_shape=jax.ShapeDtypeStruct((mw, cp), out_dtype),
        grid=(mw // tb,),
        in_specs=specs,
        out_specs=row,
        compiler_params=pltpu.CompilerParams(
            dimension_semantics=("parallel",),
            vmem_limit_bytes=vmem_limit),
    )(*args)


# --------------------------------- JAX glue ----------------------------------
def _pack_weight(w_hwio, cp):
    c = w_hwio.shape[2]
    wpad = jnp.pad(w_hwio, ((0, 0), (0, 0), (0, cp - c), (0, cp - c)))
    return wpad.reshape(9, cp, cp).astype(jnp.bfloat16)


def _pad_vec(v, cp, value=0.0):
    return jnp.pad(v, (0, cp - v.shape[0]), constant_values=value).astype(jnp.float32)


def _finalize_bn(stats, gamma, beta, count):
    # Training-mode BatchNorm2d: biased variance over (N, H, W); combine per-batch
    # partial sums and fold into fused scale/shift vectors.
    s = jnp.sum(stats.astype(jnp.float32), axis=0)
    mean = s[0] / count
    var = jnp.maximum(s[1] / count - mean * mean, 0.0)
    scale = gamma * jax.lax.rsqrt(var + EPS)
    shift = beta - mean * scale
    return scale.reshape(1, -1), shift.reshape(1, -1)


def _pick_tile_rows(h, wp2, cp, vmem_limit):
    # Largest row-tile th | H whose flat tile (th*(W+2) rows) is sublane-friendly and
    # fits the per-step VMEM budget (main+y double-buffered, f32 acc, window, weights).
    budget = vmem_limit // 2
    divisors = [t for t in range(h, 0, -1) if h % t == 0]
    for align in (16, 8):
        for t in divisors:
            tm = t * wp2
            if tm % align:
                continue
            need = 14 * tm * cp + 4 * 9 * cp * cp
            if need <= budget:
                return t
    raise NotImplementedError(
        "ResnetBlock Pallas kernel needs a row tile th | H with th*(W+2) % 8 == 0")


def resblock_forward(x_nchw, params):
    """ResnetBlock forward. x_nchw: (N, C, H, W) -> (N, C, H, W)."""
    w1, g1, be1, w2, g2, be2 = params
    n, c, h, w = x_nchw.shape
    cp = _round_up(c, 128)    # lane-dense channels. TODO(synk): round to 256 on v6e/v7x when C > 128.
    wp2 = w + 2
    m_valid = n * h * w
    vmem_limit = _vmem_limit_bytes()
    th = _pick_tile_rows(h, wp2, cp, vmem_limit)
    tb = th * wp2

    # NHWC, cast to bf16 BEFORE any padding so all glue traffic is half-width.
    x_nhwc = jnp.transpose(x_nchw, (0, 2, 3, 1)).astype(jnp.bfloat16)
    x_nhwc = jnp.pad(x_nhwc, ((0, 0), (0, 0), (0, 0), (0, cp - c)))
    xp = jnp.pad(x_nhwc, ((0, 0), (1, 1), (1, 1), (0, 0)))            # zero pad H and W by 1
    xp_flat = xp.reshape(n, (h + 2) * wp2, cp)

    w1p, w2p = _pack_weight(w1, cp), _pack_weight(w2, cp)
    g1p, be1p = _pad_vec(g1, cp, 1.0), _pad_vec(be1, cp)
    g2p, be2p = _pad_vec(g2, cp, 1.0), _pad_vec(be2, cp)

    # Validity mask over the wide (W+2-column) row layout: wide column q holds output
    # pixel q-1 for q in [1, W]; q = 0 and q = W+1 are the zero-pad columns.
    col = np.arange(tb) % wp2
    mask = jnp.asarray(((col >= 1) & (col <= w)).astype(np.float32)[:, None])

    # ---- block 1: conv3x3 + BN stats (pass A), then BN/ReLU (pass B, bf16 handoff) ----
    y1, s1 = _conv_bn_stats_call(xp_flat, xp, w1p, mask,
                                 n=n, h=h, wp2=wp2, cp=cp, th=th, vmem_limit=vmem_limit)
    sc1, sh1 = _finalize_bn(s1, g1p, be1p, m_valid)
    z1 = _bn_relu_call(y1.reshape(n * h * wp2, cp), sc1, sh1, tb, vmem_limit,
                       mask=mask, out_dtype=jnp.bfloat16)

    # ---- block 2: z1 already carries zeroed width padding; just add the two zero rows ----
    z1p_flat = jnp.pad(z1.reshape(n, h * wp2, cp), ((0, 0), (wp2, wp2), (0, 0)))
    z1p = z1p_flat.reshape(n, h + 2, wp2, cp)
    y2, s2 = _conv_bn_stats_call(z1p_flat, z1p, w2p, mask,
                                 n=n, h=h, wp2=wp2, cp=cp, th=th, vmem_limit=vmem_limit)
    sc2, sh2 = _finalize_bn(s2, g2p, be2p, m_valid)

    # Residual (bf16) in the same wide layout = interior rows of the padded input.
    res = xp_flat[:, wp2:(h + 1) * wp2, :].reshape(n * h * wp2, cp)
    out = _bn_relu_call(y2.reshape(n * h * wp2, cp), sc2, sh2, tb, vmem_limit,
                        residual=res, out_dtype=jnp.float32)

    out = out.reshape(n, h, wp2, cp)[:, :, 1:w + 1, :c]
    return jnp.transpose(out, (0, 3, 1, 2))                           # back to NCHW


# --------------------------- parameters / reference ---------------------------
def init_params(key, c):
    # Conv2d default init (use_bias=False), BN affine gamma=1 / beta=0.
    k1, k2 = jax.random.split(key)
    bound = 1.0 / np.sqrt(9 * c)
    w1 = jax.random.uniform(k1, (3, 3, c, c), jnp.float32, -bound, bound)   # HWIO
    w2 = jax.random.uniform(k2, (3, 3, c, c), jnp.float32, -bound, bound)
    g1 = jnp.ones((c,), jnp.float32)
    be1 = jnp.zeros((c,), jnp.float32)
    g2 = jnp.ones((c,), jnp.float32)
    be2 = jnp.zeros((c,), jnp.float32)
    return w1, g1, be1, w2, g2, be2


def resblock_ref(x_nchw, params):
    """Pure-JAX f32 reference (no Pallas) matching the PyTorch module defaults."""
    w1, g1, be1, w2, g2, be2 = params
    x = jnp.transpose(x_nchw, (0, 2, 3, 1))

    def conv(z, wgt):
        zp = jnp.pad(z, ((0, 0), (1, 1), (1, 1), (0, 0)))             # zero pad
        return jax.lax.conv_general_dilated(
            zp, wgt, (1, 1), "VALID", dimension_numbers=("NHWC", "HWIO", "NHWC"))

    def bn(y, g, be):
        mu = y.mean(axis=(0, 1, 2), keepdims=True)
        var = ((y - mu) ** 2).mean(axis=(0, 1, 2), keepdims=True)     # biased
        return (y - mu) * jax.lax.rsqrt(var + EPS) * g.reshape(1, 1, 1, -1) \
            + be.reshape(1, 1, 1, -1)

    y = jnp.maximum(bn(conv(x, w1), g1, be1), 0.0)
    y = jnp.maximum(bn(conv(y, w2), g2, be2), 0.0) + x
    return jnp.transpose(y, (0, 3, 1, 2))


if __name__ == "__main__":
    key = jax.random.PRNGKey(0)
    kx, kp = jax.random.split(key)
    N, C, H, W = 2, 4, 16, 16
    x = jax.random.normal(kx, (N, C, H, W), jnp.float32)
    params = init_params(kp, C)

    out = jax.block_until_ready(jax.jit(resblock_forward)(x, params))
    ref = resblock_ref(x, params)

    assert out.shape == (N, C, H, W)
    # bf16 MXU operands + bf16 conv intermediates / handoff / residual (f32 accumulation)
    # -> slightly looser tolerance than a pure-f32 pipeline.
    np.testing.assert_allclose(np.asarray(out), np.asarray(ref), atol=3e-2, rtol=3e-2)
    print("KERNEL_OK")
</pallas_src>

<mosaic_0001>
module attributes {stable_mosaic.version = 11 : i64} {
  func.func @_conv_bn_stats_kernel(%arg0: i32, %arg1: i32, %arg2: memref<1x288x128xbf16, #tpu.memory_space<vmem>>, %arg3: memref<1x1x18x128xbf16, #tpu.memory_space<vmem>>, %arg4: memref<1x1x18x128xbf16, #tpu.memory_space<vmem>>, %arg5: memref<9x128x128xbf16, #tpu.memory_space<vmem>>, %arg6: memref<288x1xf32, #tpu.memory_space<vmem>>, %arg7: memref<1x288x128xbf16, #tpu.memory_space<vmem>>, %arg8: memref<1x2x128xf32, #tpu.memory_space<vmem>>, %arg9: memref<352x128xbf16, #tpu.memory_space<vmem>>, %arg10: memref<288x128xf32, #tpu.memory_space<vmem>>, %arg11: memref<2x128xf32, #tpu.memory_space<vmem>>) attributes {dimension_semantics = [#tpu.dimension_semantics<parallel>, #tpu.dimension_semantics<arbitrary>], iteration_bounds = array<i64: 2, 1>, scalar_prefetch = 0 : i64, scratch_operands = 3 : i64, tpu.core_type = #tpu.core_type<tc>, window_params = [{transform_indices = @transform_0, window_bounds = array<i64: 1, 288, 128>}, {transform_indices = @transform_1, window_bounds = array<i64: 1, 1, 18, 128>}, {transform_indices = @transform_2, window_bounds = array<i64: 1, 1, 18, 128>}, {pipeline_mode = #tpu.pipeline_mode<synchronous>, transform_indices = @transform_3, window_bounds = array<i64: 9, 128, 128>}, {pipeline_mode = #tpu.pipeline_mode<synchronous>, transform_indices = @transform_4, window_bounds = array<i64: 288, 1>}, {transform_indices = @transform_5, window_bounds = array<i64: 1, 288, 128>}, {transform_indices = @transform_6, window_bounds = array<i64: 1, 2, 128>}]} {
    %c0_i32 = arith.constant 0 : i32
    %0 = arith.cmpi eq, %arg1, %c0_i32 : i32
    %1 = arith.extui %0 : i1 to i32
    %c0_i32_0 = arith.constant 0 : i32
    %2 = arith.cmpi ne, %1, %c0_i32_0 : i32
    scf.if %2 {
      %cst_111 = arith.constant 0.000000e+00 : f32
      %103 = vector.broadcast %cst_111 : f32 to vector<2x128xf32>
      %c0_112 = arith.constant 0 : index
      %c0_113 = arith.constant 0 : index
      %104 = vector.load %arg11[%c0_112, %c0_113] : memref<2x128xf32, #tpu.memory_space<vmem>>, vector<2x128xf32>
      tpu.vector_store %arg11[%c0_112, %c0_113], %103 {strides = array<i32>} : memref<2x128xf32, #tpu.memory_space<vmem>>, vector<2x128xf32>,
    } else {
    }
    %c0 = arith.constant 0 : index
    %c0_1 = arith.constant 0 : index
    %c0_2 = arith.constant 0 : index
    %3 = vector.load %arg2[%c0, %c0_1, %c0_2] : memref<1x288x128xbf16, #tpu.memory_space<vmem>>, vector<1x288x128xbf16>
    %4 = vector.shape_cast %3 : vector<1x288x128xbf16> to vector<288x128xbf16>
    %c16 = arith.constant 16 : index
    %c0_3 = arith.constant 0 : index
    %5 = vector.load %arg9[%c16, %c0_3] : memref<352x128xbf16, #tpu.memory_space<vmem>>, vector<288x128xbf16>
    tpu.vector_store %arg9[%c16, %c0_3], %4 {strides = array<i32>} : memref<352x128xbf16, #tpu.memory_space<vmem>>, vector<288x128xbf16>,
    %c0_4 = arith.constant 0 : index
    %c0_5 = arith.constant 0 : index
    %c0_6 = arith.constant 0 : index
    %c0_7 = arith.constant 0 : index
    %6 = vector.load %arg3[%c0_4, %c0_5, %c0_6, %c0_7] : memref<1x1x18x128xbf16, #tpu.memory_space<vmem>>, vector<1x1x18x128xbf16>
    %7 = vector.shape_cast %6 : vector<1x1x18x128xbf16> to vector<18x128xbf16>
    %c304 = arith.constant 304 : index
    %c0_8 = arith.constant 0 : index
    %8 = vector.load %arg9[%c304, %c0_8] : memref<352x128xbf16, #tpu.memory_space<vmem>>, vector<18x128xbf16>
    tpu.vector_store %arg9[%c304, %c0_8], %7 {strides = array<i32>} : memref<352x128xbf16, #tpu.memory_space<vmem>>, vector<18x128xbf16>,
    %c0_9 = arith.constant 0 : index
    %c0_10 = arith.constant 0 : index
    %c0_11 = arith.constant 0 : index
    %c0_12 = arith.constant 0 : index
    %9 = vector.load %arg4[%c0_9, %c0_10, %c0_11, %c0_12] : memref<1x1x18x128xbf16, #tpu.memory_space<vmem>>, vector<1x1x18x128xbf16>
    %10 = vector.shape_cast %9 : vector<1x1x18x128xbf16> to vector<18x128xbf16>
    %c322 = arith.constant 322 : index
    %c0_13 = arith.constant 0 : index
    %11 = vector.load %arg9[%c322, %c0_13] : memref<352x128xbf16, #tpu.memory_space<vmem>>, vector<18x128xbf16>
    tpu.vector_store %arg9[%c322, %c0_13], %10 {strides = array<i32>} : memref<352x128xbf16, #tpu.memory_space<vmem>>, vector<18x128xbf16>,
    %cst = arith.constant 0.000000e+00 : f32
    %12 = vector.broadcast %cst : f32 to vector<288x128xf32>
    %c0_14 = arith.constant 0 : index
    %c0_15 = arith.constant 0 : index
    %13 = vector.load %arg10[%c0_14, %c0_15] : memref<288x128xf32, #tpu.memory_space<vmem>>, vector<288x128xf32>
    tpu.vector_store %arg10[%c0_14, %c0_15], %12 {strides = array<i32>} : memref<288x128xf32, #tpu.memory_space<vmem>>, vector<288x128xf32>,
    %c15 = arith.constant 15 : index
    %c0_16 = arith.constant 0 : index
    %14 = vector.load %arg9[%c15, %c0_16] : memref<352x128xbf16, #tpu.memory_space<vmem>>, vector<288x128xbf16>
    %c0_17 = arith.constant 0 : index
    %c0_18 = arith.constant 0 : index
    %15 = vector.load %arg10[%c0_17, %c0_18] : memref<288x128xf32, #tpu.memory_space<vmem>>, vector<288x128xf32>
    %c0_19 = arith.constant 0 : index
    %c0_20 = arith.constant 0 : index
    %c0_21 = arith.constant 0 : index
    %16 = vector.load %arg5[%c0_19, %c0_20, %c0_21] : memref<9x128x128xbf16, #tpu.memory_space<vmem>>, vector<1x128x128xbf16>
    %17 = vector.shape_cast %16 : vector<1x128x128xbf16> to vector<128x128xbf16>
    %cst_22 = arith.constant dense<0.000000e+00> : vector<288x128xf32>
    %18 = tpu.matmul %14, %17, %cst_22 {dimension_numbers = #tpu.dot_dimension_numbers<[1], [0], [0], [1], [0, 0, 1, 1], [], []>} : vector<288x128xbf16>, vector<128x128xbf16>, vector<288x128xf32> -> vector<288x128xf32>
    %19 = arith.addf %15, %18 : vector<288x128xf32>
    %c0_23 = arith.constant 0 : index
    %c0_24 = arith.constant 0 : index
    %20 = vector.load %arg10[%c0_23, %c0_24] : memref<288x128xf32, #tpu.memory_space<vmem>>, vector<288x128xf32>
    tpu.vector_store %arg10[%c0_23, %c0_24], %19 {strides = array<i32>} : memref<288x128xf32, #tpu.memory_space<vmem>>, vector<288x128xf32>,
    %c16_25 = arith.constant 16 : index
    %c0_26 = arith.constant 0 : index
    %21 = vector.load %arg9[%c16_25, %c0_26] : memref<352x128xbf16, #tpu.memory_space<vmem>>, vector<288x128xbf16>
    %c0_27 = arith.constant 0 : index
    %c0_28 = arith.constant 0 : index
    %22 = vector.load %arg10[%c0_27, %c0_28] : memref<288x128xf32, #tpu.memory_space<vmem>>, vector<288x128xf32>
    %c1 = arith.constant 1 : index
    %c0_29 = arith.constant 0 : index
    %c0_30 = arith.constant 0 : index
    %23 = vector.load %arg5[%c1, %c0_29, %c0_30] : memref<9x128x128xbf16, #tpu.memory_space<vmem>>, vector<1x128x128xbf16>
    %24 = vector.shape_cast %23 : vector<1x128x128xbf16> to vector<128x128xbf16>
    %cst_31 = arith.constant dense<0.000000e+00> : vector<288x128xf32>
    %25 = tpu.matmul %21, %24, %cst_31 {dimension_numbers = #tpu.dot_dimension_numbers<[1], [0], [0], [1], [0, 0, 1, 1], [], []>} : vector<288x128xbf16>, vector<128x128xbf16>, vector<288x128xf32> -> vector<288x128xf32>
    %26 = arith.addf %22, %25 : vector<288x128xf32>
    %c0_32 = arith.constant 0 : index
    %c0_33 = arith.constant 0 : index
    %27 = vector.load %arg10[%c0_32, %c0_33] : memref<288x128xf32, #tpu.memory_space<vmem>>, vector<288x128xf32>
    tpu.vector_store %arg10[%c0_32, %c0_33], %26 {strides = array<i32>} : memref<288x128xf32, #tpu.memory_space<vmem>>, vector<288x128xf32>,
    %c17 = arith.constant 17 : index
    %c0_34 = arith.constant 0 : index
    %28 = vector.load %arg9[%c17, %c0_34] : memref<352x128xbf16, #tpu.memory_space<vmem>>, vector<288x128xbf16>
    %c0_35 = arith.constant 0 : index
    %c0_36 = arith.constant 0 : index
    %29 = vector.load %arg10[%c0_35, %c0_36] : memref<288x128xf32, #tpu.memory_space<vmem>>, vector<288x128xf32>
    %c2 = arith.constant 2 : index
    %c0_37 = arith.constant 0 : index
    %c0_38 = arith.constant 0 : index
    %30 = vector.load %arg5[%c2, %c0_37, %c0_38] : memref<9x128x128xbf16, #tpu.memory_space<vmem>>, vector<1x128x128xbf16>
    %31 = vector.shape_cast %30 : vector<1x128x128xbf16> to vector<128x128xbf16>
    %cst_39 = arith.constant dense<0.000000e+00> : vector<288x128xf32>
    %32 = tpu.matmul %28, %31, %cst_39 {dimension_numbers = #tpu.dot_dimension_numbers<[1], [0], [0], [1], [0, 0, 1, 1], [], []>} : vector<288x128xbf16>, vector<128x128xbf16>, vector<288x128xf32> -> vector<288x128xf32>
    %33 = arith.addf %29, %32 : vector<288x128xf32>
    %c0_40 = arith.constant 0 : index
    %c0_41 = arith.constant 0 : index
    %34 = vector.load %arg10[%c0_40, %c0_41] : memref<288x128xf32, #tpu.memory_space<vmem>>, vector<288x128xf32>
    tpu.vector_store %arg10[%c0_40, %c0_41], %33 {strides = array<i32>} : memref<288x128xf32, #tpu.memory_space<vmem>>, vector<288x128xf32>,
    %c33 = arith.constant 33 : index
    %c0_42 = arith.constant 0 : index
    %35 = vector.load %arg9[%c33, %c0_42] : memref<352x128xbf16, #tpu.memory_space<vmem>>, vector<288x128xbf16>
    %c0_43 = arith.constant 0 : index
    %c0_44 = arith.constant 0 : index
    %36 = vector.load %arg10[%c0_43, %c0_44] : memref<288x128xf32, #tpu.memory_space<vmem>>, vector<288x128xf32>
    %c3 = arith.constant 3 : index
    %c0_45 = arith.constant 0 : index
    %c0_46 = arith.constant 0 : index
    %37 = vector.load %arg5[%c3, %c0_45, %c0_46] : memref<9x128x128xbf16, #tpu.memory_space<vmem>>, vector<1x128x128xbf16>
    %38 = vector.shape_cast %37 : vector<1x128x128xbf16> to vector<128x128xbf16>
    %cst_47 = arith.constant dense<0.000000e+00> : vector<288x128xf32>
    %39 = tpu.matmul %35, %38, %cst_47 {dimension_numbers = #tpu.dot_dimension_numbers<[1], [0], [0], [1], [0, 0, 1, 1], [], []>} : vector<288x128xbf16>, vector<128x128xbf16>, vector<288x128xf32> -> vector<288x128xf32>
    %40 = arith.addf %36, %39 : vector<288x128xf32>
    %c0_48 = arith.constant 0 : index
    %c0_49 = arith.constant 0 : index
    %41 = vector.load %arg10[%c0_48, %c0_49] : memref<288x128xf32, #tpu.memory_space<vmem>>, vector<288x128xf32>
    tpu.vector_store %arg10[%c0_48, %c0_49], %40 {strides = array<i32>} : memref<288x128xf32, #tpu.memory_space<vmem>>, vector<288x128xf32>,
    %c34 = arith.constant 34 : index
    %c0_50 = arith.constant 0 : index
    %42 = vector.load %arg9[%c34, %c0_50] : memref<352x128xbf16, #tpu.memory_space<vmem>>, vector<288x128xbf16>
    %c0_51 = arith.constant 0 : index
    %c0_52 = arith.constant 0 : index
    %43 = vector.load %arg10[%c0_51, %c0_52] : memref<288x128xf32, #tpu.memory_space<vmem>>, vector<288x128xf32>
    %c4 = arith.constant 4 : index
    %c0_53 = arith.constant 0 : index
    %c0_54 = arith.constant 0 : index
    %44 = vector.load %arg5[%c4, %c0_53, %c0_54] : memref<9x128x128xbf16, #tpu.memory_space<vmem>>, vector<1x128x128xbf16>
    %45 = vector.shape_cast %44 : vector<1x128x128xbf16> to vector<128x128xbf16>
    %cst_55 = arith.constant dense<0.000000e+00> : vector<288x128xf32>
    %46 = tpu.matmul %42, %45, %cst_55 {dimension_numbers = #tpu.dot_dimension_numbers<[1], [0], [0], [1], [0, 0, 1, 1], [], []>} : vector<288x128xbf16>, vector<128x128xbf16>, vector<288x128xf32> -> vector<288x128xf32>
    %47 = arith.addf %43, %46 : vector<288x128xf32>
    %c0_56 = arith.constant 0 : index
    %c0_57 = arith.constant 0 : index
    %48 = vector.load %arg10[%c0_56, %c0_57] : memref<288x128xf32, #tpu.memory_space<vmem>>, vector<288x128xf32>
    tpu.vector_store %arg10[%c0_56, %c0_57], %47 {strides = array<i32>} : memref<288x128xf32, #tpu.memory_space<vmem>>, vector<288x128xf32>,
    %c35 = arith.constant 35 : index
    %c0_58 = arith.constant 0 : index
    %49 = vector.load %arg9[%c35, %c0_58] : memref<352x128xbf16, #tpu.memory_space<vmem>>, vector<288x128xbf16>
    %c0_59 = arith.constant 0 : index
    %c0_60 = arith.constant 0 : index
    %50 = vector.load %arg10[%c0_59, %c0_60] : memref<288x128xf32, #tpu.memory_space<vmem>>, vector<288x128xf32>
    %c5 = arith.constant 5 : index
    %c0_61 = arith.constant 0 : index
    %c0_62 = arith.constant 0 : index
    %51 = vector.load %arg5[%c5, %c0_61, %c0_62] : memref<9x128x128xbf16, #tpu.memory_space<vmem>>, vector<1x128x128xbf16>
    %52 = vector.shape_cast %51 : vector<1x128x128xbf16> to vector<128x128xbf16>
    %cst_63 = arith.constant dense<0.000000e+00> : vector<288x128xf32>
    %53 = tpu.matmul %49, %52, %cst_63 {dimension_numbers = #tpu.dot_dimension_numbers<[1], [0], [0], [1], [0, 0, 1, 1], [], []>} : vector<288x128xbf16>, vector<128x128xbf16>, vector<288x128xf32> -> vector<288x128xf32>
    %54 = arith.addf %50, %53 : vector<288x128xf32>
    %c0_64 = arith.constant 0 : index
    %c0_65 = arith.constant 0 : index
    %55 = vector.load %arg10[%c0_64, %c0_65] : memref<288x128xf32, #tpu.memory_space<vmem>>, vector<288x128xf32>
    tpu.vector_store %arg10[%c0_64, %c0_65], %54 {strides = array<i32>} : memref<288x128xf32, #tpu.memory_space<vmem>>, vector<288x128xf32>,
    %c51 = arith.constant 51 : index
    %c0_66 = arith.constant 0 : index
    %56 = vector.load %arg9[%c51, %c0_66] : memref<352x128xbf16, #tpu.memory_space<vmem>>, vector<288x128xbf16>
    %c0_67 = arith.constant 0 : index
    %c0_68 = arith.constant 0 : index
    %57 = vector.load %arg10[%c0_67, %c0_68] : memref<288x128xf32, #tpu.memory_space<vmem>>, vector<288x128xf32>
    %c6 = arith.constant 6 : index
    %c0_69 = arith.constant 0 : index
    %c0_70 = arith.constant 0 : index
    %58 = vector.load %arg5[%c6, %c0_69, %c0_70] : memref<9x128x128xbf16, #tpu.memory_space<vmem>>, vector<1x128x128xbf16>
    %59 = vector.shape_cast %58 : vector<1x128x128xbf16> to vector<128x128xbf16>
    %cst_71 = arith.constant dense<0.000000e+00> : vector<288x128xf32>
    %60 = tpu.matmul %56, %59, %cst_71 {dimension_numbers = #tpu.dot_dimension_numbers<[1], [0], [0], [1], [0, 0, 1, 1], [], []>} : vector<288x128xbf16>, vector<128x128xbf16>, vector<288x128xf32> -> vector<288x128xf32>
    %61 = arith.addf %57, %60 : vector<288x128xf32>
    %c0_72 = arith.constant 0 : index
    %c0_73 = arith.constant 0 : index
    %62 = vector.load %arg10[%c0_72, %c0_73] : memref<288x128xf32, #tpu.memory_space<vmem>>, vector<288x128xf32>
    tpu.vector_store %arg10[%c0_72, %c0_73], %61 {strides = array<i32>} : memref<288x128xf32, #tpu.memory_space<vmem>>, vector<288x128xf32>,
    %c52 = arith.constant 52 : index
    %c0_74 = arith.constant 0 : index
    %63 = vector.load %arg9[%c52, %c0_74] : memref<352x128xbf16, #tpu.memory_space<vmem>>, vector<288x128xbf16>
    %c0_75 = arith.constant 0 : index
    %c0_76 = arith.constant 0 : index
    %64 = vector.load %arg10[%c0_75, %c0_76] : memref<288x128xf32, #tpu.memory_space<vmem>>, vector<288x128xf32>
    %c7 = arith.constant 7 : index
    %c0_77 = arith.constant 0 : index
    %c0_78 = arith.constant 0 : index
    %65 = vector.load %arg5[%c7, %c0_77, %c0_78] : memref<9x128x128xbf16, #tpu.memory_space<vmem>>, vector<1x128x128xbf16>
    %66 = vector.shape_cast %65 : vector<1x128x128xbf16> to vector<128x128xbf16>
    %cst_79 = arith.constant dense<0.000000e+00> : vector<288x128xf32>
    %67 = tpu.matmul %63, %66, %cst_79 {dimension_numbers = #tpu.dot_dimension_numbers<[1], [0], [0], [1], [0, 0, 1, 1], [], []>} : vector<288x128xbf16>, vector<128x128xbf16>, vector<288x128xf32> -> vector<288x128xf32>
    %68 = arith.addf %64, %67 : vector<288x128xf32>
    %c0_80 = arith.constant 0 : index
    %c0_81 = arith.constant 0 : index
    %69 = vector.load %arg10[%c0_80, %c0_81] : memref<288x128xf32, #tpu.memory_space<vmem>>, vector<288x128xf32>
    tpu.vector_store %arg10[%c0_80, %c0_81], %68 {strides = array<i32>} : memref<288x128xf32, #tpu.memory_space<vmem>>, vector<288x128xf32>,
    %c53 = arith.constant 53 : index
    %c0_82 = arith.constant 0 : index
    %70 = vector.load %arg9[%c53, %c0_82] : memref<352x128xbf16, #tpu.memory_space<vmem>>, vector<288x128xbf16>
    %c0_83 = arith.constant 0 : index
    %c0_84 = arith.constant 0 : index
    %71 = vector.load %arg10[%c0_83, %c0_84] : memref<288x128xf32, #tpu.memory_space<vmem>>, vector<288x128xf32>
    %c8 = arith.constant 8 : index
    %c0_85 = arith.constant 0 : index
    %c0_86 = arith.constant 0 : index
    %72 = vector.load %arg5[%c8, %c0_85, %c0_86] : memref<9x128x128xbf16, #tpu.memory_space<vmem>>, vector<1x128x128xbf16>
    %73 = vector.shape_cast %72 : vector<1x128x128xbf16> to vector<128x128xbf16>
    %cst_87 = arith.constant dense<0.000000e+00> : vector<288x128xf32>
    %74 = tpu.matmul %70, %73, %cst_87 {dimension_numbers = #tpu.dot_dimension_numbers<[1], [0], [0], [1], [0, 0, 1, 1], [], []>} : vector<288x128xbf16>, vector<128x128xbf16>, vector<288x128xf32> -> vector<288x128xf32>
    %75 = arith.addf %71, %74 : vector<288x128xf32>
    %c0_88 = arith.constant 0 : index
    %c0_89 = arith.constant 0 : index
    %76 = vector.load %arg10[%c0_88, %c0_89] : memref<288x128xf32, #tpu.memory_space<vmem>>, vector<288x128xf32>
    tpu.vector_store %arg10[%c0_88, %c0_89], %75 {strides = array<i32>} : memref<288x128xf32, #tpu.memory_space<vmem>>, vector<288x128xf32>,
    %c0_90 = arith.constant 0 : index
    %c0_91 = arith.constant 0 : index
    %77 = vector.load %arg6[%c0_90, %c0_91] : memref<288x1xf32, #tpu.memory_space<vmem>>, vector<288x1xf32>
    %cst_92 = arith.constant 0.000000e+00 : f32
    %78 = vector.broadcast %cst_92 : f32 to vector<288x1xf32>
    %79 = arith.cmpf ogt, %77, %78 : vector<288x1xf32>
    %c0_93 = arith.constant 0 : index
    %c0_94 = arith.constant 0 : index
    %80 = vector.load %arg10[%c0_93, %c0_94] : memref<288x128xf32, #tpu.memory_space<vmem>>, vector<288x128xf32>
    %cst_95 = arith.constant 0.000000e+00 : f32
    %81 = vector.shape_cast %79 : vector<288x1xi1> to vector<288x1xi1>
    %82 = vector.broadcast %81 : vector<288x1xi1> to vector<288x128xi1>
    %83 = vector.broadcast %cst_95 : f32 to vector<288x128xf32>
    %84 = arith.select %82, %80, %83 : vector<288x128xi1>, vector<288x128xf32>
    %85 = arith.truncf %84 : vector<288x128xf32> to vector<288x128xbf16>
    %c0_96 = arith.constant 0 : index
    %c0_97 = arith.constant 0 : index
    %c0_98 = arith.constant 0 : index
    %86 = vector.load %arg7[%c0_96, %c0_97, %c0_98] : memref<1x288x128xbf16, #tpu.memory_space<vmem>>, vector<1x288x128xbf16>
    %87 = vector.shape_cast %86 : vector<1x288x128xbf16> to vector<288x128xbf16>
    %88 = vector.shape_cast %85 : vector<288x128xbf16> to vector<1x288x128xbf16>
    tpu.vector_store %arg7[%c0_96, %c0_97, %c0_98], %88 {strides = array<i32>} : memref<1x288x128xbf16, #tpu.memory_space<vmem>>, vector<1x288x128xbf16>,
    %c0_99 = arith.constant 0 : index
    %c0_100 = arith.constant 0 : index
    %89 = vector.load %arg11[%c0_99, %c0_100] : memref<2x128xf32, #tpu.memory_space<vmem>>, vector<1x128xf32>
    %cst_101 = arith.constant dense<0.000000e+00> : vector<128xf32>
    %90 = vector.multi_reduction <add>, %84, %cst_101 [0] : vector<288x128xf32> to vector<128xf32>
    %91 = vector.shape_cast %90 : vector<128xf32> to vector<1x128xf32>
    %92 = arith.addf %89, %91 : vector<1x128xf32>
    %c0_102 = arith.constant 0 : index
    %c0_103 = arith.constant 0 : index
    %93 = vector.load %arg11[%c0_102, %c0_103] : memref<2x128xf32, #tpu.memory_space<vmem>>, vector<1x128xf32>
    tpu.vector_store %arg11[%c0_102, %c0_103], %92 {strides = array<i32>} : memref<2x128xf32, #tpu.memory_space<vmem>>, vector<1x128xf32>,
    %c1_104 = arith.constant 1 : index
    %c0_105 = arith.constant 0 : index
    %94 = vector.load %arg11[%c1_104, %c0_105] : memref<2x128xf32, #tpu.memory_space<vmem>>, vector<1x128xf32>
    %95 = arith.mulf %84, %84 : vector<288x128xf32>
    %cst_106 = arith.constant dense<0.000000e+00> : vector<128xf32>
    %96 = vector.multi_reduction <add>, %95, %cst_106 [0] : vector<288x128xf32> to vector<128xf32>
    %97 = vector.shape_cast %96 : vector<128xf32> to vector<1x128xf32>
    %98 = arith.addf %94, %97 : vector<1x128xf32>
    %c1_107 = arith.constant 1 : index
    %c0_108 = arith.constant 0 : index
    %99 = vector.load %arg11[%c1_107, %c0_108] : memref<2x128xf32, #tpu.memory_space<vmem>>, vector<1x128xf32>
    tpu.vector_store %arg11[%c1_107, %c0_108], %98 {strides = array<i32>} : memref<2x128xf32, #tpu.memory_space<vmem>>, vector<1x128xf32>,
    %c0_i32_109 = arith.constant 0 : i32
    %100 = arith.cmpi eq, %arg1, %c0_i32_109 : i32
    %101 = arith.extui %100 : i1 to i32
    %c0_i32_110 = arith.constant 0 : i32
    %102 = arith.cmpi ne, %101, %c0_i32_110 : i32
    scf.if %102 {
      %c0_111 = arith.constant 0 : index
      %c0_112 = arith.constant 0 : index
      %103 = vector.load %arg11[%c0_111, %c0_112] : memref<2x128xf32, #tpu.memory_space<vmem>>, vector<2x128xf32>
      %c0_113 = arith.constant 0 : index
      %c0_114 = arith.constant 0 : index
      %c0_115 = arith.constant 0 : index
      %104 = vector.load %arg8[%c0_113, %c0_114, %c0_115] : memref<1x2x128xf32, #tpu.memory_space<vmem>>, vector<1x2x128xf32>
      %105 = vector.shape_cast %104 : vector<1x2x128xf32> to vector<2x128xf32>
      %106 = vector.shape_cast %103 : vector<2x128xf32> to vector<1x2x128xf32>
      tpu.vector_store %arg8[%c0_113, %c0_114, %c0_115], %106 {strides = array<i32>} : memref<1x2x128xf32, #tpu.memory_space<vmem>>, vector<1x2x128xf32>,
    } else {
    }
    return
  }
  func.func @transform_0(%arg0: i32, %arg1: i32) -> (i32, i32, i32) {
    %c0_i32 = arith.constant 0 : i32
    %c0_i32_0 = arith.constant 0 : i32
    return %arg0, %arg1, %c0_i32 : i32, i32, i32
  }
  func.func @transform_1(%arg0: i32, %arg1: i32) -> (i32, i32, i32, i32) {
    %c1_i32 = arith.constant 1 : i32
    %0 = arith.addi %arg1, %c1_i32 : i32
    %c16_i32 = arith.constant 16 : i32
    %1 = arith.muli %0, %c16_i32 : i32
    %c0_i32 = arith.constant 0 : i32
    %c0_i32_0 = arith.constant 0 : i32
    %c0_i32_1 = arith.constant 0 : i32
    return %arg0, %1, %c0_i32, %c0_i32_0 : i32, i32, i32, i32
  }
  func.func @transform_2(%arg0: i32, %arg1: i32) -> (i32, i32, i32, i32) {
    %c1_i32 = arith.constant 1 : i32
    %0 = arith.addi %arg1, %c1_i32 : i32
    %c16_i32 = arith.constant 16 : i32
    %1 = arith.muli %0, %c16_i32 : i32
    %c1_i32_0 = arith.constant 1 : i32
    %2 = arith.addi %1, %c1_i32_0 : i32
    %c0_i32 = arith.constant 0 : i32
    %c0_i32_1 = arith.constant 0 : i32
    %c0_i32_2 = arith.constant 0 : i32
    return %arg0, %2, %c0_i32, %c0_i32_1 : i32, i32, i32, i32
  }
  func.func @transform_3(%arg0: i32, %arg1: i32) -> (i32, i32, i32) {
    %c0_i32 = arith.constant 0 : i32
    %c0_i32_0 = arith.constant 0 : i32
    %c0_i32_1 = arith.constant 0 : i32
    %c0_i32_2 = arith.constant 0 : i32
    return %c0_i32, %c0_i32_0, %c0_i32_1 : i32, i32, i32
  }
  func.func @transform_4(%arg0: i32, %arg1: i32) -> (i32, i32) {
    %c0_i32 = arith.constant 0 : i32
    %c0_i32_0 = arith.constant 0 : i32
    %c0_i32_1 = arith.constant 0 : i32
    return %c0_i32, %c0_i32_0 : i32, i32
  }
  func.func @transform_5(%arg0: i32, %arg1: i32) -> (i32, i32, i32) {
    %c0_i32 = arith.constant 0 : i32
    %c0_i32_0 = arith.constant 0 : i32
    return %arg0, %arg1, %c0_i32 : i32, i32, i32
  }
  func.func @transform_6(%arg0: i32, %arg1: i32) -> (i32, i32, i32) {
    %c0_i32 = arith.constant 0 : i32
    %c0_i32_0 = arith.constant 0 : i32
    %c0_i32_1 = arith.constant 0 : i32
    return %arg0, %c0_i32, %c0_i32_0 : i32, i32, i32
  }
}

module attributes {stable_mosaic.version = 11 : i64} {
  func.func @_bn_relu_kernel(%arg0: i32, %arg1: memref<288x128xbf16, #tpu.memory_space<vmem>>, %arg2: memref<1x128xf32, #tpu.memory_space<vmem>>, %arg3: memref<1x128xf32, #tpu.memory_space<vmem>>, %arg4: memref<288x1xf32, #tpu.memory_space<vmem>>, %arg5: memref<288x128xbf16, #tpu.memory_space<vmem>>) attributes {dimension_semantics = [#tpu.dimension_semantics<parallel>], iteration_bounds = array<i64: 2>, scalar_prefetch = 0 : i64, scratch_operands = 0 : i64, tpu.core_type = #tpu.core_type<tc>, window_params = [{transform_indices = @transform_0, window_bounds = array<i64: 288, 128>}, {pipeline_mode = #tpu.pipeline_mode<synchronous>, transform_indices = @transform_1, window_bounds = array<i64: 1, 128>}, {pipeline_mode = #tpu.pipeline_mode<synchronous>, transform_indices = @transform_2, window_bounds = array<i64: 1, 128>}, {pipeline_mode = #tpu.pipeline_mode<synchronous>, transform_indices = @transform_3, window_bounds = array<i64: 288, 1>}, {transform_indices = @transform_4, window_bounds = array<i64: 288, 128>}]} {
    %c0 = arith.constant 0 : index
    %c0_0 = arith.constant 0 : index
    %0 = vector.load %arg1[%c0, %c0_0] : memref<288x128xbf16, #tpu.memory_space<vmem>>, vector<288x128xbf16>
    %1 = arith.extf %0 : vector<288x128xbf16> to vector<288x128xf32>
    %c0_1 = arith.constant 0 : index
    %c0_2 = arith.constant 0 : index
    %2 = vector.load %arg2[%c0_1, %c0_2] : memref<1x128xf32, #tpu.memory_space<vmem>>, vector<1x128xf32>
    %3 = vector.broadcast %2 : vector<1x128xf32> to vector<288x128xf32>
    %4 = arith.mulf %1, %3 : vector<288x128xf32>
    %c0_3 = arith.constant 0 : index
    %c0_4 = arith.constant 0 : index
    %5 = vector.load %arg3[%c0_3, %c0_4] : memref<1x128xf32, #tpu.memory_space<vmem>>, vector<1x128xf32>
    %6 = vector.broadcast %5 : vector<1x128xf32> to vector<288x128xf32>
    %7 = arith.addf %4, %6 : vector<288x128xf32>
    %c0_5 = arith.constant 0 : index
    %c0_6 = arith.constant 0 : index
    %8 = vector.load %arg4[%c0_5, %c0_6] : memref<288x1xf32, #tpu.memory_space<vmem>>, vector<288x1xf32>
    %cst = arith.constant 0.000000e+00 : f32
    %9 = vector.broadcast %cst : f32 to vector<288x1xf32>
    %10 = arith.cmpf ogt, %8, %9 : vector<288x1xf32>
    %cst_7 = arith.constant 0.000000e+00 : f32
    %11 = vector.broadcast %cst_7 : f32 to vector<288x128xf32>
    %12 = arith.maximumf %7, %11 : vector<288x128xf32>
    %cst_8 = arith.constant 0.000000e+00 : f32
    %13 = vector.shape_cast %10 : vector<288x1xi1> to vector<288x1xi1>
    %14 = vector.broadcast %13 : vector<288x1xi1> to vector<288x128xi1>
    %15 = vector.broadcast %cst_8 : f32 to vector<288x128xf32>
    %16 = arith.select %14, %12, %15 : vector<288x128xi1>, vector<288x128xf32>
    %17 = arith.truncf %16 : vector<288x128xf32> to vector<288x128xbf16>
    %c0_9 = arith.constant 0 : index
    %c0_10 = arith.constant 0 : index
    %18 = vector.load %arg5[%c0_9, %c0_10] : memref<288x128xbf16, #tpu.memory_space<vmem>>, vector<288x128xbf16>
    tpu.vector_store %arg5[%c0_9, %c0_10], %17 {strides = array<i32>} : memref<288x128xbf16, #tpu.memory_space<vmem>>, vector<288x128xbf16>,
    return
  }
  func.func @transform_0(%arg0: i32) -> (i32, i32) {
    %c0_i32 = arith.constant 0 : i32
    %c0_i32_0 = arith.constant 0 : i32
    return %arg0, %c0_i32 : i32, i32
  }
  func.func @transform_1(%arg0: i32) -> (i32, i32) {
    %c0_i32 = arith.constant 0 : i32
    %c0_i32_0 = arith.constant 0 : i32
    %c0_i32_1 = arith.constant 0 : i32
    return %c0_i32, %c0_i32_0 : i32, i32
  }
  func.func @transform_2(%arg0: i32) -> (i32, i32) {
    %c0_i32 = arith.constant 0 : i32
    %c0_i32_0 = arith.constant 0 : i32
    %c0_i32_1 = arith.constant 0 : i32
    return %c0_i32, %c0_i32_0 : i32, i32
  }
  func.func @transform_3(%arg0: i32) -> (i32, i32) {
    %c0_i32 = arith.constant 0 : i32
    %c0_i32_0 = arith.constant 0 : i32
    %c0_i32_1 = arith.constant 0 : i32
    return %c0_i32, %c0_i32_0 : i32, i32
  }
  func.func @transform_4(%arg0: i32) -> (i32, i32) {
    %c0_i32 = arith.constant 0 : i32
    %c0_i32_0 = arith.constant 0 : i32
    return %arg0, %c0_i32 : i32, i32
  }
}

module attributes {stable_mosaic.version = 11 : i64} {
  func.func @_bn_relu_res_kernel(%arg0: i32, %arg1: memref<288x128xbf16, #tpu.memory_space<vmem>>, %arg2: memref<1x128xf32, #tpu.memory_space<vmem>>, %arg3: memref<1x128xf32, #tpu.memory_space<vmem>>, %arg4: memref<288x128xbf16, #tpu.memory_space<vmem>>, %arg5: memref<288x128xf32, #tpu.memory_space<vmem>>) attributes {dimension_semantics = [#tpu.dimension_semantics<parallel>], iteration_bounds = array<i64: 2>, scalar_prefetch = 0 : i64, scratch_operands = 0 : i64, tpu.core_type = #tpu.core_type<tc>, window_params = [{transform_indices = @transform_0, window_bounds = array<i64: 288, 128>}, {pipeline_mode = #tpu.pipeline_mode<synchronous>, transform_indices = @transform_1, window_bounds = array<i64: 1, 128>}, {pipeline_mode = #tpu.pipeline_mode<synchronous>, transform_indices = @transform_2, window_bounds = array<i64: 1, 128>}, {transform_indices = @transform_3, window_bounds = array<i64: 288, 128>}, {transform_indices = @transform_4, window_bounds = array<i64: 288, 128>}]} {
    %c0 = arith.constant 0 : index
    %c0_0 = arith.constant 0 : index
    %0 = vector.load %arg1[%c0, %c0_0] : memref<288x128xbf16, #tpu.memory_space<vmem>>, vector<288x128xbf16>
    %1 = arith.extf %0 : vector<288x128xbf16> to vector<288x128xf32>
    %c0_1 = arith.constant 0 : index
    %c0_2 = arith.constant 0 : index
    %2 = vector.load %arg2[%c0_1, %c0_2] : memref<1x128xf32, #tpu.memory_space<vmem>>, vector<1x128xf32>
    %3 = vector.broadcast %2 : vector<1x128xf32> to vector<288x128xf32>
    %4 = arith.mulf %1, %3 : vector<288x128xf32>
    %c0_3 = arith.constant 0 : index
    %c0_4 = arith.constant 0 : index
    %5 = vector.load %arg3[%c0_3, %c0_4] : memref<1x128xf32, #tpu.memory_space<vmem>>, vector<1x128xf32>
    %6 = vector.broadcast %5 : vector<1x128xf32> to vector<288x128xf32>
    %7 = arith.addf %4, %6 : vector<288x128xf32>
    %cst = arith.constant 0.000000e+00 : f32
    %8 = vector.broadcast %cst : f32 to vector<288x128xf32>
    %9 = arith.maximumf %7, %8 : vector<288x128xf32>
    %c0_5 = arith.constant 0 : index
    %c0_6 = arith.constant 0 : index
    %10 = vector.load %arg4[%c0_5, %c0_6] : memref<288x128xbf16, #tpu.memory_space<vmem>>, vector<288x128xbf16>
    %11 = arith.extf %10 : vector<288x128xbf16> to vector<288x128xf32>
    %12 = arith.addf %9, %11 : vector<288x128xf32>
    %c0_7 = arith.constant 0 : index
    %c0_8 = arith.constant 0 : index
    %13 = vector.load %arg5[%c0_7, %c0_8] : memref<288x128xf32, #tpu.memory_space<vmem>>, vector<288x128xf32>
    tpu.vector_store %arg5[%c0_7, %c0_8], %12 {strides = array<i32>} : memref<288x128xf32, #tpu.memory_space<vmem>>, vector<288x128xf32>,
    return
  }
  func.func @transform_0(%arg0: i32) -> (i32, i32) {
    %c0_i32 = arith.constant 0 : i32
    %c0_i32_0 = arith.constant 0 : i32
    return %arg0, %c0_i32 : i32, i32
  }
  func.func @transform_1(%arg0: i32) -> (i32, i32) {
    %c0_i32 = arith.constant 0 : i32
    %c0_i32_0 = arith.constant 0 : i32
    %c0_i32_1 = arith.constant 0 : i32
    return %c0_i32, %c0_i32_0 : i32, i32
  }
  func.func @transform_2(%arg0: i32) -> (i32, i32) {
    %c0_i32 = arith.constant 0 : i32
    %c0_i32_0 = arith.constant 0 : i32
    %c0_i32_1 = arith.constant 0 : i32
    return %c0_i32, %c0_i32_0 : i32, i32
  }
  func.func @transform_3(%arg0: i32) -> (i32, i32) {
    %c0_i32 = arith.constant 0 : i32
    %c0_i32_0 = arith.constant 0 : i32
    return %arg0, %c0_i32 : i32, i32
  }
  func.func @transform_4(%arg0: i32) -> (i32, i32) {
    %c0_i32 = arith.constant 0 : i32
    %c0_i32_0 = arith.constant 0 : i32
    return %arg0, %c0_i32 : i32, i32
  }
}

</mosaic_0001>

<llo_original>
// kernel: resblock_forward.5
$region0: #{resblock_forward.5}
  #allocation0 [shape = 'u32[]', space=smem, size = 0x4, offset = 0x4, fixed_abs, tag = 'smem constant byte address 0x4 - core index']
  #allocation1 [shape = 'u32[144,128]{1,0:T(1,128)}', space=vmem, size = 0x12000, scoped, tag = 'internal scratch']
  %s0 = inlined_call_operand.vmem [shape: bf16[576,128], index: 0, kind: input, shape index: {}]
  %s1 = inlined_call_operand.vmem [shape: f32[1,128], index: 1, kind: input, shape index: {}]
  %s2 = inlined_call_operand.vmem [shape: f32[1,128], index: 2, kind: input, shape index: {}]
  %s3 = inlined_call_operand.vmem [shape: f32[288,1], index: 3, kind: input, shape index: {}]
  %s4 = inlined_call_operand.vmem [shape: bf16[576,128], index: 4, kind: output, shape index: {}]
  %s5 = sld [smem:[#allocation0]]
  $region49: #{resblock_forward.5} parent=0
    _
  %s7 = ssub.s32 1, %s5
  %s8 = scalar_select 0, %s7, %s5
  loop: start=0, step=1, limit=4
  $region2: #{resblock_forward.5} parent=0 // loop_pre_header
    _
  $region3: #{resblock_forward.5} parent=0 // loop_header
    %s10 = sphi 0, %s14
    %p11 = scmp.ge.s32.totalorder %s10, 4
    %s20 = sphi 0, %s22
    %s23 = sphi 0, %s20
    %s24 = sphi 0, %s23
    %s40 = sphi 0, %s24
    %s44 = sphi 0, %s44
    %s46 = sphi 0, %s44
    %s47 = sphi 0, %s46
    %s61 = sphi 0, %s47
    %s65 = sphi 0, %s65
    %s67 = sphi 0, %s65
    %s68 = sphi 0, %s67
    %s82 = sphi 0, %s68
    %s86 = sphi 0, %s86
    %s88 = sphi 0, %s86
    %s89 = sphi 0, %s88
    %s103 = sphi 0, %s89
    %s109 = sphi 0, %s111
    %s112 = sphi 0, %s109
    %s113 = sphi 0, %s112
    %s129 = sphi 0, %s113
  $region4: #{resblock_forward.5} parent=0 // loop_header_branch
    %13 = sbr.rel (%p11) target = $region8
  $region5: #{resblock_forward.5} parent=0 // loop_body
    %s15 = ssub.s32 %s10, 1
    %s16 = ssub.s32 %s10, 2
    %s17 = sadd.s32 %s10, 1
    %s18 = ssub.s32 %s10, %s17
    %p19 = scmp.eq.s32.totalorder %s18, 0
    %s21 = sadd.s32 %s20, 1
    %s22 = scalar_select %p19, %s20, %s21
    %p25 = pneg %p19
    %p26 = scmp.eq.s32.totalorder %s10, 1
    %p27 = por %p25, %p26
    %p28 = scmp.ne.s32.totalorder %s20, %s23
    %p29 = scmp.eq.s32.totalorder %s10, 0
    %p30 = por %p28, %p29
    %p31 = scmp.ne.s32.totalorder %s20, %s23
    %p32 = scmp.eq.s32.totalorder %s15, 1
    %p33 = por %p31, %p32
    %p34 = scmp.ne.s32.totalorder %s23, %s24
    %p35 = scmp.eq.s32.totalorder %s15, 0
    %p36 = por %p34, %p35
    %p37 = scmp.ne.s32.totalorder %s23, %s24
    %p38 = scmp.eq.s32.totalorder %s16, 1
    %p39 = por %p37, %p38
    %p41 = scmp.ne.s32.totalorder %s24, %s40
    %p42 = scmp.eq.s32.totalorder %s16, 0
    %p43 = por %p41, %p42
    %s45 = sadd.s32 %s44, 1
    %p48 = scmp.eq.s32.totalorder %s10, 1
    %p49 = scmp.ne.s32.totalorder %s44, %s46
    %p50 = scmp.eq.s32.totalorder %s10, 0
    %p51 = por %p49, %p50
    %p52 = scmp.ne.s32.totalorder %s44, %s46
    %p53 = scmp.eq.s32.totalorder %s15, 1
    %p54 = por %p52, %p53
    %p55 = scmp.ne.s32.totalorder %s46, %s47
    %p56 = scmp.eq.s32.totalorder %s15, 0
    %p57 = por %p55, %p56
    %p58 = scmp.ne.s32.totalorder %s46, %s47
    %p59 = scmp.eq.s32.totalorder %s16, 1
    %p60 = por %p58, %p59
    %p62 = scmp.ne.s32.totalorder %s47, %s61
    %p63 = scmp.eq.s32.totalorder %s16, 0
    %p64 = por %p62, %p63
    %s66 = sadd.s32 %s65, 1
    %p69 = scmp.eq.s32.totalorder %s10, 1
    %p70 = scmp.ne.s32.totalorder %s65, %s67
    %p71 = scmp.eq.s32.totalorder %s10, 0
    %p72 = por %p70, %p71
    %p73 = scmp.ne.s32.totalorder %s65, %s67
    %p74 = scmp.eq.s32.totalorder %s15, 1
    %p75 = por %p73, %p74
    %p76 = scmp.ne.s32.totalorder %s67, %s68
    %p77 = scmp.eq.s32.totalorder %s15, 0
    %p78 = por %p76, %p77
    %p79 = scmp.ne.s32.totalorder %s67, %s68
    %p80 = scmp.eq.s32.totalorder %s16, 1
    %p81 = por %p79, %p80
    %p83 = scmp.ne.s32.totalorder %s68, %s82
    %p84 = scmp.eq.s32.totalorder %s16, 0
    %p85 = por %p83, %p84
    %s87 = sadd.s32 %s86, 1
    %p90 = scmp.eq.s32.totalorder %s10, 1
    %p91 = scmp.ne.s32.totalorder %s86, %s88
    %p92 = scmp.eq.s32.totalorder %s10, 0
    %p93 = por %p91, %p92
    %p94 = scmp.ne.s32.totalorder %s86, %s88
    %p95 = scmp.eq.s32.totalorder %s15, 1
    %p96 = por %p94, %p95
    %p97 = scmp.ne.s32.totalorder %s88, %s89
    %p98 = scmp.eq.s32.totalorder %s15, 0
    %p99 = por %p97, %p98
    %p100 = scmp.ne.s32.totalorder %s88, %s89
    %p101 = scmp.eq.s32.totalorder %s16, 1
    %p102 = por %p100, %p101
    %p104 = scmp.ne.s32.totalorder %s89, %s103
    %p105 = scmp.eq.s32.totalorder %s16, 0
    %p106 = por %p104, %p105
    %s107 = ssub.s32 %s10, %s17
    %p108 = scmp.eq.s32.totalorder %s107, 0
    %s110 = sadd.s32 %s109, 1
    %s111 = scalar_select %p108, %s109, %s110
    %p114 = pneg %p108
    %p115 = scmp.eq.s32.totalorder %s10, 1
    %p116 = por %p114, %p115
    %p117 = scmp.ne.s32.totalorder %s109, %s112
    %p118 = scmp.eq.s32.totalorder %s10, 0
    %p119 = por %p117, %p118
    %p120 = scmp.ne.s32.totalorder %s109, %s112
    %p121 = scmp.eq.s32.totalorder %s15, 1
    %p122 = por %p120, %p121
    %p123 = scmp.ne.s32.totalorder %s112, %s113
    %p124 = scmp.eq.s32.totalorder %s15, 0
    %p125 = por %p123, %p124
    %p126 = scmp.ne.s32.totalorder %s112, %s113
    %p127 = scmp.eq.s32.totalorder %s16, 1
    %p128 = por %p126, %p127
    %p130 = scmp.ne.s32.totalorder %s113, %s129
    %p131 = scmp.eq.s32.totalorder %s16, 0
    %p132 = por %p130, %p131
    %p133 = scmp.le.s32.totalorder 1, %s10
    %p134 = scmp.lt.s32.totalorder %s10, 3
    %p135 = pnand %p133, %p134
    %p136 = pneg %p135
    // Predicated region
    $region9: #{resblock_forward.5} parent=5 // pred_check
      _
    $region10: #{resblock_forward.5} parent=5 // pred_check_branch
      %138 = sbr.rel (%p135) target = $region12
    $region11: #{resblock_forward.5} parent=5 // pred_region
      %s139 = ssub.s32 %s10, 1
      // Predicated region
      $region13: #{resblock_forward.5} parent=11 // pred_check
        %p140 = pneg %p57
      $region14: #{resblock_forward.5} parent=11 // pred_check_branch
        %142 = sbr.rel (%p140) target = $region16
      $region15: #{resblock_forward.5} parent=11 // pred_region
        _
      $region16: #{resblock_forward.5} parent=11 // pred_fallthru
        _
      // Predicated region
      $region17: #{resblock_forward.5} parent=11 // pred_check
        %p143 = pneg %p78
      $region18: #{resblock_forward.5} parent=11 // pred_check_branch
        %145 = sbr.rel (%p143) target = $region20
      $region19: #{resblock_forward.5} parent=11 // pred_region
        _
      $region20: #{resblock_forward.5} parent=11 // pred_fallthru
        _
      // Predicated region
      $region21: #{resblock_forward.5} parent=11 // pred_check
        %p146 = pneg %p99
      $region22: #{resblock_forward.5} parent=11 // pred_check_branch
        %148 = sbr.rel (%p146) target = $region24
      $region23: #{resblock_forward.5} parent=11 // pred_region
        _
      $region24: #{resblock_forward.5} parent=11 // pred_fallthru
        _
    $region12: #{resblock_forward.5} parent=5 // pred_fallthru
      _
    %p149 = scmp.lt.s32.totalorder %s10, 2
    // Predicated region
    $region25: #{resblock_forward.5} parent=5 // pred_check
      %p150 = pneg %p149
    $region26: #{resblock_forward.5} parent=5 // pred_check_branch
      %152 = sbr.rel (%p150) target = $region28
    $region27: #{resblock_forward.5} parent=5 // pred_region
      // Predicated region
      $region29: #{resblock_forward.5} parent=27 // pred_check
        %p153 = pneg %p30
      $region30: #{resblock_forward.5} parent=27 // pred_check_branch
        %155 = sbr.rel (%p153) target = $region32
      $region31: #{resblock_forward.5} parent=27 // pred_region
        %s156 = smul.u32 36, %s10
        %p157 = scmp.lt.s32.totalorder %s156, 71
        %s158 = scalar_select %p157, %s156, 71
        %s159 = smul.addr %s158, 4
        %s160 = scalar_lea.vmem %s0, %s159
        %s161 = smul.u32 36, %s10
      $region32: #{resblock_forward.5} parent=27 // pred_fallthru
        _
    $region28: #{resblock_forward.5} parent=5 // pred_fallthru
      _
    %p162 = scmp.le.s32.totalorder 1, %s10
    %p163 = scmp.lt.s32.totalorder %s10, 3
    %p164 = pnand %p162, %p163
    %p165 = pneg %p164
    // Predicated region
    $region33: #{resblock_forward.5} parent=5 // pred_check
      _
    $region34: #{resblock_forward.5} parent=5 // pred_check_branch
      %167 = sbr.rel (%p164) target = $region36
    $region35: #{resblock_forward.5} parent=5 // pred_region
      %s168 = ssub.s32 %s10, 1
      %s169 = smul.u32 36, %s15
      %p170 = scmp.lt.s32.totalorder %s169, 71
      %s171 = scalar_select %p170, %s169, 71
      %s172 = smul.addr %s171, 4
      %s173 = scalar_lea.vmem %s0, %s172
      %p174 = pneg %p36
      %p175 = pneg %p33
      %p176 = pneg %p57
      %p177 = pneg %p54
      %p178 = pneg %p78
      %p179 = pneg %p75
      %p180 = pneg %p99
      %p181 = pneg %p96
      %p182 = pneg %p125
      %p183 = pneg %p122
      %s184 = smul.u32 36, %s15
      %p185 = scmp.lt.s32.totalorder %s184, 71
      %s186 = scalar_select %p185, %s184, 71
      %s187 = smul.addr %s186, 4
      %s188 = scalar_lea.vmem %s4, %s187
      %s189 = smul.u32 36, %s15
      %p190 = scmp.lt.s32.totalorder %s189, 71
      %s191 = scalar_select %p190, %s189, 71
      %s192 = smul.addr %s191, 4
      %s193 = scalar_lea.vmem %s0, %s192
      %s194 = smul.u32 36, %s15
      %s195 = smul.u32 36, %s15
      %p196 = scmp.lt.s32.totalorder %s195, 71
      %s197 = scalar_select %p196, %s195, 71
      %s198 = smul.addr %s197, 4
      %s199 = scalar_lea.vmem %s4, %s198
      %s200 = smul.u32 36, %s15
      %v201 = vld [vmem:[%s193] sm:$0xf]
      %v202 = vld [vmem:[%s193 + $0x4] sm:$0xf]
      %v203 = vld [vmem:[%s193 + $0x8] sm:$0xf]
      %v204 = vld [vmem:[%s193 + $0xc] sm:$0xf]
      %v205 = vld [vmem:[%s193 + $0x10] sm:$0xf]
      %v206 = vld [vmem:[%s193 + $0x14] sm:$0xf]
      %v207 = vld [vmem:[%s193 + $0x18] sm:$0xf]
      %v208 = vld [vmem:[%s193 + $0x1c] sm:$0xf]
      %v209 = vld [vmem:[%s193 + $0x20] sm:$0xf]
      %v210 = vld [vmem:[%s193 + $0x24] sm:$0xf]
      %v211 = vld [vmem:[%s193 + $0x28] sm:$0xf]
      %v212 = vld [vmem:[%s193 + $0x2c] sm:$0xf]
      %v213 = vld [vmem:[%s193 + $0x30] sm:$0xf]
      %v214 = vld [vmem:[%s193 + $0x34] sm:$0xf]
      %v215 = vld [vmem:[%s193 + $0x38] sm:$0xf]
      %v216 = vld [vmem:[%s193 + $0x3c] sm:$0xf]
      %v217 = vld [vmem:[%s193 + $0x40] sm:$0xf]
      %v218 = vld [vmem:[%s193 + $0x44] sm:$0xf]
      %v219 = vld [vmem:[%s193 + $0x48] sm:$0xf]
      %v220 = vld [vmem:[%s193 + $0x4c] sm:$0xf]
      %v221 = vld [vmem:[%s193 + $0x50] sm:$0xf]
      %v222 = vld [vmem:[%s193 + $0x54] sm:$0xf]
      %v223 = vld [vmem:[%s193 + $0x58] sm:$0xf]
      %v224 = vld [vmem:[%s193 + $0x5c] sm:$0xf]
      %v225 = vld [vmem:[%s193 + $0x60] sm:$0xf]
      %v226 = vld [vmem:[%s193 + $0x64] sm:$0xf]
      %v227 = vld [vmem:[%s193 + $0x68] sm:$0xf]
      %v228 = vld [vmem:[%s193 + $0x6c] sm:$0xf]
      %v229 = vld [vmem:[%s193 + $0x70] sm:$0xf]
      %v230 = vld [vmem:[%s193 + $0x74] sm:$0xf]
      %v231 = vld [vmem:[%s193 + $0x78] sm:$0xf]
      %v232 = vld [vmem:[%s193 + $0x7c] sm:$0xf]
      %v233 = vld [vmem:[%s193 + $0x80] sm:$0xf]
      %v234 = vld [vmem:[%s193 + $0x84] sm:$0xf]
      %v235 = vld [vmem:[%s193 + $0x88] sm:$0xf]
      %v236 = vld [vmem:[%s193 + $0x8c] sm:$0xf]
      %v237 = vunpack.c.l.bf16 %v201
      %v238 = vunpack.c.l.bf16 %v202
      %v239 = vunpack.c.l.bf16 %v203
      %v240 = vunpack.c.l.bf16 %v204
      %v241 = vunpack.c.l.bf16 %v205
      %v242 = vunpack.c.l.bf16 %v206
      %v243 = vunpack.c.l.bf16 %v207
      %v244 = vunpack.c.l.bf16 %v208
      %v245 = vunpack.c.l.bf16 %v209
      %v246 = vunpack.c.l.bf16 %v210
      %v247 = vunpack.c.l.bf16 %v211
      %v248 = vunpack.c.l.bf16 %v212
      %v249 = vunpack.c.l.bf16 %v213
      %v250 = vunpack.c.l.bf16 %v214
      %v251 = vunpack.c.l.bf16 %v215
      %v252 = vunpack.c.l.bf16 %v216
      %v253 = vunpack.c.l.bf16 %v217
      %v254 = vunpack.c.l.bf16 %v218
      %v255 = vunpack.c.l.bf16 %v219
      %v256 = vunpack.c.l.bf16 %v220
      %v257 = vunpack.c.l.bf16 %v221
      %v258 = vunpack.c.l.bf16 %v222
      %v259 = vunpack.c.l.bf16 %v223
      %v260 = vunpack.c.l.bf16 %v224
      %v261 = vunpack.c.l.bf16 %v225
      %v262 = vunpack.c.l.bf16 %v226
      %v263 = vunpack.c.l.bf16 %v227
      %v264 = vunpack.c.l.bf16 %v228
      %v265 = vunpack.c.l.bf16 %v229
      %v266 = vunpack.c.l.bf16 %v230
      %v267 = vunpack.c.l.bf16 %v231
      %v268 = vunpack.c.l.bf16 %v232
      %v269 = vunpack.c.l.bf16 %v233
      %v270 = vunpack.c.l.bf16 %v234
      %v271 = vunpack.c.l.bf16 %v235
      %v272 = vunpack.c.l.bf16 %v236
      %v273 = vld [vmem:[%s1] sm:$0x1]
      %v275 = vlaneseq
      %v276 = vshrl.u32 %v275, 7
      %v277 = vsub.s32 0, %v276
      %v278 = vrot.slane %v273, %v277
      %v280 = vmul.f32 %v237, %v278
      %v281 = vmul.f32 %v238, %v278
      %v282 = vmul.f32 %v239, %v278
      %v283 = vmul.f32 %v240, %v278
      %v284 = vmul.f32 %v241, %v278
      %v285 = vmul.f32 %v242, %v278
      %v286 = vmul.f32 %v243, %v278
      %v287 = vmul.f32 %v244, %v278
      %v288 = vmul.f32 %v245, %v278
      %v289 = vmul.f32 %v246, %v278
      %v290 = vmul.f32 %v247, %v278
      %v291 = vmul.f32 %v248, %v278
      %v292 = vmul.f32 %v249, %v278
      %v293 = vmul.f32 %v250, %v278
      %v294 = vmul.f32 %v251, %v278
      %v295 = vmul.f32 %v252, %v278
      %v296 = vmul.f32 %v253, %v278
      %v297 = vmul.f32 %v254, %v278
      %v298 = vmul.f32 %v255, %v278
      %v299 = vmul.f32 %v256, %v278
      %v300 = vmul.f32 %v257, %v278
      %v301 = vmul.f32 %v258, %v278
      %v302 = vmul.f32 %v259, %v278
      %v303 = vmul.f32 %v260, %v278
      %v304 = vmul.f32 %v261, %v278
      %v305 = vmul.f32 %v262, %v278
      %v306 = vmul.f32 %v263, %v278
      %v307 = vmul.f32 %v264, %v278
      %v308 = vmul.f32 %v265, %v278
      %v309 = vmul.f32 %v266, %v278
      %v310 = vmul.f32 %v267, %v278
      %v311 = vmul.f32 %v268, %v278
      %v312 = vmul.f32 %v269, %v278
      %v313 = vmul.f32 %v270, %v278
      %v314 = vmul.f32 %v271, %v278
      %v315 = vmul.f32 %v272, %v278
      %v316 = vld [vmem:[%s2] sm:$0x1]
      %v318 = vlaneseq
      %v319 = vshrl.u32 %v318, 7
      %v320 = vsub.s32 0, %v319
      %v321 = vrot.slane %v316, %v320
      %v323 = vadd.f32 %v280, %v321
      %v324 = vadd.f32 %v281, %v321
      %v325 = vadd.f32 %v282, %v321
      %v326 = vadd.f32 %v283, %v321
      %v327 = vadd.f32 %v284, %v321
      %v328 = vadd.f32 %v285, %v321
      %v329 = vadd.f32 %v286, %v321
      %v330 = vadd.f32 %v287, %v321
      %v331 = vadd.f32 %v288, %v321
      %v332 = vadd.f32 %v289, %v321
      %v333 = vadd.f32 %v290, %v321
      %v334 = vadd.f32 %v291, %v321
      %v335 = vadd.f32 %v292, %v321
      %v336 = vadd.f32 %v293, %v321
      %v337 = vadd.f32 %v294, %v321
      %v338 = vadd.f32 %v295, %v321
      %v339 = vadd.f32 %v296, %v321
      %v340 = vadd.f32 %v297, %v321
      %v341 = vadd.f32 %v298, %v321
      %v342 = vadd.f32 %v299, %v321
      %v343 = vadd.f32 %v300, %v321
      %v344 = vadd.f32 %v301, %v321
      %v345 = vadd.f32 %v302, %v321
      %v346 = vadd.f32 %v303, %v321
      %v347 = vadd.f32 %v304, %v321
      %v348 = vadd.f32 %v305, %v321
      %v349 = vadd.f32 %v306, %v321
      %v350 = vadd.f32 %v307, %v321
      %v351 = vadd.f32 %v308, %v321
      %v352 = vadd.f32 %v309, %v321
      %v353 = vadd.f32 %v310, %v321
      %v354 = vadd.f32 %v311, %v321
      %v355 = vadd.f32 %v312, %v321
      %v356 = vadd.f32 %v313, %v321
      %v357 = vadd.f32 %v314, %v321
      %v358 = vadd.f32 %v315, %v321
      %v359 = vld [vmem:[%s3] sm:$0xff]
      %v360 = vld [vmem:[%s3 + $0x8] sm:$0xff]
      %v361 = vld [vmem:[%s3 + $0x10] sm:$0xff]
      %v362 = vld [vmem:[%s3 + $0x18] sm:$0xff]
      %v363 = vld [vmem:[%s3 + $0x20] sm:$0xff]
      %v364 = vld [vmem:[%s3 + $0x28] sm:$0xff]
      %v365 = vld [vmem:[%s3 + $0x30] sm:$0xff]
      %v366 = vld [vmem:[%s3 + $0x38] sm:$0xff]
      %v367 = vld [vmem:[%s3 + $0x40] sm:$0xff]
      %v368 = vld [vmem:[%s3 + $0x48] sm:$0xff]
      %v369 = vld [vmem:[%s3 + $0x50] sm:$0xff]
      %v370 = vld [vmem:[%s3 + $0x58] sm:$0xff]
      %v371 = vld [vmem:[%s3 + $0x60] sm:$0xff]
      %v372 = vld [vmem:[%s3 + $0x68] sm:$0xff]
      %v373 = vld [vmem:[%s3 + $0x70] sm:$0xff]
      %v374 = vld [vmem:[%s3 + $0x78] sm:$0xff]
      %v375 = vld [vmem:[%s3 + $0x80] sm:$0xff]
      %v376 = vld [vmem:[%s3 + $0x88] sm:$0xff]
      %v377 = vld [vmem:[%s3 + $0x90] sm:$0xff]
      %v378 = vld [vmem:[%s3 + $0x98] sm:$0xff]
      %v379 = vld [vmem:[%s3 + $0xa0] sm:$0xff]
      %v380 = vld [vmem:[%s3 + $0xa8] sm:$0xff]
      %v381 = vld [vmem:[%s3 + $0xb0] sm:$0xff]
      %v382 = vld [vmem:[%s3 + $0xb8] sm:$0xff]
      %v383 = vld [vmem:[%s3 + $0xc0] sm:$0xff]
      %v384 = vld [vmem:[%s3 + $0xc8] sm:$0xff]
      %v385 = vld [vmem:[%s3 + $0xd0] sm:$0xff]
      %v386 = vld [vmem:[%s3 + $0xd8] sm:$0xff]
      %v387 = vld [vmem:[%s3 + $0xe0] sm:$0xff]
      %v388 = vld [vmem:[%s3 + $0xe8] sm:$0xff]
      %v389 = vld [vmem:[%s3 + $0xf0] sm:$0xff]
      %v390 = vld [vmem:[%s3 + $0xf8] sm:$0xff]
      %v391 = vld [vmem:[%s3 + $0x100] sm:$0xff]
      %v392 = vld [vmem:[%s3 + $0x108] sm:$0xff]
      %v393 = vld [vmem:[%s3 + $0x110] sm:$0xff]
      %v394 = vld [vmem:[%s3 + $0x118] sm:$0xff]
      %vm395 = vcmp.gt.f32.partialorder %v359, 0.0
      %vm396 = vcmp.gt.f32.partialorder %v360, 0.0
      %vm397 = vcmp.gt.f32.partialorder %v361, 0.0
      %vm398 = vcmp.gt.f32.partialorder %v362, 0.0
      %vm399 = vcmp.gt.f32.partialorder %v363, 0.0
      %vm400 = vcmp.gt.f32.partialorder %v364, 0.0
      %vm401 = vcmp.gt.f32.partialorder %v365, 0.0
      %vm402 = vcmp.gt.f32.partialorder %v366, 0.0
      %vm403 = vcmp.gt.f32.partialorder %v367, 0.0
      %vm404 = vcmp.gt.f32.partialorder %v368, 0.0
      %vm405 = vcmp.gt.f32.partialorder %v369, 0.0
      %vm406 = vcmp.gt.f32.partialorder %v370, 0.0
      %vm407 = vcmp.gt.f32.partialorder %v371, 0.0
      %vm408 = vcmp.gt.f32.partialorder %v372, 0.0
      %vm409 = vcmp.gt.f32.partialorder %v373, 0.0
      %vm410 = vcmp.gt.f32.partialorder %v374, 0.0
      %vm411 = vcmp.gt.f32.partialorder %v375, 0.0
      %vm412 = vcmp.gt.f32.partialorder %v376, 0.0
      %vm413 = vcmp.gt.f32.partialorder %v377, 0.0
      %vm414 = vcmp.gt.f32.partialorder %v378, 0.0
      %vm415 = vcmp.gt.f32.partialorder %v379, 0.0
      %vm416 = vcmp.gt.f32.partialorder %v380, 0.0
      %vm417 = vcmp.gt.f32.partialorder %v381, 0.0
      %vm418 = vcmp.gt.f32.partialorder %v382, 0.0
      %vm419 = vcmp.gt.f32.partialorder %v383, 0.0
      %vm420 = vcmp.gt.f32.partialorder %v384, 0.0
      %vm421 = vcmp.gt.f32.partialorder %v385, 0.0
      %vm422 = vcmp.gt.f32.partialorder %v386, 0.0
      %vm423 = vcmp.gt.f32.partialorder %v387, 0.0
      %vm424 = vcmp.gt.f32.partialorder %v388, 0.0
      %vm425 = vcmp.gt.f32.partialorder %v389, 0.0
      %vm426 = vcmp.gt.f32.partialorder %v390, 0.0
      %vm427 = vcmp.gt.f32.partialorder %v391, 0.0
      %vm428 = vcmp.gt.f32.partialorder %v392, 0.0
      %vm429 = vcmp.gt.f32.partialorder %v393, 0.0
      %vm430 = vcmp.gt.f32.partialorder %v394, 0.0
      %v431 = vmax.f32 %v323, 0.0
      %v432 = vmax.f32 %v324, 0.0
      %v433 = vmax.f32 %v325, 0.0
      %v434 = vmax.f32 %v326, 0.0
      %v435 = vmax.f32 %v327, 0.0
      %v436 = vmax.f32 %v328, 0.0
      %v437 = vmax.f32 %v329, 0.0
      %v438 = vmax.f32 %v330, 0.0
      %v439 = vmax.f32 %v331, 0.0
      %v440 = vmax.f32 %v332, 0.0
      %v441 = vmax.f32 %v333, 0.0
      %v442 = vmax.f32 %v334, 0.0
      %v443 = vmax.f32 %v335, 0.0
      %v444 = vmax.f32 %v336, 0.0
      %v445 = vmax.f32 %v337, 0.0
      %v446 = vmax.f32 %v338, 0.0
      %v447 = vmax.f32 %v339, 0.0
      %v448 = vmax.f32 %v340, 0.0
      %v449 = vmax.f32 %v341, 0.0
      %v450 = vmax.f32 %v342, 0.0
      %v451 = vmax.f32 %v343, 0.0
      %v452 = vmax.f32 %v344, 0.0
      %v453 = vmax.f32 %v345, 0.0
      %v454 = vmax.f32 %v346, 0.0
      %v455 = vmax.f32 %v347, 0.0
      %v456 = vmax.f32 %v348, 0.0
      %v457 = vmax.f32 %v349, 0.0
      %v458 = vmax.f32 %v350, 0.0
      %v459 = vmax.f32 %v351, 0.0
      %v460 = vmax.f32 %v352, 0.0
      %v461 = vmax.f32 %v353, 0.0
      %v462 = vmax.f32 %v354, 0.0
      %v463 = vmax.f32 %v355, 0.0
      %v464 = vmax.f32 %v356, 0.0
      %v465 = vmax.f32 %v357, 0.0
      %v466 = vmax.f32 %v358, 0.0
      %v467 = vsel %vm395, 1, 0
      %v468 = vsel %vm396, 1, 0
      %v469 = vsel %vm397, 1, 0
      %v470 = vsel %vm398, 1, 0
      %v471 = vsel %vm399, 1, 0
      %v472 = vsel %vm400, 1, 0
      %v473 = vsel %vm401, 1, 0
      %v474 = vsel %vm402, 1, 0
      %v475 = vsel %vm403, 1, 0
      %v476 = vsel %vm404, 1, 0
      %v477 = vsel %vm405, 1, 0
      %v478 = vsel %vm406, 1, 0
      %v479 = vsel %vm407, 1, 0
      %v480 = vsel %vm408, 1, 0
      %v481 = vsel %vm409, 1, 0
      %v482 = vsel %vm410, 1, 0
      %v483 = vsel %vm411, 1, 0
      %v484 = vsel %vm412, 1, 0
      %v485 = vsel %vm413, 1, 0
      %v486 = vsel %vm414, 1, 0
      %v487 = vsel %vm415, 1, 0
      %v488 = vsel %vm416, 1, 0
      %v489 = vsel %vm417, 1, 0
      %v490 = vsel %vm418, 1, 0
      %v491 = vsel %vm419, 1, 0
      %v492 = vsel %vm420, 1, 0
      %v493 = vsel %vm421, 1, 0
      %v494 = vsel %vm422, 1, 0
      %v495 = vsel %vm423, 1, 0
      %v496 = vsel %vm424, 1, 0
      %v497 = vsel %vm425, 1, 0
      %v498 = vsel %vm426, 1, 0
      %v499 = vsel %vm427, 1, 0
      %v500 = vsel %vm428, 1, 0
      %v501 = vsel %vm429, 1, 0
      %v502 = vsel %vm430, 1, 0
      %503 = vset.pattern.permute.xlu0 0
      %504 = vperm.xlu0 %503, %v467
      %v505 = vpop.permute.xlu0 %504
      %506 = vset.pattern.permute.xlu0 0
      %507 = vperm.xlu0 %506, %v468
      %v508 = vpop.permute.xlu0 %507
      %509 = vset.pattern.permute.xlu0 0
      %510 = vperm.xlu0 %509, %v469
      %v511 = vpop.permute.xlu0 %510
      %512 = vset.pattern.permute.xlu0 0
      %513 = vperm.xlu0 %512, %v470
      %v514 = vpop.permute.xlu0 %513
      %515 = vset.pattern.permute.xlu0 0
      %516 = vperm.xlu0 %515, %v471
      %v517 = vpop.permute.xlu0 %516
      %518 = vset.pattern.permute.xlu0 0
      %519 = vperm.xlu0 %518, %v472
      %v520 = vpop.permute.xlu0 %519
      %521 = vset.pattern.permute.xlu0 0
      %522 = vperm.xlu0 %521, %v473
      %v523 = vpop.permute.xlu0 %522
      %524 = vset.pattern.permute.xlu0 0
      %525 = vperm.xlu0 %524, %v474
      %v526 = vpop.permute.xlu0 %525
      %527 = vset.pattern.permute.xlu0 0
      %528 = vperm.xlu0 %527, %v475
      %v529 = vpop.permute.xlu0 %528
      %530 = vset.pattern.permute.xlu0 0
      %531 = vperm.xlu0 %530, %v476
      %v532 = vpop.permute.xlu0 %531
      %533 = vset.pattern.permute.xlu0 0
      %534 = vperm.xlu0 %533, %v477
      %v535 = vpop.permute.xlu0 %534
      %536 = vset.pattern.permute.xlu0 0
      %537 = vperm.xlu0 %536, %v478
      %v538 = vpop.permute.xlu0 %537
      %539 = vset.pattern.permute.xlu0 0
      %540 = vperm.xlu0 %539, %v479
      %v541 = vpop.permute.xlu0 %540
      %542 = vset.pattern.permute.xlu0 0
      %543 = vperm.xlu0 %542, %v480
      %v544 = vpop.permute.xlu0 %543
      %545 = vset.pattern.permute.xlu0 0
      %546 = vperm.xlu0 %545, %v481
      %v547 = vpop.permute.xlu0 %546
      %548 = vset.pattern.permute.xlu0 0
      %549 = vperm.xlu0 %548, %v482
      %v550 = vpop.permute.xlu0 %549
      %551 = vset.pattern.permute.xlu0 0
      %552 = vperm.xlu0 %551, %v483
      %v553 = vpop.permute.xlu0 %552
      %554 = vset.pattern.permute.xlu0 0
      %555 = vperm.xlu0 %554, %v484
      %v556 = vpop.permute.xlu0 %555
      %557 = vset.pattern.permute.xlu0 0
      %558 = vperm.xlu0 %557, %v485
      %v559 = vpop.permute.xlu0 %558
      %560 = vset.pattern.permute.xlu0 0
      %561 = vperm.xlu0 %560, %v486
      %v562 = vpop.permute.xlu0 %561
      %563 = vset.pattern.permute.xlu0 0
      %564 = vperm.xlu0 %563, %v487
      %v565 = vpop.permute.xlu0 %564
      %566 = vset.pattern.permute.xlu0 0
      %567 = vperm.xlu0 %566, %v488
      %v568 = vpop.permute.xlu0 %567
      %569 = vset.pattern.permute.xlu0 0
      %570 = vperm.xlu0 %569, %v489
      %v571 = vpop.permute.xlu0 %570
      %572 = vset.pattern.permute.xlu0 0
      %573 = vperm.xlu0 %572, %v490
      %v574 = vpop.permute.xlu0 %573
      %575 = vset.pattern.permute.xlu0 0
      %576 = vperm.xlu0 %575, %v491
      %v577 = vpop.permute.xlu0 %576
      %578 = vset.pattern.permute.xlu0 0
      %579 = vperm.xlu0 %578, %v492
      %v580 = vpop.permute.xlu0 %579
      %581 = vset.pattern.permute.xlu0 0
      %582 = vperm.xlu0 %581, %v493
      %v583 = vpop.permute.xlu0 %582
      %584 = vset.pattern.permute.xlu0 0
      %585 = vperm.xlu0 %584, %v494
      %v586 = vpop.permute.xlu0 %585
      %587 = vset.pattern.permute.xlu0 0
      %588 = vperm.xlu0 %587, %v495
      %v589 = vpop.permute.xlu0 %588
      %590 = vset.pattern.permute.xlu0 0
      %591 = vperm.xlu0 %590, %v496
      %v592 = vpop.permute.xlu0 %591
      %593 = vset.pattern.permute.xlu0 0
      %594 = vperm.xlu0 %593, %v497
      %v595 = vpop.permute.xlu0 %594
      %596 = vset.pattern.permute.xlu0 0
      %597 = vperm.xlu0 %596, %v498
      %v598 = vpop.permute.xlu0 %597
      %599 = vset.pattern.permute.xlu0 0
      %600 = vperm.xlu0 %599, %v499
      %v601 = vpop.permute.xlu0 %600
      %602 = vset.pattern.permute.xlu0 0
      %603 = vperm.xlu0 %602, %v500
      %v604 = vpop.permute.xlu0 %603
      %605 = vset.pattern.permute.xlu0 0
      %606 = vperm.xlu0 %605, %v501
      %v607 = vpop.permute.xlu0 %606
      %608 = vset.pattern.permute.xlu0 0
      %609 = vperm.xlu0 %608, %v502
      %v610 = vpop.permute.xlu0 %609
      %vm611 = vcmp.eq.s32.totalorder %v505, 1
      %vm612 = vcmp.eq.s32.totalorder %v508, 1
      %vm613 = vcmp.eq.s32.totalorder %v511, 1
      %vm614 = vcmp.eq.s32.totalorder %v514, 1
      %vm615 = vcmp.eq.s32.totalorder %v517, 1
      %vm616 = vcmp.eq.s32.totalorder %v520, 1
      %vm617 = vcmp.eq.s32.totalorder %v523, 1
      %vm618 = vcmp.eq.s32.totalorder %v526, 1
      %vm619 = vcmp.eq.s32.totalorder %v529, 1
      %vm620 = vcmp.eq.s32.totalorder %v532, 1
      %vm621 = vcmp.eq.s32.totalorder %v535, 1
      %vm622 = vcmp.eq.s32.totalorder %v538, 1
      %vm623 = vcmp.eq.s32.totalorder %v541, 1
      %vm624 = vcmp.eq.s32.totalorder %v544, 1
      %vm625 = vcmp.eq.s32.totalorder %v547, 1
      %vm626 = vcmp.eq.s32.totalorder %v550, 1
      %vm627 = vcmp.eq.s32.totalorder %v553, 1
      %vm628 = vcmp.eq.s32.totalorder %v556, 1
      %vm629 = vcmp.eq.s32.totalorder %v559, 1
      %vm630 = vcmp.eq.s32.totalorder %v562, 1
      %vm631 = vcmp.eq.s32.totalorder %v565, 1
      %vm632 = vcmp.eq.s32.totalorder %v568, 1
      %vm633 = vcmp.eq.s32.totalorder %v571, 1
      %vm634 = vcmp.eq.s32.totalorder %v574, 1
      %vm635 = vcmp.eq.s32.totalorder %v577, 1
      %vm636 = vcmp.eq.s32.totalorder %v580, 1
      %vm637 = vcmp.eq.s32.totalorder %v583, 1
      %vm638 = vcmp.eq.s32.totalorder %v586, 1
      %vm639 = vcmp.eq.s32.totalorder %v589, 1
      %vm640 = vcmp.eq.s32.totalorder %v592, 1
      %vm641 = vcmp.eq.s32.totalorder %v595, 1
      %vm642 = vcmp.eq.s32.totalorder %v598, 1
      %vm643 = vcmp.eq.s32.totalorder %v601, 1
      %vm644 = vcmp.eq.s32.totalorder %v604, 1
      %vm645 = vcmp.eq.s32.totalorder %v607, 1
      %vm646 = vcmp.eq.s32.totalorder %v610, 1
      %v647 = vsel %vm611, %v431, 0.0
      %v648 = vsel %vm612, %v432, 0.0
      %v649 = vsel %vm613, %v433, 0.0
      %v650 = vsel %vm614, %v434, 0.0
      %v651 = vsel %vm615, %v435, 0.0
      %v652 = vsel %vm616, %v436, 0.0
      %v653 = vsel %vm617, %v437, 0.0
      %v654 = vsel %vm618, %v438, 0.0
      %v655 = vsel %vm619, %v439, 0.0
      %v656 = vsel %vm620, %v440, 0.0
      %v657 = vsel %vm621, %v441, 0.0
      %v658 = vsel %vm622, %v442, 0.0
      %v659 = vsel %vm623, %v443, 0.0
      %v660 = vsel %vm624, %v444, 0.0
      %v661 = vsel %vm625, %v445, 0.0
      %v662 = vsel %vm626, %v446, 0.0
      %v663 = vsel %vm627, %v447, 0.0
      %v664 = vsel %vm628, %v448, 0.0
      %v665 = vsel %vm629, %v449, 0.0
      %v666 = vsel %vm630, %v450, 0.0
      %v667 = vsel %vm631, %v451, 0.0
      %v668 = vsel %vm632, %v452, 0.0
      %v669 = vsel %vm633, %v453, 0.0
      %v670 = vsel %vm634, %v454, 0.0
      %v671 = vsel %vm635, %v455, 0.0
      %v672 = vsel %vm636, %v456, 0.0
      %v673 = vsel %vm637, %v457, 0.0
      %v674 = vsel %vm638, %v458, 0.0
      %v675 = vsel %vm639, %v459, 0.0
      %v676 = vsel %vm640, %v460, 0.0
      %v677 = vsel %vm641, %v461, 0.0
      %v678 = vsel %vm642, %v462, 0.0
      %v679 = vsel %vm643, %v463, 0.0
      %v680 = vsel %vm644, %v464, 0.0
      %v681 = vsel %vm645, %v465, 0.0
      %v682 = vsel %vm646, %v466, 0.0
      %v683 = vpack.c.bf16 %v648, %v647
      %v684 = vpack.c.bf16 %v650, %v649
      %v685 = vpack.c.bf16 %v652, %v651
      %v686 = vpack.c.bf16 %v654, %v653
      %v687 = vpack.c.bf16 %v656, %v655
      %v688 = vpack.c.bf16 %v658, %v657
      %v689 = vpack.c.bf16 %v660, %v659
      %v690 = vpack.c.bf16 %v662, %v661
      %v691 = vpack.c.bf16 %v664, %v663
      %v692 = vpack.c.bf16 %v666, %v665
      %v693 = vpack.c.bf16 %v668, %v667
      %v694 = vpack.c.bf16 %v670, %v669
      %v695 = vpack.c.bf16 %v672, %v671
      %v696 = vpack.c.bf16 %v674, %v673
      %v697 = vpack.c.bf16 %v676, %v675
      %v698 = vpack.c.bf16 %v678, %v677
      %v699 = vpack.c.bf16 %v680, %v679
      %v700 = vpack.c.bf16 %v682, %v681
      %v719 = vunpack.c.l.b16 %v683
      %v720 = vunpack.c.h.b16 %v683
      %v721 = vunpack.c.l.b16 %v684
      %v722 = vunpack.c.h.b16 %v684
      %v723 = vunpack.c.l.b16 %v685
      %v724 = vunpack.c.h.b16 %v685
      %v725 = vunpack.c.l.b16 %v686
      %v726 = vunpack.c.h.b16 %v686
      %v727 = vunpack.c.l.b16 %v687
      %v728 = vunpack.c.h.b16 %v687
      %v729 = vunpack.c.l.b16 %v688
      %v730 = vunpack.c.h.b16 %v688
      %v731 = vunpack.c.l.b16 %v689
      %v732 = vunpack.c.h.b16 %v689
      %v733 = vunpack.c.l.b16 %v690
      %v734 = vunpack.c.h.b16 %v690
      %v735 = vunpack.c.l.b16 %v691
      %v736 = vunpack.c.h.b16 %v691
      %v737 = vunpack.c.l.b16 %v692
      %v738 = vunpack.c.h.b16 %v692
      %v739 = vunpack.c.l.b16 %v693
      %v740 = vunpack.c.h.b16 %v693
      %v741 = vunpack.c.l.b16 %v694
      %v742 = vunpack.c.h.b16 %v694
      %v743 = vunpack.c.l.b16 %v695
      %v744 = vunpack.c.h.b16 %v695
      %v745 = vunpack.c.l.b16 %v696
      %v746 = vunpack.c.h.b16 %v696
      %v747 = vunpack.c.l.b16 %v697
      %v748 = vunpack.c.h.b16 %v697
      %v749 = vunpack.c.l.b16 %v698
      %v750 = vunpack.c.h.b16 %v698
      %v751 = vunpack.c.l.b16 %v699
      %v752 = vunpack.c.h.b16 %v699
      %v753 = vunpack.c.l.b16 %v700
      %v754 = vunpack.c.h.b16 %v700
      %v755 = vpack.c.b16 %v719, %v719
      %v756 = vpack.c.b16 %v720, %v720
      %v757 = vpack.c.b16 %v721, %v721
      %v758 = vpack.c.b16 %v722, %v722
      %v759 = vpack.c.b16 %v723, %v723
      %v760 = vpack.c.b16 %v724, %v724
      %v761 = vpack.c.b16 %v725, %v725
      %v762 = vpack.c.b16 %v726, %v726
      %v763 = vpack.c.b16 %v727, %v727
      %v764 = vpack.c.b16 %v728, %v728
      %v765 = vpack.c.b16 %v729, %v729
      %v766 = vpack.c.b16 %v730, %v730
      %v767 = vpack.c.b16 %v731, %v731
      %v768 = vpack.c.b16 %v732, %v732
      %v769 = vpack.c.b16 %v733, %v733
      %v770 = vpack.c.b16 %v734, %v734
      %v771 = vpack.c.b16 %v735, %v735
      %v772 = vpack.c.b16 %v736, %v736
      %v773 = vpack.c.b16 %v737, %v737
      %v774 = vpack.c.b16 %v738, %v738
      %v775 = vpack.c.b16 %v739, %v739
      %v776 = vpack.c.b16 %v740, %v740
      %v777 = vpack.c.b16 %v741, %v741
      %v778 = vpack.c.b16 %v742, %v742
      %v779 = vpack.c.b16 %v743, %v743
      %v780 = vpack.c.b16 %v744, %v744
      %v781 = vpack.c.b16 %v745, %v745
      %v782 = vpack.c.b16 %v746, %v746
      %v783 = vpack.c.b16 %v747, %v747
      %v784 = vpack.c.b16 %v748, %v748
      %v785 = vpack.c.b16 %v749, %v749
      %v786 = vpack.c.b16 %v750, %v750
      %v787 = vpack.c.b16 %v751, %v751
      %v788 = vpack.c.b16 %v752, %v752
      %v789 = vpack.c.b16 %v753, %v753
      %v790 = vpack.c.b16 %v754, %v754
      %827 = vst [vmem:[%s199] sm:$0xf] %v755
      %828 = vst [vmem:[%s199 + $0x4] sm:$0xf] %v756
      %829 = vst [vmem:[%s199 + $0x8] sm:$0xf] %v757
      %830 = vst [vmem:[%s199 + $0xc] sm:$0xf] %v758
      %831 = vst [vmem:[%s199 + $0x10] sm:$0xf] %v759
      %832 = vst [vmem:[%s199 + $0x14] sm:$0xf] %v760
      %833 = vst [vmem:[%s199 + $0x18] sm:$0xf] %v761
      %834 = vst [vmem:[%s199 + $0x1c] sm:$0xf] %v762
      %835 = vst [vmem:[%s199 + $0x20] sm:$0xf] %v763
      %836 = vst [vmem:[%s199 + $0x24] sm:$0xf] %v764
      %837 = vst [vmem:[%s199 + $0x28] sm:$0xf] %v765
      %838 = vst [vmem:[%s199 + $0x2c] sm:$0xf] %v766
      %839 = vst [vmem:[%s199 + $0x30] sm:$0xf] %v767
      %840 = vst [vmem:[%s199 + $0x34] sm:$0xf] %v768
      %841 = vst [vmem:[%s199 + $0x38] sm:$0xf] %v769
      %842 = vst [vmem:[%s199 + $0x3c] sm:$0xf] %v770
      %843 = vst [vmem:[%s199 + $0x40] sm:$0xf] %v771
      %844 = vst [vmem:[%s199 + $0x44] sm:$0xf] %v772
      %845 = vst [vmem:[%s199 + $0x48] sm:$0xf] %v773
      %846 = vst [vmem:[%s199 + $0x4c] sm:$0xf] %v774
      %847 = vst [vmem:[%s199 + $0x50] sm:$0xf] %v775
      %848 = vst [vmem:[%s199 + $0x54] sm:$0xf] %v776
      %849 = vst [vmem:[%s199 + $0x58] sm:$0xf] %v777
      %850 = vst [vmem:[%s199 + $0x5c] sm:$0xf] %v778
      %851 = vst [vmem:[%s199 + $0x60] sm:$0xf] %v779
      %852 = vst [vmem:[%s199 + $0x64] sm:$0xf] %v780
      %853 = vst [vmem:[%s199 + $0x68] sm:$0xf] %v781
      %854 = vst [vmem:[%s199 + $0x6c] sm:$0xf] %v782
      %855 = vst [vmem:[%s199 + $0x70] sm:$0xf] %v783
      %856 = vst [vmem:[%s199 + $0x74] sm:$0xf] %v784
      %857 = vst [vmem:[%s199 + $0x78] sm:$0xf] %v785
      %858 = vst [vmem:[%s199 + $0x7c] sm:$0xf] %v786
      %859 = vst [vmem:[%s199 + $0x80] sm:$0xf] %v787
      %860 = vst [vmem:[%s199 + $0x84] sm:$0xf] %v788
      %861 = vst [vmem:[%s199 + $0x88] sm:$0xf] %v789
      %862 = vst [vmem:[%s199 + $0x8c] sm:$0xf] %v790
      %s863 = smul.u32 36, %s15
      %p864 = scmp.lt.s32.totalorder %s863, 71
      %s865 = scalar_select %p864, %s863, 71
      %s866 = smul.addr %s865, 4
      %s867 = scalar_lea.vmem %s4, %s866
      // Predicated region
      $region37: #{resblock_forward.5} parent=35 // pred_check
        %p868 = pneg %p122
      $region38: #{resblock_forward.5} parent=35 // pred_check_branch
        %870 = sbr.rel (%p868) target = $region40
      $region39: #{resblock_forward.5} parent=35 // pred_region
        %s871 = smul.u32 36, %s15
      $region40: #{resblock_forward.5} parent=35 // pred_fallthru
        _
    $region36: #{resblock_forward.5} parent=5 // pred_fallthru
      _
    %p872 = scmp.le.s32.totalorder 2, %s10
    // Predicated region
    $region41: #{resblock_forward.5} parent=5 // pred_check
      %p873 = pneg %p872
    $region42: #{resblock_forward.5} parent=5 // pred_check_branch
      %875 = sbr.rel (%p873) target = $region44
    $region43: #{resblock_forward.5} parent=5 // pred_region
      %s876 = ssub.s32 %s10, 2
      // Predicated region
      $region45: #{resblock_forward.5} parent=43 // pred_check
        %p877 = pneg %p128
      $region46: #{resblock_forward.5} parent=43 // pred_check_branch
        %879 = sbr.rel (%p877) target = $region48
      $region47: #{resblock_forward.5} parent=43 // pred_region
        %s880 = smul.u32 36, %s16
        %p881 = scmp.lt.s32.totalorder %s880, 71
        %s882 = scalar_select %p881, %s880, 71
        %s883 = smul.addr %s882, 4
        %s884 = scalar_lea.vmem %s4, %s883
      $region48: #{resblock_forward.5} parent=43 // pred_fallthru
        _
    $region44: #{resblock_forward.5} parent=5 // pred_fallthru
      _
  $region6: #{resblock_forward.5} parent=0 // loop_footer
    %s14 = sadd.s32 1, %s10
  $region7: #{resblock_forward.5} parent=0 // loop_footer_branch
    %9 = sbr.rel target = $region3
  $region8: #{resblock_forward.5} parent=0 // loop_exit
    _

// kernel: resblock_forward.7
$region0: #{resblock_forward.7}
  #allocation0 [shape = 'u32[]', space=smem, size = 0x4, offset = 0x4, fixed_abs, tag = 'smem constant byte address 0x4 - core index']
  #allocation1 [shape = 'u32[144,128]{1,0:T(1,128)}', space=vmem, size = 0x12000, scoped, tag = 'internal scratch']
  %s0 = inlined_call_operand.vmem [shape: bf16[576,128], index: 0, kind: input, shape index: {}]
  %s1 = inlined_call_operand.vmem [shape: f32[1,128], index: 1, kind: input, shape index: {}]
  %s2 = inlined_call_operand.vmem [shape: f32[1,128], index: 2, kind: input, shape index: {}]
  %s3 = inlined_call_operand.vmem [shape: bf16[576,128], index: 3, kind: input, shape index: {}]
  %s4 = inlined_call_operand.vmem [shape: f32[576,128], index: 4, kind: output, shape index: {}]
  %s5 = sld [smem:[#allocation0]]
  $region49: #{resblock_forward.7} parent=0
    _
  %s7 = ssub.s32 1, %s5
  %s8 = scalar_select 0, %s7, %s5
  loop: start=0, step=1, limit=4
  $region2: #{resblock_forward.7} parent=0 // loop_pre_header
    _
  $region3: #{resblock_forward.7} parent=0 // loop_header
    %s10 = sphi 0, %s14
    %p11 = scmp.ge.s32.totalorder %s10, 4
    %s20 = sphi 0, %s22
    %s23 = sphi 0, %s20
    %s24 = sphi 0, %s23
    %s40 = sphi 0, %s24
    %s44 = sphi 0, %s44
    %s46 = sphi 0, %s44
    %s47 = sphi 0, %s46
    %s61 = sphi 0, %s47
    %s65 = sphi 0, %s65
    %s67 = sphi 0, %s65
    %s68 = sphi 0, %s67
    %s82 = sphi 0, %s68
    %s88 = sphi 0, %s90
    %s91 = sphi 0, %s88
    %s92 = sphi 0, %s91
    %s108 = sphi 0, %s92
    %s114 = sphi 0, %s116
    %s117 = sphi 0, %s114
    %s118 = sphi 0, %s117
    %s134 = sphi 0, %s118
  $region4: #{resblock_forward.7} parent=0 // loop_header_branch
    %13 = sbr.rel (%p11) target = $region8
  $region5: #{resblock_forward.7} parent=0 // loop_body
    %s15 = ssub.s32 %s10, 1
    %s16 = ssub.s32 %s10, 2
    %s17 = sadd.s32 %s10, 1
    %s18 = ssub.s32 %s10, %s17
    %p19 = scmp.eq.s32.totalorder %s18, 0
    %s21 = sadd.s32 %s20, 1
    %s22 = scalar_select %p19, %s20, %s21
    %p25 = pneg %p19
    %p26 = scmp.eq.s32.totalorder %s10, 1
    %p27 = por %p25, %p26
    %p28 = scmp.ne.s32.totalorder %s20, %s23
    %p29 = scmp.eq.s32.totalorder %s10, 0
    %p30 = por %p28, %p29
    %p31 = scmp.ne.s32.totalorder %s20, %s23
    %p32 = scmp.eq.s32.totalorder %s15, 1
    %p33 = por %p31, %p32
    %p34 = scmp.ne.s32.totalorder %s23, %s24
    %p35 = scmp.eq.s32.totalorder %s15, 0
    %p36 = por %p34, %p35
    %p37 = scmp.ne.s32.totalorder %s23, %s24
    %p38 = scmp.eq.s32.totalorder %s16, 1
    %p39 = por %p37, %p38
    %p41 = scmp.ne.s32.totalorder %s24, %s40
    %p42 = scmp.eq.s32.totalorder %s16, 0
    %p43 = por %p41, %p42
    %s45 = sadd.s32 %s44, 1
    %p48 = scmp.eq.s32.totalorder %s10, 1
    %p49 = scmp.ne.s32.totalorder %s44, %s46
    %p50 = scmp.eq.s32.totalorder %s10, 0
    %p51 = por %p49, %p50
    %p52 = scmp.ne.s32.totalorder %s44, %s46
    %p53 = scmp.eq.s32.totalorder %s15, 1
    %p54 = por %p52, %p53
    %p55 = scmp.ne.s32.totalorder %s46, %s47
    %p56 = scmp.eq.s32.totalorder %s15, 0
    %p57 = por %p55, %p56
    %p58 = scmp.ne.s32.totalorder %s46, %s47
    %p59 = scmp.eq.s32.totalorder %s16, 1
    %p60 = por %p58, %p59
    %p62 = scmp.ne.s32.totalorder %s47, %s61
    %p63 = scmp.eq.s32.totalorder %s16, 0
    %p64 = por %p62, %p63
    %s66 = sadd.s32 %s65, 1
    %p69 = scmp.eq.s32.totalorder %s10, 1
    %p70 = scmp.ne.s32.totalorder %s65, %s67
    %p71 = scmp.eq.s32.totalorder %s10, 0
    %p72 = por %p70, %p71
    %p73 = scmp.ne.s32.totalorder %s65, %s67
    %p74 = scmp.eq.s32.totalorder %s15, 1
    %p75 = por %p73, %p74
    %p76 = scmp.ne.s32.totalorder %s67, %s68
    %p77 = scmp.eq.s32.totalorder %s15, 0
    %p78 = por %p76, %p77
    %p79 = scmp.ne.s32.totalorder %s67, %s68
    %p80 = scmp.eq.s32.totalorder %s16, 1
    %p81 = por %p79, %p80
    %p83 = scmp.ne.s32.totalorder %s68, %s82
    %p84 = scmp.eq.s32.totalorder %s16, 0
    %p85 = por %p83, %p84
    %s86 = ssub.s32 %s10, %s17
    %p87 = scmp.eq.s32.totalorder %s86, 0
    %s89 = sadd.s32 %s88, 1
    %s90 = scalar_select %p87, %s88, %s89
    %p93 = pneg %p87
    %p94 = scmp.eq.s32.totalorder %s10, 1
    %p95 = por %p93, %p94
    %p96 = scmp.ne.s32.totalorder %s88, %s91
    %p97 = scmp.eq.s32.totalorder %s10, 0
    %p98 = por %p96, %p97
    %p99 = scmp.ne.s32.totalorder %s88, %s91
    %p100 = scmp.eq.s32.totalorder %s15, 1
    %p101 = por %p99, %p100
    %p102 = scmp.ne.s32.totalorder %s91, %s92
    %p103 = scmp.eq.s32.totalorder %s15, 0
    %p104 = por %p102, %p103
    %p105 = scmp.ne.s32.totalorder %s91, %s92
    %p106 = scmp.eq.s32.totalorder %s16, 1
    %p107 = por %p105, %p106
    %p109 = scmp.ne.s32.totalorder %s92, %s108
    %p110 = scmp.eq.s32.totalorder %s16, 0
    %p111 = por %p109, %p110
    %s112 = ssub.s32 %s10, %s17
    %p113 = scmp.eq.s32.totalorder %s112, 0
    %s115 = sadd.s32 %s114, 1
    %s116 = scalar_select %p113, %s114, %s115
    %p119 = pneg %p113
    %p120 = scmp.eq.s32.totalorder %s10, 1
    %p121 = por %p119, %p120
    %p122 = scmp.ne.s32.totalorder %s114, %s117
    %p123 = scmp.eq.s32.totalorder %s10, 0
    %p124 = por %p122, %p123
    %p125 = scmp.ne.s32.totalorder %s114, %s117
    %p126 = scmp.eq.s32.totalorder %s15, 1
    %p127 = por %p125, %p126
    %p128 = scmp.ne.s32.totalorder %s117, %s118
    %p129 = scmp.eq.s32.totalorder %s15, 0
    %p130 = por %p128, %p129
    %p131 = scmp.ne.s32.totalorder %s117, %s118
    %p132 = scmp.eq.s32.totalorder %s16, 1
    %p133 = por %p131, %p132
    %p135 = scmp.ne.s32.totalorder %s118, %s134
    %p136 = scmp.eq.s32.totalorder %s16, 0
    %p137 = por %p135, %p136
    %p138 = scmp.le.s32.totalorder 1, %s10
    %p139 = scmp.lt.s32.totalorder %s10, 3
    %p140 = pnand %p138, %p139
    %p141 = pneg %p140
    // Predicated region
    $region9: #{resblock_forward.7} parent=5 // pred_check
      _
    $region10: #{resblock_forward.7} parent=5 // pred_check_branch
      %143 = sbr.rel (%p140) target = $region12
    $region11: #{resblock_forward.7} parent=5 // pred_region
      %s144 = ssub.s32 %s10, 1
      // Predicated region
      $region13: #{resblock_forward.7} parent=11 // pred_check
        %p145 = pneg %p57
      $region14: #{resblock_forward.7} parent=11 // pred_check_branch
        %147 = sbr.rel (%p145) target = $region16
      $region15: #{resblock_forward.7} parent=11 // pred_region
        _
      $region16: #{resblock_forward.7} parent=11 // pred_fallthru
        _
      // Predicated region
      $region17: #{resblock_forward.7} parent=11 // pred_check
        %p148 = pneg %p78
      $region18: #{resblock_forward.7} parent=11 // pred_check_branch
        %150 = sbr.rel (%p148) target = $region20
      $region19: #{resblock_forward.7} parent=11 // pred_region
        _
      $region20: #{resblock_forward.7} parent=11 // pred_fallthru
        _
    $region12: #{resblock_forward.7} parent=5 // pred_fallthru
      _
    %p151 = scmp.lt.s32.totalorder %s10, 2
    // Predicated region
    $region21: #{resblock_forward.7} parent=5 // pred_check
      %p152 = pneg %p151
    $region22: #{resblock_forward.7} parent=5 // pred_check_branch
      %154 = sbr.rel (%p152) target = $region24
    $region23: #{resblock_forward.7} parent=5 // pred_region
      // Predicated region
      $region25: #{resblock_forward.7} parent=23 // pred_check
        %p155 = pneg %p30
      $region26: #{resblock_forward.7} parent=23 // pred_check_branch
        %157 = sbr.rel (%p155) target = $region28
      $region27: #{resblock_forward.7} parent=23 // pred_region
        %s158 = smul.u32 36, %s10
        %p159 = scmp.lt.s32.totalorder %s158, 71
        %s160 = scalar_select %p159, %s158, 71
        %s161 = smul.addr %s160, 4
        %s162 = scalar_lea.vmem %s0, %s161
        %s163 = smul.u32 36, %s10
      $region28: #{resblock_forward.7} parent=23 // pred_fallthru
        _
      // Predicated region
      $region29: #{resblock_forward.7} parent=23 // pred_check
        %p164 = pneg %p98
      $region30: #{resblock_forward.7} parent=23 // pred_check_branch
        %166 = sbr.rel (%p164) target = $region32
      $region31: #{resblock_forward.7} parent=23 // pred_region
        %s167 = smul.u32 36, %s10
        %p168 = scmp.lt.s32.totalorder %s167, 71
        %s169 = scalar_select %p168, %s167, 71
        %s170 = smul.addr %s169, 4
        %s171 = scalar_lea.vmem %s3, %s170
        %s172 = smul.u32 36, %s10
      $region32: #{resblock_forward.7} parent=23 // pred_fallthru
        _
    $region24: #{resblock_forward.7} parent=5 // pred_fallthru
      _
    %p173 = scmp.le.s32.totalorder 1, %s10
    %p174 = scmp.lt.s32.totalorder %s10, 3
    %p175 = pnand %p173, %p174
    %p176 = pneg %p175
    // Predicated region
    $region33: #{resblock_forward.7} parent=5 // pred_check
      _
    $region34: #{resblock_forward.7} parent=5 // pred_check_branch
      %178 = sbr.rel (%p175) target = $region36
    $region35: #{resblock_forward.7} parent=5 // pred_region
      %s179 = ssub.s32 %s10, 1
      %s180 = smul.u32 36, %s15
      %p181 = scmp.lt.s32.totalorder %s180, 71
      %s182 = scalar_select %p181, %s180, 71
      %s183 = smul.addr %s182, 4
      %s184 = scalar_lea.vmem %s0, %s183
      %p185 = pneg %p36
      %p186 = pneg %p33
      %p187 = pneg %p57
      %p188 = pneg %p54
      %p189 = pneg %p78
      %p190 = pneg %p75
      %s191 = smul.u32 36, %s15
      %p192 = scmp.lt.s32.totalorder %s191, 71
      %s193 = scalar_select %p192, %s191, 71
      %s194 = smul.addr %s193, 4
      %s195 = scalar_lea.vmem %s3, %s194
      %p196 = pneg %p104
      %p197 = pneg %p101
      %p198 = pneg %p130
      %p199 = pneg %p127
      %s200 = smul.u32 36, %s15
      %p201 = scmp.lt.s32.totalorder %s200, 71
      %s202 = scalar_select %p201, %s200, 71
      %s203 = smul.addr %s202, 8
      %s204 = scalar_lea.vmem %s4, %s203
      %s205 = smul.u32 36, %s15
      %p206 = scmp.lt.s32.totalorder %s205, 71
      %s207 = scalar_select %p206, %s205, 71
      %s208 = smul.addr %s207, 4
      %s209 = scalar_lea.vmem %s0, %s208
      %s210 = smul.u32 36, %s15
      %s211 = smul.u32 36, %s15
      %p212 = scmp.lt.s32.totalorder %s211, 71
      %s213 = scalar_select %p212, %s211, 71
      %s214 = smul.addr %s213, 4
      %s215 = scalar_lea.vmem %s3, %s214
      %s216 = smul.u32 36, %s15
      %s217 = smul.u32 36, %s15
      %p218 = scmp.lt.s32.totalorder %s217, 71
      %s219 = scalar_select %p218, %s217, 71
      %s220 = smul.addr %s219, 8
      %s221 = scalar_lea.vmem %s4, %s220
      %s222 = smul.u32 36, %s15
      %v223 = vld [vmem:[%s209] sm:$0xf]
      %v224 = vld [vmem:[%s209 + $0x4] sm:$0xf]
      %v225 = vld [vmem:[%s209 + $0x8] sm:$0xf]
      %v226 = vld [vmem:[%s209 + $0xc] sm:$0xf]
      %v227 = vld [vmem:[%s209 + $0x10] sm:$0xf]
      %v228 = vld [vmem:[%s209 + $0x14] sm:$0xf]
      %v229 = vld [vmem:[%s209 + $0x18] sm:$0xf]
      %v230 = vld [vmem:[%s209 + $0x1c] sm:$0xf]
      %v231 = vld [vmem:[%s209 + $0x20] sm:$0xf]
      %v232 = vld [vmem:[%s209 + $0x24] sm:$0xf]
      %v233 = vld [vmem:[%s209 + $0x28] sm:$0xf]
      %v234 = vld [vmem:[%s209 + $0x2c] sm:$0xf]
      %v235 = vld [vmem:[%s209 + $0x30] sm:$0xf]
      %v236 = vld [vmem:[%s209 + $0x34] sm:$0xf]
      %v237 = vld [vmem:[%s209 + $0x38] sm:$0xf]
      %v238 = vld [vmem:[%s209 + $0x3c] sm:$0xf]
      %v239 = vld [vmem:[%s209 + $0x40] sm:$0xf]
      %v240 = vld [vmem:[%s209 + $0x44] sm:$0xf]
      %v241 = vld [vmem:[%s209 + $0x48] sm:$0xf]
      %v242 = vld [vmem:[%s209 + $0x4c] sm:$0xf]
      %v243 = vld [vmem:[%s209 + $0x50] sm:$0xf]
      %v244 = vld [vmem:[%s209 + $0x54] sm:$0xf]
      %v245 = vld [vmem:[%s209 + $0x58] sm:$0xf]
      %v246 = vld [vmem:[%s209 + $0x5c] sm:$0xf]
      %v247 = vld [vmem:[%s209 + $0x60] sm:$0xf]
      %v248 = vld [vmem:[%s209 + $0x64] sm:$0xf]
      %v249 = vld [vmem:[%s209 + $0x68] sm:$0xf]
      %v250 = vld [vmem:[%s209 + $0x6c] sm:$0xf]
      %v251 = vld [vmem:[%s209 + $0x70] sm:$0xf]
      %v252 = vld [vmem:[%s209 + $0x74] sm:$0xf]
      %v253 = vld [vmem:[%s209 + $0x78] sm:$0xf]
      %v254 = vld [vmem:[%s209 + $0x7c] sm:$0xf]
      %v255 = vld [vmem:[%s209 + $0x80] sm:$0xf]
      %v256 = vld [vmem:[%s209 + $0x84] sm:$0xf]
      %v257 = vld [vmem:[%s209 + $0x88] sm:$0xf]
      %v258 = vld [vmem:[%s209 + $0x8c] sm:$0xf]
      %v259 = vunpack.c.l.bf16 %v223
      %v260 = vunpack.c.l.bf16 %v224
      %v261 = vunpack.c.l.bf16 %v225
      %v262 = vunpack.c.l.bf16 %v226
      %v263 = vunpack.c.l.bf16 %v227
      %v264 = vunpack.c.l.bf16 %v228
      %v265 = vunpack.c.l.bf16 %v229
      %v266 = vunpack.c.l.bf16 %v230
      %v267 = vunpack.c.l.bf16 %v231
      %v268 = vunpack.c.l.bf16 %v232
      %v269 = vunpack.c.l.bf16 %v233
      %v270 = vunpack.c.l.bf16 %v234
      %v271 = vunpack.c.l.bf16 %v235
      %v272 = vunpack.c.l.bf16 %v236
      %v273 = vunpack.c.l.bf16 %v237
      %v274 = vunpack.c.l.bf16 %v238
      %v275 = vunpack.c.l.bf16 %v239
      %v276 = vunpack.c.l.bf16 %v240
      %v277 = vunpack.c.l.bf16 %v241
      %v278 = vunpack.c.l.bf16 %v242
      %v279 = vunpack.c.l.bf16 %v243
      %v280 = vunpack.c.l.bf16 %v244
      %v281 = vunpack.c.l.bf16 %v245
      %v282 = vunpack.c.l.bf16 %v246
      %v283 = vunpack.c.l.bf16 %v247
      %v284 = vunpack.c.l.bf16 %v248
      %v285 = vunpack.c.l.bf16 %v249
      %v286 = vunpack.c.l.bf16 %v250
      %v287 = vunpack.c.l.bf16 %v251
      %v288 = vunpack.c.l.bf16 %v252
      %v289 = vunpack.c.l.bf16 %v253
      %v290 = vunpack.c.l.bf16 %v254
      %v291 = vunpack.c.l.bf16 %v255
      %v292 = vunpack.c.l.bf16 %v256
      %v293 = vunpack.c.l.bf16 %v257
      %v294 = vunpack.c.l.bf16 %v258
      %v295 = vld [vmem:[%s1] sm:$0x1]
      %v297 = vlaneseq
      %v298 = vshrl.u32 %v297, 7
      %v299 = vsub.s32 0, %v298
      %v300 = vrot.slane %v295, %v299
      %v302 = vmul.f32 %v259, %v300
      %v303 = vmul.f32 %v260, %v300
      %v304 = vmul.f32 %v261, %v300
      %v305 = vmul.f32 %v262, %v300
      %v306 = vmul.f32 %v263, %v300
      %v307 = vmul.f32 %v264, %v300
      %v308 = vmul.f32 %v265, %v300
      %v309 = vmul.f32 %v266, %v300
      %v310 = vmul.f32 %v267, %v300
      %v311 = vmul.f32 %v268, %v300
      %v312 = vmul.f32 %v269, %v300
      %v313 = vmul.f32 %v270, %v300
      %v314 = vmul.f32 %v271, %v300
      %v315 = vmul.f32 %v272, %v300
      %v316 = vmul.f32 %v273, %v300
      %v317 = vmul.f32 %v274, %v300
      %v318 = vmul.f32 %v275, %v300
      %v319 = vmul.f32 %v276, %v300
      %v320 = vmul.f32 %v277, %v300
      %v321 = vmul.f32 %v278, %v300
      %v322 = vmul.f32 %v279, %v300
      %v323 = vmul.f32 %v280, %v300
      %v324 = vmul.f32 %v281, %v300
      %v325 = vmul.f32 %v282, %v300
      %v326 = vmul.f32 %v283, %v300
      %v327 = vmul.f32 %v284, %v300
      %v328 = vmul.f32 %v285, %v300
      %v329 = vmul.f32 %v286, %v300
      %v330 = vmul.f32 %v287, %v300
      %v331 = vmul.f32 %v288, %v300
      %v332 = vmul.f32 %v289, %v300
      %v333 = vmul.f32 %v290, %v300
      %v334 = vmul.f32 %v291, %v300
      %v335 = vmul.f32 %v292, %v300
      %v336 = vmul.f32 %v293, %v300
      %v337 = vmul.f32 %v294, %v300
      %v338 = vld [vmem:[%s2] sm:$0x1]
      %v340 = vlaneseq
      %v341 = vshrl.u32 %v340, 7
      %v342 = vsub.s32 0, %v341
      %v343 = vrot.slane %v338, %v342
      %v345 = vadd.f32 %v302, %v343
      %v346 = vadd.f32 %v303, %v343
      %v347 = vadd.f32 %v304, %v343
      %v348 = vadd.f32 %v305, %v343
      %v349 = vadd.f32 %v306, %v343
      %v350 = vadd.f32 %v307, %v343
      %v351 = vadd.f32 %v308, %v343
      %v352 = vadd.f32 %v309, %v343
      %v353 = vadd.f32 %v310, %v343
      %v354 = vadd.f32 %v311, %v343
      %v355 = vadd.f32 %v312, %v343
      %v356 = vadd.f32 %v313, %v343
      %v357 = vadd.f32 %v314, %v343
      %v358 = vadd.f32 %v315, %v343
      %v359 = vadd.f32 %v316, %v343
      %v360 = vadd.f32 %v317, %v343
      %v361 = vadd.f32 %v318, %v343
      %v362 = vadd.f32 %v319, %v343
      %v363 = vadd.f32 %v320, %v343
      %v364 = vadd.f32 %v321, %v343
      %v365 = vadd.f32 %v322, %v343
      %v366 = vadd.f32 %v323, %v343
      %v367 = vadd.f32 %v324, %v343
      %v368 = vadd.f32 %v325, %v343
      %v369 = vadd.f32 %v326, %v343
      %v370 = vadd.f32 %v327, %v343
      %v371 = vadd.f32 %v328, %v343
      %v372 = vadd.f32 %v329, %v343
      %v373 = vadd.f32 %v330, %v343
      %v374 = vadd.f32 %v331, %v343
      %v375 = vadd.f32 %v332, %v343
      %v376 = vadd.f32 %v333, %v343
      %v377 = vadd.f32 %v334, %v343
      %v378 = vadd.f32 %v335, %v343
      %v379 = vadd.f32 %v336, %v343
      %v380 = vadd.f32 %v337, %v343
      %v381 = vmax.f32 %v345, 0.0
      %v382 = vmax.f32 %v346, 0.0
      %v383 = vmax.f32 %v347, 0.0
      %v384 = vmax.f32 %v348, 0.0
      %v385 = vmax.f32 %v349, 0.0
      %v386 = vmax.f32 %v350, 0.0
      %v387 = vmax.f32 %v351, 0.0
      %v388 = vmax.f32 %v352, 0.0
      %v389 = vmax.f32 %v353, 0.0
      %v390 = vmax.f32 %v354, 0.0
      %v391 = vmax.f32 %v355, 0.0
      %v392 = vmax.f32 %v356, 0.0
      %v393 = vmax.f32 %v357, 0.0
      %v394 = vmax.f32 %v358, 0.0
      %v395 = vmax.f32 %v359, 0.0
      %v396 = vmax.f32 %v360, 0.0
      %v397 = vmax.f32 %v361, 0.0
      %v398 = vmax.f32 %v362, 0.0
      %v399 = vmax.f32 %v363, 0.0
      %v400 = vmax.f32 %v364, 0.0
      %v401 = vmax.f32 %v365, 0.0
      %v402 = vmax.f32 %v366, 0.0
      %v403 = vmax.f32 %v367, 0.0
      %v404 = vmax.f32 %v368, 0.0
      %v405 = vmax.f32 %v369, 0.0
      %v406 = vmax.f32 %v370, 0.0
      %v407 = vmax.f32 %v371, 0.0
      %v408 = vmax.f32 %v372, 0.0
      %v409 = vmax.f32 %v373, 0.0
      %v410 = vmax.f32 %v374, 0.0
      %v411 = vmax.f32 %v375, 0.0
      %v412 = vmax.f32 %v376, 0.0
      %v413 = vmax.f32 %v377, 0.0
      %v414 = vmax.f32 %v378, 0.0
      %v415 = vmax.f32 %v379, 0.0
      %v416 = vmax.f32 %v380, 0.0
      %v417 = vld [vmem:[%s215] sm:$0xf]
      %v418 = vld [vmem:[%s215 + $0x4] sm:$0xf]
      %v419 = vld [vmem:[%s215 + $0x8] sm:$0xf]
      %v420 = vld [vmem:[%s215 + $0xc] sm:$0xf]
      %v421 = vld [vmem:[%s215 + $0x10] sm:$0xf]
      %v422 = vld [vmem:[%s215 + $0x14] sm:$0xf]
      %v423 = vld [vmem:[%s215 + $0x18] sm:$0xf]
      %v424 = vld [vmem:[%s215 + $0x1c] sm:$0xf]
      %v425 = vld [vmem:[%s215 + $0x20] sm:$0xf]
      %v426 = vld [vmem:[%s215 + $0x24] sm:$0xf]
      %v427 = vld [vmem:[%s215 + $0x28] sm:$0xf]
      %v428 = vld [vmem:[%s215 + $0x2c] sm:$0xf]
      %v429 = vld [vmem:[%s215 + $0x30] sm:$0xf]
      %v430 = vld [vmem:[%s215 + $0x34] sm:$0xf]
      %v431 = vld [vmem:[%s215 + $0x38] sm:$0xf]
      %v432 = vld [vmem:[%s215 + $0x3c] sm:$0xf]
      %v433 = vld [vmem:[%s215 + $0x40] sm:$0xf]
      %v434 = vld [vmem:[%s215 + $0x44] sm:$0xf]
      %v435 = vld [vmem:[%s215 + $0x48] sm:$0xf]
      %v436 = vld [vmem:[%s215 + $0x4c] sm:$0xf]
      %v437 = vld [vmem:[%s215 + $0x50] sm:$0xf]
      %v438 = vld [vmem:[%s215 + $0x54] sm:$0xf]
      %v439 = vld [vmem:[%s215 + $0x58] sm:$0xf]
      %v440 = vld [vmem:[%s215 + $0x5c] sm:$0xf]
      %v441 = vld [vmem:[%s215 + $0x60] sm:$0xf]
      %v442 = vld [vmem:[%s215 + $0x64] sm:$0xf]
      %v443 = vld [vmem:[%s215 + $0x68] sm:$0xf]
      %v444 = vld [vmem:[%s215 + $0x6c] sm:$0xf]
      %v445 = vld [vmem:[%s215 + $0x70] sm:$0xf]
      %v446 = vld [vmem:[%s215 + $0x74] sm:$0xf]
      %v447 = vld [vmem:[%s215 + $0x78] sm:$0xf]
      %v448 = vld [vmem:[%s215 + $0x7c] sm:$0xf]
      %v449 = vld [vmem:[%s215 + $0x80] sm:$0xf]
      %v450 = vld [vmem:[%s215 + $0x84] sm:$0xf]
      %v451 = vld [vmem:[%s215 + $0x88] sm:$0xf]
      %v452 = vld [vmem:[%s215 + $0x8c] sm:$0xf]
      %v453 = vunpack.c.l.bf16 %v417
      %v454 = vunpack.c.l.bf16 %v418
      %v455 = vunpack.c.l.bf16 %v419
      %v456 = vunpack.c.l.bf16 %v420
      %v457 = vunpack.c.l.bf16 %v421
      %v458 = vunpack.c.l.bf16 %v422
      %v459 = vunpack.c.l.bf16 %v423
      %v460 = vunpack.c.l.bf16 %v424
      %v461 = vunpack.c.l.bf16 %v425
      %v462 = vunpack.c.l.bf16 %v426
      %v463 = vunpack.c.l.bf16 %v427
      %v464 = vunpack.c.l.bf16 %v428
      %v465 = vunpack.c.l.bf16 %v429
      %v466 = vunpack.c.l.bf16 %v430
      %v467 = vunpack.c.l.bf16 %v431
      %v468 = vunpack.c.l.bf16 %v432
      %v469 = vunpack.c.l.bf16 %v433
      %v470 = vunpack.c.l.bf16 %v434
      %v471 = vunpack.c.l.bf16 %v435
      %v472 = vunpack.c.l.bf16 %v436
      %v473 = vunpack.c.l.bf16 %v437
      %v474 = vunpack.c.l.bf16 %v438
      %v475 = vunpack.c.l.bf16 %v439
      %v476 = vunpack.c.l.bf16 %v440
      %v477 = vunpack.c.l.bf16 %v441
      %v478 = vunpack.c.l.bf16 %v442
      %v479 = vunpack.c.l.bf16 %v443
      %v480 = vunpack.c.l.bf16 %v444
      %v481 = vunpack.c.l.bf16 %v445
      %v482 = vunpack.c.l.bf16 %v446
      %v483 = vunpack.c.l.bf16 %v447
      %v484 = vunpack.c.l.bf16 %v448
      %v485 = vunpack.c.l.bf16 %v449
      %v486 = vunpack.c.l.bf16 %v450
      %v487 = vunpack.c.l.bf16 %v451
      %v488 = vunpack.c.l.bf16 %v452
      %v489 = vadd.f32 %v381, %v453
      %v490 = vadd.f32 %v382, %v454
      %v491 = vadd.f32 %v383, %v455
      %v492 = vadd.f32 %v384, %v456
      %v493 = vadd.f32 %v385, %v457
      %v494 = vadd.f32 %v386, %v458
      %v495 = vadd.f32 %v387, %v459
      %v496 = vadd.f32 %v388, %v460
      %v497 = vadd.f32 %v389, %v461
      %v498 = vadd.f32 %v390, %v462
      %v499 = vadd.f32 %v391, %v463
      %v500 = vadd.f32 %v392, %v464
      %v501 = vadd.f32 %v393, %v465
      %v502 = vadd.f32 %v394, %v466
      %v503 = vadd.f32 %v395, %v467
      %v504 = vadd.f32 %v396, %v468
      %v505 = vadd.f32 %v397, %v469
      %v506 = vadd.f32 %v398, %v470
      %v507 = vadd.f32 %v399, %v471
      %v508 = vadd.f32 %v400, %v472
      %v509 = vadd.f32 %v401, %v473
      %v510 = vadd.f32 %v402, %v474
      %v511 = vadd.f32 %v403, %v475
      %v512 = vadd.f32 %v404, %v476
      %v513 = vadd.f32 %v405, %v477
      %v514 = vadd.f32 %v406, %v478
      %v515 = vadd.f32 %v407, %v479
      %v516 = vadd.f32 %v408, %v480
      %v517 = vadd.f32 %v409, %v481
      %v518 = vadd.f32 %v410, %v482
      %v519 = vadd.f32 %v411, %v483
      %v520 = vadd.f32 %v412, %v484
      %v521 = vadd.f32 %v413, %v485
      %v522 = vadd.f32 %v414, %v486
      %v523 = vadd.f32 %v415, %v487
      %v524 = vadd.f32 %v416, %v488
      %525 = vst [vmem:[%s221] sm:$0xff] %v489
      %526 = vst [vmem:[%s221 + $0x8] sm:$0xff] %v490
      %527 = vst [vmem:[%s221 + $0x10] sm:$0xff] %v491
      %528 = vst [vmem:[%s221 + $0x18] sm:$0xff] %v492
      %529 = vst [vmem:[%s221 + $0x20] sm:$0xff] %v493
      %530 = vst [vmem:[%s221 + $0x28] sm:$0xff] %v494
      %531 = vst [vmem:[%s221 + $0x30] sm:$0xff] %v495
      %532 = vst [vmem:[%s221 + $0x38] sm:$0xff] %v496
      %533 = vst [vmem:[%s221 + $0x40] sm:$0xff] %v497
      %534 = vst [vmem:[%s221 + $0x48] sm:$0xff] %v498
      %535 = vst [vmem:[%s221 + $0x50] sm:$0xff] %v499
      %536 = vst [vmem:[%s221 + $0x58] sm:$0xff] %v500
      %537 = vst [vmem:[%s221 + $0x60] sm:$0xff] %v501
      %538 = vst [vmem:[%s221 + $0x68] sm:$0xff] %v502
      %539 = vst [vmem:[%s221 + $0x70] sm:$0xff] %v503
      %540 = vst [vmem:[%s221 + $0x78] sm:$0xff] %v504
      %541 = vst [vmem:[%s221 + $0x80] sm:$0xff] %v505
      %542 = vst [vmem:[%s221 + $0x88] sm:$0xff] %v506
      %543 = vst [vmem:[%s221 + $0x90] sm:$0xff] %v507
      %544 = vst [vmem:[%s221 + $0x98] sm:$0xff] %v508
      %545 = vst [vmem:[%s221 + $0xa0] sm:$0xff] %v509
      %546 = vst [vmem:[%s221 + $0xa8] sm:$0xff] %v510
      %547 = vst [vmem:[%s221 + $0xb0] sm:$0xff] %v511
      %548 = vst [vmem:[%s221 + $0xb8] sm:$0xff] %v512
      %549 = vst [vmem:[%s221 + $0xc0] sm:$0xff] %v513
      %550 = vst [vmem:[%s221 + $0xc8] sm:$0xff] %v514
      %551 = vst [vmem:[%s221 + $0xd0] sm:$0xff] %v515
      %552 = vst [vmem:[%s221 + $0xd8] sm:$0xff] %v516
      %553 = vst [vmem:[%s221 + $0xe0] sm:$0xff] %v517
      %554 = vst [vmem:[%s221 + $0xe8] sm:$0xff] %v518
      %555 = vst [vmem:[%s221 + $0xf0] sm:$0xff] %v519
      %556 = vst [vmem:[%s221 + $0xf8] sm:$0xff] %v520
      %557 = vst [vmem:[%s221 + $0x100] sm:$0xff] %v521
      %558 = vst [vmem:[%s221 + $0x108] sm:$0xff] %v522
      %559 = vst [vmem:[%s221 + $0x110] sm:$0xff] %v523
      %560 = vst [vmem:[%s221 + $0x118] sm:$0xff] %v524
      %s561 = smul.u32 36, %s15
      %p562 = scmp.lt.s32.totalorder %s561, 71
      %s563 = scalar_select %p562, %s561, 71
      %s564 = smul.addr %s563, 8
      %s565 = scalar_lea.vmem %s4, %s564
      // Predicated region
      $region37: #{resblock_forward.7} parent=35 // pred_check
        %p566 = pneg %p127
      $region38: #{resblock_forward.7} parent=35 // pred_check_branch
        %568 = sbr.rel (%p566) target = $region40
      $region39: #{resblock_forward.7} parent=35 // pred_region
        %s569 = smul.u32 36, %s15
      $region40: #{resblock_forward.7} parent=35 // pred_fallthru
        _
    $region36: #{resblock_forward.7} parent=5 // pred_fallthru
      _
    %p570 = scmp.le.s32.totalorder 2, %s10
    // Predicated region
    $region41: #{resblock_forward.7} parent=5 // pred_check
      %p571 = pneg %p570
    $region42: #{resblock_forward.7} parent=5 // pred_check_branch
      %573 = sbr.rel (%p571) target = $region44
    $region43: #{resblock_forward.7} parent=5 // pred_region
      %s574 = ssub.s32 %s10, 2
      // Predicated region
      $region45: #{resblock_forward.7} parent=43 // pred_check
        %p575 = pneg %p133
      $region46: #{resblock_forward.7} parent=43 // pred_check_branch
        %577 = sbr.rel (%p575) target = $region48
      $region47: #{resblock_forward.7} parent=43 // pred_region
        %s578 = smul.u32 36, %s16
        %p579 = scmp.lt.s32.totalorder %s578, 71
        %s580 = scalar_select %p579, %s578, 71
        %s581 = smul.addr %s580, 8
        %s582 = scalar_lea.vmem %s4, %s581
      $region48: #{resblock_forward.7} parent=43 // pred_fallthru
        _
    $region44: #{resblock_forward.7} parent=5 // pred_fallthru
      _
  $region6: #{resblock_forward.7} parent=0 // loop_footer
    %s14 = sadd.s32 1, %s10
  $region7: #{resblock_forward.7} parent=0 // loop_footer_branch
    %9 = sbr.rel target = $region3
  $region8: #{resblock_forward.7} parent=0 // loop_exit
    _

// kernel: resblock_forward.4
$region0: #{resblock_forward.4}
  #allocation0 [shape = 'u32[]', space=smem, size = 0x4, offset = 0x4, fixed_abs, tag = 'smem constant byte address 0x4 - core index']
  #allocation1 [shape = 'u32[144,128]{1,0:T(1,128)}', space=vmem, size = 0x12000, scoped, tag = 'internal scratch']
  #allocation2 [shape = 'bf16[352,128]{1,0:T(16,128)(2,1)}', space=vmem, size = 0x16000, scoped, tag = 'scratch operand']
  #allocation3 [shape = 'f32[288,128]{1,0:T(8,128)}', space=vmem, size = 0x24000, scoped, tag = 'scratch operand']
  #allocation4 [shape = 'f32[2,128]{1,0:T(2,128)}', space=vmem, size = 0x400, scoped, tag = 'scratch operand']
  %s0 = inlined_call_operand.vmem [shape: bf16[2,324,128], index: 0, kind: input, shape index: {}]
  %s1 = inlined_call_operand.vmem [shape: bf16[2,18,18,128], index: 1, kind: input, shape index: {}, may-alias: {1,2}]
  %s2 = inlined_call_operand.vmem [shape: bf16[2,18,18,128], index: 2, kind: input, shape index: {}, may-alias: {1,2}]
  %s3 = inlined_call_operand.vmem [shape: bf16[9,128,128], index: 3, kind: input, shape index: {}]
  %s4 = inlined_call_operand.vmem [shape: f32[288,1], index: 4, kind: input, shape index: {}]
  %s5 = inlined_call_operand.vmem [shape: bf16[2,288,128], index: 5, kind: output, shape index: {0}]
  %s6 = inlined_call_operand.vmem [shape: f32[2,2,128], index: 6, kind: output, shape index: {1}]
  %7 = xla_tuple %s5, %s6
  %s8 = sld [smem:[#allocation0]]
  $region69: #{resblock_forward.4} parent=0
    _
  %s10 = ssub.s32 1, %s8
  %s11 = scalar_select 0, %s10, %s8
  loop: start=0, step=1, limit=4
  $region2: #{resblock_forward.4} parent=0 // loop_pre_header
    _
  $region3: #{resblock_forward.4} parent=0 // loop_header
    %s13 = sphi 0, %s17
    %p14 = scmp.ge.s32.totalorder %s13, 4
    %s20 = sphi 0, %s32
    %s21 = sphi 0, %s28
    %s22 = sphi 0, %s20
    %s23 = sphi 0, %s21
    %s24 = sphi 0, %s22
    %s25 = sphi 0, %s23
    %s37 = sphi 0, %s39
    %s40 = sphi 0, %s37
    %s41 = sphi 0, %s40
    %s57 = sphi 0, %s41
    %s69 = sphi 0, %s71
    %s72 = sphi 0, %s69
    %s73 = sphi 0, %s72
    %s89 = sphi 0, %s73
    %s103 = sphi 0, %s105
    %s106 = sphi 0, %s103
    %s107 = sphi 0, %s106
    %s123 = sphi 0, %s107
    %s127 = sphi 0, %s127
    %s129 = sphi 0, %s127
    %s130 = sphi 0, %s129
    %s144 = sphi 0, %s130
    %s148 = sphi 0, %s148
    %s150 = sphi 0, %s148
    %s151 = sphi 0, %s150
    %s165 = sphi 0, %s151
    %s173 = sphi 0, %s175
    %s176 = sphi 0, %s173
    %s177 = sphi 0, %s176
    %s193 = sphi 0, %s177
    %s199 = sphi 0, %s201
    %s202 = sphi 0, %s199
    %s203 = sphi 0, %s202
    %s219 = sphi 0, %s203
  $region4: #{resblock_forward.4} parent=0 // loop_header_branch
    %16 = sbr.rel (%p14) target = $region8
  $region5: #{resblock_forward.4} parent=0 // loop_body
    %s18 = ssub.s32 %s13, 1
    %s19 = ssub.s32 %s13, 2
    %s26 = sadd.s32 1, %s21
    %p27 = scmp.ge.s32.totalorder %s26, 1
    %s28 = scalar_select %p27, 0, %s26
    %s29 = sadd.s32 1, %s20
    %s30 = scalar_select %p27, %s29, %s20
    %p31 = scmp.ge.s32.totalorder %s30, 2
    %s32 = scalar_select %p31, 0, %s30
    %s33 = ssub.s32 %s20, %s32
    %s34 = ssub.s32 %s21, %s28
    %s35 = sor.u32 %s33, %s34
    %p36 = scmp.eq.s32.totalorder %s35, 0
    %s38 = sadd.s32 %s37, 1
    %s39 = scalar_select %p36, %s37, %s38
    %p42 = pneg %p36
    %p43 = scmp.eq.s32.totalorder %s13, 1
    %p44 = por %p42, %p43
    %p45 = scmp.ne.s32.totalorder %s37, %s40
    %p46 = scmp.eq.s32.totalorder %s13, 0
    %p47 = por %p45, %p46
    %p48 = scmp.ne.s32.totalorder %s37, %s40
    %p49 = scmp.eq.s32.totalorder %s18, 1
    %p50 = por %p48, %p49
    %p51 = scmp.ne.s32.totalorder %s40, %s41
    %p52 = scmp.eq.s32.totalorder %s18, 0
    %p53 = por %p51, %p52
    %p54 = scmp.ne.s32.totalorder %s40, %s41
    %p55 = scmp.eq.s32.totalorder %s19, 1
    %p56 = por %p54, %p55
    %p58 = scmp.ne.s32.totalorder %s41, %s57
    %p59 = scmp.eq.s32.totalorder %s19, 0
    %p60 = por %p58, %p59
    %s61 = sadd.s32 %s21, 1
    %s62 = smul.u32 %s61, 16
    %s63 = sadd.s32 %s28, 1
    %s64 = smul.u32 %s63, 16
    %s65 = ssub.s32 %s20, %s32
    %s66 = ssub.s32 %s62, %s64
    %s67 = sor.u32 %s65, %s66
    %p68 = scmp.eq.s32.totalorder %s67, 0
    %s70 = sadd.s32 %s69, 1
    %s71 = scalar_select %p68, %s69, %s70
    %p74 = pneg %p68
    %p75 = scmp.eq.s32.totalorder %s13, 1
    %p76 = por %p74, %p75
    %p77 = scmp.ne.s32.totalorder %s69, %s72
    %p78 = scmp.eq.s32.totalorder %s13, 0
    %p79 = por %p77, %p78
    %p80 = scmp.ne.s32.totalorder %s69, %s72
    %p81 = scmp.eq.s32.totalorder %s18, 1
    %p82 = por %p80, %p81
    %p83 = scmp.ne.s32.totalorder %s72, %s73
    %p84 = scmp.eq.s32.totalorder %s18, 0
    %p85 = por %p83, %p84
    %p86 = scmp.ne.s32.totalorder %s72, %s73
    %p87 = scmp.eq.s32.totalorder %s19, 1
    %p88 = por %p86, %p87
    %p90 = scmp.ne.s32.totalorder %s73, %s89
    %p91 = scmp.eq.s32.totalorder %s19, 0
    %p92 = por %p90, %p91
    %s93 = sadd.s32 %s21, 1
    %s94 = smul.u32 %s93, 16
    %s95 = sadd.s32 %s94, 1
    %s96 = sadd.s32 %s28, 1
    %s97 = smul.u32 %s96, 16
    %s98 = sadd.s32 %s97, 1
    %s99 = ssub.s32 %s20, %s32
    %s100 = ssub.s32 %s95, %s98
    %s101 = sor.u32 %s99, %s100
    %p102 = scmp.eq.s32.totalorder %s101, 0
    %s104 = sadd.s32 %s103, 1
    %s105 = scalar_select %p102, %s103, %s104
    %p108 = pneg %p102
    %p109 = scmp.eq.s32.totalorder %s13, 1
    %p110 = por %p108, %p109
    %p111 = scmp.ne.s32.totalorder %s103, %s106
    %p112 = scmp.eq.s32.totalorder %s13, 0
    %p113 = por %p111, %p112
    %p114 = scmp.ne.s32.totalorder %s103, %s106
    %p115 = scmp.eq.s32.totalorder %s18, 1
    %p116 = por %p114, %p115
    %p117 = scmp.ne.s32.totalorder %s106, %s107
    %p118 = scmp.eq.s32.totalorder %s18, 0
    %p119 = por %p117, %p118
    %p120 = scmp.ne.s32.totalorder %s106, %s107
    %p121 = scmp.eq.s32.totalorder %s19, 1
    %p122 = por %p120, %p121
    %p124 = scmp.ne.s32.totalorder %s107, %s123
    %p125 = scmp.eq.s32.totalorder %s19, 0
    %p126 = por %p124, %p125
    %s128 = sadd.s32 %s127, 1
    %p131 = scmp.eq.s32.totalorder %s13, 1
    %p132 = scmp.ne.s32.totalorder %s127, %s129
    %p133 = scmp.eq.s32.totalorder %s13, 0
    %p134 = por %p132, %p133
    %p135 = scmp.ne.s32.totalorder %s127, %s129
    %p136 = scmp.eq.s32.totalorder %s18, 1
    %p137 = por %p135, %p136
    %p138 = scmp.ne.s32.totalorder %s129, %s130
    %p139 = scmp.eq.s32.totalorder %s18, 0
    %p140 = por %p138, %p139
    %p141 = scmp.ne.s32.totalorder %s129, %s130
    %p142 = scmp.eq.s32.totalorder %s19, 1
    %p143 = por %p141, %p142
    %p145 = scmp.ne.s32.totalorder %s130, %s144
    %p146 = scmp.eq.s32.totalorder %s19, 0
    %p147 = por %p145, %p146
    %s149 = sadd.s32 %s148, 1
    %p152 = scmp.eq.s32.totalorder %s13, 1
    %p153 = scmp.ne.s32.totalorder %s148, %s150
    %p154 = scmp.eq.s32.totalorder %s13, 0
    %p155 = por %p153, %p154
    %p156 = scmp.ne.s32.totalorder %s148, %s150
    %p157 = scmp.eq.s32.totalorder %s18, 1
    %p158 = por %p156, %p157
    %p159 = scmp.ne.s32.totalorder %s150, %s151
    %p160 = scmp.eq.s32.totalorder %s18, 0
    %p161 = por %p159, %p160
    %p162 = scmp.ne.s32.totalorder %s150, %s151
    %p163 = scmp.eq.s32.totalorder %s19, 1
    %p164 = por %p162, %p163
    %p166 = scmp.ne.s32.totalorder %s151, %s165
    %p167 = scmp.eq.s32.totalorder %s19, 0
    %p168 = por %p166, %p167
    %s169 = ssub.s32 %s20, %s32
    %s170 = ssub.s32 %s21, %s28
    %s171 = sor.u32 %s169, %s170
    %p172 = scmp.eq.s32.totalorder %s171, 0
    %s174 = sadd.s32 %s173, 1
    %s175 = scalar_select %p172, %s173, %s174
    %p178 = pneg %p172
    %p179 = scmp.eq.s32.totalorder %s13, 1
    %p180 = por %p178, %p179
    %p181 = scmp.ne.s32.totalorder %s173, %s176
    %p182 = scmp.eq.s32.totalorder %s13, 0
    %p183 = por %p181, %p182
    %p184 = scmp.ne.s32.totalorder %s173, %s176
    %p185 = scmp.eq.s32.totalorder %s18, 1
    %p186 = por %p184, %p185
    %p187 = scmp.ne.s32.totalorder %s176, %s177
    %p188 = scmp.eq.s32.totalorder %s18, 0
    %p189 = por %p187, %p188
    %p190 = scmp.ne.s32.totalorder %s176, %s177
    %p191 = scmp.eq.s32.totalorder %s19, 1
    %p192 = por %p190, %p191
    %p194 = scmp.ne.s32.totalorder %s177, %s193
    %p195 = scmp.eq.s32.totalorder %s19, 0
    %p196 = por %p194, %p195
    %s197 = ssub.s32 %s20, %s32
    %p198 = scmp.eq.s32.totalorder %s197, 0
    %s200 = sadd.s32 %s199, 1
    %s201 = scalar_select %p198, %s199, %s200
    %p204 = pneg %p198
    %p205 = scmp.eq.s32.totalorder %s13, 1
    %p206 = por %p204, %p205
    %p207 = scmp.ne.s32.totalorder %s199, %s202
    %p208 = scmp.eq.s32.totalorder %s13, 0
    %p209 = por %p207, %p208
    %p210 = scmp.ne.s32.totalorder %s199, %s202
    %p211 = scmp.eq.s32.totalorder %s18, 1
    %p212 = por %p210, %p211
    %p213 = scmp.ne.s32.totalorder %s202, %s203
    %p214 = scmp.eq.s32.totalorder %s18, 0
    %p215 = por %p213, %p214
    %p216 = scmp.ne.s32.totalorder %s202, %s203
    %p217 = scmp.eq.s32.totalorder %s19, 1
    %p218 = por %p216, %p217
    %p220 = scmp.ne.s32.totalorder %s203, %s219
    %p221 = scmp.eq.s32.totalorder %s19, 0
    %p222 = por %p220, %p221
    %p223 = scmp.le.s32.totalorder 1, %s13
    %p224 = scmp.lt.s32.totalorder %s13, 3
    %p225 = pnand %p223, %p224
    %p226 = pneg %p225
    // Predicated region
    $region9: #{resblock_forward.4} parent=5 // pred_check
      _
    $region10: #{resblock_forward.4} parent=5 // pred_check_branch
      %228 = sbr.rel (%p225) target = $region12
    $region11: #{resblock_forward.4} parent=5 // pred_region
      %s229 = ssub.s32 %s13, 1
      // Predicated region
      $region13: #{resblock_forward.4} parent=11 // pred_check
        %p230 = pneg %p140
      $region14: #{resblock_forward.4} parent=11 // pred_check_branch
        %232 = sbr.rel (%p230) target = $region16
      $region15: #{resblock_forward.4} parent=11 // pred_region
        _
      $region16: #{resblock_forward.4} parent=11 // pred_fallthru
        _
      // Predicated region
      $region17: #{resblock_forward.4} parent=11 // pred_check
        %p233 = pneg %p161
      $region18: #{resblock_forward.4} parent=11 // pred_check_branch
        %235 = sbr.rel (%p233) target = $region20
      $region19: #{resblock_forward.4} parent=11 // pred_region
        _
      $region20: #{resblock_forward.4} parent=11 // pred_fallthru
        _
    $region12: #{resblock_forward.4} parent=5 // pred_fallthru
      _
    %p236 = scmp.lt.s32.totalorder %s13, 2
    // Predicated region
    $region21: #{resblock_forward.4} parent=5 // pred_check
      %p237 = pneg %p236
    $region22: #{resblock_forward.4} parent=5 // pred_check_branch
      %239 = sbr.rel (%p237) target = $region24
    $region23: #{resblock_forward.4} parent=5 // pred_region
      // Predicated region
      $region25: #{resblock_forward.4} parent=23 // pred_check
        %p240 = pneg %p47
      $region26: #{resblock_forward.4} parent=23 // pred_check_branch
        %242 = sbr.rel (%p240) target = $region28
      $region27: #{resblock_forward.4} parent=23 // pred_region
        %s243 = smul.u32 36, %s21
        %s244 = ssub.s32 41, %s243
        %p245 = scmp.lt.s32.totalorder %s244, 36
        %s246 = scalar_select %p245, %s244, 36
        %s247 = smul.u32 64, %s246
        %p248 = scmp.lt.s32.totalorder %s20, 1
        %s249 = scalar_select %p248, %s20, 1
        %p250 = scmp.lt.s32.totalorder %s243, 40
        %s251 = scalar_select %p250, %s243, 40
        %s252 = smul.addr %s249, 41
        %s253 = sadd.s32 %s251, %s252
        %s254 = smul.addr %s253, 4
        %s255 = scalar_lea.vmem %s0, %s254
        %s256 = smul.u32 36, %s21
        %s257 = ssub.s32 41, %s256
        %p258 = scmp.lt.s32.totalorder %s257, 36
        %s259 = scalar_select %p258, %s257, 36
        %s260 = smul.u32 64, %s259
      $region28: #{resblock_forward.4} parent=23 // pred_fallthru
        _
      // Predicated region
      $region29: #{resblock_forward.4} parent=23 // pred_check
        %p261 = pneg %p79
      $region30: #{resblock_forward.4} parent=23 // pred_check_branch
        %263 = sbr.rel (%p261) target = $region32
      $region31: #{resblock_forward.4} parent=23 // pred_region
        %s264 = sadd.s32 %s21, 1
        %s265 = smul.u32 %s264, 16
        %p266 = scmp.lt.s32.totalorder %s20, 1
        %s267 = scalar_select %p266, %s20, 1
        %p268 = scmp.lt.s32.totalorder %s265, 17
        %s269 = scalar_select %p268, %s265, 17
        %s270 = smul.addr %s269, 3
        %s271 = smul.addr %s267, 54
        %s272 = sadd.s32 %s270, %s271
        %s273 = smul.addr %s272, 4
        %s274 = scalar_lea.vmem %s1, %s273
        %s275 = sadd.s32 %s21, 1
        %s276 = smul.u32 %s275, 16
      $region32: #{resblock_forward.4} parent=23 // pred_fallthru
        _
      // Predicated region
      $region33: #{resblock_forward.4} parent=23 // pred_check
        %p277 = pneg %p113
      $region34: #{resblock_forward.4} parent=23 // pred_check_branch
        %279 = sbr.rel (%p277) target = $region36
      $region35: #{resblock_forward.4} parent=23 // pred_region
        %s280 = sadd.s32 %s21, 1
        %s281 = smul.u32 %s280, 16
        %s282 = sadd.s32 %s281, 1
        %p283 = scmp.lt.s32.totalorder %s20, 1
        %s284 = scalar_select %p283, %s20, 1
        %p285 = scmp.lt.s32.totalorder %s282, 17
        %s286 = scalar_select %p285, %s282, 17
        %s287 = smul.addr %s286, 3
        %s288 = smul.addr %s284, 54
        %s289 = sadd.s32 %s287, %s288
        %s290 = smul.addr %s289, 4
        %s291 = scalar_lea.vmem %s2, %s290
        %s292 = sadd.s32 %s21, 1
        %s293 = smul.u32 %s292, 16
        %s294 = sadd.s32 %s293, 1
      $region36: #{resblock_forward.4} parent=23 // pred_fallthru
        _
    $region24: #{resblock_forward.4} parent=5 // pred_fallthru
      _
    %p295 = scmp.le.s32.totalorder 1, %s13
    %p296 = scmp.lt.s32.totalorder %s13, 3
    %p297 = pnand %p295, %p296
    %p298 = pneg %p297
    // Predicated region
    $region37: #{resblock_forward.4} parent=5 // pred_check
      _
    $region38: #{resblock_forward.4} parent=5 // pred_check_branch
      %300 = sbr.rel (%p297) target = $region40
    $region39: #{resblock_forward.4} parent=5 // pred_region
      %s301 = ssub.s32 %s13, 1
      %s302 = smul.u32 36, %s23
      %s303 = ssub.s32 41, %s302
      %p304 = scmp.lt.s32.totalorder %s303, 36
      %s305 = scalar_select %p304, %s303, 36
      %s306 = smul.u32 64, %s305
      %p307 = scmp.lt.s32.totalorder %s22, 1
      %s308 = scalar_select %p307, %s22, 1
      %p309 = scmp.lt.s32.totalorder %s302, 40
      %s310 = scalar_select %p309, %s302, 40
      %s311 = smul.addr %s308, 41
      %s312 = sadd.s32 %s310, %s311
      %s313 = smul.addr %s312, 4
      %s314 = scalar_lea.vmem %s0, %s313
      %p315 = pneg %p53
      %p316 = pneg %p50
      %s317 = sadd.s32 %s23, 1
      %s318 = smul.u32 %s317, 16
      %p319 = scmp.lt.s32.totalorder %s22, 1
      %s320 = scalar_select %p319, %s22, 1
      %p321 = scmp.lt.s32.totalorder %s318, 17
      %s322 = scalar_select %p321, %s318, 17
      %s323 = smul.addr %s322, 3
      %s324 = smul.addr %s320, 54
      %s325 = sadd.s32 %s323, %s324
      %s326 = smul.addr %s325, 4
      %s327 = scalar_lea.vmem %s1, %s326
      %p328 = pneg %p85
      %p329 = pneg %p82
      %s330 = sadd.s32 %s23, 1
      %s331 = smul.u32 %s330, 16
      %s332 = sadd.s32 %s331, 1
      %p333 = scmp.lt.s32.totalorder %s22, 1
      %s334 = scalar_select %p333, %s22, 1
      %p335 = scmp.lt.s32.totalorder %s332, 17
      %s336 = scalar_select %p335, %s332, 17
      %s337 = smul.addr %s336, 3
      %s338 = smul.addr %s334, 54
      %s339 = sadd.s32 %s337, %s338
      %s340 = smul.addr %s339, 4
      %s341 = scalar_lea.vmem %s2, %s340
      %p342 = pneg %p119
      %p343 = pneg %p116
      %p344 = pneg %p140
      %p345 = pneg %p137
      %p346 = pneg %p161
      %p347 = pneg %p158
      %p348 = pneg %p189
      %p349 = pneg %p186
      %s350 = smul.u32 36, %s23
      %p351 = scmp.lt.s32.totalorder %s22, 1
      %s352 = scalar_select %p351, %s22, 1
      %p353 = scmp.lt.s32.totalorder %s350, 35
      %s354 = scalar_select %p353, %s350, 35
      %s355 = smul.addr %s352, 36
      %s356 = sadd.s32 %s354, %s355
      %s357 = smul.addr %s356, 4
      %s358 = scalar_lea.vmem %s5, %s357
      %p359 = pneg %p215
      %p360 = pneg %p212
      %p361 = scmp.lt.s32.totalorder %s22, 1
      %s362 = scalar_select %p361, %s22, 1
      %s363 = smul.addr %s362, 2
      %s364 = scalar_lea.vmem %s6, %s363
      %s365 = smul.u32 36, %s23
      %s366 = ssub.s32 41, %s365
      %p367 = scmp.lt.s32.totalorder %s366, 36
      %s368 = scalar_select %p367, %s366, 36
      %s369 = smul.u32 64, %s368
      %p370 = scmp.lt.s32.totalorder %s22, 1
      %s371 = scalar_select %p370, %s22, 1
      %p372 = scmp.lt.s32.totalorder %s365, 40
      %s373 = scalar_select %p372, %s365, 40
      %s374 = smul.addr %s371, 41
      %s375 = sadd.s32 %s373, %s374
      %s376 = smul.addr %s375, 4
      %s377 = scalar_lea.vmem %s0, %s376
      %s378 = smul.u32 36, %s23
      %s379 = ssub.s32 41, %s378
      %p380 = scmp.lt.s32.totalorder %s379, 36
      %s381 = scalar_select %p380, %s379, 36
      %s382 = smul.u32 64, %s381
      %s383 = sadd.s32 %s23, 1
      %s384 = smul.u32 %s383, 16
      %p385 = scmp.lt.s32.totalorder %s22, 1
      %s386 = scalar_select %p385, %s22, 1
      %p387 = scmp.lt.s32.totalorder %s384, 17
      %s388 = scalar_select %p387, %s384, 17
      %s389 = smul.addr %s388, 3
      %s390 = smul.addr %s386, 54
      %s391 = sadd.s32 %s389, %s390
      %s392 = smul.addr %s391, 4
      %s393 = scalar_lea.vmem %s1, %s392
      %s394 = sadd.s32 %s23, 1
      %s395 = smul.u32 %s394, 16
      %s396 = sadd.s32 %s23, 1
      %s397 = smul.u32 %s396, 16
      %s398 = sadd.s32 %s397, 1
      %p399 = scmp.lt.s32.totalorder %s22, 1
      %s400 = scalar_select %p399, %s22, 1
      %p401 = scmp.lt.s32.totalorder %s398, 17
      %s402 = scalar_select %p401, %s398, 17
      %s403 = smul.addr %s402, 3
      %s404 = smul.addr %s400, 54
      %s405 = sadd.s32 %s403, %s404
      %s406 = smul.addr %s405, 4
      %s407 = scalar_lea.vmem %s2, %s406
      %s408 = sadd.s32 %s23, 1
      %s409 = smul.u32 %s408, 16
      %s410 = sadd.s32 %s409, 1
      %s411 = smul.u32 36, %s23
      %p412 = scmp.lt.s32.totalorder %s22, 1
      %s413 = scalar_select %p412, %s22, 1
      %p414 = scmp.lt.s32.totalorder %s411, 35
      %s415 = scalar_select %p414, %s411, 35
      %s416 = smul.addr %s413, 36
      %s417 = sadd.s32 %s415, %s416
      %s418 = smul.addr %s417, 4
      %s419 = scalar_lea.vmem %s5, %s418
      %s420 = smul.u32 36, %s23
      %p421 = scmp.lt.s32.totalorder %s22, 1
      %s422 = scalar_select %p421, %s22, 1
      %s423 = smul.addr %s422, 2
      %s424 = scalar_lea.vmem %s6, %s423
      %p426 = scmp.eq.s32.totalorder %s23, 0
      // Predicated region
      $region41: #{resblock_forward.4} parent=39 // pred_check
        %p427 = pneg %p426
      $region42: #{resblock_forward.4} parent=39 // pred_check_branch
        %429 = sbr.rel (%p427) target = $region44
      $region43: #{resblock_forward.4} parent=39 // pred_region
        %430 = vst [vmem:[#allocation4] sm:$0x3] 0.0
      $region44: #{resblock_forward.4} parent=39 // pred_fallthru
        _
      %v431 = vld [vmem:[%s377] sm:$0xf]
      %v432 = vld [vmem:[%s377 + $0x4] sm:$0xf]
      %v433 = vld [vmem:[%s377 + $0x8] sm:$0xf]
      %v434 = vld [vmem:[%s377 + $0xc] sm:$0xf]
      %v435 = vld [vmem:[%s377 + $0x10] sm:$0xf]
      %v436 = vld [vmem:[%s377 + $0x14] sm:$0xf]
      %v437 = vld [vmem:[%s377 + $0x18] sm:$0xf]
      %v438 = vld [vmem:[%s377 + $0x1c] sm:$0xf]
      %v439 = vld [vmem:[%s377 + $0x20] sm:$0xf]
      %v440 = vld [vmem:[%s377 + $0x24] sm:$0xf]
      %v441 = vld [vmem:[%s377 + $0x28] sm:$0xf]
      %v442 = vld [vmem:[%s377 + $0x2c] sm:$0xf]
      %v443 = vld [vmem:[%s377 + $0x30] sm:$0xf]
      %v444 = vld [vmem:[%s377 + $0x34] sm:$0xf]
      %v445 = vld [vmem:[%s377 + $0x38] sm:$0xf]
      %v446 = vld [vmem:[%s377 + $0x3c] sm:$0xf]
      %v447 = vld [vmem:[%s377 + $0x40] sm:$0xf]
      %v448 = vld [vmem:[%s377 + $0x44] sm:$0xf]
      %v449 = vld [vmem:[%s377 + $0x48] sm:$0xf]
      %v450 = vld [vmem:[%s377 + $0x4c] sm:$0xf]
      %v451 = vld [vmem:[%s377 + $0x50] sm:$0xf]
      %v452 = vld [vmem:[%s377 + $0x54] sm:$0xf]
      %v453 = vld [vmem:[%s377 + $0x58] sm:$0xf]
      %v454 = vld [vmem:[%s377 + $0x5c] sm:$0xf]
      %v455 = vld [vmem:[%s377 + $0x60] sm:$0xf]
      %v456 = vld [vmem:[%s377 + $0x64] sm:$0xf]
      %v457 = vld [vmem:[%s377 + $0x68] sm:$0xf]
      %v458 = vld [vmem:[%s377 + $0x6c] sm:$0xf]
      %v459 = vld [vmem:[%s377 + $0x70] sm:$0xf]
      %v460 = vld [vmem:[%s377 + $0x74] sm:$0xf]
      %v461 = vld [vmem:[%s377 + $0x78] sm:$0xf]
      %v462 = vld [vmem:[%s377 + $0x7c] sm:$0xf]
      %v463 = vld [vmem:[%s377 + $0x80] sm:$0xf]
      %v464 = vld [vmem:[%s377 + $0x84] sm:$0xf]
      %v465 = vld [vmem:[%s377 + $0x88] sm:$0xf]
      %v466 = vld [vmem:[%s377 + $0x8c] sm:$0xf]
      %v503 = vunpack.c.l.b16 %v431
      %v504 = vunpack.c.l.b16 %v432
      %v505 = vunpack.c.l.b16 %v433
      %v506 = vunpack.c.l.b16 %v434
      %v507 = vunpack.c.l.b16 %v435
      %v508 = vunpack.c.l.b16 %v436
      %v509 = vunpack.c.l.b16 %v437
      %v510 = vunpack.c.l.b16 %v438
      %v511 = vunpack.c.l.b16 %v439
      %v512 = vunpack.c.l.b16 %v440
      %v513 = vunpack.c.l.b16 %v441
      %v514 = vunpack.c.l.b16 %v442
      %v515 = vunpack.c.l.b16 %v443
      %v516 = vunpack.c.l.b16 %v444
      %v517 = vunpack.c.l.b16 %v445
      %v518 = vunpack.c.l.b16 %v446
      %v519 = vunpack.c.l.b16 %v447
      %v520 = vunpack.c.l.b16 %v448
      %v521 = vunpack.c.l.b16 %v449
      %v522 = vunpack.c.l.b16 %v450
      %v523 = vunpack.c.l.b16 %v451
      %v524 = vunpack.c.l.b16 %v452
      %v525 = vunpack.c.l.b16 %v453
      %v526 = vunpack.c.l.b16 %v454
      %v527 = vunpack.c.l.b16 %v455
      %v528 = vunpack.c.l.b16 %v456
      %v529 = vunpack.c.l.b16 %v457
      %v530 = vunpack.c.l.b16 %v458
      %v531 = vunpack.c.l.b16 %v459
      %v532 = vunpack.c.l.b16 %v460
      %v533 = vunpack.c.l.b16 %v461
      %v534 = vunpack.c.l.b16 %v462
      %v535 = vunpack.c.l.b16 %v463
      %v536 = vunpack.c.l.b16 %v464
      %v537 = vunpack.c.l.b16 %v465
      %v538 = vunpack.c.l.b16 %v466
      %v539 = vpack.c.b16 %v504, %v503
      %v540 = vpack.c.b16 %v506, %v505
      %v541 = vpack.c.b16 %v508, %v507
      %v542 = vpack.c.b16 %v510, %v509
      %v543 = vpack.c.b16 %v512, %v511
      %v544 = vpack.c.b16 %v514, %v513
      %v545 = vpack.c.b16 %v516, %v515
      %v546 = vpack.c.b16 %v518, %v517
      %v547 = vpack.c.b16 %v520, %v519
      %v548 = vpack.c.b16 %v522, %v521
      %v549 = vpack.c.b16 %v524, %v523
      %v550 = vpack.c.b16 %v526, %v525
      %v551 = vpack.c.b16 %v528, %v527
      %v552 = vpack.c.b16 %v530, %v529
      %v553 = vpack.c.b16 %v532, %v531
      %v554 = vpack.c.b16 %v534, %v533
      %v555 = vpack.c.b16 %v536, %v535
      %v556 = vpack.c.b16 %v538, %v537
      %575 = vst [vmem:[#allocation2 + $0x8] sm:$0xff] %v539
      %576 = vst [vmem:[#allocation2 + $0x10] sm:$0xff] %v540
      %577 = vst [vmem:[#allocation2 + $0x18] sm:$0xff] %v541
      %578 = vst [vmem:[#allocation2 + $0x20] sm:$0xff] %v542
      %579 = vst [vmem:[#allocation2 + $0x28] sm:$0xff] %v543
      %580 = vst [vmem:[#allocation2 + $0x30] sm:$0xff] %v544
      %581 = vst [vmem:[#allocation2 + $0x38] sm:$0xff] %v545
      %582 = vst [vmem:[#allocation2 + $0x40] sm:$0xff] %v546
      %583 = vst [vmem:[#allocation2 + $0x48] sm:$0xff] %v547
      %584 = vst [vmem:[#allocation2 + $0x50] sm:$0xff] %v548
      %585 = vst [vmem:[#allocation2 + $0x58] sm:$0xff] %v549
      %586 = vst [vmem:[#allocation2 + $0x60] sm:$0xff] %v550
      %587 = vst [vmem:[#allocation2 + $0x68] sm:$0xff] %v551
      %588 = vst [vmem:[#allocation2 + $0x70] sm:$0xff] %v552
      %589 = vst [vmem:[#allocation2 + $0x78] sm:$0xff] %v553
      %590 = vst [vmem:[#allocation2 + $0x80] sm:$0xff] %v554
      %591 = vst [vmem:[#allocation2 + $0x88] sm:$0xff] %v555
      %592 = vst [vmem:[#allocation2 + $0x90] sm:$0xff] %v556
      %v593 = vld [vmem:[%s393] sm:$0xf]
      %v594 = vld [vmem:[%s393 + $0x4] sm:$0xf]
      %v595 = vld [vmem:[%s393 + $0x8] sm:$0x1]
      %v599 = vunpack.c.l.b16 %v593
      %v600 = vunpack.c.l.b16 %v594
      %v601 = vunpack.c.l.b16 %v595
      %v602 = vpack.c.b16 %v600, %v599
      %v603 = vpack.c.b16 %v601, %v601
      %606 = vst [vmem:[#allocation2 + $0x98] sm:$0xff] %v602
      %607 = vst [vmem:[#allocation2 + $0xa0] sm:$0x1] %v603
      %v608 = vld [vmem:[%s407] sm:$0xf]
      %v609 = vld [vmem:[%s407 + $0x4] sm:$0xf]
      %v610 = vld [vmem:[%s407 + $0x8] sm:$0x1]
      %v614 = vunpack.c.l.b16 %v608
      %v615 = vunpack.c.l.b16 %v609
      %v616 = vunpack.c.l.b16 %v610
      %v617 = vpack.c.b16 %v615, %v614
      %v618 = vpack.c.b16 %v616, %v616
      %vm619 = vcmask 1040384
      %v620 = vrot.slane %v617, 7
      %v621 = vrot.slane %v618, 7
      %v622 = vsel %vm619, %v620, %v621
      %625 = vst [vmem:[#allocation2 + $0xa0] sm:$0xfe] %v620
      %626 = vst [vmem:[#allocation2 + $0xa8] sm:$0x3] %v622
      %627 = vst [vmem:[#allocation3] sm:$0xff] 0.0
      %628 = vst [vmem:[#allocation3 + $0x8] sm:$0xff] 0.0
      %629 = vst [vmem:[#allocation3 + $0x10] sm:$0xff] 0.0
      %630 = vst [vmem:[#allocation3 + $0x18] sm:$0xff] 0.0
      %631 = vst [vmem:[#allocation3 + $0x20] sm:$0xff] 0.0
      %632 = vst [vmem:[#allocation3 + $0x28] sm:$0xff] 0.0
      %633 = vst [vmem:[#allocation3 + $0x30] sm:$0xff] 0.0
      %634 = vst [vmem:[#allocation3 + $0x38] sm:$0xff] 0.0
      %635 = vst [vmem:[#allocation3 + $0x40] sm:$0xff] 0.0
      %636 = vst [vmem:[#allocation3 + $0x48] sm:$0xff] 0.0
      %637 = vst [vmem:[#allocation3 + $0x50] sm:$0xff] 0.0
      %638 = vst [vmem:[#allocation3 + $0x58] sm:$0xff] 0.0
      %639 = vst [vmem:[#allocation3 + $0x60] sm:$0xff] 0.0
      %640 = vst [vmem:[#allocation3 + $0x68] sm:$0xff] 0.0
      %641 = vst [vmem:[#allocation3 + $0x70] sm:$0xff] 0.0
      %642 = vst [vmem:[#allocation3 + $0x78] sm:$0xff] 0.0
      %643 = vst [vmem:[#allocation3 + $0x80] sm:$0xff] 0.0
      %644 = vst [vmem:[#allocation3 + $0x88] sm:$0xff] 0.0
      %645 = vst [vmem:[#allocation3 + $0x90] sm:$0xff] 0.0
      %646 = vst [vmem:[#allocation3 + $0x98] sm:$0xff] 0.0
      %647 = vst [vmem:[#allocation3 + $0xa0] sm:$0xff] 0.0
      %648 = vst [vmem:[#allocation3 + $0xa8] sm:$0xff] 0.0
      %649 = vst [vmem:[#allocation3 + $0xb0] sm:$0xff] 0.0
      %650 = vst [vmem:[#allocation3 + $0xb8] sm:$0xff] 0.0
      %651 = vst [vmem:[#allocation3 + $0xc0] sm:$0xff] 0.0
      %652 = vst [vmem:[#allocation3 + $0xc8] sm:$0xff] 0.0
      %653 = vst [vmem:[#allocation3 + $0xd0] sm:$0xff] 0.0
      %654 = vst [vmem:[#allocation3 + $0xd8] sm:$0xff] 0.0
      %655 = vst [vmem:[#allocation3 + $0xe0] sm:$0xff] 0.0
      %656 = vst [vmem:[#allocation3 + $0xe8] sm:$0xff] 0.0
      %657 = vst [vmem:[#allocation3 + $0xf0] sm:$0xff] 0.0
      %658 = vst [vmem:[#allocation3 + $0xf8] sm:$0xff] 0.0
      %659 = vst [vmem:[#allocation3 + $0x100] sm:$0xff] 0.0
      %660 = vst [vmem:[#allocation3 + $0x108] sm:$0xff] 0.0
      %661 = vst [vmem:[#allocation3 + $0x110] sm:$0xff] 0.0
      %662 = vst [vmem:[#allocation3 + $0x118] sm:$0xff] 0.0
      %v663 = vld [vmem:[#allocation2] sm:$0x80]
      %v664 = vld [vmem:[#allocation2 + $0x8] sm:$0xff]
      %v665 = vld [vmem:[#allocation2 + $0x10] sm:$0xff]
      %v666 = vld [vmem:[#allocation2 + $0x18] sm:$0xff]
      %v667 = vld [vmem:[#allocation2 + $0x20] sm:$0xff]
      %v668 = vld [vmem:[#allocation2 + $0x28] sm:$0xff]
      %v669 = vld [vmem:[#allocation2 + $0x30] sm:$0xff]
      %v670 = vld [vmem:[#allocation2 + $0x38] sm:$0xff]
      %v671 = vld [vmem:[#allocation2 + $0x40] sm:$0xff]
      %v672 = vld [vmem:[#allocation2 + $0x48] sm:$0xff]
      %v673 = vld [vmem:[#allocation2 + $0x50] sm:$0xff]
      %v674 = vld [vmem:[#allocation2 + $0x58] sm:$0xff]
      %v675 = vld [vmem:[#allocation2 + $0x60] sm:$0xff]
      %v676 = vld [vmem:[#allocation2 + $0x68] sm:$0xff]
      %v677 = vld [vmem:[#allocation2 + $0x70] sm:$0xff]
      %v678 = vld [vmem:[#allocation2 + $0x78] sm:$0xff]
      %v679 = vld [vmem:[#allocation2 + $0x80] sm:$0xff]
      %v680 = vld [vmem:[#allocation2 + $0x88] sm:$0xff]
      %v681 = vld [vmem:[#allocation2 + $0x90] sm:$0xff]
      %v682 = vld [vmem:[#allocation3] sm:$0xff]
      %v683 = vld [vmem:[#allocation3 + $0x8] sm:$0xff]
      %v684 = vld [vmem:[#allocation3 + $0x10] sm:$0xff]
      %v685 = vld [vmem:[#allocation3 + $0x18] sm:$0xff]
      %v686 = vld [vmem:[#allocation3 + $0x20] sm:$0xff]
      %v687 = vld [vmem:[#allocation3 + $0x28] sm:$0xff]
      %v688 = vld [vmem:[#allocation3 + $0x30] sm:$0xff]
      %v689 = vld [vmem:[#allocation3 + $0x38] sm:$0xff]
      %v690 = vld [vmem:[#allocation3 + $0x40] sm:$0xff]
      %v691 = vld [vmem:[#allocation3 + $0x48] sm:$0xff]
      %v692 = vld [vmem:[#allocation3 + $0x50] sm:$0xff]
      %v693 = vld [vmem:[#allocation3 + $0x58] sm:$0xff]
      %v694 = vld [vmem:[#allocation3 + $0x60] sm:$0xff]
      %v695 = vld [vmem:[#allocation3 + $0x68] sm:$0xff]
      %v696 = vld [vmem:[#allocation3 + $0x70] sm:$0xff]
      %v697 = vld [vmem:[#allocation3 + $0x78] sm:$0xff]
      %v698 = vld [vmem:[#allocation3 + $0x80] sm:$0xff]
      %v699 = vld [vmem:[#allocation3 + $0x88] sm:$0xff]
      %v700 = vld [vmem:[#allocation3 + $0x90] sm:$0xff]
      %v701 = vld [vmem:[#allocation3 + $0x98] sm:$0xff]
      %v702 = vld [vmem:[#allocation3 + $0xa0] sm:$0xff]
      %v703 = vld [vmem:[#allocation3 + $0xa8] sm:$0xff]
      %v704 = vld [vmem:[#allocation3 + $0xb0] sm:$0xff]
      %v705 = vld [vmem:[#allocation3 + $0xb8] sm:$0xff]
      %v706 = vld [vmem:[#allocation3 + $0xc0] sm:$0xff]
      %v707 = vld [vmem:[#allocation3 + $0xc8] sm:$0xff]
      %v708 = vld [vmem:[#allocation3 + $0xd0] sm:$0xff]
      %v709 = vld [vmem:[#allocation3 + $0xd8] sm:$0xff]
      %v710 = vld [vmem:[#allocation3 + $0xe0] sm:$0xff]
      %v711 = vld [vmem:[#allocation3 + $0xe8] sm:$0xff]
      %v712 = vld [vmem:[#allocation3 + $0xf0] sm:$0xff]
      %v713 = vld [vmem:[#allocation3 + $0xf8] sm:$0xff]
      %v714 = vld [vmem:[#allocation3 + $0x100] sm:$0xff]
      %v715 = vld [vmem:[#allocation3 + $0x108] sm:$0xff]
      %v716 = vld [vmem:[#allocation3 + $0x110] sm:$0xff]
      %v717 = vld [vmem:[#allocation3 + $0x118] sm:$0xff]
      %v718 = vld [vmem:[%s3] sm:$0xf]
      %v719 = vld [vmem:[%s3 + $0x4] sm:$0xf]
      %v720 = vld [vmem:[%s3 + $0x8] sm:$0xf]
      %v721 = vld [vmem:[%s3 + $0xc] sm:$0xf]
      %v722 = vld [vmem:[%s3 + $0x10] sm:$0xf]
      %v723 = vld [vmem:[%s3 + $0x14] sm:$0xf]
      %v724 = vld [vmem:[%s3 + $0x18] sm:$0xf]
      %v725 = vld [vmem:[%s3 + $0x1c] sm:$0xf]
      %v726 = vld [vmem:[%s3 + $0x20] sm:$0xf]
      %v727 = vld [vmem:[%s3 + $0x24] sm:$0xf]
      %v728 = vld [vmem:[%s3 + $0x28] sm:$0xf]
      %v729 = vld [vmem:[%s3 + $0x2c] sm:$0xf]
      %v730 = vld [vmem:[%s3 + $0x30] sm:$0xf]
      %v731 = vld [vmem:[%s3 + $0x34] sm:$0xf]
      %v732 = vld [vmem:[%s3 + $0x38] sm:$0xf]
      %v733 = vld [vmem:[%s3 + $0x3c] sm:$0xf]
      %vm734 = vsmask.f32 256
      %v736 = vshrl.u32 %v663, 16
      %v738 = vrot.slane %v736, 7
      %v740 = vshrl.u32 %v664, 16
      %v742 = vrot.slane %v740, 7
      %v743 = vshll.u32 %v664, 16
      %v745 = vor.u32 %v742, %v743
      %v746 = vsel %vm734, %v738, %v745
      %v748 = vshrl.u32 %v665, 16
      %v750 = vrot.slane %v748, 7
      %v751 = vshll.u32 %v665, 16
      %v753 = vor.u32 %v750, %v751
      %v754 = vsel %vm734, %v742, %v753
      %v756 = vshrl.u32 %v666, 16
      %v758 = vrot.slane %v756, 7
      %v759 = vshll.u32 %v666, 16
      %v761 = vor.u32 %v758, %v759
      %v762 = vsel %vm734, %v750, %v761
      %v764 = vshrl.u32 %v667, 16
      %v766 = vrot.slane %v764, 7
      %v767 = vshll.u32 %v667, 16
      %v769 = vor.u32 %v766, %v767
      %v770 = vsel %vm734, %v758, %v769
      %v772 = vshrl.u32 %v668, 16
      %v774 = vrot.slane %v772, 7
      %v775 = vshll.u32 %v668, 16
      %v777 = vor.u32 %v774, %v775
      %v778 = vsel %vm734, %v766, %v777
      %v780 = vshrl.u32 %v669, 16
      %v782 = vrot.slane %v780, 7
      %v783 = vshll.u32 %v669, 16
      %v785 = vor.u32 %v782, %v783
      %v786 = vsel %vm734, %v774, %v785
      %v788 = vshrl.u32 %v670, 16
      %v790 = vrot.slane %v788, 7
      %v791 = vshll.u32 %v670, 16
      %v793 = vor.u32 %v790, %v791
      %v794 = vsel %vm734, %v782, %v793
      %v796 = vshrl.u32 %v671, 16
      %v798 = vrot.slane %v796, 7
      %v799 = vshll.u32 %v671, 16
      %v801 = vor.u32 %v798, %v799
      %v802 = vsel %vm734, %v790, %v801
      %v804 = vshrl.u32 %v672, 16
      %v806 = vrot.slane %v804, 7
      %v807 = vshll.u32 %v672, 16
      %v809 = vor.u32 %v806, %v807
      %v810 = vsel %vm734, %v798, %v809
      %v812 = vshrl.u32 %v673, 16
      %v814 = vrot.slane %v812, 7
      %v815 = vshll.u32 %v673, 16
      %v817 = vor.u32 %v814, %v815
      %v818 = vsel %vm734, %v806, %v817
      %v820 = vshrl.u32 %v674, 16
      %v822 = vrot.slane %v820, 7
      %v823 = vshll.u32 %v674, 16
      %v825 = vor.u32 %v822, %v823
      %v826 = vsel %vm734, %v814, %v825
      %v828 = vshrl.u32 %v675, 16
      %v830 = vrot.slane %v828, 7
      %v831 = vshll.u32 %v675, 16
      %v833 = vor.u32 %v830, %v831
      %v834 = vsel %vm734, %v822, %v833
      %v836 = vshrl.u32 %v676, 16
      %v838 = vrot.slane %v836, 7
      %v839 = vshll.u32 %v676, 16
      %v841 = vor.u32 %v838, %v839
      %v842 = vsel %vm734, %v830, %v841
      %v844 = vshrl.u32 %v677, 16
      %v846 = vrot.slane %v844, 7
      %v847 = vshll.u32 %v677, 16
      %v849 = vor.u32 %v846, %v847
      %v850 = vsel %vm734, %v838, %v849
      %v852 = vshrl.u32 %v678, 16
      %v854 = vrot.slane %v852, 7
      %v855 = vshll.u32 %v678, 16
      %v857 = vor.u32 %v854, %v855
      %v858 = vsel %vm734, %v846, %v857
      %v860 = vshrl.u32 %v679, 16
      %v862 = vrot.slane %v860, 7
      %v863 = vshll.u32 %v679, 16
      %v865 = vor.u32 %v862, %v863
      %v866 = vsel %vm734, %v854, %v865
      %v868 = vshrl.u32 %v680, 16
      %v870 = vrot.slane %v868, 7
      %v871 = vshll.u32 %v680, 16
      %v873 = vor.u32 %v870, %v871
      %v874 = vsel %vm734, %v862, %v873
      %v876 = vshrl.u32 %v681, 16
      %v878 = vrot.slane %v876, 7
      %v879 = vshll.u32 %v681, 16
      %v881 = vor.u32 %v878, %v879
      %v882 = vsel %vm734, %v870, %v881
      %v917 = vunpack.c.l.b16 %v718
      %v918 = vunpack.c.l.b16 %v719
      %v919 = vunpack.c.l.b16 %v720
      %v920 = vunpack.c.l.b16 %v721
      %v921 = vunpack.c.l.b16 %v722
      %v922 = vunpack.c.l.b16 %v723
      %v923 = vunpack.c.l.b16 %v724
      %v924 = vunpack.c.l.b16 %v725
      %v925 = vunpack.c.l.b16 %v726
      %v926 = vunpack.c.l.b16 %v727
      %v927 = vunpack.c.l.b16 %v728
      %v928 = vunpack.c.l.b16 %v729
      %v929 = vunpack.c.l.b16 %v730
      %v930 = vunpack.c.l.b16 %v731
      %v931 = vunpack.c.l.b16 %v732
      %v932 = vunpack.c.l.b16 %v733
      %v933 = vpack.c.b16 %v918, %v917
      %v934 = vpack.c.b16 %v920, %v919
      %v935 = vpack.c.b16 %v922, %v921
      %v936 = vpack.c.b16 %v924, %v923
      %v937 = vpack.c.b16 %v926, %v925
      %v938 = vpack.c.b16 %v928, %v927
      %v939 = vpack.c.b16 %v930, %v929
      %v940 = vpack.c.b16 %v932, %v931
      %949 = vmatprep.subr.bf16.mxu0 0
      %950 = vmatpush1.bf16.msra.mxu0 %v933
      %951 = vmatprep.subr.bf16.mxu0 0
      %952 = vmatpush1.bf16.msra.mxu0 %v934
      %953 = vmatprep.subr.bf16.mxu0 0
      %954 = vmatpush1.bf16.msra.mxu0 %v935
      %955 = vmatprep.subr.bf16.mxu0 0
      %956 = vmatpush1.bf16.msra.mxu0 %v936
      %957 = vmatprep.subr.bf16.mxu0 0
      %958 = vmatpush1.bf16.msra.mxu0 %v937
      %959 = vmatprep.subr.bf16.mxu0 0
      %960 = vmatpush1.bf16.msra.mxu0 %v938
      %961 = vmatprep.subr.bf16.mxu0 0
      %962 = vmatpush1.bf16.msra.mxu0 %v939
      %963 = vmatprep.subr.bf16.mxu0 0
      %964 = vmatpush1.bf16.msra.mxu0 %v940
      %965 = vmatprep.subr.bf16.mxu0 0
      %966 = vmatpush1.bf16.msra.mxu0 0
      %967 = vmatprep.subr.bf16.mxu0 0
      %968 = vmatpush1.bf16.msra.mxu0 0
      %969 = vmatprep.subr.bf16.mxu0 0
      %970 = vmatpush1.bf16.msra.mxu0 0
      %971 = vmatprep.subr.bf16.mxu0 0
      %972 = vmatpush1.bf16.msra.mxu0 0
      %973 = vmatprep.subr.bf16.mxu0 0
      %974 = vmatpush1.bf16.msra.mxu0 0
      %975 = vmatprep.subr.bf16.mxu0 0
      %976 = vmatpush1.bf16.msra.mxu0 0
      %977 = vmatprep.subr.bf16.mxu0 0
      %978 = vmatpush1.bf16.msra.mxu0 0
      %979 = vmatprep.subr.bf16.mxu0 0
      %980 = vmatpush1.bf16.msra.mxu0 0
      %981 = vmatprep.mubr.bf16.mxu0 0
      %982 = vmatmul.mubr.bf16.gmra.mrb[0].mxu0 %v746
      %v983 = vpop.f32.mrb[0].mxu0
      %v984 = vadd.f32 0.0, %v983
      %v985 = vpop.f32.mrb[0].mxu0
      %v986 = vpop.f32.mrb[0].mxu0
      %v987 = vadd.f32 0.0, %v986
      %v988 = vpop.f32.mrb[0].mxu0
      %989 = vmatprep.mubr.bf16.mxu0 0
      %990 = vmatmul.mubr.bf16.gmra.mrb[0].mxu0 %v754
      %v991 = vpop.f32.mrb[0].mxu0
      %v992 = vadd.f32 0.0, %v991
      %v993 = vpop.f32.mrb[0].mxu0
      %v994 = vpop.f32.mrb[0].mxu0
      %v995 = vadd.f32 0.0, %v994
      %v996 = vpop.f32.mrb[0].mxu0
      %997 = vmatprep.mubr.bf16.mxu0 0
      %998 = vmatmul.mubr.bf16.gmra.mrb[0].mxu0 %v762
      %v999 = vpop.f32.mrb[0].mxu0
      %v1000 = vadd.f32 0.0, %v999
      %v1001 = vpop.f32.mrb[0].mxu0
      %v1002 = vpop.f32.mrb[0].mxu0
      %v1003 = vadd.f32 0.0, %v1002
      %v1004 = vpop.f32.mrb[0].mxu0
      %1005 = vmatprep.mubr.bf16.mxu0 0
      %1006 = vmatmul.mubr.bf16.gmra.mrb[0].mxu0 %v770
      %v1007 = vpop.f32.mrb[0].mxu0
      %v1008 = vadd.f32 0.0, %v1007
      %v1009 = vpop.f32.mrb[0].mxu0
      %v1010 = vpop.f32.mrb[0].mxu0
      %v1011 = vadd.f32 0.0, %v1010
      %v1012 = vpop.f32.mrb[0].mxu0
      %1013 = vmatprep.mubr.bf16.mxu0 0
      %1014 = vmatmul.mubr.bf16.gmra.mrb[0].mxu0 %v778
      %v1015 = vpop.f32.mrb[0].mxu0
      %v1016 = vadd.f32 0.0, %v1015
      %v1017 = vpop.f32.mrb[0].mxu0
      %v1018 = vpop.f32.mrb[0].mxu0
      %v1019 = vadd.f32 0.0, %v1018
      %v1020 = vpop.f32.mrb[0].mxu0
      %1021 = vmatprep.mubr.bf16.mxu0 0
      %1022 = vmatmul.mubr.bf16.gmra.mrb[0].mxu0 %v786
      %v1023 = vpop.f32.mrb[0].mxu0
      %v1024 = vadd.f32 0.0, %v1023
      %v1025 = vpop.f32.mrb[0].mxu0
      %v1026 = vpop.f32.mrb[0].mxu0
      %v1027 = vadd.f32 0.0, %v1026
      %v1028 = vpop.f32.mrb[0].mxu0
      %1029 = vmatprep.mubr.bf16.mxu0 0
      %1030 = vmatmul.mubr.bf16.gmra.mrb[0].mxu0 %v794
      %v1031 = vpop.f32.mrb[0].mxu0
      %v1032 = vadd.f32 0.0, %v1031
      %v1033 = vpop.f32.mrb[0].mxu0
      %v1034 = vpop.f32.mrb[0].mxu0
      %v1035 = vadd.f32 0.0, %v1034
      %v1036 = vpop.f32.mrb[0].mxu0
      %1037 = vmatprep.mubr.bf16.mxu0 0
      %1038 = vmatmul.mubr.bf16.gmra.mrb[0].mxu0 %v802
      %v1039 = vpop.f32.mrb[0].mxu0
      %v1040 = vadd.f32 0.0, %v1039
      %v1041 = vpop.f32.mrb[0].mxu0
      %v1042 = vpop.f32.mrb[0].mxu0
      %v1043 = vadd.f32 0.0, %v1042
      %v1044 = vpop.f32.mrb[0].mxu0
      %1045 = vmatprep.mubr.bf16.mxu0 0
      %1046 = vmatmul.mubr.bf16.gmra.mrb[0].mxu0 %v810
      %v1047 = vpop.f32.mrb[0].mxu0
      %v1048 = vadd.f32 0.0, %v1047
      %v1049 = vpop.f32.mrb[0].mxu0
      %v1050 = vpop.f32.mrb[0].mxu0
      %v1051 = vadd.f32 0.0, %v1050
      %v1052 = vpop.f32.mrb[0].mxu0
      %1053 = vmatprep.mubr.bf16.mxu0 0
      %1054 = vmatmul.mubr.bf16.gmra.mrb[0].mxu0 %v818
      %v1055 = vpop.f32.mrb[0].mxu0
      %v1056 = vadd.f32 0.0, %v1055
      %v1057 = vpop.f32.mrb[0].mxu0
      %v1058 = vpop.f32.mrb[0].mxu0
      %v1059 = vadd.f32 0.0, %v1058
      %v1060 = vpop.f32.mrb[0].mxu0
      %1061 = vmatprep.mubr.bf16.mxu0 0
      %1062 = vmatmul.mubr.bf16.gmra.mrb[0].mxu0 %v826
      %v1063 = vpop.f32.mrb[0].mxu0
      %v1064 = vadd.f32 0.0, %v1063
      %v1065 = vpop.f32.mrb[0].mxu0
      %v1066 = vpop.f32.mrb[0].mxu0
      %v1067 = vadd.f32 0.0, %v1066
      %v1068 = vpop.f32.mrb[0].mxu0
      %1069 = vmatprep.mubr.bf16.mxu0 0
      %1070 = vmatmul.mubr.bf16.gmra.mrb[0].mxu0 %v834
      %v1071 = vpop.f32.mrb[0].mxu0
      %v1072 = vadd.f32 0.0, %v1071
      %v1073 = vpop.f32.mrb[0].mxu0
      %v1074 = vpop.f32.mrb[0].mxu0
      %v1075 = vadd.f32 0.0, %v1074
      %v1076 = vpop.f32.mrb[0].mxu0
      %1077 = vmatprep.mubr.bf16.mxu0 0
      %1078 = vmatmul.mubr.bf16.gmra.mrb[0].mxu0 %v842
      %v1079 = vpop.f32.mrb[0].mxu0
      %v1080 = vadd.f32 0.0, %v1079
      %v1081 = vpop.f32.mrb[0].mxu0
      %v1082 = vpop.f32.mrb[0].mxu0
      %v1083 = vadd.f32 0.0, %v1082
      %v1084 = vpop.f32.mrb[0].mxu0
      %1085 = vmatprep.mubr.bf16.mxu0 0
      %1086 = vmatmul.mubr.bf16.gmra.mrb[0].mxu0 %v850
      %v1087 = vpop.f32.mrb[0].mxu0
      %v1088 = vadd.f32 0.0, %v1087
      %v1089 = vpop.f32.mrb[0].mxu0
      %v1090 = vpop.f32.mrb[0].mxu0
      %v1091 = vadd.f32 0.0, %v1090
      %v1092 = vpop.f32.mrb[0].mxu0
      %1093 = vmatprep.mubr.bf16.mxu0 0
      %1094 = vmatmul.mubr.bf16.gmra.mrb[0].mxu0 %v858
      %v1095 = vpop.f32.mrb[0].mxu0
      %v1096 = vadd.f32 0.0, %v1095
      %v1097 = vpop.f32.mrb[0].mxu0
      %v1098 = vpop.f32.mrb[0].mxu0
      %v1099 = vadd.f32 0.0, %v1098
      %v1100 = vpop.f32.mrb[0].mxu0
      %1101 = vmatprep.mubr.bf16.mxu0 0
      %1102 = vmatmul.mubr.bf16.gmra.mrb[0].mxu0 %v866
      %v1103 = vpop.f32.mrb[0].mxu0
      %v1104 = vadd.f32 0.0, %v1103
      %v1105 = vpop.f32.mrb[0].mxu0
      %v1106 = vpop.f32.mrb[0].mxu0
      %v1107 = vadd.f32 0.0, %v1106
      %v1108 = vpop.f32.mrb[0].mxu0
      %1109 = vmatprep.mubr.bf16.mxu0 0
      %1110 = vmatmul.mubr.bf16.gmra.mrb[0].mxu0 %v874
      %v1111 = vpop.f32.mrb[0].mxu0
      %v1112 = vadd.f32 0.0, %v1111
      %v1113 = vpop.f32.mrb[0].mxu0
      %v1114 = vpop.f32.mrb[0].mxu0
      %v1115 = vadd.f32 0.0, %v1114
      %v1116 = vpop.f32.mrb[0].mxu0
      %1117 = vmatprep.mubr.bf16.mxu0 0
      %1118 = vmatmul.mubr.bf16.gmra.mrb[0].mxu0 %v882
      %v1119 = vpop.f32.mrb[0].mxu0
      %v1120 = vadd.f32 0.0, %v1119
      %v1121 = vpop.f32.mrb[0].mxu0
      %v1122 = vpop.f32.mrb[0].mxu0
      %v1123 = vadd.f32 0.0, %v1122
      %v1124 = vpop.f32.mrb[0].mxu0
      %1125 = vdwg.mxu0
      %v1126 = vadd.f32 %v682, %v984
      %v1127 = vadd.f32 %v683, %v987
      %v1128 = vadd.f32 %v684, %v992
      %v1129 = vadd.f32 %v685, %v995
      %v1130 = vadd.f32 %v686, %v1000
      %v1131 = vadd.f32 %v687, %v1003
      %v1132 = vadd.f32 %v688, %v1008
      %v1133 = vadd.f32 %v689, %v1011
      %v1134 = vadd.f32 %v690, %v1016
      %v1135 = vadd.f32 %v691, %v1019
      %v1136 = vadd.f32 %v692, %v1024
      %v1137 = vadd.f32 %v693, %v1027
      %v1138 = vadd.f32 %v694, %v1032
      %v1139 = vadd.f32 %v695, %v1035
      %v1140 = vadd.f32 %v696, %v1040
      %v1141 = vadd.f32 %v697, %v1043
      %v1142 = vadd.f32 %v698, %v1048
      %v1143 = vadd.f32 %v699, %v1051
      %v1144 = vadd.f32 %v700, %v1056
      %v1145 = vadd.f32 %v701, %v1059
      %v1146 = vadd.f32 %v702, %v1064
      %v1147 = vadd.f32 %v703, %v1067
      %v1148 = vadd.f32 %v704, %v1072
      %v1149 = vadd.f32 %v705, %v1075
      %v1150 = vadd.f32 %v706, %v1080
      %v1151 = vadd.f32 %v707, %v1083
      %v1152 = vadd.f32 %v708, %v1088
      %v1153 = vadd.f32 %v709, %v1091
      %v1154 = vadd.f32 %v710, %v1096
      %v1155 = vadd.f32 %v711, %v1099
      %v1156 = vadd.f32 %v712, %v1104
      %v1157 = vadd.f32 %v713, %v1107
      %v1158 = vadd.f32 %v714, %v1112
      %v1159 = vadd.f32 %v715, %v1115
      %v1160 = vadd.f32 %v716, %v1120
      %v1161 = vadd.f32 %v717, %v1123
      %1162 = vst [vmem:[#allocation3] sm:$0xff] %v1126
      %1163 = vst [vmem:[#allocation3 + $0x8] sm:$0xff] %v1127
      %1164 = vst [vmem:[#allocation3 + $0x10] sm:$0xff] %v1128
      %1165 = vst [vmem:[#allocation3 + $0x18] sm:$0xff] %v1129
      %1166 = vst [vmem:[#allocation3 + $0x20] sm:$0xff] %v1130
      %1167 = vst [vmem:[#allocation3 + $0x28] sm:$0xff] %v1131
      %1168 = vst [vmem:[#allocation3 + $0x30] sm:$0xff] %v1132
      %1169 = vst [vmem:[#allocation3 + $0x38] sm:$0xff] %v1133
      %1170 = vst [vmem:[#allocation3 + $0x40] sm:$0xff] %v1134
      %1171 = vst [vmem:[#allocation3 + $0x48] sm:$0xff] %v1135
      %1172 = vst [vmem:[#allocation3 + $0x50] sm:$0xff] %v1136
      %1173 = vst [vmem:[#allocation3 + $0x58] sm:$0xff] %v1137
      %1174 = vst [vmem:[#allocation3 + $0x60] sm:$0xff] %v1138
      %1175 = vst [vmem:[#allocation3 + $0x68] sm:$0xff] %v1139
      %1176 = vst [vmem:[#allocation3 + $0x70] sm:$0xff] %v1140
      %1177 = vst [vmem:[#allocation3 + $0x78] sm:$0xff] %v1141
      %1178 = vst [vmem:[#allocation3 + $0x80] sm:$0xff] %v1142
      %1179 = vst [vmem:[#allocation3 + $0x88] sm:$0xff] %v1143
      %1180 = vst [vmem:[#allocation3 + $0x90] sm:$0xff] %v1144
      %1181 = vst [vmem:[#allocation3 + $0x98] sm:$0xff] %v1145
      %1182 = vst [vmem:[#allocation3 + $0xa0] sm:$0xff] %v1146
      %1183 = vst [vmem:[#allocation3 + $0xa8] sm:$0xff] %v1147
      %1184 = vst [vmem:[#allocation3 + $0xb0] sm:$0xff] %v1148
      %1185 = vst [vmem:[#allocation3 + $0xb8] sm:$0xff] %v1149
      %1186 = vst [vmem:[#allocation3 + $0xc0] sm:$0xff] %v1150
      %1187 = vst [vmem:[#allocation3 + $0xc8] sm:$0xff] %v1151
      %1188 = vst [vmem:[#allocation3 + $0xd0] sm:$0xff] %v1152
      %1189 = vst [vmem:[#allocation3 + $0xd8] sm:$0xff] %v1153
      %1190 = vst [vmem:[#allocation3 + $0xe0] sm:$0xff] %v1154
      %1191 = vst [vmem:[#allocation3 + $0xe8] sm:$0xff] %v1155
      %1192 = vst [vmem:[#allocation3 + $0xf0] sm:$0xff] %v1156
      %1193 = vst [vmem:[#allocation3 + $0xf8] sm:$0xff] %v1157
      %1194 = vst [vmem:[#allocation3 + $0x100] sm:$0xff] %v1158
      %1195 = vst [vmem:[#allocation3 + $0x108] sm:$0xff] %v1159
      %1196 = vst [vmem:[#allocation3 + $0x110] sm:$0xff] %v1160
      %1197 = vst [vmem:[#allocation3 + $0x118] sm:$0xff] %v1161
      %v1198 = vld [vmem:[#allocation2 + $0x8] sm:$0xff]
      %v1199 = vld [vmem:[#allocation2 + $0x10] sm:$0xff]
      %v1200 = vld [vmem:[#allocation2 + $0x18] sm:$0xff]
      %v1201 = vld [vmem:[#allocation2 + $0x20] sm:$0xff]
      %v1202 = vld [vmem:[#allocation2 + $0x28] sm:$0xff]
      %v1203 = vld [vmem:[#allocation2 + $0x30] sm:$0xff]
      %v1204 = vld [vmem:[#allocation2 + $0x38] sm:$0xff]
      %v1205 = vld [vmem:[#allocation2 + $0x40] sm:$0xff]
      %v1206 = vld [vmem:[#allocation2 + $0x48] sm:$0xff]
      %v1207 = vld [vmem:[#allocation2 + $0x50] sm:$0xff]
      %v1208 = vld [vmem:[#allocation2 + $0x58] sm:$0xff]
      %v1209 = vld [vmem:[#allocation2 + $0x60] sm:$0xff]
      %v1210 = vld [vmem:[#allocation2 + $0x68] sm:$0xff]
      %v1211 = vld [vmem:[#allocation2 + $0x70] sm:$0xff]
      %v1212 = vld [vmem:[#allocation2 + $0x78] sm:$0xff]
      %v1213 = vld [vmem:[#allocation2 + $0x80] sm:$0xff]
      %v1214 = vld [vmem:[#allocation2 + $0x88] sm:$0xff]
      %v1215 = vld [vmem:[#allocation2 + $0x90] sm:$0xff]
      %v1216 = vld [vmem:[#allocation3] sm:$0xff]
      %v1217 = vld [vmem:[#allocation3 + $0x8] sm:$0xff]
      %v1218 = vld [vmem:[#allocation3 + $0x10] sm:$0xff]
      %v1219 = vld [vmem:[#allocation3 + $0x18] sm:$0xff]
      %v1220 = vld [vmem:[#allocation3 + $0x20] sm:$0xff]
      %v1221 = vld [vmem:[#allocation3 + $0x28] sm:$0xff]
      %v1222 = vld [vmem:[#allocation3 + $0x30] sm:$0xff]
      %v1223 = vld [vmem:[#allocation3 + $0x38] sm:$0xff]
      %v1224 = vld [vmem:[#allocation3 + $0x40] sm:$0xff]
      %v1225 = vld [vmem:[#allocation3 + $0x48] sm:$0xff]
      %v1226 = vld [vmem:[#allocation3 + $0x50] sm:$0xff]
      %v1227 = vld [vmem:[#allocation3 + $0x58] sm:$0xff]
      %v1228 = vld [vmem:[#allocation3 + $0x60] sm:$0xff]
      %v1229 = vld [vmem:[#allocation3 + $0x68] sm:$0xff]
      %v1230 = vld [vmem:[#allocation3 + $0x70] sm:$0xff]
      %v1231 = vld [vmem:[#allocation3 + $0x78] sm:$0xff]
      %v1232 = vld [vmem:[#allocation3 + $0x80] sm:$0xff]
      %v1233 = vld [vmem:[#allocation3 + $0x88] sm:$0xff]
      %v1234 = vld [vmem:[#allocation3 + $0x90] sm:$0xff]
      %v1235 = vld [vmem:[#allocation3 + $0x98] sm:$0xff]
      %v1236 = vld [vmem:[#allocation3 + $0xa0] sm:$0xff]
      %v1237 = vld [vmem:[#allocation3 + $0xa8] sm:$0xff]
      %v1238 = vld [vmem:[#allocation3 + $0xb0] sm:$0xff]
      %v1239 = vld [vmem:[#allocation3 + $0xb8] sm:$0xff]
      %v1240 = vld [vmem:[#allocation3 + $0xc0] sm:$0xff]
      %v1241 = vld [vmem:[#allocation3 + $0xc8] sm:$0xff]
      %v1242 = vld [vmem:[#allocation3 + $0xd0] sm:$0xff]
      %v1243 = vld [vmem:[#allocation3 + $0xd8] sm:$0xff]
      %v1244 = vld [vmem:[#allocation3 + $0xe0] sm:$0xff]
      %v1245 = vld [vmem:[#allocation3 + $0xe8] sm:$0xff]
      %v1246 = vld [vmem:[#allocation3 + $0xf0] sm:$0xff]
      %v1247 = vld [vmem:[#allocation3 + $0xf8] sm:$0xff]
      %v1248 = vld [vmem:[#allocation3 + $0x100] sm:$0xff]
      %v1249 = vld [vmem:[#allocation3 + $0x108] sm:$0xff]
      %v1250 = vld [vmem:[#allocation3 + $0x110] sm:$0xff]
      %v1251 = vld [vmem:[#allocation3 + $0x118] sm:$0xff]
      %s1252 = scalar_lea.vmem %s3, 64
      %v1253 = vld [vmem:[%s1252] sm:$0xf]
      %v1254 = vld [vmem:[%s1252 + $0x4] sm:$0xf]
      %v1255 = vld [vmem:[%s1252 + $0x8] sm:$0xf]
      %v1256 = vld [vmem:[%s1252 + $0xc] sm:$0xf]
      %v1257 = vld [vmem:[%s1252 + $0x10] sm:$0xf]
      %v1258 = vld [vmem:[%s1252 + $0x14] sm:$0xf]
      %v1259 = vld [vmem:[%s1252 + $0x18] sm:$0xf]
      %v1260 = vld [vmem:[%s1252 + $0x1c] sm:$0xf]
      %v1261 = vld [vmem:[%s1252 + $0x20] sm:$0xf]
      %v1262 = vld [vmem:[%s1252 + $0x24] sm:$0xf]
      %v1263 = vld [vmem:[%s1252 + $0x28] sm:$0xf]
      %v1264 = vld [vmem:[%s1252 + $0x2c] sm:$0xf]
      %v1265 = vld [vmem:[%s1252 + $0x30] sm:$0xf]
      %v1266 = vld [vmem:[%s1252 + $0x34] sm:$0xf]
      %v1267 = vld [vmem:[%s1252 + $0x38] sm:$0xf]
      %v1268 = vld [vmem:[%s1252 + $0x3c] sm:$0xf]
      %v1285 = vunpack.c.l.b16 %v1253
      %v1286 = vunpack.c.l.b16 %v1254
      %v1287 = vunpack.c.l.b16 %v1255
      %v1288 = vunpack.c.l.b16 %v1256
      %v1289 = vunpack.c.l.b16 %v1257
      %v1290 = vunpack.c.l.b16 %v1258
      %v1291 = vunpack.c.l.b16 %v1259
      %v1292 = vunpack.c.l.b16 %v1260
      %v1293 = vunpack.c.l.b16 %v1261
      %v1294 = vunpack.c.l.b16 %v1262
      %v1295 = vunpack.c.l.b16 %v1263
      %v1296 = vunpack.c.l.b16 %v1264
      %v1297 = vunpack.c.l.b16 %v1265
      %v1298 = vunpack.c.l.b16 %v1266
      %v1299 = vunpack.c.l.b16 %v1267
      %v1300 = vunpack.c.l.b16 %v1268
      %v1301 = vpack.c.b16 %v1286, %v1285
      %v1302 = vpack.c.b16 %v1288, %v1287
      %v1303 = vpack.c.b16 %v1290, %v1289
      %v1304 = vpack.c.b16 %v1292, %v1291
      %v1305 = vpack.c.b16 %v1294, %v1293
      %v1306 = vpack.c.b16 %v1296, %v1295
      %v1307 = vpack.c.b16 %v1298, %v1297
      %v1308 = vpack.c.b16 %v1300, %v1299
      %1317 = vmatprep.subr.bf16.mxu0 0
      %1318 = vmatpush1.bf16.msra.mxu0 %v1301
      %1319 = vmatprep.subr.bf16.mxu0 0
      %1320 = vmatpush1.bf16.msra.mxu0 %v1302
      %1321 = vmatprep.subr.bf16.mxu0 0
      %1322 = vmatpush1.bf16.msra.mxu0 %v1303
      %1323 = vmatprep.subr.bf16.mxu0 0
      %1324 = vmatpush1.bf16.msra.mxu0 %v1304
      %1325 = vmatprep.subr.bf16.mxu0 0
      %1326 = vmatpush1.bf16.msra.mxu0 %v1305
      %1327 = vmatprep.subr.bf16.mxu0 0
      %1328 = vmatpush1.bf16.msra.mxu0 %v1306
      %1329 = vmatprep.subr.bf16.mxu0 0
      %1330 = vmatpush1.bf16.msra.mxu0 %v1307
      %1331 = vmatprep.subr.bf16.mxu0 0
      %1332 = vmatpush1.bf16.msra.mxu0 %v1308
      %1333 = vmatprep.subr.bf16.mxu0 0
      %1334 = vmatpush1.bf16.msra.mxu0 0
      %1335 = vmatprep.subr.bf16.mxu0 0
      %1336 = vmatpush1.bf16.msra.mxu0 0
      %1337 = vmatprep.subr.bf16.mxu0 0
      %1338 = vmatpush1.bf16.msra.mxu0 0
      %1339 = vmatprep.subr.bf16.mxu0 0
      %1340 = vmatpush1.bf16.msra.mxu0 0
      %1341 = vmatprep.subr.bf16.mxu0 0
      %1342 = vmatpush1.bf16.msra.mxu0 0
      %1343 = vmatprep.subr.bf16.mxu0 0
      %1344 = vmatpush1.bf16.msra.mxu0 0
      %1345 = vmatprep.subr.bf16.mxu0 0
      %1346 = vmatpush1.bf16.msra.mxu0 0
      %1347 = vmatprep.subr.bf16.mxu0 0
      %1348 = vmatpush1.bf16.msra.mxu0 0
      %1349 = vmatprep.mubr.bf16.mxu0 0
      %1350 = vmatmul.mubr.bf16.gmra.mrb[0].mxu0 %v1198
      %v1351 = vpop.f32.mrb[0].mxu0
      %v1352 = vadd.f32 0.0, %v1351
      %v1353 = vpop.f32.mrb[0].mxu0
      %v1354 = vpop.f32.mrb[0].mxu0
      %v1355 = vadd.f32 0.0, %v1354
      %v1356 = vpop.f32.mrb[0].mxu0
      %1357 = vmatprep.mubr.bf16.mxu0 0
      %1358 = vmatmul.mubr.bf16.gmra.mrb[0].mxu0 %v1199
      %v1359 = vpop.f32.mrb[0].mxu0
      %v1360 = vadd.f32 0.0, %v1359
      %v1361 = vpop.f32.mrb[0].mxu0
      %v1362 = vpop.f32.mrb[0].mxu0
      %v1363 = vadd.f32 0.0, %v1362
      %v1364 = vpop.f32.mrb[0].mxu0
      %1365 = vmatprep.mubr.bf16.mxu0 0
      %1366 = vmatmul.mubr.bf16.gmra.mrb[0].mxu0 %v1200
      %v1367 = vpop.f32.mrb[0].mxu0
      %v1368 = vadd.f32 0.0, %v1367
      %v1369 = vpop.f32.mrb[0].mxu0
      %v1370 = vpop.f32.mrb[0].mxu0
      %v1371 = vadd.f32 0.0, %v1370
      %v1372 = vpop.f32.mrb[0].mxu0
      %1373 = vmatprep.mubr.bf16.mxu0 0
      %1374 = vmatmul.mubr.bf16.gmra.mrb[0].mxu0 %v1201
      %v1375 = vpop.f32.mrb[0].mxu0
      %v1376 = vadd.f32 0.0, %v1375
      %v1377 = vpop.f32.mrb[0].mxu0
      %v1378 = vpop.f32.mrb[0].mxu0
      %v1379 = vadd.f32 0.0, %v1378
      %v1380 = vpop.f32.mrb[0].mxu0
      %1381 = vmatprep.mubr.bf16.mxu0 0
      %1382 = vmatmul.mubr.bf16.gmra.mrb[0].mxu0 %v1202
      %v1383 = vpop.f32.mrb[0].mxu0
      %v1384 = vadd.f32 0.0, %v1383
      %v1385 = vpop.f32.mrb[0].mxu0
      %v1386 = vpop.f32.mrb[0].mxu0
      %v1387 = vadd.f32 0.0, %v1386
      %v1388 = vpop.f32.mrb[0].mxu0
      %1389 = vmatprep.mubr.bf16.mxu0 0
      %1390 = vmatmul.mubr.bf16.gmra.mrb[0].mxu0 %v1203
      %v1391 = vpop.f32.mrb[0].mxu0
      %v1392 = vadd.f32 0.0, %v1391
      %v1393 = vpop.f32.mrb[0].mxu0
      %v1394 = vpop.f32.mrb[0].mxu0
      %v1395 = vadd.f32 0.0, %v1394
      %v1396 = vpop.f32.mrb[0].mxu0
      %1397 = vmatprep.mubr.bf16.mxu0 0
      %1398 = vmatmul.mubr.bf16.gmra.mrb[0].mxu0 %v1204
      %v1399 = vpop.f32.mrb[0].mxu0
      %v1400 = vadd.f32 0.0, %v1399
      %v1401 = vpop.f32.mrb[0].mxu0
      %v1402 = vpop.f32.mrb[0].mxu0
      %v1403 = vadd.f32 0.0, %v1402
      %v1404 = vpop.f32.mrb[0].mxu0
      %1405 = vmatprep.mubr.bf16.mxu0 0
      %1406 = vmatmul.mubr.bf16.gmra.mrb[0].mxu0 %v1205
      %v1407 = vpop.f32.mrb[0].mxu0
      %v1408 = vadd.f32 0.0, %v1407
      %v1409 = vpop.f32.mrb[0].mxu0
      %v1410 = vpop.f32.mrb[0].mxu0
      %v1411 = vadd.f32 0.0, %v1410
      %v1412 = vpop.f32.mrb[0].mxu0
      %1413 = vmatprep.mubr.bf16.mxu0 0
      %1414 = vmatmul.mubr.bf16.gmra.mrb[0].mxu0 %v1206
      %v1415 = vpop.f32.mrb[0].mxu0
      %v1416 = vadd.f32 0.0, %v1415
      %v1417 = vpop.f32.mrb[0].mxu0
      %v1418 = vpop.f32.mrb[0].mxu0
      %v1419 = vadd.f32 0.0, %v1418
      %v1420 = vpop.f32.mrb[0].mxu0
      %1421 = vmatprep.mubr.bf16.mxu0 0
      %1422 = vmatmul.mubr.bf16.gmra.mrb[0].mxu0 %v1207
      %v1423 = vpop.f32.mrb[0].mxu0
      %v1424 = vadd.f32 0.0, %v1423
      %v1425 = vpop.f32.mrb[0].mxu0
      %v1426 = vpop.f32.mrb[0].mxu0
      %v1427 = vadd.f32 0.0, %v1426
      %v1428 = vpop.f32.mrb[0].mxu0
      %1429 = vmatprep.mubr.bf16.mxu0 0
      %1430 = vmatmul.mubr.bf16.gmra.mrb[0].mxu0 %v1208
      %v1431 = vpop.f32.mrb[0].mxu0
      %v1432 = vadd.f32 0.0, %v1431
      %v1433 = vpop.f32.mrb[0].mxu0
      %v1434 = vpop.f32.mrb[0].mxu0
      %v1435 = vadd.f32 0.0, %v1434
      %v1436 = vpop.f32.mrb[0].mxu0
      %1437 = vmatprep.mubr.bf16.mxu0 0
      %1438 = vmatmul.mubr.bf16.gmra.mrb[0].mxu0 %v1209
      %v1439 = vpop.f32.mrb[0].mxu0
      %v1440 = vadd.f32 0.0, %v1439
      %v1441 = vpop.f32.mrb[0].mxu0
      %v1442 = vpop.f32.mrb[0].mxu0
      %v1443 = vadd.f32 0.0, %v1442
      %v1444 = vpop.f32.mrb[0].mxu0
      %1445 = vmatprep.mubr.bf16.mxu0 0
      %1446 = vmatmul.mubr.bf16.gmra.mrb[0].mxu0 %v1210
      %v1447 = vpop.f32.mrb[0].mxu0
      %v1448 = vadd.f32 0.0, %v1447
      %v1449 = vpop.f32.mrb[0].mxu0
      %v1450 = vpop.f32.mrb[0].mxu0
      %v1451 = vadd.f32 0.0, %v1450
      %v1452 = vpop.f32.mrb[0].mxu0
      %1453 = vmatprep.mubr.bf16.mxu0 0
      %1454 = vmatmul.mubr.bf16.gmra.mrb[0].mxu0 %v1211
      %v1455 = vpop.f32.mrb[0].mxu0
      %v1456 = vadd.f32 0.0, %v1455
      %v1457 = vpop.f32.mrb[0].mxu0
      %v1458 = vpop.f32.mrb[0].mxu0
      %v1459 = vadd.f32 0.0, %v1458
      %v1460 = vpop.f32.mrb[0].mxu0
      %1461 = vmatprep.mubr.bf16.mxu0 0
      %1462 = vmatmul.mubr.bf16.gmra.mrb[0].mxu0 %v1212
      %v1463 = vpop.f32.mrb[0].mxu0
      %v1464 = vadd.f32 0.0, %v1463
      %v1465 = vpop.f32.mrb[0].mxu0
      %v1466 = vpop.f32.mrb[0].mxu0
      %v1467 = vadd.f32 0.0, %v1466
      %v1468 = vpop.f32.mrb[0].mxu0
      %1469 = vmatprep.mubr.bf16.mxu0 0
      %1470 = vmatmul.mubr.bf16.gmra.mrb[0].mxu0 %v1213
      %v1471 = vpop.f32.mrb[0].mxu0
      %v1472 = vadd.f32 0.0, %v1471
      %v1473 = vpop.f32.mrb[0].mxu0
      %v1474 = vpop.f32.mrb[0].mxu0
      %v1475 = vadd.f32 0.0, %v1474
      %v1476 = vpop.f32.mrb[0].mxu0
      %1477 = vmatprep.mubr.bf16.mxu0 0
      %1478 = vmatmul.mubr.bf16.gmra.mrb[0].mxu0 %v1214
      %v1479 = vpop.f32.mrb[0].mxu0
      %v1480 = vadd.f32 0.0, %v1479
      %v1481 = vpop.f32.mrb[0].mxu0
      %v1482 = vpop.f32.mrb[0].mxu0
      %v1483 = vadd.f32 0.0, %v1482
      %v1484 = vpop.f32.mrb[0].mxu0
      %1485 = vmatprep.mubr.bf16.mxu0 0
      %1486 = vmatmul.mubr.bf16.gmra.mrb[0].mxu0 %v1215
      %v1487 = vpop.f32.mrb[0].mxu0
      %v1488 = vadd.f32 0.0, %v1487
      %v1489 = vpop.f32.mrb[0].mxu0
      %v1490 = vpop.f32.mrb[0].mxu0
      %v1491 = vadd.f32 0.0, %v1490
      %v1492 = vpop.f32.mrb[0].mxu0
      %1493 = vdwg.mxu0
      %v1494 = vadd.f32 %v1216, %v1352
      %v1495 = vadd.f32 %v1217, %v1355
      %v1496 = vadd.f32 %v1218, %v1360
      %v1497 = vadd.f32 %v1219, %v1363
      %v1498 = vadd.f32 %v1220, %v1368
      %v1499 = vadd.f32 %v1221, %v1371
      %v1500 = vadd.f32 %v1222, %v1376
      %v1501 = vadd.f32 %v1223, %v1379
      %v1502 = vadd.f32 %v1224, %v1384
      %v1503 = vadd.f32 %v1225, %v1387
      %v1504 = vadd.f32 %v1226, %v1392
      %v1505 = vadd.f32 %v1227, %v1395
      %v1506 = vadd.f32 %v1228, %v1400
      %v1507 = vadd.f32 %v1229, %v1403
      %v1508 = vadd.f32 %v1230, %v1408
      %v1509 = vadd.f32 %v1231, %v1411
      %v1510 = vadd.f32 %v1232, %v1416
      %v1511 = vadd.f32 %v1233, %v1419
      %v1512 = vadd.f32 %v1234, %v1424
      %v1513 = vadd.f32 %v1235, %v1427
      %v1514 = vadd.f32 %v1236, %v1432
      %v1515 = vadd.f32 %v1237, %v1435
      %v1516 = vadd.f32 %v1238, %v1440
      %v1517 = vadd.f32 %v1239, %v1443
      %v1518 = vadd.f32 %v1240, %v1448
      %v1519 = vadd.f32 %v1241, %v1451
      %v1520 = vadd.f32 %v1242, %v1456
      %v1521 = vadd.f32 %v1243, %v1459
      %v1522 = vadd.f32 %v1244, %v1464
      %v1523 = vadd.f32 %v1245, %v1467
      %v1524 = vadd.f32 %v1246, %v1472
      %v1525 = vadd.f32 %v1247, %v1475
      %v1526 = vadd.f32 %v1248, %v1480
      %v1527 = vadd.f32 %v1249, %v1483
      %v1528 = vadd.f32 %v1250, %v1488
      %v1529 = vadd.f32 %v1251, %v1491
      %1530 = vst [vmem:[#allocation3] sm:$0xff] %v1494
      %1531 = vst [vmem:[#allocation3 + $0x8] sm:$0xff] %v1495
      %1532 = vst [vmem:[#allocation3 + $0x10] sm:$0xff] %v1496
      %1533 = vst [vmem:[#allocation3 + $0x18] sm:$0xff] %v1497
      %1534 = vst [vmem:[#allocation3 + $0x20] sm:$0xff] %v1498
      %1535 = vst [vmem:[#allocation3 + $0x28] sm:$0xff] %v1499
      %1536 = vst [vmem:[#allocation3 + $0x30] sm:$0xff] %v1500
      %1537 = vst [vmem:[#allocation3 + $0x38] sm:$0xff] %v1501
      %1538 = vst [vmem:[#allocation3 + $0x40] sm:$0xff] %v1502
      %1539 = vst [vmem:[#allocation3 + $0x48] sm:$0xff] %v1503
      %1540 = vst [vmem:[#allocation3 + $0x50] sm:$0xff] %v1504
      %1541 = vst [vmem:[#allocation3 + $0x58] sm:$0xff] %v1505
      %1542 = vst [vmem:[#allocation3 + $0x60] sm:$0xff] %v1506
      %1543 = vst [vmem:[#allocation3 + $0x68] sm:$0xff] %v1507
      %1544 = vst [vmem:[#allocation3 + $0x70] sm:$0xff] %v1508
      %1545 = vst [vmem:[#allocation3 + $0x78] sm:$0xff] %v1509
      %1546 = vst [vmem:[#allocation3 + $0x80] sm:$0xff] %v1510
      %1547 = vst [vmem:[#allocation3 + $0x88] sm:$0xff] %v1511
      %1548 = vst [vmem:[#allocation3 + $0x90] sm:$0xff] %v1512
      %1549 = vst [vmem:[#allocation3 + $0x98] sm:$0xff] %v1513
      %1550 = vst [vmem:[#allocation3 + $0xa0] sm:$0xff] %v1514
      %1551 = vst [vmem:[#allocation3 + $0xa8] sm:$0xff] %v1515
      %1552 = vst [vmem:[#allocation3 + $0xb0] sm:$0xff] %v1516
      %1553 = vst [vmem:[#allocation3 + $0xb8] sm:$0xff] %v1517
      %1554 = vst [vmem:[#allocation3 + $0xc0] sm:$0xff] %v1518
      %1555 = vst [vmem:[#allocation3 + $0xc8] sm:$0xff] %v1519
      %1556 = vst [vmem:[#allocation3 + $0xd0] sm:$0xff] %v1520
      %1557 = vst [vmem:[#allocation3 + $0xd8] sm:$0xff] %v1521
      %1558 = vst [vmem:[#allocation3 + $0xe0] sm:$0xff] %v1522
      %1559 = vst [vmem:[#allocation3 + $0xe8] sm:$0xff] %v1523
      %1560 = vst [vmem:[#allocation3 + $0xf0] sm:$0xff] %v1524
      %1561 = vst [vmem:[#allocation3 + $0xf8] sm:$0xff] %v1525
      %1562 = vst [vmem:[#allocation3 + $0x100] sm:$0xff] %v1526
      %1563 = vst [vmem:[#allocation3 + $0x108] sm:$0xff] %v1527
      %1564 = vst [vmem:[#allocation3 + $0x110] sm:$0xff] %v1528
      %1565 = vst [vmem:[#allocation3 + $0x118] sm:$0xff] %v1529
      %v1566 = vld [vmem:[#allocation2 + $0x8] sm:$0xff]
      %v1567 = vld [vmem:[#allocation2 + $0x10] sm:$0xff]
      %v1568 = vld [vmem:[#allocation2 + $0x18] sm:$0xff]
      %v1569 = vld [vmem:[#allocation2 + $0x20] sm:$0xff]
      %v1570 = vld [vmem:[#allocation2 + $0x28] sm:$0xff]
      %v1571 = vld [vmem:[#allocation2 + $0x30] sm:$0xff]
      %v1572 = vld [vmem:[#allocation2 + $0x38] sm:$0xff]
      %v1573 = vld [vmem:[#allocation2 + $0x40] sm:$0xff]
      %v1574 = vld [vmem:[#allocation2 + $0x48] sm:$0xff]
      %v1575 = vld [vmem:[#allocation2 + $0x50] sm:$0xff]
      %v1576 = vld [vmem:[#allocation2 + $0x58] sm:$0xff]
      %v1577 = vld [vmem:[#allocation2 + $0x60] sm:$0xff]
      %v1578 = vld [vmem:[#allocation2 + $0x68] sm:$0xff]
      %v1579 = vld [vmem:[#allocation2 + $0x70] sm:$0xff]
      %v1580 = vld [vmem:[#allocation2 + $0x78] sm:$0xff]
      %v1581 = vld [vmem:[#allocation2 + $0x80] sm:$0xff]
      %v1582 = vld [vmem:[#allocation2 + $0x88] sm:$0xff]
      %v1583 = vld [vmem:[#allocation2 + $0x90] sm:$0xff]
      %v1584 = vld [vmem:[#allocation2 + $0x98] sm:$0x1]
      %v1585 = vld [vmem:[#allocation3] sm:$0xff]
      %v1586 = vld [vmem:[#allocation3 + $0x8] sm:$0xff]
      %v1587 = vld [vmem:[#allocation3 + $0x10] sm:$0xff]
      %v1588 = vld [vmem:[#allocation3 + $0x18] sm:$0xff]
      %v1589 = vld [vmem:[#allocation3 + $0x20] sm:$0xff]
      %v1590 = vld [vmem:[#allocation3 + $0x28] sm:$0xff]
      %v1591 = vld [vmem:[#allocation3 + $0x30] sm:$0xff]
      %v1592 = vld [vmem:[#allocation3 + $0x38] sm:$0xff]
      %v1593 = vld [vmem:[#allocation3 + $0x40] sm:$0xff]
      %v1594 = vld [vmem:[#allocation3 + $0x48] sm:$0xff]
      %v1595 = vld [vmem:[#allocation3 + $0x50] sm:$0xff]
      %v1596 = vld [vmem:[#allocation3 + $0x58] sm:$0xff]
      %v1597 = vld [vmem:[#allocation3 + $0x60] sm:$0xff]
      %v1598 = vld [vmem:[#allocation3 + $0x68] sm:$0xff]
      %v1599 = vld [vmem:[#allocation3 + $0x70] sm:$0xff]
      %v1600 = vld [vmem:[#allocation3 + $0x78] sm:$0xff]
      %v1601 = vld [vmem:[#allocation3 + $0x80] sm:$0xff]
      %v1602 = vld [vmem:[#allocation3 + $0x88] sm:$0xff]
      %v1603 = vld [vmem:[#allocation3 + $0x90] sm:$0xff]
      %v1604 = vld [vmem:[#allocation3 + $0x98] sm:$0xff]
      %v1605 = vld [vmem:[#allocation3 + $0xa0] sm:$0xff]
      %v1606 = vld [vmem:[#allocation3 + $0xa8] sm:$0xff]
      %v1607 = vld [vmem:[#allocation3 + $0xb0] sm:$0xff]
      %v1608 = vld [vmem:[#allocation3 + $0xb8] sm:$0xff]
      %v1609 = vld [vmem:[#allocation3 + $0xc0] sm:$0xff]
      %v1610 = vld [vmem:[#allocation3 + $0xc8] sm:$0xff]
      %v1611 = vld [vmem:[#allocation3 + $0xd0] sm:$0xff]
      %v1612 = vld [vmem:[#allocation3 + $0xd8] sm:$0xff]
      %v1613 = vld [vmem:[#allocation3 + $0xe0] sm:$0xff]
      %v1614 = vld [vmem:[#allocation3 + $0xe8] sm:$0xff]
      %v1615 = vld [vmem:[#allocation3 + $0xf0] sm:$0xff]
      %v1616 = vld [vmem:[#allocation3 + $0xf8] sm:$0xff]
      %v1617 = vld [vmem:[#allocation3 + $0x100] sm:$0xff]
      %v1618 = vld [vmem:[#allocation3 + $0x108] sm:$0xff]
      %v1619 = vld [vmem:[#allocation3 + $0x110] sm:$0xff]
      %v1620 = vld [vmem:[#allocation3 + $0x118] sm:$0xff]
      %s1621 = scalar_lea.vmem %s3, 128
      %v1622 = vld [vmem:[%s1621] sm:$0xf]
      %v1623 = vld [vmem:[%s1621 + $0x4] sm:$0xf]
      %v1624 = vld [vmem:[%s1621 + $0x8] sm:$0xf]
      %v1625 = vld [vmem:[%s1621 + $0xc] sm:$0xf]
      %v1626 = vld [vmem:[%s1621 + $0x10] sm:$0xf]
      %v1627 = vld [vmem:[%s1621 + $0x14] sm:$0xf]
      %v1628 = vld [vmem:[%s1621 + $0x18] sm:$0xf]
      %v1629 = vld [vmem:[%s1621 + $0x1c] sm:$0xf]
      %v1630 = vld [vmem:[%s1621 + $0x20] sm:$0xf]
      %v1631 = vld [vmem:[%s1621 + $0x24] sm:$0xf]
      %v1632 = vld [vmem:[%s1621 + $0x28] sm:$0xf]
      %v1633 = vld [vmem:[%s1621 + $0x2c] sm:$0xf]
      %v1634 = vld [vmem:[%s1621 + $0x30] sm:$0xf]
      %v1635 = vld [vmem:[%s1621 + $0x34] sm:$0xf]
      %v1636 = vld [vmem:[%s1621 + $0x38] sm:$0xf]
      %v1637 = vld [vmem:[%s1621 + $0x3c] sm:$0xf]
      %vm1638 = vsmask.f32 7424
      %v1640 = vshrl.u32 %v1566, 16
      %v1642 = vshll.u32 %v1566, 16
      %v1644 = vrot.slane %v1642, 1
      %v1645 = vor.u32 %v1640, %v1644
      %v1647 = vshll.u32 %v1567, 16
      %v1649 = vrot.slane %v1647, 1
      %v1650 = vsel %vm1638, %v1645, %v1649
      %v1651 = vshrl.u32 %v1567, 16
      %v1653 = vor.u32 %v1651, %v1649
      %v1655 = vshll.u32 %v1568, 16
      %v1657 = vrot.slane %v1655, 1
      %v1658 = vsel %vm1638, %v1653, %v1657
      %v1659 = vshrl.u32 %v1568, 16
      %v1661 = vor.u32 %v1659, %v1657
      %v1663 = vshll.u32 %v1569, 16
      %v1665 = vrot.slane %v1663, 1
      %v1666 = vsel %vm1638, %v1661, %v1665
      %v1667 = vshrl.u32 %v1569, 16
      %v1669 = vor.u32 %v1667, %v1665
      %v1671 = vshll.u32 %v1570, 16
      %v1673 = vrot.slane %v1671, 1
      %v1674 = vsel %vm1638, %v1669, %v1673
      %v1675 = vshrl.u32 %v1570, 16
      %v1677 = vor.u32 %v1675, %v1673
      %v1679 = vshll.u32 %v1571, 16
      %v1681 = vrot.slane %v1679, 1
      %v1682 = vsel %vm1638, %v1677, %v1681
      %v1683 = vshrl.u32 %v1571, 16
      %v1685 = vor.u32 %v1683, %v1681
      %v1687 = vshll.u32 %v1572, 16
      %v1689 = vrot.slane %v1687, 1
      %v1690 = vsel %vm1638, %v1685, %v1689
      %v1691 = vshrl.u32 %v1572, 16
      %v1693 = vor.u32 %v1691, %v1689
      %v1695 = vshll.u32 %v1573, 16
      %v1697 = vrot.slane %v1695, 1
      %v1698 = vsel %vm1638, %v1693, %v1697
      %v1699 = vshrl.u32 %v1573, 16
      %v1701 = vor.u32 %v1699, %v1697
      %v1703 = vshll.u32 %v1574, 16
      %v1705 = vrot.slane %v1703, 1
      %v1706 = vsel %vm1638, %v1701, %v1705
      %v1707 = vshrl.u32 %v1574, 16
      %v1709 = vor.u32 %v1707, %v1705
      %v1711 = vshll.u32 %v1575, 16
      %v1713 = vrot.slane %v1711, 1
      %v1714 = vsel %vm1638, %v1709, %v1713
      %v1715 = vshrl.u32 %v1575, 16
      %v1717 = vor.u32 %v1715, %v1713
      %v1719 = vshll.u32 %v1576, 16
      %v1721 = vrot.slane %v1719, 1
      %v1722 = vsel %vm1638, %v1717, %v1721
      %v1723 = vshrl.u32 %v1576, 16
      %v1725 = vor.u32 %v1723, %v1721
      %v1727 = vshll.u32 %v1577, 16
      %v1729 = vrot.slane %v1727, 1
      %v1730 = vsel %vm1638, %v1725, %v1729
      %v1731 = vshrl.u32 %v1577, 16
      %v1733 = vor.u32 %v1731, %v1729
      %v1735 = vshll.u32 %v1578, 16
      %v1737 = vrot.slane %v1735, 1
      %v1738 = vsel %vm1638, %v1733, %v1737
      %v1739 = vshrl.u32 %v1578, 16
      %v1741 = vor.u32 %v1739, %v1737
      %v1743 = vshll.u32 %v1579, 16
      %v1745 = vrot.slane %v1743, 1
      %v1746 = vsel %vm1638, %v1741, %v1745
      %v1747 = vshrl.u32 %v1579, 16
      %v1749 = vor.u32 %v1747, %v1745
      %v1751 = vshll.u32 %v1580, 16
      %v1753 = vrot.slane %v1751, 1
      %v1754 = vsel %vm1638, %v1749, %v1753
      %v1755 = vshrl.u32 %v1580, 16
      %v1757 = vor.u32 %v1755, %v1753
      %v1759 = vshll.u32 %v1581, 16
      %v1761 = vrot.slane %v1759, 1
      %v1762 = vsel %vm1638, %v1757, %v1761
      %v1763 = vshrl.u32 %v1581, 16
      %v1765 = vor.u32 %v1763, %v1761
      %v1767 = vshll.u32 %v1582, 16
      %v1769 = vrot.slane %v1767, 1
      %v1770 = vsel %vm1638, %v1765, %v1769
      %v1771 = vshrl.u32 %v1582, 16
      %v1773 = vor.u32 %v1771, %v1769
      %v1775 = vshll.u32 %v1583, 16
      %v1777 = vrot.slane %v1775, 1
      %v1778 = vsel %vm1638, %v1773, %v1777
      %v1779 = vshrl.u32 %v1583, 16
      %v1781 = vor.u32 %v1779, %v1777
      %v1783 = vshll.u32 %v1584, 16
      %v1785 = vrot.slane %v1783, 1
      %v1786 = vsel %vm1638, %v1781, %v1785
      %v1821 = vunpack.c.l.b16 %v1622
      %v1822 = vunpack.c.l.b16 %v1623
      %v1823 = vunpack.c.l.b16 %v1624
      %v1824 = vunpack.c.l.b16 %v1625
      %v1825 = vunpack.c.l.b16 %v1626
      %v1826 = vunpack.c.l.b16 %v1627
      %v1827 = vunpack.c.l.b16 %v1628
      %v1828 = vunpack.c.l.b16 %v1629
      %v1829 = vunpack.c.l.b16 %v1630
      %v1830 = vunpack.c.l.b16 %v1631
      %v1831 = vunpack.c.l.b16 %v1632
      %v1832 = vunpack.c.l.b16 %v1633
      %v1833 = vunpack.c.l.b16 %v1634
      %v1834 = vunpack.c.l.b16 %v1635
      %v1835 = vunpack.c.l.b16 %v1636
      %v1836 = vunpack.c.l.b16 %v1637
      %v1837 = vpack.c.b16 %v1822, %v1821
      %v1838 = vpack.c.b16 %v1824, %v1823
      %v1839 = vpack.c.b16 %v1826, %v1825
      %v1840 = vpack.c.b16 %v1828, %v1827
      %v1841 = vpack.c.b16 %v1830, %v1829
      %v1842 = vpack.c.b16 %v1832, %v1831
      %v1843 = vpack.c.b16 %v1834, %v1833
      %v1844 = vpack.c.b16 %v1836, %v1835
      %1853 = vmatprep.subr.bf16.mxu0 0
      %1854 = vmatpush1.bf16.msra.mxu0 %v1837
      %1855 = vmatprep.subr.bf16.mxu0 0
      %1856 = vmatpush1.bf16.msra.mxu0 %v1838
      %1857 = vmatprep.subr.bf16.mxu0 0
      %1858 = vmatpush1.bf16.msra.mxu0 %v1839
      %1859 = vmatprep.subr.bf16.mxu0 0
      %1860 = vmatpush1.bf16.msra.mxu0 %v1840
      %1861 = vmatprep.subr.bf16.mxu0 0
      %1862 = vmatpush1.bf16.msra.mxu0 %v1841
      %1863 = vmatprep.subr.bf16.mxu0 0
      %1864 = vmatpush1.bf16.msra.mxu0 %v1842
      %1865 = vmatprep.subr.bf16.mxu0 0
      %1866 = vmatpush1.bf16.msra.mxu0 %v1843
      %1867 = vmatprep.subr.bf16.mxu0 0
      %1868 = vmatpush1.bf16.msra.mxu0 %v1844
      %1869 = vmatprep.subr.bf16.mxu0 0
      %1870 = vmatpush1.bf16.msra.mxu0 0
      %1871 = vmatprep.subr.bf16.mxu0 0
      %1872 = vmatpush1.bf16.msra.mxu0 0
      %1873 = vmatprep.subr.bf16.mxu0 0
      %1874 = vmatpush1.bf16.msra.mxu0 0
      %1875 = vmatprep.subr.bf16.mxu0 0
      %1876 = vmatpush1.bf16.msra.mxu0 0
      %1877 = vmatprep.subr.bf16.mxu0 0
      %1878 = vmatpush1.bf16.msra.mxu0 0
      %1879 = vmatprep.subr.bf16.mxu0 0
      %1880 = vmatpush1.bf16.msra.mxu0 0
      %1881 = vmatprep.subr.bf16.mxu0 0
      %1882 = vmatpush1.bf16.msra.mxu0 0
      %1883 = vmatprep.subr.bf16.mxu0 0
      %1884 = vmatpush1.bf16.msra.mxu0 0
      %1885 = vmatprep.mubr.bf16.mxu0 0
      %1886 = vmatmul.mubr.bf16.gmra.mrb[0].mxu0 %v1650
      %v1887 = vpop.f32.mrb[0].mxu0
      %v1888 = vadd.f32 0.0, %v1887
      %v1889 = vpop.f32.mrb[0].mxu0
      %v1890 = vpop.f32.mrb[0].mxu0
      %v1891 = vadd.f32 0.0, %v1890
      %v1892 = vpop.f32.mrb[0].mxu0
      %1893 = vmatprep.mubr.bf16.mxu0 0
      %1894 = vmatmul.mubr.bf16.gmra.mrb[0].mxu0 %v1658
      %v1895 = vpop.f32.mrb[0].mxu0
      %v1896 = vadd.f32 0.0, %v1895
      %v1897 = vpop.f32.mrb[0].mxu0
      %v1898 = vpop.f32.mrb[0].mxu0
      %v1899 = vadd.f32 0.0, %v1898
      %v1900 = vpop.f32.mrb[0].mxu0
      %1901 = vmatprep.mubr.bf16.mxu0 0
      %1902 = vmatmul.mubr.bf16.gmra.mrb[0].mxu0 %v1666
      %v1903 = vpop.f32.mrb[0].mxu0
      %v1904 = vadd.f32 0.0, %v1903
      %v1905 = vpop.f32.mrb[0].mxu0
      %v1906 = vpop.f32.mrb[0].mxu0
      %v1907 = vadd.f32 0.0, %v1906
      %v1908 = vpop.f32.mrb[0].mxu0
      %1909 = vmatprep.mubr.bf16.mxu0 0
      %1910 = vmatmul.mubr.bf16.gmra.mrb[0].mxu0 %v1674
      %v1911 = vpop.f32.mrb[0].mxu0
      %v1912 = vadd.f32 0.0, %v1911
      %v1913 = vpop.f32.mrb[0].mxu0
      %v1914 = vpop.f32.mrb[0].mxu0
      %v1915 = vadd.f32 0.0, %v1914
      %v1916 = vpop.f32.mrb[0].mxu0
      %1917 = vmatprep.mubr.bf16.mxu0 0
      %1918 = vmatmul.mubr.bf16.gmra.mrb[0].mxu0 %v1682
      %v1919 = vpop.f32.mrb[0].mxu0
      %v1920 = vadd.f32 0.0, %v1919
      %v1921 = vpop.f32.mrb[0].mxu0
      %v1922 = vpop.f32.mrb[0].mxu0
      %v1923 = vadd.f32 0.0, %v1922
      %v1924 = vpop.f32.mrb[0].mxu0
      %1925 = vmatprep.mubr.bf16.mxu0 0
      %1926 = vmatmul.mubr.bf16.gmra.mrb[0].mxu0 %v1690
      %v1927 = vpop.f32.mrb[0].mxu0
      %v1928 = vadd.f32 0.0, %v1927
      %v1929 = vpop.f32.mrb[0].mxu0
      %v1930 = vpop.f32.mrb[0].mxu0
      %v1931 = vadd.f32 0.0, %v1930
      %v1932 = vpop.f32.mrb[0].mxu0
      %1933 = vmatprep.mubr.bf16.mxu0 0
      %1934 = vmatmul.mubr.bf16.gmra.mrb[0].mxu0 %v1698
      %v1935 = vpop.f32.mrb[0].mxu0
      %v1936 = vadd.f32 0.0, %v1935
      %v1937 = vpop.f32.mrb[0].mxu0
      %v1938 = vpop.f32.mrb[0].mxu0
      %v1939 = vadd.f32 0.0, %v1938
      %v1940 = vpop.f32.mrb[0].mxu0
      %1941 = vmatprep.mubr.bf16.mxu0 0
      %1942 = vmatmul.mubr.bf16.gmra.mrb[0].mxu0 %v1706
      %v1943 = vpop.f32.mrb[0].mxu0
      %v1944 = vadd.f32 0.0, %v1943
      %v1945 = vpop.f32.mrb[0].mxu0
      %v1946 = vpop.f32.mrb[0].mxu0
      %v1947 = vadd.f32 0.0, %v1946
      %v1948 = vpop.f32.mrb[0].mxu0
      %1949 = vmatprep.mubr.bf16.mxu0 0
      %1950 = vmatmul.mubr.bf16.gmra.mrb[0].mxu0 %v1714
      %v1951 = vpop.f32.mrb[0].mxu0
      %v1952 = vadd.f32 0.0, %v1951
      %v1953 = vpop.f32.mrb[0].mxu0
      %v1954 = vpop.f32.mrb[0].mxu0
      %v1955 = vadd.f32 0.0, %v1954
      %v1956 = vpop.f32.mrb[0].mxu0
      %1957 = vmatprep.mubr.bf16.mxu0 0
      %1958 = vmatmul.mubr.bf16.gmra.mrb[0].mxu0 %v1722
      %v1959 = vpop.f32.mrb[0].mxu0
      %v1960 = vadd.f32 0.0, %v1959
      %v1961 = vpop.f32.mrb[0].mxu0
      %v1962 = vpop.f32.mrb[0].mxu0
      %v1963 = vadd.f32 0.0, %v1962
      %v1964 = vpop.f32.mrb[0].mxu0
      %1965 = vmatprep.mubr.bf16.mxu0 0
      %1966 = vmatmul.mubr.bf16.gmra.mrb[0].mxu0 %v1730
      %v1967 = vpop.f32.mrb[0].mxu0
      %v1968 = vadd.f32 0.0, %v1967
      %v1969 = vpop.f32.mrb[0].mxu0
      %v1970 = vpop.f32.mrb[0].mxu0
      %v1971 = vadd.f32 0.0, %v1970
      %v1972 = vpop.f32.mrb[0].mxu0
      %1973 = vmatprep.mubr.bf16.mxu0 0
      %1974 = vmatmul.mubr.bf16.gmra.mrb[0].mxu0 %v1738
      %v1975 = vpop.f32.mrb[0].mxu0
      %v1976 = vadd.f32 0.0, %v1975
      %v1977 = vpop.f32.mrb[0].mxu0
      %v1978 = vpop.f32.mrb[0].mxu0
      %v1979 = vadd.f32 0.0, %v1978
      %v1980 = vpop.f32.mrb[0].mxu0
      %1981 = vmatprep.mubr.bf16.mxu0 0
      %1982 = vmatmul.mubr.bf16.gmra.mrb[0].mxu0 %v1746
      %v1983 = vpop.f32.mrb[0].mxu0
      %v1984 = vadd.f32 0.0, %v1983
      %v1985 = vpop.f32.mrb[0].mxu0
      %v1986 = vpop.f32.mrb[0].mxu0
      %v1987 = vadd.f32 0.0, %v1986
      %v1988 = vpop.f32.mrb[0].mxu0
      %1989 = vmatprep.mubr.bf16.mxu0 0
      %1990 = vmatmul.mubr.bf16.gmra.mrb[0].mxu0 %v1754
      %v1991 = vpop.f32.mrb[0].mxu0
      %v1992 = vadd.f32 0.0, %v1991
      %v1993 = vpop.f32.mrb[0].mxu0
      %v1994 = vpop.f32.mrb[0].mxu0
      %v1995 = vadd.f32 0.0, %v1994
      %v1996 = vpop.f32.mrb[0].mxu0
      %1997 = vmatprep.mubr.bf16.mxu0 0
      %1998 = vmatmul.mubr.bf16.gmra.mrb[0].mxu0 %v1762
      %v1999 = vpop.f32.mrb[0].mxu0
      %v2000 = vadd.f32 0.0, %v1999
      %v2001 = vpop.f32.mrb[0].mxu0
      %v2002 = vpop.f32.mrb[0].mxu0
      %v2003 = vadd.f32 0.0, %v2002
      %v2004 = vpop.f32.mrb[0].mxu0
      %2005 = vmatprep.mubr.bf16.mxu0 0
      %2006 = vmatmul.mubr.bf16.gmra.mrb[0].mxu0 %v1770
      %v2007 = vpop.f32.mrb[0].mxu0
      %v2008 = vadd.f32 0.0, %v2007
      %v2009 = vpop.f32.mrb[0].mxu0
      %v2010 = vpop.f32.mrb[0].mxu0
      %v2011 = vadd.f32 0.0, %v2010
      %v2012 = vpop.f32.mrb[0].mxu0
      %2013 = vmatprep.mubr.bf16.mxu0 0
      %2014 = vmatmul.mubr.bf16.gmra.mrb[0].mxu0 %v1778
      %v2015 = vpop.f32.mrb[0].mxu0
      %v2016 = vadd.f32 0.0, %v2015
      %v2017 = vpop.f32.mrb[0].mxu0
      %v2018 = vpop.f32.mrb[0].mxu0
      %v2019 = vadd.f32 0.0, %v2018
      %v2020 = vpop.f32.mrb[0].mxu0
      %2021 = vmatprep.mubr.bf16.mxu0 0
      %2022 = vmatmul.mubr.bf16.gmra.mrb[0].mxu0 %v1786
      %v2023 = vpop.f32.mrb[0].mxu0
      %v2024 = vadd.f32 0.0, %v2023
      %v2025 = vpop.f32.mrb[0].mxu0
      %v2026 = vpop.f32.mrb[0].mxu0
      %v2027 = vadd.f32 0.0, %v2026
      %v2028 = vpop.f32.mrb[0].mxu0
      %2029 = vdwg.mxu0
      %v2030 = vadd.f32 %v1585, %v1888
      %v2031 = vadd.f32 %v1586, %v1891
      %v2032 = vadd.f32 %v1587, %v1896
      %v2033 = vadd.f32 %v1588, %v1899
      %v2034 = vadd.f32 %v1589, %v1904
      %v2035 = vadd.f32 %v1590, %v1907
      %v2036 = vadd.f32 %v1591, %v1912
      %v2037 = vadd.f32 %v1592, %v1915
      %v2038 = vadd.f32 %v1593, %v1920
      %v2039 = vadd.f32 %v1594, %v1923
      %v2040 = vadd.f32 %v1595, %v1928
      %v2041 = vadd.f32 %v1596, %v1931
      %v2042 = vadd.f32 %v1597, %v1936
      %v2043 = vadd.f32 %v1598, %v1939
      %v2044 = vadd.f32 %v1599, %v1944
      %v2045 = vadd.f32 %v1600, %v1947
      %v2046 = vadd.f32 %v1601, %v1952
      %v2047 = vadd.f32 %v1602, %v1955
      %v2048 = vadd.f32 %v1603, %v1960
      %v2049 = vadd.f32 %v1604, %v1963
      %v2050 = vadd.f32 %v1605, %v1968
      %v2051 = vadd.f32 %v1606, %v1971
      %v2052 = vadd.f32 %v1607, %v1976
      %v2053 = vadd.f32 %v1608, %v1979
      %v2054 = vadd.f32 %v1609, %v1984
      %v2055 = vadd.f32 %v1610, %v1987
      %v2056 = vadd.f32 %v1611, %v1992
      %v2057 = vadd.f32 %v1612, %v1995
      %v2058 = vadd.f32 %v1613, %v2000
      %v2059 = vadd.f32 %v1614, %v2003
      %v2060 = vadd.f32 %v1615, %v2008
      %v2061 = vadd.f32 %v1616, %v2011
      %v2062 = vadd.f32 %v1617, %v2016
      %v2063 = vadd.f32 %v1618, %v2019
      %v2064 = vadd.f32 %v1619, %v2024
      %v2065 = vadd.f32 %v1620, %v2027
      %2066 = vst [vmem:[#allocation3] sm:$0xff] %v2030
      %2067 = vst [vmem:[#allocation3 + $0x8] sm:$0xff] %v2031
      %2068 = vst [vmem:[#allocation3 + $0x10] sm:$0xff] %v2032
      %2069 = vst [vmem:[#allocation3 + $0x18] sm:$0xff] %v2033
      %2070 = vst [vmem:[#allocation3 + $0x20] sm:$0xff] %v2034
      %2071 = vst [vmem:[#allocation3 + $0x28] sm:$0xff] %v2035
      %2072 = vst [vmem:[#allocation3 + $0x30] sm:$0xff] %v2036
      %2073 = vst [vmem:[#allocation3 + $0x38] sm:$0xff] %v2037
      %2074 = vst [vmem:[#allocation3 + $0x40] sm:$0xff] %v2038
      %2075 = vst [vmem:[#allocation3 + $0x48] sm:$0xff] %v2039
      %2076 = vst [vmem:[#allocation3 + $0x50] sm:$0xff] %v2040
      %2077 = vst [vmem:[#allocation3 + $0x58] sm:$0xff] %v2041
      %2078 = vst [vmem:[#allocation3 + $0x60] sm:$0xff] %v2042
      %2079 = vst [vmem:[#allocation3 + $0x68] sm:$0xff] %v2043
      %2080 = vst [vmem:[#allocation3 + $0x70] sm:$0xff] %v2044
      %2081 = vst [vmem:[#allocation3 + $0x78] sm:$0xff] %v2045
      %2082 = vst [vmem:[#allocation3 + $0x80] sm:$0xff] %v2046
      %2083 = vst [vmem:[#allocation3 + $0x88] sm:$0xff] %v2047
      %2084 = vst [vmem:[#allocation3 + $0x90] sm:$0xff] %v2048
      %2085 = vst [vmem:[#allocation3 + $0x98] sm:$0xff] %v2049
      %2086 = vst [vmem:[#allocation3 + $0xa0] sm:$0xff] %v2050
      %2087 = vst [vmem:[#allocation3 + $0xa8] sm:$0xff] %v2051
      %2088 = vst [vmem:[#allocation3 + $0xb0] sm:$0xff] %v2052
      %2089 = vst [vmem:[#allocation3 + $0xb8] sm:$0xff] %v2053
      %2090 = vst [vmem:[#allocation3 + $0xc0] sm:$0xff] %v2054
      %2091 = vst [vmem:[#allocation3 + $0xc8] sm:$0xff] %v2055
      %2092 = vst [vmem:[#allocation3 + $0xd0] sm:$0xff] %v2056
      %2093 = vst [vmem:[#allocation3 + $0xd8] sm:$0xff] %v2057
      %2094 = vst [vmem:[#allocation3 + $0xe0] sm:$0xff] %v2058
      %2095 = vst [vmem:[#allocation3 + $0xe8] sm:$0xff] %v2059
      %2096 = vst [vmem:[#allocation3 + $0xf0] sm:$0xff] %v2060
      %2097 = vst [vmem:[#allocation3 + $0xf8] sm:$0xff] %v2061
      %2098 = vst [vmem:[#allocation3 + $0x100] sm:$0xff] %v2062
      %2099 = vst [vmem:[#allocation3 + $0x108] sm:$0xff] %v2063
      %2100 = vst [vmem:[#allocation3 + $0x110] sm:$0xff] %v2064
      %2101 = vst [vmem:[#allocation3 + $0x118] sm:$0xff] %v2065
      %v2102 = vld [vmem:[#allocation2 + $0x10] sm:$0xff]
      %v2103 = vld [vmem:[#allocation2 + $0x18] sm:$0xff]
      %v2104 = vld [vmem:[#allocation2 + $0x20] sm:$0xff]
      %v2105 = vld [vmem:[#allocation2 + $0x28] sm:$0xff]
      %v2106 = vld [vmem:[#allocation2 + $0x30] sm:$0xff]
      %v2107 = vld [vmem:[#allocation2 + $0x38] sm:$0xff]
      %v2108 = vld [vmem:[#allocation2 + $0x40] sm:$0xff]
      %v2109 = vld [vmem:[#allocation2 + $0x48] sm:$0xff]
      %v2110 = vld [vmem:[#allocation2 + $0x50] sm:$0xff]
      %v2111 = vld [vmem:[#allocation2 + $0x58] sm:$0xff]
      %v2112 = vld [vmem:[#allocation2 + $0x60] sm:$0xff]
      %v2113 = vld [vmem:[#allocation2 + $0x68] sm:$0xff]
      %v2114 = vld [vmem:[#allocation2 + $0x70] sm:$0xff]
      %v2115 = vld [vmem:[#allocation2 + $0x78] sm:$0xff]
      %v2116 = vld [vmem:[#allocation2 + $0x80] sm:$0xff]
      %v2117 = vld [vmem:[#allocation2 + $0x88] sm:$0xff]
      %v2118 = vld [vmem:[#allocation2 + $0x90] sm:$0xff]
      %v2119 = vld [vmem:[#allocation2 + $0x98] sm:$0xff]
      %v2120 = vld [vmem:[#allocation2 + $0xa0] sm:$0x1]
      %v2121 = vld [vmem:[#allocation3] sm:$0xff]
      %v2122 = vld [vmem:[#allocation3 + $0x8] sm:$0xff]
      %v2123 = vld [vmem:[#allocation3 + $0x10] sm:$0xff]
      %v2124 = vld [vmem:[#allocation3 + $0x18] sm:$0xff]
      %v2125 = vld [vmem:[#allocation3 + $0x20] sm:$0xff]
      %v2126 = vld [vmem:[#allocation3 + $0x28] sm:$0xff]
      %v2127 = vld [vmem:[#allocation3 + $0x30] sm:$0xff]
      %v2128 = vld [vmem:[#allocation3 + $0x38] sm:$0xff]
      %v2129 = vld [vmem:[#allocation3 + $0x40] sm:$0xff]
      %v2130 = vld [vmem:[#allocation3 + $0x48] sm:$0xff]
      %v2131 = vld [vmem:[#allocation3 + $0x50] sm:$0xff]
      %v2132 = vld [vmem:[#allocation3 + $0x58] sm:$0xff]
      %v2133 = vld [vmem:[#allocation3 + $0x60] sm:$0xff]
      %v2134 = vld [vmem:[#allocation3 + $0x68] sm:$0xff]
      %v2135 = vld [vmem:[#allocation3 + $0x70] sm:$0xff]
      %v2136 = vld [vmem:[#allocation3 + $0x78] sm:$0xff]
      %v2137 = vld [vmem:[#allocation3 + $0x80] sm:$0xff]
      %v2138 = vld [vmem:[#allocation3 + $0x88] sm:$0xff]
      %v2139 = vld [vmem:[#allocation3 + $0x90] sm:$0xff]
      %v2140 = vld [vmem:[#allocation3 + $0x98] sm:$0xff]
      %v2141 = vld [vmem:[#allocation3 + $0xa0] sm:$0xff]
      %v2142 = vld [vmem:[#allocation3 + $0xa8] sm:$0xff]
      %v2143 = vld [vmem:[#allocation3 + $0xb0] sm:$0xff]
      %v2144 = vld [vmem:[#allocation3 + $0xb8] sm:$0xff]
      %v2145 = vld [vmem:[#allocation3 + $0xc0] sm:$0xff]
      %v2146 = vld [vmem:[#allocation3 + $0xc8] sm:$0xff]
      %v2147 = vld [vmem:[#allocation3 + $0xd0] sm:$0xff]
      %v2148 = vld [vmem:[#allocation3 + $0xd8] sm:$0xff]
      %v2149 = vld [vmem:[#allocation3 + $0xe0] sm:$0xff]
      %v2150 = vld [vmem:[#allocation3 + $0xe8] sm:$0xff]
      %v2151 = vld [vmem:[#allocation3 + $0xf0] sm:$0xff]
      %v2152 = vld [vmem:[#allocation3 + $0xf8] sm:$0xff]
      %v2153 = vld [vmem:[#allocation3 + $0x100] sm:$0xff]
      %v2154 = vld [vmem:[#allocation3 + $0x108] sm:$0xff]
      %v2155 = vld [vmem:[#allocation3 + $0x110] sm:$0xff]
      %v2156 = vld [vmem:[#allocation3 + $0x118] sm:$0xff]
      %s2157 = scalar_lea.vmem %s3, 192
      %v2158 = vld [vmem:[%s2157] sm:$0xf]
      %v2159 = vld [vmem:[%s2157 + $0x4] sm:$0xf]
      %v2160 = vld [vmem:[%s2157 + $0x8] sm:$0xf]
      %v2161 = vld [vmem:[%s2157 + $0xc] sm:$0xf]
      %v2162 = vld [vmem:[%s2157 + $0x10] sm:$0xf]
      %v2163 = vld [vmem:[%s2157 + $0x14] sm:$0xf]
      %v2164 = vld [vmem:[%s2157 + $0x18] sm:$0xf]
      %v2165 = vld [vmem:[%s2157 + $0x1c] sm:$0xf]
      %v2166 = vld [vmem:[%s2157 + $0x20] sm:$0xf]
      %v2167 = vld [vmem:[%s2157 + $0x24] sm:$0xf]
      %v2168 = vld [vmem:[%s2157 + $0x28] sm:$0xf]
      %v2169 = vld [vmem:[%s2157 + $0x2c] sm:$0xf]
      %v2170 = vld [vmem:[%s2157 + $0x30] sm:$0xf]
      %v2171 = vld [vmem:[%s2157 + $0x34] sm:$0xf]
      %v2172 = vld [vmem:[%s2157 + $0x38] sm:$0xf]
      %v2173 = vld [vmem:[%s2157 + $0x3c] sm:$0xf]
      %v2175 = vshrl.u32 %v2102, 16
      %v2177 = vshll.u32 %v2102, 16
      %v2179 = vrot.slane %v2177, 1
      %v2180 = vor.u32 %v2175, %v2179
      %v2182 = vshll.u32 %v2103, 16
      %v2184 = vrot.slane %v2182, 1
      %v2185 = vsel %vm1638, %v2180, %v2184
      %v2186 = vshrl.u32 %v2103, 16
      %v2188 = vor.u32 %v2186, %v2184
      %v2190 = vshll.u32 %v2104, 16
      %v2192 = vrot.slane %v2190, 1
      %v2193 = vsel %vm1638, %v2188, %v2192
      %v2194 = vshrl.u32 %v2104, 16
      %v2196 = vor.u32 %v2194, %v2192
      %v2198 = vshll.u32 %v2105, 16
      %v2200 = vrot.slane %v2198, 1
      %v2201 = vsel %vm1638, %v2196, %v2200
      %v2202 = vshrl.u32 %v2105, 16
      %v2204 = vor.u32 %v2202, %v2200
      %v2206 = vshll.u32 %v2106, 16
      %v2208 = vrot.slane %v2206, 1
      %v2209 = vsel %vm1638, %v2204, %v2208
      %v2210 = vshrl.u32 %v2106, 16
      %v2212 = vor.u32 %v2210, %v2208
      %v2214 = vshll.u32 %v2107, 16
      %v2216 = vrot.slane %v2214, 1
      %v2217 = vsel %vm1638, %v2212, %v2216
      %v2218 = vshrl.u32 %v2107, 16
      %v2220 = vor.u32 %v2218, %v2216
      %v2222 = vshll.u32 %v2108, 16
      %v2224 = vrot.slane %v2222, 1
      %v2225 = vsel %vm1638, %v2220, %v2224
      %v2226 = vshrl.u32 %v2108, 16
      %v2228 = vor.u32 %v2226, %v2224
      %v2230 = vshll.u32 %v2109, 16
      %v2232 = vrot.slane %v2230, 1
      %v2233 = vsel %vm1638, %v2228, %v2232
      %v2234 = vshrl.u32 %v2109, 16
      %v2236 = vor.u32 %v2234, %v2232
      %v2238 = vshll.u32 %v2110, 16
      %v2240 = vrot.slane %v2238, 1
      %v2241 = vsel %vm1638, %v2236, %v2240
      %v2242 = vshrl.u32 %v2110, 16
      %v2244 = vor.u32 %v2242, %v2240
      %v2246 = vshll.u32 %v2111, 16
      %v2248 = vrot.slane %v2246, 1
      %v2249 = vsel %vm1638, %v2244, %v2248
      %v2250 = vshrl.u32 %v2111, 16
      %v2252 = vor.u32 %v2250, %v2248
      %v2254 = vshll.u32 %v2112, 16
      %v2256 = vrot.slane %v2254, 1
      %v2257 = vsel %vm1638, %v2252, %v2256
      %v2258 = vshrl.u32 %v2112, 16
      %v2260 = vor.u32 %v2258, %v2256
      %v2262 = vshll.u32 %v2113, 16
      %v2264 = vrot.slane %v2262, 1
      %v2265 = vsel %vm1638, %v2260, %v2264
      %v2266 = vshrl.u32 %v2113, 16
      %v2268 = vor.u32 %v2266, %v2264
      %v2270 = vshll.u32 %v2114, 16
      %v2272 = vrot.slane %v2270, 1
      %v2273 = vsel %vm1638, %v2268, %v2272
      %v2274 = vshrl.u32 %v2114, 16
      %v2276 = vor.u32 %v2274, %v2272
      %v2278 = vshll.u32 %v2115, 16
      %v2280 = vrot.slane %v2278, 1
      %v2281 = vsel %vm1638, %v2276, %v2280
      %v2282 = vshrl.u32 %v2115, 16
      %v2284 = vor.u32 %v2282, %v2280
      %v2286 = vshll.u32 %v2116, 16
      %v2288 = vrot.slane %v2286, 1
      %v2289 = vsel %vm1638, %v2284, %v2288
      %v2290 = vshrl.u32 %v2116, 16
      %v2292 = vor.u32 %v2290, %v2288
      %v2294 = vshll.u32 %v2117, 16
      %v2296 = vrot.slane %v2294, 1
      %v2297 = vsel %vm1638, %v2292, %v2296
      %v2298 = vshrl.u32 %v2117, 16
      %v2300 = vor.u32 %v2298, %v2296
      %v2302 = vshll.u32 %v2118, 16
      %v2304 = vrot.slane %v2302, 1
      %v2305 = vsel %vm1638, %v2300, %v2304
      %v2306 = vshrl.u32 %v2118, 16
      %v2308 = vor.u32 %v2306, %v2304
      %v2310 = vshll.u32 %v2119, 16
      %v2312 = vrot.slane %v2310, 1
      %v2313 = vsel %vm1638, %v2308, %v2312
      %v2314 = vshrl.u32 %v2119, 16
      %v2316 = vor.u32 %v2314, %v2312
      %v2318 = vshll.u32 %v2120, 16
      %v2320 = vrot.slane %v2318, 1
      %v2321 = vsel %vm1638, %v2316, %v2320
      %v2356 = vunpack.c.l.b16 %v2158
      %v2357 = vunpack.c.l.b16 %v2159
      %v2358 = vunpack.c.l.b16 %v2160
      %v2359 = vunpack.c.l.b16 %v2161
      %v2360 = vunpack.c.l.b16 %v2162
      %v2361 = vunpack.c.l.b16 %v2163
      %v2362 = vunpack.c.l.b16 %v2164
      %v2363 = vunpack.c.l.b16 %v2165
      %v2364 = vunpack.c.l.b16 %v2166
      %v2365 = vunpack.c.l.b16 %v2167
      %v2366 = vunpack.c.l.b16 %v2168
      %v2367 = vunpack.c.l.b16 %v2169
      %v2368 = vunpack.c.l.b16 %v2170
      %v2369 = vunpack.c.l.b16 %v2171
      %v2370 = vunpack.c.l.b16 %v2172
      %v2371 = vunpack.c.l.b16 %v2173
      %v2372 = vpack.c.b16 %v2357, %v2356
      %v2373 = vpack.c.b16 %v2359, %v2358
      %v2374 = vpack.c.b16 %v2361, %v2360
      %v2375 = vpack.c.b16 %v2363, %v2362
      %v2376 = vpack.c.b16 %v2365, %v2364
      %v2377 = vpack.c.b16 %v2367, %v2366
      %v2378 = vpack.c.b16 %v2369, %v2368
      %v2379 = vpack.c.b16 %v2371, %v2370
      %2388 = vmatprep.subr.bf16.mxu0 0
      %2389 = vmatpush1.bf16.msra.mxu0 %v2372
      %2390 = vmatprep.subr.bf16.mxu0 0
      %2391 = vmatpush1.bf16.msra.mxu0 %v2373
      %2392 = vmatprep.subr.bf16.mxu0 0
      %2393 = vmatpush1.bf16.msra.mxu0 %v2374
      %2394 = vmatprep.subr.bf16.mxu0 0
      %2395 = vmatpush1.bf16.msra.mxu0 %v2375
      %2396 = vmatprep.subr.bf16.mxu0 0
      %2397 = vmatpush1.bf16.msra.mxu0 %v2376
      %2398 = vmatprep.subr.bf16.mxu0 0
      %2399 = vmatpush1.bf16.msra.mxu0 %v2377
      %2400 = vmatprep.subr.bf16.mxu0 0
      %2401 = vmatpush1.bf16.msra.mxu0 %v2378
      %2402 = vmatprep.subr.bf16.mxu0 0
      %2403 = vmatpush1.bf16.msra.mxu0 %v2379
      %2404 = vmatprep.subr.bf16.mxu0 0
      %2405 = vmatpush1.bf16.msra.mxu0 0
      %2406 = vmatprep.subr.bf16.mxu0 0
      %2407 = vmatpush1.bf16.msra.mxu0 0
      %2408 = vmatprep.subr.bf16.mxu0 0
      %2409 = vmatpush1.bf16.msra.mxu0 0
      %2410 = vmatprep.subr.bf16.mxu0 0
      %2411 = vmatpush1.bf16.msra.mxu0 0
      %2412 = vmatprep.subr.bf16.mxu0 0
      %2413 = vmatpush1.bf16.msra.mxu0 0
      %2414 = vmatprep.subr.bf16.mxu0 0
      %2415 = vmatpush1.bf16.msra.mxu0 0
      %2416 = vmatprep.subr.bf16.mxu0 0
      %2417 = vmatpush1.bf16.msra.mxu0 0
      %2418 = vmatprep.subr.bf16.mxu0 0
      %2419 = vmatpush1.bf16.msra.mxu0 0
      %2420 = vmatprep.mubr.bf16.mxu0 0
      %2421 = vmatmul.mubr.bf16.gmra.mrb[0].mxu0 %v2185
      %v2422 = vpop.f32.mrb[0].mxu0
      %v2423 = vadd.f32 0.0, %v2422
      %v2424 = vpop.f32.mrb[0].mxu0
      %v2425 = vpop.f32.mrb[0].mxu0
      %v2426 = vadd.f32 0.0, %v2425
      %v2427 = vpop.f32.mrb[0].mxu0
      %2428 = vmatprep.mubr.bf16.mxu0 0
      %2429 = vmatmul.mubr.bf16.gmra.mrb[0].mxu0 %v2193
      %v2430 = vpop.f32.mrb[0].mxu0
      %v2431 = vadd.f32 0.0, %v2430
      %v2432 = vpop.f32.mrb[0].mxu0
      %v2433 = vpop.f32.mrb[0].mxu0
      %v2434 = vadd.f32 0.0, %v2433
      %v2435 = vpop.f32.mrb[0].mxu0
      %2436 = vmatprep.mubr.bf16.mxu0 0
      %2437 = vmatmul.mubr.bf16.gmra.mrb[0].mxu0 %v2201
      %v2438 = vpop.f32.mrb[0].mxu0
      %v2439 = vadd.f32 0.0, %v2438
      %v2440 = vpop.f32.mrb[0].mxu0
      %v2441 = vpop.f32.mrb[0].mxu0
      %v2442 = vadd.f32 0.0, %v2441
      %v2443 = vpop.f32.mrb[0].mxu0
      %2444 = vmatprep.mubr.bf16.mxu0 0
      %2445 = vmatmul.mubr.bf16.gmra.mrb[0].mxu0 %v2209
      %v2446 = vpop.f32.mrb[0].mxu0
      %v2447 = vadd.f32 0.0, %v2446
      %v2448 = vpop.f32.mrb[0].mxu0
      %v2449 = vpop.f32.mrb[0].mxu0
      %v2450 = vadd.f32 0.0, %v2449
      %v2451 = vpop.f32.mrb[0].mxu0
      %2452 = vmatprep.mubr.bf16.mxu0 0
      %2453 = vmatmul.mubr.bf16.gmra.mrb[0].mxu0 %v2217
      %v2454 = vpop.f32.mrb[0].mxu0
      %v2455 = vadd.f32 0.0, %v2454
      %v2456 = vpop.f32.mrb[0].mxu0
      %v2457 = vpop.f32.mrb[0].mxu0
      %v2458 = vadd.f32 0.0, %v2457
      %v2459 = vpop.f32.mrb[0].mxu0
      %2460 = vmatprep.mubr.bf16.mxu0 0
      %2461 = vmatmul.mubr.bf16.gmra.mrb[0].mxu0 %v2225
      %v2462 = vpop.f32.mrb[0].mxu0
      %v2463 = vadd.f32 0.0, %v2462
      %v2464 = vpop.f32.mrb[0].mxu0
      %v2465 = vpop.f32.mrb[0].mxu0
      %v2466 = vadd.f32 0.0, %v2465
      %v2467 = vpop.f32.mrb[0].mxu0
      %2468 = vmatprep.mubr.bf16.mxu0 0
      %2469 = vmatmul.mubr.bf16.gmra.mrb[0].mxu0 %v2233
      %v2470 = vpop.f32.mrb[0].mxu0
      %v2471 = vadd.f32 0.0, %v2470
      %v2472 = vpop.f32.mrb[0].mxu0
      %v2473 = vpop.f32.mrb[0].mxu0
      %v2474 = vadd.f32 0.0, %v2473
      %v2475 = vpop.f32.mrb[0].mxu0
      %2476 = vmatprep.mubr.bf16.mxu0 0
      %2477 = vmatmul.mubr.bf16.gmra.mrb[0].mxu0 %v2241
      %v2478 = vpop.f32.mrb[0].mxu0
      %v2479 = vadd.f32 0.0, %v2478
      %v2480 = vpop.f32.mrb[0].mxu0
      %v2481 = vpop.f32.mrb[0].mxu0
      %v2482 = vadd.f32 0.0, %v2481
      %v2483 = vpop.f32.mrb[0].mxu0
      %2484 = vmatprep.mubr.bf16.mxu0 0
      %2485 = vmatmul.mubr.bf16.gmra.mrb[0].mxu0 %v2249
      %v2486 = vpop.f32.mrb[0].mxu0
      %v2487 = vadd.f32 0.0, %v2486
      %v2488 = vpop.f32.mrb[0].mxu0
      %v2489 = vpop.f32.mrb[0].mxu0
      %v2490 = vadd.f32 0.0, %v2489
      %v2491 = vpop.f32.mrb[0].mxu0
      %2492 = vmatprep.mubr.bf16.mxu0 0
      %2493 = vmatmul.mubr.bf16.gmra.mrb[0].mxu0 %v2257
      %v2494 = vpop.f32.mrb[0].mxu0
      %v2495 = vadd.f32 0.0, %v2494
      %v2496 = vpop.f32.mrb[0].mxu0
      %v2497 = vpop.f32.mrb[0].mxu0
      %v2498 = vadd.f32 0.0, %v2497
      %v2499 = vpop.f32.mrb[0].mxu0
      %2500 = vmatprep.mubr.bf16.mxu0 0
      %2501 = vmatmul.mubr.bf16.gmra.mrb[0].mxu0 %v2265
      %v2502 = vpop.f32.mrb[0].mxu0
      %v2503 = vadd.f32 0.0, %v2502
      %v2504 = vpop.f32.mrb[0].mxu0
      %v2505 = vpop.f32.mrb[0].mxu0
      %v2506 = vadd.f32 0.0, %v2505
      %v2507 = vpop.f32.mrb[0].mxu0
      %2508 = vmatprep.mubr.bf16.mxu0 0
      %2509 = vmatmul.mubr.bf16.gmra.mrb[0].mxu0 %v2273
      %v2510 = vpop.f32.mrb[0].mxu0
      %v2511 = vadd.f32 0.0, %v2510
      %v2512 = vpop.f32.mrb[0].mxu0
      %v2513 = vpop.f32.mrb[0].mxu0
      %v2514 = vadd.f32 0.0, %v2513
      %v2515 = vpop.f32.mrb[0].mxu0
      %2516 = vmatprep.mubr.bf16.mxu0 0
      %2517 = vmatmul.mubr.bf16.gmra.mrb[0].mxu0 %v2281
      %v2518 = vpop.f32.mrb[0].mxu0
      %v2519 = vadd.f32 0.0, %v2518
      %v2520 = vpop.f32.mrb[0].mxu0
      %v2521 = vpop.f32.mrb[0].mxu0
      %v2522 = vadd.f32 0.0, %v2521
      %v2523 = vpop.f32.mrb[0].mxu0
      %2524 = vmatprep.mubr.bf16.mxu0 0
      %2525 = vmatmul.mubr.bf16.gmra.mrb[0].mxu0 %v2289
      %v2526 = vpop.f32.mrb[0].mxu0
      %v2527 = vadd.f32 0.0, %v2526
      %v2528 = vpop.f32.mrb[0].mxu0
      %v2529 = vpop.f32.mrb[0].mxu0
      %v2530 = vadd.f32 0.0, %v2529
      %v2531 = vpop.f32.mrb[0].mxu0
      %2532 = vmatprep.mubr.bf16.mxu0 0
      %2533 = vmatmul.mubr.bf16.gmra.mrb[0].mxu0 %v2297
      %v2534 = vpop.f32.mrb[0].mxu0
      %v2535 = vadd.f32 0.0, %v2534
      %v2536 = vpop.f32.mrb[0].mxu0
      %v2537 = vpop.f32.mrb[0].mxu0
      %v2538 = vadd.f32 0.0, %v2537
      %v2539 = vpop.f32.mrb[0].mxu0
      %2540 = vmatprep.mubr.bf16.mxu0 0
      %2541 = vmatmul.mubr.bf16.gmra.mrb[0].mxu0 %v2305
      %v2542 = vpop.f32.mrb[0].mxu0
      %v2543 = vadd.f32 0.0, %v2542
      %v2544 = vpop.f32.mrb[0].mxu0
      %v2545 = vpop.f32.mrb[0].mxu0
      %v2546 = vadd.f32 0.0, %v2545
      %v2547 = vpop.f32.mrb[0].mxu0
      %2548 = vmatprep.mubr.bf16.mxu0 0
      %2549 = vmatmul.mubr.bf16.gmra.mrb[0].mxu0 %v2313
      %v2550 = vpop.f32.mrb[0].mxu0
      %v2551 = vadd.f32 0.0, %v2550
      %v2552 = vpop.f32.mrb[0].mxu0
      %v2553 = vpop.f32.mrb[0].mxu0
      %v2554 = vadd.f32 0.0, %v2553
      %v2555 = vpop.f32.mrb[0].mxu0
      %2556 = vmatprep.mubr.bf16.mxu0 0
      %2557 = vmatmul.mubr.bf16.gmra.mrb[0].mxu0 %v2321
      %v2558 = vpop.f32.mrb[0].mxu0
      %v2559 = vadd.f32 0.0, %v2558
      %v2560 = vpop.f32.mrb[0].mxu0
      %v2561 = vpop.f32.mrb[0].mxu0
      %v2562 = vadd.f32 0.0, %v2561
      %v2563 = vpop.f32.mrb[0].mxu0
      %2564 = vdwg.mxu0
      %v2565 = vadd.f32 %v2121, %v2423
      %v2566 = vadd.f32 %v2122, %v2426
      %v2567 = vadd.f32 %v2123, %v2431
      %v2568 = vadd.f32 %v2124, %v2434
      %v2569 = vadd.f32 %v2125, %v2439
      %v2570 = vadd.f32 %v2126, %v2442
      %v2571 = vadd.f32 %v2127, %v2447
      %v2572 = vadd.f32 %v2128, %v2450
      %v2573 = vadd.f32 %v2129, %v2455
      %v2574 = vadd.f32 %v2130, %v2458
      %v2575 = vadd.f32 %v2131, %v2463
      %v2576 = vadd.f32 %v2132, %v2466
      %v2577 = vadd.f32 %v2133, %v2471
      %v2578 = vadd.f32 %v2134, %v2474
      %v2579 = vadd.f32 %v2135, %v2479
      %v2580 = vadd.f32 %v2136, %v2482
      %v2581 = vadd.f32 %v2137, %v2487
      %v2582 = vadd.f32 %v2138, %v2490
      %v2583 = vadd.f32 %v2139, %v2495
      %v2584 = vadd.f32 %v2140, %v2498
      %v2585 = vadd.f32 %v2141, %v2503
      %v2586 = vadd.f32 %v2142, %v2506
      %v2587 = vadd.f32 %v2143, %v2511
      %v2588 = vadd.f32 %v2144, %v2514
      %v2589 = vadd.f32 %v2145, %v2519
      %v2590 = vadd.f32 %v2146, %v2522
      %v2591 = vadd.f32 %v2147, %v2527
      %v2592 = vadd.f32 %v2148, %v2530
      %v2593 = vadd.f32 %v2149, %v2535
      %v2594 = vadd.f32 %v2150, %v2538
      %v2595 = vadd.f32 %v2151, %v2543
      %v2596 = vadd.f32 %v2152, %v2546
      %v2597 = vadd.f32 %v2153, %v2551
      %v2598 = vadd.f32 %v2154, %v2554
      %v2599 = vadd.f32 %v2155, %v2559
      %v2600 = vadd.f32 %v2156, %v2562
      %2601 = vst [vmem:[#allocation3] sm:$0xff] %v2565
      %2602 = vst [vmem:[#allocation3 + $0x8] sm:$0xff] %v2566
      %2603 = vst [vmem:[#allocation3 + $0x10] sm:$0xff] %v2567
      %2604 = vst [vmem:[#allocation3 + $0x18] sm:$0xff] %v2568
      %2605 = vst [vmem:[#allocation3 + $0x20] sm:$0xff] %v2569
      %2606 = vst [vmem:[#allocation3 + $0x28] sm:$0xff] %v2570
      %2607 = vst [vmem:[#allocation3 + $0x30] sm:$0xff] %v2571
      %2608 = vst [vmem:[#allocation3 + $0x38] sm:$0xff] %v2572
      %2609 = vst [vmem:[#allocation3 + $0x40] sm:$0xff] %v2573
      %2610 = vst [vmem:[#allocation3 + $0x48] sm:$0xff] %v2574
      %2611 = vst [vmem:[#allocation3 + $0x50] sm:$0xff] %v2575
      %2612 = vst [vmem:[#allocation3 + $0x58] sm:$0xff] %v2576
      %2613 = vst [vmem:[#allocation3 + $0x60] sm:$0xff] %v2577
      %2614 = vst [vmem:[#allocation3 + $0x68] sm:$0xff] %v2578
      %2615 = vst [vmem:[#allocation3 + $0x70] sm:$0xff] %v2579
      %2616 = vst [vmem:[#allocation3 + $0x78] sm:$0xff] %v2580
      %2617 = vst [vmem:[#allocation3 + $0x80] sm:$0xff] %v2581
      %2618 = vst [vmem:[#allocation3 + $0x88] sm:$0xff] %v2582
      %2619 = vst [vmem:[#allocation3 + $0x90] sm:$0xff] %v2583
      %2620 = vst [vmem:[#allocation3 + $0x98] sm:$0xff] %v2584
      %2621 = vst [vmem:[#allocation3 + $0xa0] sm:$0xff] %v2585
      %2622 = vst [vmem:[#allocation3 + $0xa8] sm:$0xff] %v2586
      %2623 = vst [vmem:[#allocation3 + $0xb0] sm:$0xff] %v2587
      %2624 = vst [vmem:[#allocation3 + $0xb8] sm:$0xff] %v2588
      %2625 = vst [vmem:[#allocation3 + $0xc0] sm:$0xff] %v2589
      %2626 = vst [vmem:[#allocation3 + $0xc8] sm:$0xff] %v2590
      %2627 = vst [vmem:[#allocation3 + $0xd0] sm:$0xff] %v2591
      %2628 = vst [vmem:[#allocation3 + $0xd8] sm:$0xff] %v2592
      %2629 = vst [vmem:[#allocation3 + $0xe0] sm:$0xff] %v2593
      %2630 = vst [vmem:[#allocation3 + $0xe8] sm:$0xff] %v2594
      %2631 = vst [vmem:[#allocation3 + $0xf0] sm:$0xff] %v2595
      %2632 = vst [vmem:[#allocation3 + $0xf8] sm:$0xff] %v2596
      %2633 = vst [vmem:[#allocation3 + $0x100] sm:$0xff] %v2597
      %2634 = vst [vmem:[#allocation3 + $0x108] sm:$0xff] %v2598
      %2635 = vst [vmem:[#allocation3 + $0x110] sm:$0xff] %v2599
      %2636 = vst [vmem:[#allocation3 + $0x118] sm:$0xff] %v2600
      %v2637 = vld [vmem:[#allocation2 + $0x10] sm:$0xfe]
      %v2638 = vld [vmem:[#allocation2 + $0x18] sm:$0xff]
      %v2639 = vld [vmem:[#allocation2 + $0x20] sm:$0xff]
      %v2640 = vld [vmem:[#allocation2 + $0x28] sm:$0xff]
      %v2641 = vld [vmem:[#allocation2 + $0x30] sm:$0xff]
      %v2642 = vld [vmem:[#allocation2 + $0x38] sm:$0xff]
      %v2643 = vld [vmem:[#allocation2 + $0x40] sm:$0xff]
      %v2644 = vld [vmem:[#allocation2 + $0x48] sm:$0xff]
      %v2645 = vld [vmem:[#allocation2 + $0x50] sm:$0xff]
      %v2646 = vld [vmem:[#allocation2 + $0x58] sm:$0xff]
      %v2647 = vld [vmem:[#allocation2 + $0x60] sm:$0xff]
      %v2648 = vld [vmem:[#allocation2 + $0x68] sm:$0xff]
      %v2649 = vld [vmem:[#allocation2 + $0x70] sm:$0xff]
      %v2650 = vld [vmem:[#allocation2 + $0x78] sm:$0xff]
      %v2651 = vld [vmem:[#allocation2 + $0x80] sm:$0xff]
      %v2652 = vld [vmem:[#allocation2 + $0x88] sm:$0xff]
      %v2653 = vld [vmem:[#allocation2 + $0x90] sm:$0xff]
      %v2654 = vld [vmem:[#allocation2 + $0x98] sm:$0xff]
      %v2655 = vld [vmem:[#allocation2 + $0xa0] sm:$0x1]
      %v2656 = vld [vmem:[#allocation3] sm:$0xff]
      %v2657 = vld [vmem:[#allocation3 + $0x8] sm:$0xff]
      %v2658 = vld [vmem:[#allocation3 + $0x10] sm:$0xff]
      %v2659 = vld [vmem:[#allocation3 + $0x18] sm:$0xff]
      %v2660 = vld [vmem:[#allocation3 + $0x20] sm:$0xff]
      %v2661 = vld [vmem:[#allocation3 + $0x28] sm:$0xff]
      %v2662 = vld [vmem:[#allocation3 + $0x30] sm:$0xff]
      %v2663 = vld [vmem:[#allocation3 + $0x38] sm:$0xff]
      %v2664 = vld [vmem:[#allocation3 + $0x40] sm:$0xff]
      %v2665 = vld [vmem:[#allocation3 + $0x48] sm:$0xff]
      %v2666 = vld [vmem:[#allocation3 + $0x50] sm:$0xff]
      %v2667 = vld [vmem:[#allocation3 + $0x58] sm:$0xff]
      %v2668 = vld [vmem:[#allocation3 + $0x60] sm:$0xff]
      %v2669 = vld [vmem:[#allocation3 + $0x68] sm:$0xff]
      %v2670 = vld [vmem:[#allocation3 + $0x70] sm:$0xff]
      %v2671 = vld [vmem:[#allocation3 + $0x78] sm:$0xff]
      %v2672 = vld [vmem:[#allocation3 + $0x80] sm:$0xff]
      %v2673 = vld [vmem:[#allocation3 + $0x88] sm:$0xff]
      %v2674 = vld [vmem:[#allocation3 + $0x90] sm:$0xff]
      %v2675 = vld [vmem:[#allocation3 + $0x98] sm:$0xff]
      %v2676 = vld [vmem:[#allocation3 + $0xa0] sm:$0xff]
      %v2677 = vld [vmem:[#allocation3 + $0xa8] sm:$0xff]
      %v2678 = vld [vmem:[#allocation3 + $0xb0] sm:$0xff]
      %v2679 = vld [vmem:[#allocation3 + $0xb8] sm:$0xff]
      %v2680 = vld [vmem:[#allocation3 + $0xc0] sm:$0xff]
      %v2681 = vld [vmem:[#allocation3 + $0xc8] sm:$0xff]
      %v2682 = vld [vmem:[#allocation3 + $0xd0] sm:$0xff]
      %v2683 = vld [vmem:[#allocation3 + $0xd8] sm:$0xff]
      %v2684 = vld [vmem:[#allocation3 + $0xe0] sm:$0xff]
      %v2685 = vld [vmem:[#allocation3 + $0xe8] sm:$0xff]
      %v2686 = vld [vmem:[#allocation3 + $0xf0] sm:$0xff]
      %v2687 = vld [vmem:[#allocation3 + $0xf8] sm:$0xff]
      %v2688 = vld [vmem:[#allocation3 + $0x100] sm:$0xff]
      %v2689 = vld [vmem:[#allocation3 + $0x108] sm:$0xff]
      %v2690 = vld [vmem:[#allocation3 + $0x110] sm:$0xff]
      %v2691 = vld [vmem:[#allocation3 + $0x118] sm:$0xff]
      %s2692 = scalar_lea.vmem %s3, 256
      %v2693 = vld [vmem:[%s2692] sm:$0xf]
      %v2694 = vld [vmem:[%s2692 + $0x4] sm:$0xf]
      %v2695 = vld [vmem:[%s2692 + $0x8] sm:$0xf]
      %v2696 = vld [vmem:[%s2692 + $0xc] sm:$0xf]
      %v2697 = vld [vmem:[%s2692 + $0x10] sm:$0xf]
      %v2698 = vld [vmem:[%s2692 + $0x14] sm:$0xf]
      %v2699 = vld [vmem:[%s2692 + $0x18] sm:$0xf]
      %v2700 = vld [vmem:[%s2692 + $0x1c] sm:$0xf]
      %v2701 = vld [vmem:[%s2692 + $0x20] sm:$0xf]
      %v2702 = vld [vmem:[%s2692 + $0x24] sm:$0xf]
      %v2703 = vld [vmem:[%s2692 + $0x28] sm:$0xf]
      %v2704 = vld [vmem:[%s2692 + $0x2c] sm:$0xf]
      %v2705 = vld [vmem:[%s2692 + $0x30] sm:$0xf]
      %v2706 = vld [vmem:[%s2692 + $0x34] sm:$0xf]
      %v2707 = vld [vmem:[%s2692 + $0x38] sm:$0xf]
      %v2708 = vld [vmem:[%s2692 + $0x3c] sm:$0xf]
      %vm2728 = vcmask 1046528
      %v2729 = vrot.slane %v2637, 1
      %v2730 = vrot.slane %v2638, 1
      %v2731 = vsel %vm2728, %v2729, %v2730
      %v2732 = vrot.slane %v2639, 1
      %v2733 = vsel %vm2728, %v2730, %v2732
      %v2734 = vrot.slane %v2640, 1
      %v2735 = vsel %vm2728, %v2732, %v2734
      %v2736 = vrot.slane %v2641, 1
      %v2737 = vsel %vm2728, %v2734, %v2736
      %v2738 = vrot.slane %v2642, 1
      %v2739 = vsel %vm2728, %v2736, %v2738
      %v2740 = vrot.slane %v2643, 1
      %v2741 = vsel %vm2728, %v2738, %v2740
      %v2742 = vrot.slane %v2644, 1
      %v2743 = vsel %vm2728, %v2740, %v2742
      %v2744 = vrot.slane %v2645, 1
      %v2745 = vsel %vm2728, %v2742, %v2744
      %v2746 = vrot.slane %v2646, 1
      %v2747 = vsel %vm2728, %v2744, %v2746
      %v2748 = vrot.slane %v2647, 1
      %v2749 = vsel %vm2728, %v2746, %v2748
      %v2750 = vrot.slane %v2648, 1
      %v2751 = vsel %vm2728, %v2748, %v2750
      %v2752 = vrot.slane %v2649, 1
      %v2753 = vsel %vm2728, %v2750, %v2752
      %v2754 = vrot.slane %v2650, 1
      %v2755 = vsel %vm2728, %v2752, %v2754
      %v2756 = vrot.slane %v2651, 1
      %v2757 = vsel %vm2728, %v2754, %v2756
      %v2758 = vrot.slane %v2652, 1
      %v2759 = vsel %vm2728, %v2756, %v2758
      %v2760 = vrot.slane %v2653, 1
      %v2761 = vsel %vm2728, %v2758, %v2760
      %v2762 = vrot.slane %v2654, 1
      %v2763 = vsel %vm2728, %v2760, %v2762
      %v2764 = vrot.slane %v2655, 1
      %v2765 = vsel %vm2728, %v2762, %v2764
      %v2800 = vunpack.c.l.b16 %v2693
      %v2801 = vunpack.c.l.b16 %v2694
      %v2802 = vunpack.c.l.b16 %v2695
      %v2803 = vunpack.c.l.b16 %v2696
      %v2804 = vunpack.c.l.b16 %v2697
      %v2805 = vunpack.c.l.b16 %v2698
      %v2806 = vunpack.c.l.b16 %v2699
      %v2807 = vunpack.c.l.b16 %v2700
      %v2808 = vunpack.c.l.b16 %v2701
      %v2809 = vunpack.c.l.b16 %v2702
      %v2810 = vunpack.c.l.b16 %v2703
      %v2811 = vunpack.c.l.b16 %v2704
      %v2812 = vunpack.c.l.b16 %v2705
      %v2813 = vunpack.c.l.b16 %v2706
      %v2814 = vunpack.c.l.b16 %v2707
      %v2815 = vunpack.c.l.b16 %v2708
      %v2816 = vpack.c.b16 %v2801, %v2800
      %v2817 = vpack.c.b16 %v2803, %v2802
      %v2818 = vpack.c.b16 %v2805, %v2804
      %v2819 = vpack.c.b16 %v2807, %v2806
      %v2820 = vpack.c.b16 %v2809, %v2808
      %v2821 = vpack.c.b16 %v2811, %v2810
      %v2822 = vpack.c.b16 %v2813, %v2812
      %v2823 = vpack.c.b16 %v2815, %v2814
      %2832 = vmatprep.subr.bf16.mxu0 0
      %2833 = vmatpush1.bf16.msra.mxu0 %v2816
      %2834 = vmatprep.subr.bf16.mxu0 0
      %2835 = vmatpush1.bf16.msra.mxu0 %v2817
      %2836 = vmatprep.subr.bf16.mxu0 0
      %2837 = vmatpush1.bf16.msra.mxu0 %v2818
      %2838 = vmatprep.subr.bf16.mxu0 0
      %2839 = vmatpush1.bf16.msra.mxu0 %v2819
      %2840 = vmatprep.subr.bf16.mxu0 0
      %2841 = vmatpush1.bf16.msra.mxu0 %v2820
      %2842 = vmatprep.subr.bf16.mxu0 0
      %2843 = vmatpush1.bf16.msra.mxu0 %v2821
      %2844 = vmatprep.subr.bf16.mxu0 0
      %2845 = vmatpush1.bf16.msra.mxu0 %v2822
      %2846 = vmatprep.subr.bf16.mxu0 0
      %2847 = vmatpush1.bf16.msra.mxu0 %v2823
      %2848 = vmatprep.subr.bf16.mxu0 0
      %2849 = vmatpush1.bf16.msra.mxu0 0
      %2850 = vmatprep.subr.bf16.mxu0 0
      %2851 = vmatpush1.bf16.msra.mxu0 0
      %2852 = vmatprep.subr.bf16.mxu0 0
      %2853 = vmatpush1.bf16.msra.mxu0 0
      %2854 = vmatprep.subr.bf16.mxu0 0
      %2855 = vmatpush1.bf16.msra.mxu0 0
      %2856 = vmatprep.subr.bf16.mxu0 0
      %2857 = vmatpush1.bf16.msra.mxu0 0
      %2858 = vmatprep.subr.bf16.mxu0 0
      %2859 = vmatpush1.bf16.msra.mxu0 0
      %2860 = vmatprep.subr.bf16.mxu0 0
      %2861 = vmatpush1.bf16.msra.mxu0 0
      %2862 = vmatprep.subr.bf16.mxu0 0
      %2863 = vmatpush1.bf16.msra.mxu0 0
      %2864 = vmatprep.mubr.bf16.mxu0 0
      %2865 = vmatmul.mubr.bf16.gmra.mrb[0].mxu0 %v2731
      %v2866 = vpop.f32.mrb[0].mxu0
      %v2867 = vadd.f32 0.0, %v2866
      %v2868 = vpop.f32.mrb[0].mxu0
      %v2869 = vpop.f32.mrb[0].mxu0
      %v2870 = vadd.f32 0.0, %v2869
      %v2871 = vpop.f32.mrb[0].mxu0
      %2872 = vmatprep.mubr.bf16.mxu0 0
      %2873 = vmatmul.mubr.bf16.gmra.mrb[0].mxu0 %v2733
      %v2874 = vpop.f32.mrb[0].mxu0
      %v2875 = vadd.f32 0.0, %v2874
      %v2876 = vpop.f32.mrb[0].mxu0
      %v2877 = vpop.f32.mrb[0].mxu0
      %v2878 = vadd.f32 0.0, %v2877
      %v2879 = vpop.f32.mrb[0].mxu0
      %2880 = vmatprep.mubr.bf16.mxu0 0
      %2881 = vmatmul.mubr.bf16.gmra.mrb[0].mxu0 %v2735
      %v2882 = vpop.f32.mrb[0].mxu0
      %v2883 = vadd.f32 0.0, %v2882
      %v2884 = vpop.f32.mrb[0].mxu0
      %v2885 = vpop.f32.mrb[0].mxu0
      %v2886 = vadd.f32 0.0, %v2885
      %v2887 = vpop.f32.mrb[0].mxu0
      %2888 = vmatprep.mubr.bf16.mxu0 0
      %2889 = vmatmul.mubr.bf16.gmra.mrb[0].mxu0 %v2737
      %v2890 = vpop.f32.mrb[0].mxu0
      %v2891 = vadd.f32 0.0, %v2890
      %v2892 = vpop.f32.mrb[0].mxu0
      %v2893 = vpop.f32.mrb[0].mxu0
      %v2894 = vadd.f32 0.0, %v2893
      %v2895 = vpop.f32.mrb[0].mxu0
      %2896 = vmatprep.mubr.bf16.mxu0 0
      %2897 = vmatmul.mubr.bf16.gmra.mrb[0].mxu0 %v2739
      %v2898 = vpop.f32.mrb[0].mxu0
      %v2899 = vadd.f32 0.0, %v2898
      %v2900 = vpop.f32.mrb[0].mxu0
      %v2901 = vpop.f32.mrb[0].mxu0
      %v2902 = vadd.f32 0.0, %v2901
      %v2903 = vpop.f32.mrb[0].mxu0
      %2904 = vmatprep.mubr.bf16.mxu0 0
      %2905 = vmatmul.mubr.bf16.gmra.mrb[0].mxu0 %v2741
      %v2906 = vpop.f32.mrb[0].mxu0
      %v2907 = vadd.f32 0.0, %v2906
      %v2908 = vpop.f32.mrb[0].mxu0
      %v2909 = vpop.f32.mrb[0].mxu0
      %v2910 = vadd.f32 0.0, %v2909
      %v2911 = vpop.f32.mrb[0].mxu0
      %2912 = vmatprep.mubr.bf16.mxu0 0
      %2913 = vmatmul.mubr.bf16.gmra.mrb[0].mxu0 %v2743
      %v2914 = vpop.f32.mrb[0].mxu0
      %v2915 = vadd.f32 0.0, %v2914
      %v2916 = vpop.f32.mrb[0].mxu0
      %v2917 = vpop.f32.mrb[0].mxu0
      %v2918 = vadd.f32 0.0, %v2917
      %v2919 = vpop.f32.mrb[0].mxu0
      %2920 = vmatprep.mubr.bf16.mxu0 0
      %2921 = vmatmul.mubr.bf16.gmra.mrb[0].mxu0 %v2745
      %v2922 = vpop.f32.mrb[0].mxu0
      %v2923 = vadd.f32 0.0, %v2922
      %v2924 = vpop.f32.mrb[0].mxu0
      %v2925 = vpop.f32.mrb[0].mxu0
      %v2926 = vadd.f32 0.0, %v2925
      %v2927 = vpop.f32.mrb[0].mxu0
      %2928 = vmatprep.mubr.bf16.mxu0 0
      %2929 = vmatmul.mubr.bf16.gmra.mrb[0].mxu0 %v2747
      %v2930 = vpop.f32.mrb[0].mxu0
      %v2931 = vadd.f32 0.0, %v2930
      %v2932 = vpop.f32.mrb[0].mxu0
      %v2933 = vpop.f32.mrb[0].mxu0
      %v2934 = vadd.f32 0.0, %v2933
      %v2935 = vpop.f32.mrb[0].mxu0
      %2936 = vmatprep.mubr.bf16.mxu0 0
      %2937 = vmatmul.mubr.bf16.gmra.mrb[0].mxu0 %v2749
      %v2938 = vpop.f32.mrb[0].mxu0
      %v2939 = vadd.f32 0.0, %v2938
      %v2940 = vpop.f32.mrb[0].mxu0
      %v2941 = vpop.f32.mrb[0].mxu0
      %v2942 = vadd.f32 0.0, %v2941
      %v2943 = vpop.f32.mrb[0].mxu0
      %2944 = vmatprep.mubr.bf16.mxu0 0
      %2945 = vmatmul.mubr.bf16.gmra.mrb[0].mxu0 %v2751
      %v2946 = vpop.f32.mrb[0].mxu0
      %v2947 = vadd.f32 0.0, %v2946
      %v2948 = vpop.f32.mrb[0].mxu0
      %v2949 = vpop.f32.mrb[0].mxu0
      %v2950 = vadd.f32 0.0, %v2949
      %v2951 = vpop.f32.mrb[0].mxu0
      %2952 = vmatprep.mubr.bf16.mxu0 0
      %2953 = vmatmul.mubr.bf16.gmra.mrb[0].mxu0 %v2753
      %v2954 = vpop.f32.mrb[0].mxu0
      %v2955 = vadd.f32 0.0, %v2954
      %v2956 = vpop.f32.mrb[0].mxu0
      %v2957 = vpop.f32.mrb[0].mxu0
      %v2958 = vadd.f32 0.0, %v2957
      %v2959 = vpop.f32.mrb[0].mxu0
      %2960 = vmatprep.mubr.bf16.mxu0 0
      %2961 = vmatmul.mubr.bf16.gmra.mrb[0].mxu0 %v2755
      %v2962 = vpop.f32.mrb[0].mxu0
      %v2963 = vadd.f32 0.0, %v2962
      %v2964 = vpop.f32.mrb[0].mxu0
      %v2965 = vpop.f32.mrb[0].mxu0
      %v2966 = vadd.f32 0.0, %v2965
      %v2967 = vpop.f32.mrb[0].mxu0
      %2968 = vmatprep.mubr.bf16.mxu0 0
      %2969 = vmatmul.mubr.bf16.gmra.mrb[0].mxu0 %v2757
      %v2970 = vpop.f32.mrb[0].mxu0
      %v2971 = vadd.f32 0.0, %v2970
      %v2972 = vpop.f32.mrb[0].mxu0
      %v2973 = vpop.f32.mrb[0].mxu0
      %v2974 = vadd.f32 0.0, %v2973
      %v2975 = vpop.f32.mrb[0].mxu0
      %2976 = vmatprep.mubr.bf16.mxu0 0
      %2977 = vmatmul.mubr.bf16.gmra.mrb[0].mxu0 %v2759
      %v2978 = vpop.f32.mrb[0].mxu0
      %v2979 = vadd.f32 0.0, %v2978
      %v2980 = vpop.f32.mrb[0].mxu0
      %v2981 = vpop.f32.mrb[0].mxu0
      %v2982 = vadd.f32 0.0, %v2981
      %v2983 = vpop.f32.mrb[0].mxu0
      %2984 = vmatprep.mubr.bf16.mxu0 0
      %2985 = vmatmul.mubr.bf16.gmra.mrb[0].mxu0 %v2761
      %v2986 = vpop.f32.mrb[0].mxu0
      %v2987 = vadd.f32 0.0, %v2986
      %v2988 = vpop.f32.mrb[0].mxu0
      %v2989 = vpop.f32.mrb[0].mxu0
      %v2990 = vadd.f32 0.0, %v2989
      %v2991 = vpop.f32.mrb[0].mxu0
      %2992 = vmatprep.mubr.bf16.mxu0 0
      %2993 = vmatmul.mubr.bf16.gmra.mrb[0].mxu0 %v2763
      %v2994 = vpop.f32.mrb[0].mxu0
      %v2995 = vadd.f32 0.0, %v2994
      %v2996 = vpop.f32.mrb[0].mxu0
      %v2997 = vpop.f32.mrb[0].mxu0
      %v2998 = vadd.f32 0.0, %v2997
      %v2999 = vpop.f32.mrb[0].mxu0
      %3000 = vmatprep.mubr.bf16.mxu0 0
      %3001 = vmatmul.mubr.bf16.gmra.mrb[0].mxu0 %v2765
      %v3002 = vpop.f32.mrb[0].mxu0
      %v3003 = vadd.f32 0.0, %v3002
      %v3004 = vpop.f32.mrb[0].mxu0
      %v3005 = vpop.f32.mrb[0].mxu0
      %v3006 = vadd.f32 0.0, %v3005
      %v3007 = vpop.f32.mrb[0].mxu0
      %3008 = vdwg.mxu0
      %v3009 = vadd.f32 %v2656, %v2867
      %v3010 = vadd.f32 %v2657, %v2870
      %v3011 = vadd.f32 %v2658, %v2875
      %v3012 = vadd.f32 %v2659, %v2878
      %v3013 = vadd.f32 %v2660, %v2883
      %v3014 = vadd.f32 %v2661, %v2886
      %v3015 = vadd.f32 %v2662, %v2891
      %v3016 = vadd.f32 %v2663, %v2894
      %v3017 = vadd.f32 %v2664, %v2899
      %v3018 = vadd.f32 %v2665, %v2902
      %v3019 = vadd.f32 %v2666, %v2907
      %v3020 = vadd.f32 %v2667, %v2910
      %v3021 = vadd.f32 %v2668, %v2915
      %v3022 = vadd.f32 %v2669, %v2918
      %v3023 = vadd.f32 %v2670, %v2923
      %v3024 = vadd.f32 %v2671, %v2926
      %v3025 = vadd.f32 %v2672, %v2931
      %v3026 = vadd.f32 %v2673, %v2934
      %v3027 = vadd.f32 %v2674, %v2939
      %v3028 = vadd.f32 %v2675, %v2942
      %v3029 = vadd.f32 %v2676, %v2947
      %v3030 = vadd.f32 %v2677, %v2950
      %v3031 = vadd.f32 %v2678, %v2955
      %v3032 = vadd.f32 %v2679, %v2958
      %v3033 = vadd.f32 %v2680, %v2963
      %v3034 = vadd.f32 %v2681, %v2966
      %v3035 = vadd.f32 %v2682, %v2971
      %v3036 = vadd.f32 %v2683, %v2974
      %v3037 = vadd.f32 %v2684, %v2979
      %v3038 = vadd.f32 %v2685, %v2982
      %v3039 = vadd.f32 %v2686, %v2987
      %v3040 = vadd.f32 %v2687, %v2990
      %v3041 = vadd.f32 %v2688, %v2995
      %v3042 = vadd.f32 %v2689, %v2998
      %v3043 = vadd.f32 %v2690, %v3003
      %v3044 = vadd.f32 %v2691, %v3006
      %3045 = vst [vmem:[#allocation3] sm:$0xff] %v3009
      %3046 = vst [vmem:[#allocation3 + $0x8] sm:$0xff] %v3010
      %3047 = vst [vmem:[#allocation3 + $0x10] sm:$0xff] %v3011
      %3048 = vst [vmem:[#allocation3 + $0x18] sm:$0xff] %v3012
      %3049 = vst [vmem:[#allocation3 + $0x20] sm:$0xff] %v3013
      %3050 = vst [vmem:[#allocation3 + $0x28] sm:$0xff] %v3014
      %3051 = vst [vmem:[#allocation3 + $0x30] sm:$0xff] %v3015
      %3052 = vst [vmem:[#allocation3 + $0x38] sm:$0xff] %v3016
      %3053 = vst [vmem:[#allocation3 + $0x40] sm:$0xff] %v3017
      %3054 = vst [vmem:[#allocation3 + $0x48] sm:$0xff] %v3018
      %3055 = vst [vmem:[#allocation3 + $0x50] sm:$0xff] %v3019
      %3056 = vst [vmem:[#allocation3 + $0x58] sm:$0xff] %v3020
      %3057 = vst [vmem:[#allocation3 + $0x60] sm:$0xff] %v3021
      %3058 = vst [vmem:[#allocation3 + $0x68] sm:$0xff] %v3022
      %3059 = vst [vmem:[#allocation3 + $0x70] sm:$0xff] %v3023
      %3060 = vst [vmem:[#allocation3 + $0x78] sm:$0xff] %v3024
      %3061 = vst [vmem:[#allocation3 + $0x80] sm:$0xff] %v3025
      %3062 = vst [vmem:[#allocation3 + $0x88] sm:$0xff] %v3026
      %3063 = vst [vmem:[#allocation3 + $0x90] sm:$0xff] %v3027
      %3064 = vst [vmem:[#allocation3 + $0x98] sm:$0xff] %v3028
      %3065 = vst [vmem:[#allocation3 + $0xa0] sm:$0xff] %v3029
      %3066 = vst [vmem:[#allocation3 + $0xa8] sm:$0xff] %v3030
      %3067 = vst [vmem:[#allocation3 + $0xb0] sm:$0xff] %v3031
      %3068 = vst [vmem:[#allocation3 + $0xb8] sm:$0xff] %v3032
      %3069 = vst [vmem:[#allocation3 + $0xc0] sm:$0xff] %v3033
      %3070 = vst [vmem:[#allocation3 + $0xc8] sm:$0xff] %v3034
      %3071 = vst [vmem:[#allocation3 + $0xd0] sm:$0xff] %v3035
      %3072 = vst [vmem:[#allocation3 + $0xd8] sm:$0xff] %v3036
      %3073 = vst [vmem:[#allocation3 + $0xe0] sm:$0xff] %v3037
      %3074 = vst [vmem:[#allocation3 + $0xe8] sm:$0xff] %v3038
      %3075 = vst [vmem:[#allocation3 + $0xf0] sm:$0xff] %v3039
      %3076 = vst [vmem:[#allocation3 + $0xf8] sm:$0xff] %v3040
      %3077 = vst [vmem:[#allocation3 + $0x100] sm:$0xff] %v3041
      %3078 = vst [vmem:[#allocation3 + $0x108] sm:$0xff] %v3042
      %3079 = vst [vmem:[#allocation3 + $0x110] sm:$0xff] %v3043
      %3080 = vst [vmem:[#allocation3 + $0x118] sm:$0xff] %v3044
      %v3081 = vld [vmem:[#allocation2 + $0x10] sm:$0xfe]
      %v3082 = vld [vmem:[#allocation2 + $0x18] sm:$0xff]
      %v3083 = vld [vmem:[#allocation2 + $0x20] sm:$0xff]
      %v3084 = vld [vmem:[#allocation2 + $0x28] sm:$0xff]
      %v3085 = vld [vmem:[#allocation2 + $0x30] sm:$0xff]
      %v3086 = vld [vmem:[#allocation2 + $0x38] sm:$0xff]
      %v3087 = vld [vmem:[#allocation2 + $0x40] sm:$0xff]
      %v3088 = vld [vmem:[#allocation2 + $0x48] sm:$0xff]
      %v3089 = vld [vmem:[#allocation2 + $0x50] sm:$0xff]
      %v3090 = vld [vmem:[#allocation2 + $0x58] sm:$0xff]
      %v3091 = vld [vmem:[#allocation2 + $0x60] sm:$0xff]
      %v3092 = vld [vmem:[#allocation2 + $0x68] sm:$0xff]
      %v3093 = vld [vmem:[#allocation2 + $0x70] sm:$0xff]
      %v3094 = vld [vmem:[#allocation2 + $0x78] sm:$0xff]
      %v3095 = vld [vmem:[#allocation2 + $0x80] sm:$0xff]
      %v3096 = vld [vmem:[#allocation2 + $0x88] sm:$0xff]
      %v3097 = vld [vmem:[#allocation2 + $0x90] sm:$0xff]
      %v3098 = vld [vmem:[#allocation2 + $0x98] sm:$0xff]
      %v3099 = vld [vmem:[#allocation2 + $0xa0] sm:$0x3]
      %v3100 = vld [vmem:[#allocation3] sm:$0xff]
      %v3101 = vld [vmem:[#allocation3 + $0x8] sm:$0xff]
      %v3102 = vld [vmem:[#allocation3 + $0x10] sm:$0xff]
      %v3103 = vld [vmem:[#allocation3 + $0x18] sm:$0xff]
      %v3104 = vld [vmem:[#allocation3 + $0x20] sm:$0xff]
      %v3105 = vld [vmem:[#allocation3 + $0x28] sm:$0xff]
      %v3106 = vld [vmem:[#allocation3 + $0x30] sm:$0xff]
      %v3107 = vld [vmem:[#allocation3 + $0x38] sm:$0xff]
      %v3108 = vld [vmem:[#allocation3 + $0x40] sm:$0xff]
      %v3109 = vld [vmem:[#allocation3 + $0x48] sm:$0xff]
      %v3110 = vld [vmem:[#allocation3 + $0x50] sm:$0xff]
      %v3111 = vld [vmem:[#allocation3 + $0x58] sm:$0xff]
      %v3112 = vld [vmem:[#allocation3 + $0x60] sm:$0xff]
      %v3113 = vld [vmem:[#allocation3 + $0x68] sm:$0xff]
      %v3114 = vld [vmem:[#allocation3 + $0x70] sm:$0xff]
      %v3115 = vld [vmem:[#allocation3 + $0x78] sm:$0xff]
      %v3116 = vld [vmem:[#allocation3 + $0x80] sm:$0xff]
      %v3117 = vld [vmem:[#allocation3 + $0x88] sm:$0xff]
      %v3118 = vld [vmem:[#allocation3 + $0x90] sm:$0xff]
      %v3119 = vld [vmem:[#allocation3 + $0x98] sm:$0xff]
      %v3120 = vld [vmem:[#allocation3 + $0xa0] sm:$0xff]
      %v3121 = vld [vmem:[#allocation3 + $0xa8] sm:$0xff]
      %v3122 = vld [vmem:[#allocation3 + $0xb0] sm:$0xff]
      %v3123 = vld [vmem:[#allocation3 + $0xb8] sm:$0xff]
      %v3124 = vld [vmem:[#allocation3 + $0xc0] sm:$0xff]
      %v3125 = vld [vmem:[#allocation3 + $0xc8] sm:$0xff]
      %v3126 = vld [vmem:[#allocation3 + $0xd0] sm:$0xff]
      %v3127 = vld [vmem:[#allocation3 + $0xd8] sm:$0xff]
      %v3128 = vld [vmem:[#allocation3 + $0xe0] sm:$0xff]
      %v3129 = vld [vmem:[#allocation3 + $0xe8] sm:$0xff]
      %v3130 = vld [vmem:[#allocation3 + $0xf0] sm:$0xff]
      %v3131 = vld [vmem:[#allocation3 + $0xf8] sm:$0xff]
      %v3132 = vld [vmem:[#allocation3 + $0x100] sm:$0xff]
      %v3133 = vld [vmem:[#allocation3 + $0x108] sm:$0xff]
      %v3134 = vld [vmem:[#allocation3 + $0x110] sm:$0xff]
      %v3135 = vld [vmem:[#allocation3 + $0x118] sm:$0xff]
      %s3136 = scalar_lea.vmem %s3, 320
      %v3137 = vld [vmem:[%s3136] sm:$0xf]
      %v3138 = vld [vmem:[%s3136 + $0x4] sm:$0xf]
      %v3139 = vld [vmem:[%s3136 + $0x8] sm:$0xf]
      %v3140 = vld [vmem:[%s3136 + $0xc] sm:$0xf]
      %v3141 = vld [vmem:[%s3136 + $0x10] sm:$0xf]
      %v3142 = vld [vmem:[%s3136 + $0x14] sm:$0xf]
      %v3143 = vld [vmem:[%s3136 + $0x18] sm:$0xf]
      %v3144 = vld [vmem:[%s3136 + $0x1c] sm:$0xf]
      %v3145 = vld [vmem:[%s3136 + $0x20] sm:$0xf]
      %v3146 = vld [vmem:[%s3136 + $0x24] sm:$0xf]
      %v3147 = vld [vmem:[%s3136 + $0x28] sm:$0xf]
      %v3148 = vld [vmem:[%s3136 + $0x2c] sm:$0xf]
      %v3149 = vld [vmem:[%s3136 + $0x30] sm:$0xf]
      %v3150 = vld [vmem:[%s3136 + $0x34] sm:$0xf]
      %v3151 = vld [vmem:[%s3136 + $0x38] sm:$0xf]
      %v3152 = vld [vmem:[%s3136 + $0x3c] sm:$0xf]
      %vm3153 = vsmask.f32 6400
      %v3155 = vshrl.u32 %v3081, 16
      %v3157 = vrot.slane %v3155, 1
      %v3158 = vshll.u32 %v3081, 16
      %v3160 = vrot.slane %v3158, 2
      %v3161 = vor.u32 %v3157, %v3160
      %v3163 = vshrl.u32 %v3082, 16
      %v3165 = vrot.slane %v3163, 1
      %v3166 = vshll.u32 %v3082, 16
      %v3168 = vrot.slane %v3166, 2
      %v3169 = vor.u32 %v3165, %v3168
      %v3170 = vsel %vm3153, %v3161, %v3169
      %v3172 = vshrl.u32 %v3083, 16
      %v3174 = vrot.slane %v3172, 1
      %v3175 = vshll.u32 %v3083, 16
      %v3177 = vrot.slane %v3175, 2
      %v3178 = vor.u32 %v3174, %v3177
      %v3179 = vsel %vm3153, %v3169, %v3178
      %v3181 = vshrl.u32 %v3084, 16
      %v3183 = vrot.slane %v3181, 1
      %v3184 = vshll.u32 %v3084, 16
      %v3186 = vrot.slane %v3184, 2
      %v3187 = vor.u32 %v3183, %v3186
      %v3188 = vsel %vm3153, %v3178, %v3187
      %v3190 = vshrl.u32 %v3085, 16
      %v3192 = vrot.slane %v3190, 1
      %v3193 = vshll.u32 %v3085, 16
      %v3195 = vrot.slane %v3193, 2
      %v3196 = vor.u32 %v3192, %v3195
      %v3197 = vsel %vm3153, %v3187, %v3196
      %v3199 = vshrl.u32 %v3086, 16
      %v3201 = vrot.slane %v3199, 1
      %v3202 = vshll.u32 %v3086, 16
      %v3204 = vrot.slane %v3202, 2
      %v3205 = vor.u32 %v3201, %v3204
      %v3206 = vsel %vm3153, %v3196, %v3205
      %v3208 = vshrl.u32 %v3087, 16
      %v3210 = vrot.slane %v3208, 1
      %v3211 = vshll.u32 %v3087, 16
      %v3213 = vrot.slane %v3211, 2
      %v3214 = vor.u32 %v3210, %v3213
      %v3215 = vsel %vm3153, %v3205, %v3214
      %v3217 = vshrl.u32 %v3088, 16
      %v3219 = vrot.slane %v3217, 1
      %v3220 = vshll.u32 %v3088, 16
      %v3222 = vrot.slane %v3220, 2
      %v3223 = vor.u32 %v3219, %v3222
      %v3224 = vsel %vm3153, %v3214, %v3223
      %v3226 = vshrl.u32 %v3089, 16
      %v3228 = vrot.slane %v3226, 1
      %v3229 = vshll.u32 %v3089, 16
      %v3231 = vrot.slane %v3229, 2
      %v3232 = vor.u32 %v3228, %v3231
      %v3233 = vsel %vm3153, %v3223, %v3232
      %v3235 = vshrl.u32 %v3090, 16
      %v3237 = vrot.slane %v3235, 1
      %v3238 = vshll.u32 %v3090, 16
      %v3240 = vrot.slane %v3238, 2
      %v3241 = vor.u32 %v3237, %v3240
      %v3242 = vsel %vm3153, %v3232, %v3241
      %v3244 = vshrl.u32 %v3091, 16
      %v3246 = vrot.slane %v3244, 1
      %v3247 = vshll.u32 %v3091, 16
      %v3249 = vrot.slane %v3247, 2
      %v3250 = vor.u32 %v3246, %v3249
      %v3251 = vsel %vm3153, %v3241, %v3250
      %v3253 = vshrl.u32 %v3092, 16
      %v3255 = vrot.slane %v3253, 1
      %v3256 = vshll.u32 %v3092, 16
      %v3258 = vrot.slane %v3256, 2
      %v3259 = vor.u32 %v3255, %v3258
      %v3260 = vsel %vm3153, %v3250, %v3259
      %v3262 = vshrl.u32 %v3093, 16
      %v3264 = vrot.slane %v3262, 1
      %v3265 = vshll.u32 %v3093, 16
      %v3267 = vrot.slane %v3265, 2
      %v3268 = vor.u32 %v3264, %v3267
      %v3269 = vsel %vm3153, %v3259, %v3268
      %v3271 = vshrl.u32 %v3094, 16
      %v3273 = vrot.slane %v3271, 1
      %v3274 = vshll.u32 %v3094, 16
      %v3276 = vrot.slane %v3274, 2
      %v3277 = vor.u32 %v3273, %v3276
      %v3278 = vsel %vm3153, %v3268, %v3277
      %v3280 = vshrl.u32 %v3095, 16
      %v3282 = vrot.slane %v3280, 1
      %v3283 = vshll.u32 %v3095, 16
      %v3285 = vrot.slane %v3283, 2
      %v3286 = vor.u32 %v3282, %v3285
      %v3287 = vsel %vm3153, %v3277, %v3286
      %v3289 = vshrl.u32 %v3096, 16
      %v3291 = vrot.slane %v3289, 1
      %v3292 = vshll.u32 %v3096, 16
      %v3294 = vrot.slane %v3292, 2
      %v3295 = vor.u32 %v3291, %v3294
      %v3296 = vsel %vm3153, %v3286, %v3295
      %v3298 = vshrl.u32 %v3097, 16
      %v3300 = vrot.slane %v3298, 1
      %v3301 = vshll.u32 %v3097, 16
      %v3303 = vrot.slane %v3301, 2
      %v3304 = vor.u32 %v3300, %v3303
      %v3305 = vsel %vm3153, %v3295, %v3304
      %v3307 = vshrl.u32 %v3098, 16
      %v3309 = vrot.slane %v3307, 1
      %v3310 = vshll.u32 %v3098, 16
      %v3312 = vrot.slane %v3310, 2
      %v3313 = vor.u32 %v3309, %v3312
      %v3314 = vsel %vm3153, %v3304, %v3313
      %v3316 = vshrl.u32 %v3099, 16
      %v3318 = vrot.slane %v3316, 1
      %v3319 = vshll.u32 %v3099, 16
      %v3321 = vrot.slane %v3319, 2
      %v3322 = vor.u32 %v3318, %v3321
      %v3323 = vsel %vm3153, %v3313, %v3322
      %v3358 = vunpack.c.l.b16 %v3137
      %v3359 = vunpack.c.l.b16 %v3138
      %v3360 = vunpack.c.l.b16 %v3139
      %v3361 = vunpack.c.l.b16 %v3140
      %v3362 = vunpack.c.l.b16 %v3141
      %v3363 = vunpack.c.l.b16 %v3142
      %v3364 = vunpack.c.l.b16 %v3143
      %v3365 = vunpack.c.l.b16 %v3144
      %v3366 = vunpack.c.l.b16 %v3145
      %v3367 = vunpack.c.l.b16 %v3146
      %v3368 = vunpack.c.l.b16 %v3147
      %v3369 = vunpack.c.l.b16 %v3148
      %v3370 = vunpack.c.l.b16 %v3149
      %v3371 = vunpack.c.l.b16 %v3150
      %v3372 = vunpack.c.l.b16 %v3151
      %v3373 = vunpack.c.l.b16 %v3152
      %v3374 = vpack.c.b16 %v3359, %v3358
      %v3375 = vpack.c.b16 %v3361, %v3360
      %v3376 = vpack.c.b16 %v3363, %v3362
      %v3377 = vpack.c.b16 %v3365, %v3364
      %v3378 = vpack.c.b16 %v3367, %v3366
      %v3379 = vpack.c.b16 %v3369, %v3368
      %v3380 = vpack.c.b16 %v3371, %v3370
      %v3381 = vpack.c.b16 %v3373, %v3372
      %3390 = vmatprep.subr.bf16.mxu0 0
      %3391 = vmatpush1.bf16.msra.mxu0 %v3374
      %3392 = vmatprep.subr.bf16.mxu0 0
      %3393 = vmatpush1.bf16.msra.mxu0 %v3375
      %3394 = vmatprep.subr.bf16.mxu0 0
      %3395 = vmatpush1.bf16.msra.mxu0 %v3376
      %3396 = vmatprep.subr.bf16.mxu0 0
      %3397 = vmatpush1.bf16.msra.mxu0 %v3377
      %3398 = vmatprep.subr.bf16.mxu0 0
      %3399 = vmatpush1.bf16.msra.mxu0 %v3378
      %3400 = vmatprep.subr.bf16.mxu0 0
      %3401 = vmatpush1.bf16.msra.mxu0 %v3379
      %3402 = vmatprep.subr.bf16.mxu0 0
      %3403 = vmatpush1.bf16.msra.mxu0 %v3380
      %3404 = vmatprep.subr.bf16.mxu0 0
      %3405 = vmatpush1.bf16.msra.mxu0 %v3381
      %3406 = vmatprep.subr.bf16.mxu0 0
      %3407 = vmatpush1.bf16.msra.mxu0 0
      %3408 = vmatprep.subr.bf16.mxu0 0
      %3409 = vmatpush1.bf16.msra.mxu0 0
      %3410 = vmatprep.subr.bf16.mxu0 0
      %3411 = vmatpush1.bf16.msra.mxu0 0
      %3412 = vmatprep.subr.bf16.mxu0 0
      %3413 = vmatpush1.bf16.msra.mxu0 0
      %3414 = vmatprep.subr.bf16.mxu0 0
      %3415 = vmatpush1.bf16.msra.mxu0 0
      %3416 = vmatprep.subr.bf16.mxu0 0
      %3417 = vmatpush1.bf16.msra.mxu0 0
      %3418 = vmatprep.subr.bf16.mxu0 0
      %3419 = vmatpush1.bf16.msra.mxu0 0
      %3420 = vmatprep.subr.bf16.mxu0 0
      %3421 = vmatpush1.bf16.msra.mxu0 0
      %3422 = vmatprep.mubr.bf16.mxu0 0
      %3423 = vmatmul.mubr.bf16.gmra.mrb[0].mxu0 %v3170
      %v3424 = vpop.f32.mrb[0].mxu0
      %v3425 = vadd.f32 0.0, %v3424
      %v3426 = vpop.f32.mrb[0].mxu0
      %v3427 = vpop.f32.mrb[0].mxu0
      %v3428 = vadd.f32 0.0, %v3427
      %v3429 = vpop.f32.mrb[0].mxu0
      %3430 = vmatprep.mubr.bf16.mxu0 0
      %3431 = vmatmul.mubr.bf16.gmra.mrb[0].mxu0 %v3179
      %v3432 = vpop.f32.mrb[0].mxu0
      %v3433 = vadd.f32 0.0, %v3432
      %v3434 = vpop.f32.mrb[0].mxu0
      %v3435 = vpop.f32.mrb[0].mxu0
      %v3436 = vadd.f32 0.0, %v3435
      %v3437 = vpop.f32.mrb[0].mxu0
      %3438 = vmatprep.mubr.bf16.mxu0 0
      %3439 = vmatmul.mubr.bf16.gmra.mrb[0].mxu0 %v3188
      %v3440 = vpop.f32.mrb[0].mxu0
      %v3441 = vadd.f32 0.0, %v3440
      %v3442 = vpop.f32.mrb[0].mxu0
      %v3443 = vpop.f32.mrb[0].mxu0
      %v3444 = vadd.f32 0.0, %v3443
      %v3445 = vpop.f32.mrb[0].mxu0
      %3446 = vmatprep.mubr.bf16.mxu0 0
      %3447 = vmatmul.mubr.bf16.gmra.mrb[0].mxu0 %v3197
      %v3448 = vpop.f32.mrb[0].mxu0
      %v3449 = vadd.f32 0.0, %v3448
      %v3450 = vpop.f32.mrb[0].mxu0
      %v3451 = vpop.f32.mrb[0].mxu0
      %v3452 = vadd.f32 0.0, %v3451
      %v3453 = vpop.f32.mrb[0].mxu0
      %3454 = vmatprep.mubr.bf16.mxu0 0
      %3455 = vmatmul.mubr.bf16.gmra.mrb[0].mxu0 %v3206
      %v3456 = vpop.f32.mrb[0].mxu0
      %v3457 = vadd.f32 0.0, %v3456
      %v3458 = vpop.f32.mrb[0].mxu0
      %v3459 = vpop.f32.mrb[0].mxu0
      %v3460 = vadd.f32 0.0, %v3459
      %v3461 = vpop.f32.mrb[0].mxu0
      %3462 = vmatprep.mubr.bf16.mxu0 0
      %3463 = vmatmul.mubr.bf16.gmra.mrb[0].mxu0 %v3215
      %v3464 = vpop.f32.mrb[0].mxu0
      %v3465 = vadd.f32 0.0, %v3464
      %v3466 = vpop.f32.mrb[0].mxu0
      %v3467 = vpop.f32.mrb[0].mxu0
      %v3468 = vadd.f32 0.0, %v3467
      %v3469 = vpop.f32.mrb[0].mxu0
      %3470 = vmatprep.mubr.bf16.mxu0 0
      %3471 = vmatmul.mubr.bf16.gmra.mrb[0].mxu0 %v3224
      %v3472 = vpop.f32.mrb[0].mxu0
      %v3473 = vadd.f32 0.0, %v3472
      %v3474 = vpop.f32.mrb[0].mxu0
      %v3475 = vpop.f32.mrb[0].mxu0
      %v3476 = vadd.f32 0.0, %v3475
      %v3477 = vpop.f32.mrb[0].mxu0
      %3478 = vmatprep.mubr.bf16.mxu0 0
      %3479 = vmatmul.mubr.bf16.gmra.mrb[0].mxu0 %v3233
      %v3480 = vpop.f32.mrb[0].mxu0
      %v3481 = vadd.f32 0.0, %v3480
      %v3482 = vpop.f32.mrb[0].mxu0
      %v3483 = vpop.f32.mrb[0].mxu0
      %v3484 = vadd.f32 0.0, %v3483
      %v3485 = vpop.f32.mrb[0].mxu0
      %3486 = vmatprep.mubr.bf16.mxu0 0
      %3487 = vmatmul.mubr.bf16.gmra.mrb[0].mxu0 %v3242
      %v3488 = vpop.f32.mrb[0].mxu0
      %v3489 = vadd.f32 0.0, %v3488
      %v3490 = vpop.f32.mrb[0].mxu0
      %v3491 = vpop.f32.mrb[0].mxu0
      %v3492 = vadd.f32 0.0, %v3491
      %v3493 = vpop.f32.mrb[0].mxu0
      %3494 = vmatprep.mubr.bf16.mxu0 0
      %3495 = vmatmul.mubr.bf16.gmra.mrb[0].mxu0 %v3251
      %v3496 = vpop.f32.mrb[0].mxu0
      %v3497 = vadd.f32 0.0, %v3496
      %v3498 = vpop.f32.mrb[0].mxu0
      %v3499 = vpop.f32.mrb[0].mxu0
      %v3500 = vadd.f32 0.0, %v3499
      %v3501 = vpop.f32.mrb[0].mxu0
      %3502 = vmatprep.mubr.bf16.mxu0 0
      %3503 = vmatmul.mubr.bf16.gmra.mrb[0].mxu0 %v3260
      %v3504 = vpop.f32.mrb[0].mxu0
      %v3505 = vadd.f32 0.0, %v3504
      %v3506 = vpop.f32.mrb[0].mxu0
      %v3507 = vpop.f32.mrb[0].mxu0
      %v3508 = vadd.f32 0.0, %v3507
      %v3509 = vpop.f32.mrb[0].mxu0
      %3510 = vmatprep.mubr.bf16.mxu0 0
      %3511 = vmatmul.mubr.bf16.gmra.mrb[0].mxu0 %v3269
      %v3512 = vpop.f32.mrb[0].mxu0
      %v3513 = vadd.f32 0.0, %v3512
      %v3514 = vpop.f32.mrb[0].mxu0
      %v3515 = vpop.f32.mrb[0].mxu0
      %v3516 = vadd.f32 0.0, %v3515
      %v3517 = vpop.f32.mrb[0].mxu0
      %3518 = vmatprep.mubr.bf16.mxu0 0
      %3519 = vmatmul.mubr.bf16.gmra.mrb[0].mxu0 %v3278
      %v3520 = vpop.f32.mrb[0].mxu0
      %v3521 = vadd.f32 0.0, %v3520
      %v3522 = vpop.f32.mrb[0].mxu0
      %v3523 = vpop.f32.mrb[0].mxu0
      %v3524 = vadd.f32 0.0, %v3523
      %v3525 = vpop.f32.mrb[0].mxu0
      %3526 = vmatprep.mubr.bf16.mxu0 0
      %3527 = vmatmul.mubr.bf16.gmra.mrb[0].mxu0 %v3287
      %v3528 = vpop.f32.mrb[0].mxu0
      %v3529 = vadd.f32 0.0, %v3528
      %v3530 = vpop.f32.mrb[0].mxu0
      %v3531 = vpop.f32.mrb[0].mxu0
      %v3532 = vadd.f32 0.0, %v3531
      %v3533 = vpop.f32.mrb[0].mxu0
      %3534 = vmatprep.mubr.bf16.mxu0 0
      %3535 = vmatmul.mubr.bf16.gmra.mrb[0].mxu0 %v3296
      %v3536 = vpop.f32.mrb[0].mxu0
      %v3537 = vadd.f32 0.0, %v3536
      %v3538 = vpop.f32.mrb[0].mxu0
      %v3539 = vpop.f32.mrb[0].mxu0
      %v3540 = vadd.f32 0.0, %v3539
      %v3541 = vpop.f32.mrb[0].mxu0
      %3542 = vmatprep.mubr.bf16.mxu0 0
      %3543 = vmatmul.mubr.bf16.gmra.mrb[0].mxu0 %v3305
      %v3544 = vpop.f32.mrb[0].mxu0
      %v3545 = vadd.f32 0.0, %v3544
      %v3546 = vpop.f32.mrb[0].mxu0
      %v3547 = vpop.f32.mrb[0].mxu0
      %v3548 = vadd.f32 0.0, %v3547
      %v3549 = vpop.f32.mrb[0].mxu0
      %3550 = vmatprep.mubr.bf16.mxu0 0
      %3551 = vmatmul.mubr.bf16.gmra.mrb[0].mxu0 %v3314
      %v3552 = vpop.f32.mrb[0].mxu0
      %v3553 = vadd.f32 0.0, %v3552
      %v3554 = vpop.f32.mrb[0].mxu0
      %v3555 = vpop.f32.mrb[0].mxu0
      %v3556 = vadd.f32 0.0, %v3555
      %v3557 = vpop.f32.mrb[0].mxu0
      %3558 = vmatprep.mubr.bf16.mxu0 0
      %3559 = vmatmul.mubr.bf16.gmra.mrb[0].mxu0 %v3323
      %v3560 = vpop.f32.mrb[0].mxu0
      %v3561 = vadd.f32 0.0, %v3560
      %v3562 = vpop.f32.mrb[0].mxu0
      %v3563 = vpop.f32.mrb[0].mxu0
      %v3564 = vadd.f32 0.0, %v3563
      %v3565 = vpop.f32.mrb[0].mxu0
      %3566 = vdwg.mxu0
      %v3567 = vadd.f32 %v3100, %v3425
      %v3568 = vadd.f32 %v3101, %v3428
      %v3569 = vadd.f32 %v3102, %v3433
      %v3570 = vadd.f32 %v3103, %v3436
      %v3571 = vadd.f32 %v3104, %v3441
      %v3572 = vadd.f32 %v3105, %v3444
      %v3573 = vadd.f32 %v3106, %v3449
      %v3574 = vadd.f32 %v3107, %v3452
      %v3575 = vadd.f32 %v3108, %v3457
      %v3576 = vadd.f32 %v3109, %v3460
      %v3577 = vadd.f32 %v3110, %v3465
      %v3578 = vadd.f32 %v3111, %v3468
      %v3579 = vadd.f32 %v3112, %v3473
      %v3580 = vadd.f32 %v3113, %v3476
      %v3581 = vadd.f32 %v3114, %v3481
      %v3582 = vadd.f32 %v3115, %v3484
      %v3583 = vadd.f32 %v3116, %v3489
      %v3584 = vadd.f32 %v3117, %v3492
      %v3585 = vadd.f32 %v3118, %v3497
      %v3586 = vadd.f32 %v3119, %v3500
      %v3587 = vadd.f32 %v3120, %v3505
      %v3588 = vadd.f32 %v3121, %v3508
      %v3589 = vadd.f32 %v3122, %v3513
      %v3590 = vadd.f32 %v3123, %v3516
      %v3591 = vadd.f32 %v3124, %v3521
      %v3592 = vadd.f32 %v3125, %v3524
      %v3593 = vadd.f32 %v3126, %v3529
      %v3594 = vadd.f32 %v3127, %v3532
      %v3595 = vadd.f32 %v3128, %v3537
      %v3596 = vadd.f32 %v3129, %v3540
      %v3597 = vadd.f32 %v3130, %v3545
      %v3598 = vadd.f32 %v3131, %v3548
      %v3599 = vadd.f32 %v3132, %v3553
      %v3600 = vadd.f32 %v3133, %v3556
      %v3601 = vadd.f32 %v3134, %v3561
      %v3602 = vadd.f32 %v3135, %v3564
      %3603 = vst [vmem:[#allocation3] sm:$0xff] %v3567
      %3604 = vst [vmem:[#allocation3 + $0x8] sm:$0xff] %v3568
      %3605 = vst [vmem:[#allocation3 + $0x10] sm:$0xff] %v3569
      %3606 = vst [vmem:[#allocation3 + $0x18] sm:$0xff] %v3570
      %3607 = vst [vmem:[#allocation3 + $0x20] sm:$0xff] %v3571
      %3608 = vst [vmem:[#allocation3 + $0x28] sm:$0xff] %v3572
      %3609 = vst [vmem:[#allocation3 + $0x30] sm:$0xff] %v3573
      %3610 = vst [vmem:[#allocation3 + $0x38] sm:$0xff] %v3574
      %3611 = vst [vmem:[#allocation3 + $0x40] sm:$0xff] %v3575
      %3612 = vst [vmem:[#allocation3 + $0x48] sm:$0xff] %v3576
      %3613 = vst [vmem:[#allocation3 + $0x50] sm:$0xff] %v3577
      %3614 = vst [vmem:[#allocation3 + $0x58] sm:$0xff] %v3578
      %3615 = vst [vmem:[#allocation3 + $0x60] sm:$0xff] %v3579
      %3616 = vst [vmem:[#allocation3 + $0x68] sm:$0xff] %v3580
      %3617 = vst [vmem:[#allocation3 + $0x70] sm:$0xff] %v3581
      %3618 = vst [vmem:[#allocation3 + $0x78] sm:$0xff] %v3582
      %3619 = vst [vmem:[#allocation3 + $0x80] sm:$0xff] %v3583
      %3620 = vst [vmem:[#allocation3 + $0x88] sm:$0xff] %v3584
      %3621 = vst [vmem:[#allocation3 + $0x90] sm:$0xff] %v3585
      %3622 = vst [vmem:[#allocation3 + $0x98] sm:$0xff] %v3586
      %3623 = vst [vmem:[#allocation3 + $0xa0] sm:$0xff] %v3587
      %3624 = vst [vmem:[#allocation3 + $0xa8] sm:$0xff] %v3588
      %3625 = vst [vmem:[#allocation3 + $0xb0] sm:$0xff] %v3589
      %3626 = vst [vmem:[#allocation3 + $0xb8] sm:$0xff] %v3590
      %3627 = vst [vmem:[#allocation3 + $0xc0] sm:$0xff] %v3591
      %3628 = vst [vmem:[#allocation3 + $0xc8] sm:$0xff] %v3592
      %3629 = vst [vmem:[#allocation3 + $0xd0] sm:$0xff] %v3593
      %3630 = vst [vmem:[#allocation3 + $0xd8] sm:$0xff] %v3594
      %3631 = vst [vmem:[#allocation3 + $0xe0] sm:$0xff] %v3595
      %3632 = vst [vmem:[#allocation3 + $0xe8] sm:$0xff] %v3596
      %3633 = vst [vmem:[#allocation3 + $0xf0] sm:$0xff] %v3597
      %3634 = vst [vmem:[#allocation3 + $0xf8] sm:$0xff] %v3598
      %3635 = vst [vmem:[#allocation3 + $0x100] sm:$0xff] %v3599
      %3636 = vst [vmem:[#allocation3 + $0x108] sm:$0xff] %v3600
      %3637 = vst [vmem:[#allocation3 + $0x110] sm:$0xff] %v3601
      %3638 = vst [vmem:[#allocation3 + $0x118] sm:$0xff] %v3602
      %v3639 = vld [vmem:[#allocation2 + $0x18] sm:$0xfe]
      %v3640 = vld [vmem:[#allocation2 + $0x20] sm:$0xff]
      %v3641 = vld [vmem:[#allocation2 + $0x28] sm:$0xff]
      %v3642 = vld [vmem:[#allocation2 + $0x30] sm:$0xff]
      %v3643 = vld [vmem:[#allocation2 + $0x38] sm:$0xff]
      %v3644 = vld [vmem:[#allocation2 + $0x40] sm:$0xff]
      %v3645 = vld [vmem:[#allocation2 + $0x48] sm:$0xff]
      %v3646 = vld [vmem:[#allocation2 + $0x50] sm:$0xff]
      %v3647 = vld [vmem:[#allocation2 + $0x58] sm:$0xff]
      %v3648 = vld [vmem:[#allocation2 + $0x60] sm:$0xff]
      %v3649 = vld [vmem:[#allocation2 + $0x68] sm:$0xff]
      %v3650 = vld [vmem:[#allocation2 + $0x70] sm:$0xff]
      %v3651 = vld [vmem:[#allocation2 + $0x78] sm:$0xff]
      %v3652 = vld [vmem:[#allocation2 + $0x80] sm:$0xff]
      %v3653 = vld [vmem:[#allocation2 + $0x88] sm:$0xff]
      %v3654 = vld [vmem:[#allocation2 + $0x90] sm:$0xff]
      %v3655 = vld [vmem:[#allocation2 + $0x98] sm:$0xff]
      %v3656 = vld [vmem:[#allocation2 + $0xa0] sm:$0xff]
      %v3657 = vld [vmem:[#allocation2 + $0xa8] sm:$0x3]
      %v3658 = vld [vmem:[#allocation3] sm:$0xff]
      %v3659 = vld [vmem:[#allocation3 + $0x8] sm:$0xff]
      %v3660 = vld [vmem:[#allocation3 + $0x10] sm:$0xff]
      %v3661 = vld [vmem:[#allocation3 + $0x18] sm:$0xff]
      %v3662 = vld [vmem:[#allocation3 + $0x20] sm:$0xff]
      %v3663 = vld [vmem:[#allocation3 + $0x28] sm:$0xff]
      %v3664 = vld [vmem:[#allocation3 + $0x30] sm:$0xff]
      %v3665 = vld [vmem:[#allocation3 + $0x38] sm:$0xff]
      %v3666 = vld [vmem:[#allocation3 + $0x40] sm:$0xff]
      %v3667 = vld [vmem:[#allocation3 + $0x48] sm:$0xff]
      %v3668 = vld [vmem:[#allocation3 + $0x50] sm:$0xff]
      %v3669 = vld [vmem:[#allocation3 + $0x58] sm:$0xff]
      %v3670 = vld [vmem:[#allocation3 + $0x60] sm:$0xff]
      %v3671 = vld [vmem:[#allocation3 + $0x68] sm:$0xff]
      %v3672 = vld [vmem:[#allocation3 + $0x70] sm:$0xff]
      %v3673 = vld [vmem:[#allocation3 + $0x78] sm:$0xff]
      %v3674 = vld [vmem:[#allocation3 + $0x80] sm:$0xff]
      %v3675 = vld [vmem:[#allocation3 + $0x88] sm:$0xff]
      %v3676 = vld [vmem:[#allocation3 + $0x90] sm:$0xff]
      %v3677 = vld [vmem:[#allocation3 + $0x98] sm:$0xff]
      %v3678 = vld [vmem:[#allocation3 + $0xa0] sm:$0xff]
      %v3679 = vld [vmem:[#allocation3 + $0xa8] sm:$0xff]
      %v3680 = vld [vmem:[#allocation3 + $0xb0] sm:$0xff]
      %v3681 = vld [vmem:[#allocation3 + $0xb8] sm:$0xff]
      %v3682 = vld [vmem:[#allocation3 + $0xc0] sm:$0xff]
      %v3683 = vld [vmem:[#allocation3 + $0xc8] sm:$0xff]
      %v3684 = vld [vmem:[#allocation3 + $0xd0] sm:$0xff]
      %v3685 = vld [vmem:[#allocation3 + $0xd8] sm:$0xff]
      %v3686 = vld [vmem:[#allocation3 + $0xe0] sm:$0xff]
      %v3687 = vld [vmem:[#allocation3 + $0xe8] sm:$0xff]
      %v3688 = vld [vmem:[#allocation3 + $0xf0] sm:$0xff]
      %v3689 = vld [vmem:[#allocation3 + $0xf8] sm:$0xff]
      %v3690 = vld [vmem:[#allocation3 + $0x100] sm:$0xff]
      %v3691 = vld [vmem:[#allocation3 + $0x108] sm:$0xff]
      %v3692 = vld [vmem:[#allocation3 + $0x110] sm:$0xff]
      %v3693 = vld [vmem:[#allocation3 + $0x118] sm:$0xff]
      %s3694 = scalar_lea.vmem %s3, 384
      %v3695 = vld [vmem:[%s3694] sm:$0xf]
      %v3696 = vld [vmem:[%s3694 + $0x4] sm:$0xf]
      %v3697 = vld [vmem:[%s3694 + $0x8] sm:$0xf]
      %v3698 = vld [vmem:[%s3694 + $0xc] sm:$0xf]
      %v3699 = vld [vmem:[%s3694 + $0x10] sm:$0xf]
      %v3700 = vld [vmem:[%s3694 + $0x14] sm:$0xf]
      %v3701 = vld [vmem:[%s3694 + $0x18] sm:$0xf]
      %v3702 = vld [vmem:[%s3694 + $0x1c] sm:$0xf]
      %v3703 = vld [vmem:[%s3694 + $0x20] sm:$0xf]
      %v3704 = vld [vmem:[%s3694 + $0x24] sm:$0xf]
      %v3705 = vld [vmem:[%s3694 + $0x28] sm:$0xf]
      %v3706 = vld [vmem:[%s3694 + $0x2c] sm:$0xf]
      %v3707 = vld [vmem:[%s3694 + $0x30] sm:$0xf]
      %v3708 = vld [vmem:[%s3694 + $0x34] sm:$0xf]
      %v3709 = vld [vmem:[%s3694 + $0x38] sm:$0xf]
      %v3710 = vld [vmem:[%s3694 + $0x3c] sm:$0xf]
      %v3712 = vshrl.u32 %v3639, 16
      %v3714 = vrot.slane %v3712, 1
      %v3715 = vshll.u32 %v3639, 16
      %v3717 = vrot.slane %v3715, 2
      %v3718 = vor.u32 %v3714, %v3717
      %v3720 = vshrl.u32 %v3640, 16
      %v3722 = vrot.slane %v3720, 1
      %v3723 = vshll.u32 %v3640, 16
      %v3725 = vrot.slane %v3723, 2
      %v3726 = vor.u32 %v3722, %v3725
      %v3727 = vsel %vm3153, %v3718, %v3726
      %v3729 = vshrl.u32 %v3641, 16
      %v3731 = vrot.slane %v3729, 1
      %v3732 = vshll.u32 %v3641, 16
      %v3734 = vrot.slane %v3732, 2
      %v3735 = vor.u32 %v3731, %v3734
      %v3736 = vsel %vm3153, %v3726, %v3735
      %v3738 = vshrl.u32 %v3642, 16
      %v3740 = vrot.slane %v3738, 1
      %v3741 = vshll.u32 %v3642, 16
      %v3743 = vrot.slane %v3741, 2
      %v3744 = vor.u32 %v3740, %v3743
      %v3745 = vsel %vm3153, %v3735, %v3744
      %v3747 = vshrl.u32 %v3643, 16
      %v3749 = vrot.slane %v3747, 1
      %v3750 = vshll.u32 %v3643, 16
      %v3752 = vrot.slane %v3750, 2
      %v3753 = vor.u32 %v3749, %v3752
      %v3754 = vsel %vm3153, %v3744, %v3753
      %v3756 = vshrl.u32 %v3644, 16
      %v3758 = vrot.slane %v3756, 1
      %v3759 = vshll.u32 %v3644, 16
      %v3761 = vrot.slane %v3759, 2
      %v3762 = vor.u32 %v3758, %v3761
      %v3763 = vsel %vm3153, %v3753, %v3762
      %v3765 = vshrl.u32 %v3645, 16
      %v3767 = vrot.slane %v3765, 1
      %v3768 = vshll.u32 %v3645, 16
      %v3770 = vrot.slane %v3768, 2
      %v3771 = vor.u32 %v3767, %v3770
      %v3772 = vsel %vm3153, %v3762, %v3771
      %v3774 = vshrl.u32 %v3646, 16
      %v3776 = vrot.slane %v3774, 1
      %v3777 = vshll.u32 %v3646, 16
      %v3779 = vrot.slane %v3777, 2
      %v3780 = vor.u32 %v3776, %v3779
      %v3781 = vsel %vm3153, %v3771, %v3780
      %v3783 = vshrl.u32 %v3647, 16
      %v3785 = vrot.slane %v3783, 1
      %v3786 = vshll.u32 %v3647, 16
      %v3788 = vrot.slane %v3786, 2
      %v3789 = vor.u32 %v3785, %v3788
      %v3790 = vsel %vm3153, %v3780, %v3789
      %v3792 = vshrl.u32 %v3648, 16
      %v3794 = vrot.slane %v3792, 1
      %v3795 = vshll.u32 %v3648, 16
      %v3797 = vrot.slane %v3795, 2
      %v3798 = vor.u32 %v3794, %v3797
      %v3799 = vsel %vm3153, %v3789, %v3798
      %v3801 = vshrl.u32 %v3649, 16
      %v3803 = vrot.slane %v3801, 1
      %v3804 = vshll.u32 %v3649, 16
      %v3806 = vrot.slane %v3804, 2
      %v3807 = vor.u32 %v3803, %v3806
      %v3808 = vsel %vm3153, %v3798, %v3807
      %v3810 = vshrl.u32 %v3650, 16
      %v3812 = vrot.slane %v3810, 1
      %v3813 = vshll.u32 %v3650, 16
      %v3815 = vrot.slane %v3813, 2
      %v3816 = vor.u32 %v3812, %v3815
      %v3817 = vsel %vm3153, %v3807, %v3816
      %v3819 = vshrl.u32 %v3651, 16
      %v3821 = vrot.slane %v3819, 1
      %v3822 = vshll.u32 %v3651, 16
      %v3824 = vrot.slane %v3822, 2
      %v3825 = vor.u32 %v3821, %v3824
      %v3826 = vsel %vm3153, %v3816, %v3825
      %v3828 = vshrl.u32 %v3652, 16
      %v3830 = vrot.slane %v3828, 1
      %v3831 = vshll.u32 %v3652, 16
      %v3833 = vrot.slane %v3831, 2
      %v3834 = vor.u32 %v3830, %v3833
      %v3835 = vsel %vm3153, %v3825, %v3834
      %v3837 = vshrl.u32 %v3653, 16
      %v3839 = vrot.slane %v3837, 1
      %v3840 = vshll.u32 %v3653, 16
      %v3842 = vrot.slane %v3840, 2
      %v3843 = vor.u32 %v3839, %v3842
      %v3844 = vsel %vm3153, %v3834, %v3843
      %v3846 = vshrl.u32 %v3654, 16
      %v3848 = vrot.slane %v3846, 1
      %v3849 = vshll.u32 %v3654, 16
      %v3851 = vrot.slane %v3849, 2
      %v3852 = vor.u32 %v3848, %v3851
      %v3853 = vsel %vm3153, %v3843, %v3852
      %v3855 = vshrl.u32 %v3655, 16
      %v3857 = vrot.slane %v3855, 1
      %v3858 = vshll.u32 %v3655, 16
      %v3860 = vrot.slane %v3858, 2
      %v3861 = vor.u32 %v3857, %v3860
      %v3862 = vsel %vm3153, %v3852, %v3861
      %v3864 = vshrl.u32 %v3656, 16
      %v3866 = vrot.slane %v3864, 1
      %v3867 = vshll.u32 %v3656, 16
      %v3869 = vrot.slane %v3867, 2
      %v3870 = vor.u32 %v3866, %v3869
      %v3871 = vsel %vm3153, %v3861, %v3870
      %v3873 = vshrl.u32 %v3657, 16
      %v3875 = vrot.slane %v3873, 1
      %v3876 = vshll.u32 %v3657, 16
      %v3878 = vrot.slane %v3876, 2
      %v3879 = vor.u32 %v3875, %v3878
      %v3880 = vsel %vm3153, %v3870, %v3879
      %v3915 = vunpack.c.l.b16 %v3695
      %v3916 = vunpack.c.l.b16 %v3696
      %v3917 = vunpack.c.l.b16 %v3697
      %v3918 = vunpack.c.l.b16 %v3698
      %v3919 = vunpack.c.l.b16 %v3699
      %v3920 = vunpack.c.l.b16 %v3700
      %v3921 = vunpack.c.l.b16 %v3701
      %v3922 = vunpack.c.l.b16 %v3702
      %v3923 = vunpack.c.l.b16 %v3703
      %v3924 = vunpack.c.l.b16 %v3704
      %v3925 = vunpack.c.l.b16 %v3705
      %v3926 = vunpack.c.l.b16 %v3706
      %v3927 = vunpack.c.l.b16 %v3707
      %v3928 = vunpack.c.l.b16 %v3708
      %v3929 = vunpack.c.l.b16 %v3709
      %v3930 = vunpack.c.l.b16 %v3710
      %v3931 = vpack.c.b16 %v3916, %v3915
      %v3932 = vpack.c.b16 %v3918, %v3917
      %v3933 = vpack.c.b16 %v3920, %v3919
      %v3934 = vpack.c.b16 %v3922, %v3921
      %v3935 = vpack.c.b16 %v3924, %v3923
      %v3936 = vpack.c.b16 %v3926, %v3925
      %v3937 = vpack.c.b16 %v3928, %v3927
      %v3938 = vpack.c.b16 %v3930, %v3929
      %3947 = vmatprep.subr.bf16.mxu0 0
      %3948 = vmatpush1.bf16.msra.mxu0 %v3931
      %3949 = vmatprep.subr.bf16.mxu0 0
      %3950 = vmatpush1.bf16.msra.mxu0 %v3932
      %3951 = vmatprep.subr.bf16.mxu0 0
      %3952 = vmatpush1.bf16.msra.mxu0 %v3933
      %3953 = vmatprep.subr.bf16.mxu0 0
      %3954 = vmatpush1.bf16.msra.mxu0 %v3934
      %3955 = vmatprep.subr.bf16.mxu0 0
      %3956 = vmatpush1.bf16.msra.mxu0 %v3935
      %3957 = vmatprep.subr.bf16.mxu0 0
      %3958 = vmatpush1.bf16.msra.mxu0 %v3936
      %3959 = vmatprep.subr.bf16.mxu0 0
      %3960 = vmatpush1.bf16.msra.mxu0 %v3937
      %3961 = vmatprep.subr.bf16.mxu0 0
      %3962 = vmatpush1.bf16.msra.mxu0 %v3938
      %3963 = vmatprep.subr.bf16.mxu0 0
      %3964 = vmatpush1.bf16.msra.mxu0 0
      %3965 = vmatprep.subr.bf16.mxu0 0
      %3966 = vmatpush1.bf16.msra.mxu0 0
      %3967 = vmatprep.subr.bf16.mxu0 0
      %3968 = vmatpush1.bf16.msra.mxu0 0
      %3969 = vmatprep.subr.bf16.mxu0 0
      %3970 = vmatpush1.bf16.msra.mxu0 0
      %3971 = vmatprep.subr.bf16.mxu0 0
      %3972 = vmatpush1.bf16.msra.mxu0 0
      %3973 = vmatprep.subr.bf16.mxu0 0
      %3974 = vmatpush1.bf16.msra.mxu0 0
      %3975 = vmatprep.subr.bf16.mxu0 0
      %3976 = vmatpush1.bf16.msra.mxu0 0
      %3977 = vmatprep.subr.bf16.mxu0 0
      %3978 = vmatpush1.bf16.msra.mxu0 0
      %3979 = vmatprep.mubr.bf16.mxu0 0
      %3980 = vmatmul.mubr.bf16.gmra.mrb[0].mxu0 %v3727
      %v3981 = vpop.f32.mrb[0].mxu0
      %v3982 = vadd.f32 0.0, %v3981
      %v3983 = vpop.f32.mrb[0].mxu0
      %v3984 = vpop.f32.mrb[0].mxu0
      %v3985 = vadd.f32 0.0, %v3984
      %v3986 = vpop.f32.mrb[0].mxu0
      %3987 = vmatprep.mubr.bf16.mxu0 0
      %3988 = vmatmul.mubr.bf16.gmra.mrb[0].mxu0 %v3736
      %v3989 = vpop.f32.mrb[0].mxu0
      %v3990 = vadd.f32 0.0, %v3989
      %v3991 = vpop.f32.mrb[0].mxu0
      %v3992 = vpop.f32.mrb[0].mxu0
      %v3993 = vadd.f32 0.0, %v3992
      %v3994 = vpop.f32.mrb[0].mxu0
      %3995 = vmatprep.mubr.bf16.mxu0 0
      %3996 = vmatmul.mubr.bf16.gmra.mrb[0].mxu0 %v3745
      %v3997 = vpop.f32.mrb[0].mxu0
      %v3998 = vadd.f32 0.0, %v3997
      %v3999 = vpop.f32.mrb[0].mxu0
      %v4000 = vpop.f32.mrb[0].mxu0
      %v4001 = vadd.f32 0.0, %v4000
      %v4002 = vpop.f32.mrb[0].mxu0
      %4003 = vmatprep.mubr.bf16.mxu0 0
      %4004 = vmatmul.mubr.bf16.gmra.mrb[0].mxu0 %v3754
      %v4005 = vpop.f32.mrb[0].mxu0
      %v4006 = vadd.f32 0.0, %v4005
      %v4007 = vpop.f32.mrb[0].mxu0
      %v4008 = vpop.f32.mrb[0].mxu0
      %v4009 = vadd.f32 0.0, %v4008
      %v4010 = vpop.f32.mrb[0].mxu0
      %4011 = vmatprep.mubr.bf16.mxu0 0
      %4012 = vmatmul.mubr.bf16.gmra.mrb[0].mxu0 %v3763
      %v4013 = vpop.f32.mrb[0].mxu0
      %v4014 = vadd.f32 0.0, %v4013
      %v4015 = vpop.f32.mrb[0].mxu0
      %v4016 = vpop.f32.mrb[0].mxu0
      %v4017 = vadd.f32 0.0, %v4016
      %v4018 = vpop.f32.mrb[0].mxu0
      %4019 = vmatprep.mubr.bf16.mxu0 0
      %4020 = vmatmul.mubr.bf16.gmra.mrb[0].mxu0 %v3772
      %v4021 = vpop.f32.mrb[0].mxu0
      %v4022 = vadd.f32 0.0, %v4021
      %v4023 = vpop.f32.mrb[0].mxu0
      %v4024 = vpop.f32.mrb[0].mxu0
      %v4025 = vadd.f32 0.0, %v4024
      %v4026 = vpop.f32.mrb[0].mxu0
      %4027 = vmatprep.mubr.bf16.mxu0 0
      %4028 = vmatmul.mubr.bf16.gmra.mrb[0].mxu0 %v3781
      %v4029 = vpop.f32.mrb[0].mxu0
      %v4030 = vadd.f32 0.0, %v4029
      %v4031 = vpop.f32.mrb[0].mxu0
      %v4032 = vpop.f32.mrb[0].mxu0
      %v4033 = vadd.f32 0.0, %v4032
      %v4034 = vpop.f32.mrb[0].mxu0
      %4035 = vmatprep.mubr.bf16.mxu0 0
      %4036 = vmatmul.mubr.bf16.gmra.mrb[0].mxu0 %v3790
      %v4037 = vpop.f32.mrb[0].mxu0
      %v4038 = vadd.f32 0.0, %v4037
      %v4039 = vpop.f32.mrb[0].mxu0
      %v4040 = vpop.f32.mrb[0].mxu0
      %v4041 = vadd.f32 0.0, %v4040
      %v4042 = vpop.f32.mrb[0].mxu0
      %4043 = vmatprep.mubr.bf16.mxu0 0
      %4044 = vmatmul.mubr.bf16.gmra.mrb[0].mxu0 %v3799
      %v4045 = vpop.f32.mrb[0].mxu0
      %v4046 = vadd.f32 0.0, %v4045
      %v4047 = vpop.f32.mrb[0].mxu0
      %v4048 = vpop.f32.mrb[0].mxu0
      %v4049 = vadd.f32 0.0, %v4048
      %v4050 = vpop.f32.mrb[0].mxu0
      %4051 = vmatprep.mubr.bf16.mxu0 0
      %4052 = vmatmul.mubr.bf16.gmra.mrb[0].mxu0 %v3808
      %v4053 = vpop.f32.mrb[0].mxu0
      %v4054 = vadd.f32 0.0, %v4053
      %v4055 = vpop.f32.mrb[0].mxu0
      %v4056 = vpop.f32.mrb[0].mxu0
      %v4057 = vadd.f32 0.0, %v4056
      %v4058 = vpop.f32.mrb[0].mxu0
      %4059 = vmatprep.mubr.bf16.mxu0 0
      %4060 = vmatmul.mubr.bf16.gmra.mrb[0].mxu0 %v3817
      %v4061 = vpop.f32.mrb[0].mxu0
      %v4062 = vadd.f32 0.0, %v4061
      %v4063 = vpop.f32.mrb[0].mxu0
      %v4064 = vpop.f32.mrb[0].mxu0
      %v4065 = vadd.f32 0.0, %v4064
      %v4066 = vpop.f32.mrb[0].mxu0
      %4067 = vmatprep.mubr.bf16.mxu0 0
      %4068 = vmatmul.mubr.bf16.gmra.mrb[0].mxu0 %v3826
      %v4069 = vpop.f32.mrb[0].mxu0
      %v4070 = vadd.f32 0.0, %v4069
      %v4071 = vpop.f32.mrb[0].mxu0
      %v4072 = vpop.f32.mrb[0].mxu0
      %v4073 = vadd.f32 0.0, %v4072
      %v4074 = vpop.f32.mrb[0].mxu0
      %4075 = vmatprep.mubr.bf16.mxu0 0
      %4076 = vmatmul.mubr.bf16.gmra.mrb[0].mxu0 %v3835
      %v4077 = vpop.f32.mrb[0].mxu0
      %v4078 = vadd.f32 0.0, %v4077
      %v4079 = vpop.f32.mrb[0].mxu0
      %v4080 = vpop.f32.mrb[0].mxu0
      %v4081 = vadd.f32 0.0, %v4080
      %v4082 = vpop.f32.mrb[0].mxu0
      %4083 = vmatprep.mubr.bf16.mxu0 0
      %4084 = vmatmul.mubr.bf16.gmra.mrb[0].mxu0 %v3844
      %v4085 = vpop.f32.mrb[0].mxu0
      %v4086 = vadd.f32 0.0, %v4085
      %v4087 = vpop.f32.mrb[0].mxu0
      %v4088 = vpop.f32.mrb[0].mxu0
      %v4089 = vadd.f32 0.0, %v4088
      %v4090 = vpop.f32.mrb[0].mxu0
      %4091 = vmatprep.mubr.bf16.mxu0 0
      %4092 = vmatmul.mubr.bf16.gmra.mrb[0].mxu0 %v3853
      %v4093 = vpop.f32.mrb[0].mxu0
      %v4094 = vadd.f32 0.0, %v4093
      %v4095 = vpop.f32.mrb[0].mxu0
      %v4096 = vpop.f32.mrb[0].mxu0
      %v4097 = vadd.f32 0.0, %v4096
      %v4098 = vpop.f32.mrb[0].mxu0
      %4099 = vmatprep.mubr.bf16.mxu0 0
      %4100 = vmatmul.mubr.bf16.gmra.mrb[0].mxu0 %v3862
      %v4101 = vpop.f32.mrb[0].mxu0
      %v4102 = vadd.f32 0.0, %v4101
      %v4103 = vpop.f32.mrb[0].mxu0
      %v4104 = vpop.f32.mrb[0].mxu0
      %v4105 = vadd.f32 0.0, %v4104
      %v4106 = vpop.f32.mrb[0].mxu0
      %4107 = vmatprep.mubr.bf16.mxu0 0
      %4108 = vmatmul.mubr.bf16.gmra.mrb[0].mxu0 %v3871
      %v4109 = vpop.f32.mrb[0].mxu0
      %v4110 = vadd.f32 0.0, %v4109
      %v4111 = vpop.f32.mrb[0].mxu0
      %v4112 = vpop.f32.mrb[0].mxu0
      %v4113 = vadd.f32 0.0, %v4112
      %v4114 = vpop.f32.mrb[0].mxu0
      %4115 = vmatprep.mubr.bf16.mxu0 0
      %4116 = vmatmul.mubr.bf16.gmra.mrb[0].mxu0 %v3880
      %v4117 = vpop.f32.mrb[0].mxu0
      %v4118 = vadd.f32 0.0, %v4117
      %v4119 = vpop.f32.mrb[0].mxu0
      %v4120 = vpop.f32.mrb[0].mxu0
      %v4121 = vadd.f32 0.0, %v4120
      %v4122 = vpop.f32.mrb[0].mxu0
      %4123 = vdwg.mxu0
      %v4124 = vadd.f32 %v3658, %v3982
      %v4125 = vadd.f32 %v3659, %v3985
      %v4126 = vadd.f32 %v3660, %v3990
      %v4127 = vadd.f32 %v3661, %v3993
      %v4128 = vadd.f32 %v3662, %v3998
      %v4129 = vadd.f32 %v3663, %v4001
      %v4130 = vadd.f32 %v3664, %v4006
      %v4131 = vadd.f32 %v3665, %v4009
      %v4132 = vadd.f32 %v3666, %v4014
      %v4133 = vadd.f32 %v3667, %v4017
      %v4134 = vadd.f32 %v3668, %v4022
      %v4135 = vadd.f32 %v3669, %v4025
      %v4136 = vadd.f32 %v3670, %v4030
      %v4137 = vadd.f32 %v3671, %v4033
      %v4138 = vadd.f32 %v3672, %v4038
      %v4139 = vadd.f32 %v3673, %v4041
      %v4140 = vadd.f32 %v3674, %v4046
      %v4141 = vadd.f32 %v3675, %v4049
      %v4142 = vadd.f32 %v3676, %v4054
      %v4143 = vadd.f32 %v3677, %v4057
      %v4144 = vadd.f32 %v3678, %v4062
      %v4145 = vadd.f32 %v3679, %v4065
      %v4146 = vadd.f32 %v3680, %v4070
      %v4147 = vadd.f32 %v3681, %v4073
      %v4148 = vadd.f32 %v3682, %v4078
      %v4149 = vadd.f32 %v3683, %v4081
      %v4150 = vadd.f32 %v3684, %v4086
      %v4151 = vadd.f32 %v3685, %v4089
      %v4152 = vadd.f32 %v3686, %v4094
      %v4153 = vadd.f32 %v3687, %v4097
      %v4154 = vadd.f32 %v3688, %v4102
      %v4155 = vadd.f32 %v3689, %v4105
      %v4156 = vadd.f32 %v3690, %v4110
      %v4157 = vadd.f32 %v3691, %v4113
      %v4158 = vadd.f32 %v3692, %v4118
      %v4159 = vadd.f32 %v3693, %v4121
      %4160 = vst [vmem:[#allocation3] sm:$0xff] %v4124
      %4161 = vst [vmem:[#allocation3 + $0x8] sm:$0xff] %v4125
      %4162 = vst [vmem:[#allocation3 + $0x10] sm:$0xff] %v4126
      %4163 = vst [vmem:[#allocation3 + $0x18] sm:$0xff] %v4127
      %4164 = vst [vmem:[#allocation3 + $0x20] sm:$0xff] %v4128
      %4165 = vst [vmem:[#allocation3 + $0x28] sm:$0xff] %v4129
      %4166 = vst [vmem:[#allocation3 + $0x30] sm:$0xff] %v4130
      %4167 = vst [vmem:[#allocation3 + $0x38] sm:$0xff] %v4131
      %4168 = vst [vmem:[#allocation3 + $0x40] sm:$0xff] %v4132
      %4169 = vst [vmem:[#allocation3 + $0x48] sm:$0xff] %v4133
      %4170 = vst [vmem:[#allocation3 + $0x50] sm:$0xff] %v4134
      %4171 = vst [vmem:[#allocation3 + $0x58] sm:$0xff] %v4135
      %4172 = vst [vmem:[#allocation3 + $0x60] sm:$0xff] %v4136
      %4173 = vst [vmem:[#allocation3 + $0x68] sm:$0xff] %v4137
      %4174 = vst [vmem:[#allocation3 + $0x70] sm:$0xff] %v4138
      %4175 = vst [vmem:[#allocation3 + $0x78] sm:$0xff] %v4139
      %4176 = vst [vmem:[#allocation3 + $0x80] sm:$0xff] %v4140
      %4177 = vst [vmem:[#allocation3 + $0x88] sm:$0xff] %v4141
      %4178 = vst [vmem:[#allocation3 + $0x90] sm:$0xff] %v4142
      %4179 = vst [vmem:[#allocation3 + $0x98] sm:$0xff] %v4143
      %4180 = vst [vmem:[#allocation3 + $0xa0] sm:$0xff] %v4144
      %4181 = vst [vmem:[#allocation3 + $0xa8] sm:$0xff] %v4145
      %4182 = vst [vmem:[#allocation3 + $0xb0] sm:$0xff] %v4146
      %4183 = vst [vmem:[#allocation3 + $0xb8] sm:$0xff] %v4147
      %4184 = vst [vmem:[#allocation3 + $0xc0] sm:$0xff] %v4148
      %4185 = vst [vmem:[#allocation3 + $0xc8] sm:$0xff] %v4149
      %4186 = vst [vmem:[#allocation3 + $0xd0] sm:$0xff] %v4150
      %4187 = vst [vmem:[#allocation3 + $0xd8] sm:$0xff] %v4151
      %4188 = vst [vmem:[#allocation3 + $0xe0] sm:$0xff] %v4152
      %4189 = vst [vmem:[#allocation3 + $0xe8] sm:$0xff] %v4153
      %4190 = vst [vmem:[#allocation3 + $0xf0] sm:$0xff] %v4154
      %4191 = vst [vmem:[#allocation3 + $0xf8] sm:$0xff] %v4155
      %4192 = vst [vmem:[#allocation3 + $0x100] sm:$0xff] %v4156
      %4193 = vst [vmem:[#allocation3 + $0x108] sm:$0xff] %v4157
      %4194 = vst [vmem:[#allocation3 + $0x110] sm:$0xff] %v4158
      %4195 = vst [vmem:[#allocation3 + $0x118] sm:$0xff] %v4159
      %v4196 = vld [vmem:[#allocation2 + $0x18] sm:$0xfc]
      %v4197 = vld [vmem:[#allocation2 + $0x20] sm:$0xff]
      %v4198 = vld [vmem:[#allocation2 + $0x28] sm:$0xff]
      %v4199 = vld [vmem:[#allocation2 + $0x30] sm:$0xff]
      %v4200 = vld [vmem:[#allocation2 + $0x38] sm:$0xff]
      %v4201 = vld [vmem:[#allocation2 + $0x40] sm:$0xff]
      %v4202 = vld [vmem:[#allocation2 + $0x48] sm:$0xff]
      %v4203 = vld [vmem:[#allocation2 + $0x50] sm:$0xff]
      %v4204 = vld [vmem:[#allocation2 + $0x58] sm:$0xff]
      %v4205 = vld [vmem:[#allocation2 + $0x60] sm:$0xff]
      %v4206 = vld [vmem:[#allocation2 + $0x68] sm:$0xff]
      %v4207 = vld [vmem:[#allocation2 + $0x70] sm:$0xff]
      %v4208 = vld [vmem:[#allocation2 + $0x78] sm:$0xff]
      %v4209 = vld [vmem:[#allocation2 + $0x80] sm:$0xff]
      %v4210 = vld [vmem:[#allocation2 + $0x88] sm:$0xff]
      %v4211 = vld [vmem:[#allocation2 + $0x90] sm:$0xff]
      %v4212 = vld [vmem:[#allocation2 + $0x98] sm:$0xff]
      %v4213 = vld [vmem:[#allocation2 + $0xa0] sm:$0xff]
      %v4214 = vld [vmem:[#allocation2 + $0xa8] sm:$0x3]
      %v4215 = vld [vmem:[#allocation3] sm:$0xff]
      %v4216 = vld [vmem:[#allocation3 + $0x8] sm:$0xff]
      %v4217 = vld [vmem:[#allocation3 + $0x10] sm:$0xff]
      %v4218 = vld [vmem:[#allocation3 + $0x18] sm:$0xff]
      %v4219 = vld [vmem:[#allocation3 + $0x20] sm:$0xff]
      %v4220 = vld [vmem:[#allocation3 + $0x28] sm:$0xff]
      %v4221 = vld [vmem:[#allocation3 + $0x30] sm:$0xff]
      %v4222 = vld [vmem:[#allocation3 + $0x38] sm:$0xff]
      %v4223 = vld [vmem:[#allocation3 + $0x40] sm:$0xff]
      %v4224 = vld [vmem:[#allocation3 + $0x48] sm:$0xff]
      %v4225 = vld [vmem:[#allocation3 + $0x50] sm:$0xff]
      %v4226 = vld [vmem:[#allocation3 + $0x58] sm:$0xff]
      %v4227 = vld [vmem:[#allocation3 + $0x60] sm:$0xff]
      %v4228 = vld [vmem:[#allocation3 + $0x68] sm:$0xff]
      %v4229 = vld [vmem:[#allocation3 + $0x70] sm:$0xff]
      %v4230 = vld [vmem:[#allocation3 + $0x78] sm:$0xff]
      %v4231 = vld [vmem:[#allocation3 + $0x80] sm:$0xff]
      %v4232 = vld [vmem:[#allocation3 + $0x88] sm:$0xff]
      %v4233 = vld [vmem:[#allocation3 + $0x90] sm:$0xff]
      %v4234 = vld [vmem:[#allocation3 + $0x98] sm:$0xff]
      %v4235 = vld [vmem:[#allocation3 + $0xa0] sm:$0xff]
      %v4236 = vld [vmem:[#allocation3 + $0xa8] sm:$0xff]
      %v4237 = vld [vmem:[#allocation3 + $0xb0] sm:$0xff]
      %v4238 = vld [vmem:[#allocation3 + $0xb8] sm:$0xff]
      %v4239 = vld [vmem:[#allocation3 + $0xc0] sm:$0xff]
      %v4240 = vld [vmem:[#allocation3 + $0xc8] sm:$0xff]
      %v4241 = vld [vmem:[#allocation3 + $0xd0] sm:$0xff]
      %v4242 = vld [vmem:[#allocation3 + $0xd8] sm:$0xff]
      %v4243 = vld [vmem:[#allocation3 + $0xe0] sm:$0xff]
      %v4244 = vld [vmem:[#allocation3 + $0xe8] sm:$0xff]
      %v4245 = vld [vmem:[#allocation3 + $0xf0] sm:$0xff]
      %v4246 = vld [vmem:[#allocation3 + $0xf8] sm:$0xff]
      %v4247 = vld [vmem:[#allocation3 + $0x100] sm:$0xff]
      %v4248 = vld [vmem:[#allocation3 + $0x108] sm:$0xff]
      %v4249 = vld [vmem:[#allocation3 + $0x110] sm:$0xff]
      %v4250 = vld [vmem:[#allocation3 + $0x118] sm:$0xff]
      %s4251 = scalar_lea.vmem %s3, 448
      %v4252 = vld [vmem:[%s4251] sm:$0xf]
      %v4253 = vld [vmem:[%s4251 + $0x4] sm:$0xf]
      %v4254 = vld [vmem:[%s4251 + $0x8] sm:$0xf]
      %v4255 = vld [vmem:[%s4251 + $0xc] sm:$0xf]
      %v4256 = vld [vmem:[%s4251 + $0x10] sm:$0xf]
      %v4257 = vld [vmem:[%s4251 + $0x14] sm:$0xf]
      %v4258 = vld [vmem:[%s4251 + $0x18] sm:$0xf]
      %v4259 = vld [vmem:[%s4251 + $0x1c] sm:$0xf]
      %v4260 = vld [vmem:[%s4251 + $0x20] sm:$0xf]
      %v4261 = vld [vmem:[%s4251 + $0x24] sm:$0xf]
      %v4262 = vld [vmem:[%s4251 + $0x28] sm:$0xf]
      %v4263 = vld [vmem:[%s4251 + $0x2c] sm:$0xf]
      %v4264 = vld [vmem:[%s4251 + $0x30] sm:$0xf]
      %v4265 = vld [vmem:[%s4251 + $0x34] sm:$0xf]
      %v4266 = vld [vmem:[%s4251 + $0x38] sm:$0xf]
      %v4267 = vld [vmem:[%s4251 + $0x3c] sm:$0xf]
      %vm4287 = vcmask 1045504
      %v4288 = vrot.slane %v4196, 2
      %v4289 = vrot.slane %v4197, 2
      %v4290 = vsel %vm4287, %v4288, %v4289
      %v4291 = vrot.slane %v4198, 2
      %v4292 = vsel %vm4287, %v4289, %v4291
      %v4293 = vrot.slane %v4199, 2
      %v4294 = vsel %vm4287, %v4291, %v4293
      %v4295 = vrot.slane %v4200, 2
      %v4296 = vsel %vm4287, %v4293, %v4295
      %v4297 = vrot.slane %v4201, 2
      %v4298 = vsel %vm4287, %v4295, %v4297
      %v4299 = vrot.slane %v4202, 2
      %v4300 = vsel %vm4287, %v4297, %v4299
      %v4301 = vrot.slane %v4203, 2
      %v4302 = vsel %vm4287, %v4299, %v4301
      %v4303 = vrot.slane %v4204, 2
      %v4304 = vsel %vm4287, %v4301, %v4303
      %v4305 = vrot.slane %v4205, 2
      %v4306 = vsel %vm4287, %v4303, %v4305
      %v4307 = vrot.slane %v4206, 2
      %v4308 = vsel %vm4287, %v4305, %v4307
      %v4309 = vrot.slane %v4207, 2
      %v4310 = vsel %vm4287, %v4307, %v4309
      %v4311 = vrot.slane %v4208, 2
      %v4312 = vsel %vm4287, %v4309, %v4311
      %v4313 = vrot.slane %v4209, 2
      %v4314 = vsel %vm4287, %v4311, %v4313
      %v4315 = vrot.slane %v4210, 2
      %v4316 = vsel %vm4287, %v4313, %v4315
      %v4317 = vrot.slane %v4211, 2
      %v4318 = vsel %vm4287, %v4315, %v4317
      %v4319 = vrot.slane %v4212, 2
      %v4320 = vsel %vm4287, %v4317, %v4319
      %v4321 = vrot.slane %v4213, 2
      %v4322 = vsel %vm4287, %v4319, %v4321
      %v4323 = vrot.slane %v4214, 2
      %v4324 = vsel %vm4287, %v4321, %v4323
      %v4359 = vunpack.c.l.b16 %v4252
      %v4360 = vunpack.c.l.b16 %v4253
      %v4361 = vunpack.c.l.b16 %v4254
      %v4362 = vunpack.c.l.b16 %v4255
      %v4363 = vunpack.c.l.b16 %v4256
      %v4364 = vunpack.c.l.b16 %v4257
      %v4365 = vunpack.c.l.b16 %v4258
      %v4366 = vunpack.c.l.b16 %v4259
      %v4367 = vunpack.c.l.b16 %v4260
      %v4368 = vunpack.c.l.b16 %v4261
      %v4369 = vunpack.c.l.b16 %v4262
      %v4370 = vunpack.c.l.b16 %v4263
      %v4371 = vunpack.c.l.b16 %v4264
      %v4372 = vunpack.c.l.b16 %v4265
      %v4373 = vunpack.c.l.b16 %v4266
      %v4374 = vunpack.c.l.b16 %v4267
      %v4375 = vpack.c.b16 %v4360, %v4359
      %v4376 = vpack.c.b16 %v4362, %v4361
      %v4377 = vpack.c.b16 %v4364, %v4363
      %v4378 = vpack.c.b16 %v4366, %v4365
      %v4379 = vpack.c.b16 %v4368, %v4367
      %v4380 = vpack.c.b16 %v4370, %v4369
      %v4381 = vpack.c.b16 %v4372, %v4371
      %v4382 = vpack.c.b16 %v4374, %v4373
      %4391 = vmatprep.subr.bf16.mxu0 0
      %4392 = vmatpush1.bf16.msra.mxu0 %v4375
      %4393 = vmatprep.subr.bf16.mxu0 0
      %4394 = vmatpush1.bf16.msra.mxu0 %v4376
      %4395 = vmatprep.subr.bf16.mxu0 0
      %4396 = vmatpush1.bf16.msra.mxu0 %v4377
      %4397 = vmatprep.subr.bf16.mxu0 0
      %4398 = vmatpush1.bf16.msra.mxu0 %v4378
      %4399 = vmatprep.subr.bf16.mxu0 0
      %4400 = vmatpush1.bf16.msra.mxu0 %v4379
      %4401 = vmatprep.subr.bf16.mxu0 0
      %4402 = vmatpush1.bf16.msra.mxu0 %v4380
      %4403 = vmatprep.subr.bf16.mxu0 0
      %4404 = vmatpush1.bf16.msra.mxu0 %v4381
      %4405 = vmatprep.subr.bf16.mxu0 0
      %4406 = vmatpush1.bf16.msra.mxu0 %v4382
      %4407 = vmatprep.subr.bf16.mxu0 0
      %4408 = vmatpush1.bf16.msra.mxu0 0
      %4409 = vmatprep.subr.bf16.mxu0 0
      %4410 = vmatpush1.bf16.msra.mxu0 0
      %4411 = vmatprep.subr.bf16.mxu0 0
      %4412 = vmatpush1.bf16.msra.mxu0 0
      %4413 = vmatprep.subr.bf16.mxu0 0
      %4414 = vmatpush1.bf16.msra.mxu0 0
      %4415 = vmatprep.subr.bf16.mxu0 0
      %4416 = vmatpush1.bf16.msra.mxu0 0
      %4417 = vmatprep.subr.bf16.mxu0 0
      %4418 = vmatpush1.bf16.msra.mxu0 0
      %4419 = vmatprep.subr.bf16.mxu0 0
      %4420 = vmatpush1.bf16.msra.mxu0 0
      %4421 = vmatprep.subr.bf16.mxu0 0
      %4422 = vmatpush1.bf16.msra.mxu0 0
      %4423 = vmatprep.mubr.bf16.mxu0 0
      %4424 = vmatmul.mubr.bf16.gmra.mrb[0].mxu0 %v4290
      %v4425 = vpop.f32.mrb[0].mxu0
      %v4426 = vadd.f32 0.0, %v4425
      %v4427 = vpop.f32.mrb[0].mxu0
      %v4428 = vpop.f32.mrb[0].mxu0
      %v4429 = vadd.f32 0.0, %v4428
      %v4430 = vpop.f32.mrb[0].mxu0
      %4431 = vmatprep.mubr.bf16.mxu0 0
      %4432 = vmatmul.mubr.bf16.gmra.mrb[0].mxu0 %v4292
      %v4433 = vpop.f32.mrb[0].mxu0
      %v4434 = vadd.f32 0.0, %v4433
      %v4435 = vpop.f32.mrb[0].mxu0
      %v4436 = vpop.f32.mrb[0].mxu0
      %v4437 = vadd.f32 0.0, %v4436
      %v4438 = vpop.f32.mrb[0].mxu0
      %4439 = vmatprep.mubr.bf16.mxu0 0
      %4440 = vmatmul.mubr.bf16.gmra.mrb[0].mxu0 %v4294
      %v4441 = vpop.f32.mrb[0].mxu0
      %v4442 = vadd.f32 0.0, %v4441
      %v4443 = vpop.f32.mrb[0].mxu0
      %v4444 = vpop.f32.mrb[0].mxu0
      %v4445 = vadd.f32 0.0, %v4444
      %v4446 = vpop.f32.mrb[0].mxu0
      %4447 = vmatprep.mubr.bf16.mxu0 0
      %4448 = vmatmul.mubr.bf16.gmra.mrb[0].mxu0 %v4296
      %v4449 = vpop.f32.mrb[0].mxu0
      %v4450 = vadd.f32 0.0, %v4449
      %v4451 = vpop.f32.mrb[0].mxu0
      %v4452 = vpop.f32.mrb[0].mxu0
      %v4453 = vadd.f32 0.0, %v4452
      %v4454 = vpop.f32.mrb[0].mxu0
      %4455 = vmatprep.mubr.bf16.mxu0 0
      %4456 = vmatmul.mubr.bf16.gmra.mrb[0].mxu0 %v4298
      %v4457 = vpop.f32.mrb[0].mxu0
      %v4458 = vadd.f32 0.0, %v4457
      %v4459 = vpop.f32.mrb[0].mxu0
      %v4460 = vpop.f32.mrb[0].mxu0
      %v4461 = vadd.f32 0.0, %v4460
      %v4462 = vpop.f32.mrb[0].mxu0
      %4463 = vmatprep.mubr.bf16.mxu0 0
      %4464 = vmatmul.mubr.bf16.gmra.mrb[0].mxu0 %v4300
      %v4465 = vpop.f32.mrb[0].mxu0
      %v4466 = vadd.f32 0.0, %v4465
      %v4467 = vpop.f32.mrb[0].mxu0
      %v4468 = vpop.f32.mrb[0].mxu0
      %v4469 = vadd.f32 0.0, %v4468
      %v4470 = vpop.f32.mrb[0].mxu0
      %4471 = vmatprep.mubr.bf16.mxu0 0
      %4472 = vmatmul.mubr.bf16.gmra.mrb[0].mxu0 %v4302
      %v4473 = vpop.f32.mrb[0].mxu0
      %v4474 = vadd.f32 0.0, %v4473
      %v4475 = vpop.f32.mrb[0].mxu0
      %v4476 = vpop.f32.mrb[0].mxu0
      %v4477 = vadd.f32 0.0, %v4476
      %v4478 = vpop.f32.mrb[0].mxu0
      %4479 = vmatprep.mubr.bf16.mxu0 0
      %4480 = vmatmul.mubr.bf16.gmra.mrb[0].mxu0 %v4304
      %v4481 = vpop.f32.mrb[0].mxu0
      %v4482 = vadd.f32 0.0, %v4481
      %v4483 = vpop.f32.mrb[0].mxu0
      %v4484 = vpop.f32.mrb[0].mxu0
      %v4485 = vadd.f32 0.0, %v4484
      %v4486 = vpop.f32.mrb[0].mxu0
      %4487 = vmatprep.mubr.bf16.mxu0 0
      %4488 = vmatmul.mubr.bf16.gmra.mrb[0].mxu0 %v4306
      %v4489 = vpop.f32.mrb[0].mxu0
      %v4490 = vadd.f32 0.0, %v4489
      %v4491 = vpop.f32.mrb[0].mxu0
      %v4492 = vpop.f32.mrb[0].mxu0
      %v4493 = vadd.f32 0.0, %v4492
      %v4494 = vpop.f32.mrb[0].mxu0
      %4495 = vmatprep.mubr.bf16.mxu0 0
      %4496 = vmatmul.mubr.bf16.gmra.mrb[0].mxu0 %v4308
      %v4497 = vpop.f32.mrb[0].mxu0
      %v4498 = vadd.f32 0.0, %v4497
      %v4499 = vpop.f32.mrb[0].mxu0
      %v4500 = vpop.f32.mrb[0].mxu0
      %v4501 = vadd.f32 0.0, %v4500
      %v4502 = vpop.f32.mrb[0].mxu0
      %4503 = vmatprep.mubr.bf16.mxu0 0
      %4504 = vmatmul.mubr.bf16.gmra.mrb[0].mxu0 %v4310
      %v4505 = vpop.f32.mrb[0].mxu0
      %v4506 = vadd.f32 0.0, %v4505
      %v4507 = vpop.f32.mrb[0].mxu0
      %v4508 = vpop.f32.mrb[0].mxu0
      %v4509 = vadd.f32 0.0, %v4508
      %v4510 = vpop.f32.mrb[0].mxu0
      %4511 = vmatprep.mubr.bf16.mxu0 0
      %4512 = vmatmul.mubr.bf16.gmra.mrb[0].mxu0 %v4312
      %v4513 = vpop.f32.mrb[0].mxu0
      %v4514 = vadd.f32 0.0, %v4513
      %v4515 = vpop.f32.mrb[0].mxu0
      %v4516 = vpop.f32.mrb[0].mxu0
      %v4517 = vadd.f32 0.0, %v4516
      %v4518 = vpop.f32.mrb[0].mxu0
      %4519 = vmatprep.mubr.bf16.mxu0 0
      %4520 = vmatmul.mubr.bf16.gmra.mrb[0].mxu0 %v4314
      %v4521 = vpop.f32.mrb[0].mxu0
      %v4522 = vadd.f32 0.0, %v4521
      %v4523 = vpop.f32.mrb[0].mxu0
      %v4524 = vpop.f32.mrb[0].mxu0
      %v4525 = vadd.f32 0.0, %v4524
      %v4526 = vpop.f32.mrb[0].mxu0
      %4527 = vmatprep.mubr.bf16.mxu0 0
      %4528 = vmatmul.mubr.bf16.gmra.mrb[0].mxu0 %v4316
      %v4529 = vpop.f32.mrb[0].mxu0
      %v4530 = vadd.f32 0.0, %v4529
      %v4531 = vpop.f32.mrb[0].mxu0
      %v4532 = vpop.f32.mrb[0].mxu0
      %v4533 = vadd.f32 0.0, %v4532
      %v4534 = vpop.f32.mrb[0].mxu0
      %4535 = vmatprep.mubr.bf16.mxu0 0
      %4536 = vmatmul.mubr.bf16.gmra.mrb[0].mxu0 %v4318
      %v4537 = vpop.f32.mrb[0].mxu0
      %v4538 = vadd.f32 0.0, %v4537
      %v4539 = vpop.f32.mrb[0].mxu0
      %v4540 = vpop.f32.mrb[0].mxu0
      %v4541 = vadd.f32 0.0, %v4540
      %v4542 = vpop.f32.mrb[0].mxu0
      %4543 = vmatprep.mubr.bf16.mxu0 0
      %4544 = vmatmul.mubr.bf16.gmra.mrb[0].mxu0 %v4320
      %v4545 = vpop.f32.mrb[0].mxu0
      %v4546 = vadd.f32 0.0, %v4545
      %v4547 = vpop.f32.mrb[0].mxu0
      %v4548 = vpop.f32.mrb[0].mxu0
      %v4549 = vadd.f32 0.0, %v4548
      %v4550 = vpop.f32.mrb[0].mxu0
      %4551 = vmatprep.mubr.bf16.mxu0 0
      %4552 = vmatmul.mubr.bf16.gmra.mrb[0].mxu0 %v4322
      %v4553 = vpop.f32.mrb[0].mxu0
      %v4554 = vadd.f32 0.0, %v4553
      %v4555 = vpop.f32.mrb[0].mxu0
      %v4556 = vpop.f32.mrb[0].mxu0
      %v4557 = vadd.f32 0.0, %v4556
      %v4558 = vpop.f32.mrb[0].mxu0
      %4559 = vmatprep.mubr.bf16.mxu0 0
      %4560 = vmatmul.mubr.bf16.gmra.mrb[0].mxu0 %v4324
      %v4561 = vpop.f32.mrb[0].mxu0
      %v4562 = vadd.f32 0.0, %v4561
      %v4563 = vpop.f32.mrb[0].mxu0
      %v4564 = vpop.f32.mrb[0].mxu0
      %v4565 = vadd.f32 0.0, %v4564
      %v4566 = vpop.f32.mrb[0].mxu0
      %4567 = vdwg.mxu0
      %v4568 = vadd.f32 %v4215, %v4426
      %v4569 = vadd.f32 %v4216, %v4429
      %v4570 = vadd.f32 %v4217, %v4434
      %v4571 = vadd.f32 %v4218, %v4437
      %v4572 = vadd.f32 %v4219, %v4442
      %v4573 = vadd.f32 %v4220, %v4445
      %v4574 = vadd.f32 %v4221, %v4450
      %v4575 = vadd.f32 %v4222, %v4453
      %v4576 = vadd.f32 %v4223, %v4458
      %v4577 = vadd.f32 %v4224, %v4461
      %v4578 = vadd.f32 %v4225, %v4466
      %v4579 = vadd.f32 %v4226, %v4469
      %v4580 = vadd.f32 %v4227, %v4474
      %v4581 = vadd.f32 %v4228, %v4477
      %v4582 = vadd.f32 %v4229, %v4482
      %v4583 = vadd.f32 %v4230, %v4485
      %v4584 = vadd.f32 %v4231, %v4490
      %v4585 = vadd.f32 %v4232, %v4493
      %v4586 = vadd.f32 %v4233, %v4498
      %v4587 = vadd.f32 %v4234, %v4501
      %v4588 = vadd.f32 %v4235, %v4506
      %v4589 = vadd.f32 %v4236, %v4509
      %v4590 = vadd.f32 %v4237, %v4514
      %v4591 = vadd.f32 %v4238, %v4517
      %v4592 = vadd.f32 %v4239, %v4522
      %v4593 = vadd.f32 %v4240, %v4525
      %v4594 = vadd.f32 %v4241, %v4530
      %v4595 = vadd.f32 %v4242, %v4533
      %v4596 = vadd.f32 %v4243, %v4538
      %v4597 = vadd.f32 %v4244, %v4541
      %v4598 = vadd.f32 %v4245, %v4546
      %v4599 = vadd.f32 %v4246, %v4549
      %v4600 = vadd.f32 %v4247, %v4554
      %v4601 = vadd.f32 %v4248, %v4557
      %v4602 = vadd.f32 %v4249, %v4562
      %v4603 = vadd.f32 %v4250, %v4565
      %4604 = vst [vmem:[#allocation3] sm:$0xff] %v4568
      %4605 = vst [vmem:[#allocation3 + $0x8] sm:$0xff] %v4569
      %4606 = vst [vmem:[#allocation3 + $0x10] sm:$0xff] %v4570
      %4607 = vst [vmem:[#allocation3 + $0x18] sm:$0xff] %v4571
      %4608 = vst [vmem:[#allocation3 + $0x20] sm:$0xff] %v4572
      %4609 = vst [vmem:[#allocation3 + $0x28] sm:$0xff] %v4573
      %4610 = vst [vmem:[#allocation3 + $0x30] sm:$0xff] %v4574
      %4611 = vst [vmem:[#allocation3 + $0x38] sm:$0xff] %v4575
      %4612 = vst [vmem:[#allocation3 + $0x40] sm:$0xff] %v4576
      %4613 = vst [vmem:[#allocation3 + $0x48] sm:$0xff] %v4577
      %4614 = vst [vmem:[#allocation3 + $0x50] sm:$0xff] %v4578
      %4615 = vst [vmem:[#allocation3 + $0x58] sm:$0xff] %v4579
      %4616 = vst [vmem:[#allocation3 + $0x60] sm:$0xff] %v4580
      %4617 = vst [vmem:[#allocation3 + $0x68] sm:$0xff] %v4581
      %4618 = vst [vmem:[#allocation3 + $0x70] sm:$0xff] %v4582
      %4619 = vst [vmem:[#allocation3 + $0x78] sm:$0xff] %v4583
      %4620 = vst [vmem:[#allocation3 + $0x80] sm:$0xff] %v4584
      %4621 = vst [vmem:[#allocation3 + $0x88] sm:$0xff] %v4585
      %4622 = vst [vmem:[#allocation3 + $0x90] sm:$0xff] %v4586
      %4623 = vst [vmem:[#allocation3 + $0x98] sm:$0xff] %v4587
      %4624 = vst [vmem:[#allocation3 + $0xa0] sm:$0xff] %v4588
      %4625 = vst [vmem:[#allocation3 + $0xa8] sm:$0xff] %v4589
      %4626 = vst [vmem:[#allocation3 + $0xb0] sm:$0xff] %v4590
      %4627 = vst [vmem:[#allocation3 + $0xb8] sm:$0xff] %v4591
      %4628 = vst [vmem:[#allocation3 + $0xc0] sm:$0xff] %v4592
      %4629 = vst [vmem:[#allocation3 + $0xc8] sm:$0xff] %v4593
      %4630 = vst [vmem:[#allocation3 + $0xd0] sm:$0xff] %v4594
      %4631 = vst [vmem:[#allocation3 + $0xd8] sm:$0xff] %v4595
      %4632 = vst [vmem:[#allocation3 + $0xe0] sm:$0xff] %v4596
      %4633 = vst [vmem:[#allocation3 + $0xe8] sm:$0xff] %v4597
      %4634 = vst [vmem:[#allocation3 + $0xf0] sm:$0xff] %v4598
      %4635 = vst [vmem:[#allocation3 + $0xf8] sm:$0xff] %v4599
      %4636 = vst [vmem:[#allocation3 + $0x100] sm:$0xff] %v4600
      %4637 = vst [vmem:[#allocation3 + $0x108] sm:$0xff] %v4601
      %4638 = vst [vmem:[#allocation3 + $0x110] sm:$0xff] %v4602
      %4639 = vst [vmem:[#allocation3 + $0x118] sm:$0xff] %v4603
      %v4640 = vld [vmem:[#allocation2 + $0x18] sm:$0xfc]
      %v4641 = vld [vmem:[#allocation2 + $0x20] sm:$0xff]
      %v4642 = vld [vmem:[#allocation2 + $0x28] sm:$0xff]
      %v4643 = vld [vmem:[#allocation2 + $0x30] sm:$0xff]
      %v4644 = vld [vmem:[#allocation2 + $0x38] sm:$0xff]
      %v4645 = vld [vmem:[#allocation2 + $0x40] sm:$0xff]
      %v4646 = vld [vmem:[#allocation2 + $0x48] sm:$0xff]
      %v4647 = vld [vmem:[#allocation2 + $0x50] sm:$0xff]
      %v4648 = vld [vmem:[#allocation2 + $0x58] sm:$0xff]
      %v4649 = vld [vmem:[#allocation2 + $0x60] sm:$0xff]
      %v4650 = vld [vmem:[#allocation2 + $0x68] sm:$0xff]
      %v4651 = vld [vmem:[#allocation2 + $0x70] sm:$0xff]
      %v4652 = vld [vmem:[#allocation2 + $0x78] sm:$0xff]
      %v4653 = vld [vmem:[#allocation2 + $0x80] sm:$0xff]
      %v4654 = vld [vmem:[#allocation2 + $0x88] sm:$0xff]
      %v4655 = vld [vmem:[#allocation2 + $0x90] sm:$0xff]
      %v4656 = vld [vmem:[#allocation2 + $0x98] sm:$0xff]
      %v4657 = vld [vmem:[#allocation2 + $0xa0] sm:$0xff]
      %v4658 = vld [vmem:[#allocation2 + $0xa8] sm:$0x7]
      %v4659 = vld [vmem:[#allocation3] sm:$0xff]
      %v4660 = vld [vmem:[#allocation3 + $0x8] sm:$0xff]
      %v4661 = vld [vmem:[#allocation3 + $0x10] sm:$0xff]
      %v4662 = vld [vmem:[#allocation3 + $0x18] sm:$0xff]
      %v4663 = vld [vmem:[#allocation3 + $0x20] sm:$0xff]
      %v4664 = vld [vmem:[#allocation3 + $0x28] sm:$0xff]
      %v4665 = vld [vmem:[#allocation3 + $0x30] sm:$0xff]
      %v4666 = vld [vmem:[#allocation3 + $0x38] sm:$0xff]
      %v4667 = vld [vmem:[#allocation3 + $0x40] sm:$0xff]
      %v4668 = vld [vmem:[#allocation3 + $0x48] sm:$0xff]
      %v4669 = vld [vmem:[#allocation3 + $0x50] sm:$0xff]
      %v4670 = vld [vmem:[#allocation3 + $0x58] sm:$0xff]
      %v4671 = vld [vmem:[#allocation3 + $0x60] sm:$0xff]
      %v4672 = vld [vmem:[#allocation3 + $0x68] sm:$0xff]
      %v4673 = vld [vmem:[#allocation3 + $0x70] sm:$0xff]
      %v4674 = vld [vmem:[#allocation3 + $0x78] sm:$0xff]
      %v4675 = vld [vmem:[#allocation3 + $0x80] sm:$0xff]
      %v4676 = vld [vmem:[#allocation3 + $0x88] sm:$0xff]
      %v4677 = vld [vmem:[#allocation3 + $0x90] sm:$0xff]
      %v4678 = vld [vmem:[#allocation3 + $0x98] sm:$0xff]
      %v4679 = vld [vmem:[#allocation3 + $0xa0] sm:$0xff]
      %v4680 = vld [vmem:[#allocation3 + $0xa8] sm:$0xff]
      %v4681 = vld [vmem:[#allocation3 + $0xb0] sm:$0xff]
      %v4682 = vld [vmem:[#allocation3 + $0xb8] sm:$0xff]
      %v4683 = vld [vmem:[#allocation3 + $0xc0] sm:$0xff]
      %v4684 = vld [vmem:[#allocation3 + $0xc8] sm:$0xff]
      %v4685 = vld [vmem:[#allocation3 + $0xd0] sm:$0xff]
      %v4686 = vld [vmem:[#allocation3 + $0xd8] sm:$0xff]
      %v4687 = vld [vmem:[#allocation3 + $0xe0] sm:$0xff]
      %v4688 = vld [vmem:[#allocation3 + $0xe8] sm:$0xff]
      %v4689 = vld [vmem:[#allocation3 + $0xf0] sm:$0xff]
      %v4690 = vld [vmem:[#allocation3 + $0xf8] sm:$0xff]
      %v4691 = vld [vmem:[#allocation3 + $0x100] sm:$0xff]
      %v4692 = vld [vmem:[#allocation3 + $0x108] sm:$0xff]
      %v4693 = vld [vmem:[#allocation3 + $0x110] sm:$0xff]
      %v4694 = vld [vmem:[#allocation3 + $0x118] sm:$0xff]
      %s4695 = scalar_lea.vmem %s3, 512
      %v4696 = vld [vmem:[%s4695] sm:$0xf]
      %v4697 = vld [vmem:[%s4695 + $0x4] sm:$0xf]
      %v4698 = vld [vmem:[%s4695 + $0x8] sm:$0xf]
      %v4699 = vld [vmem:[%s4695 + $0xc] sm:$0xf]
      %v4700 = vld [vmem:[%s4695 + $0x10] sm:$0xf]
      %v4701 = vld [vmem:[%s4695 + $0x14] sm:$0xf]
      %v4702 = vld [vmem:[%s4695 + $0x18] sm:$0xf]
      %v4703 = vld [vmem:[%s4695 + $0x1c] sm:$0xf]
      %v4704 = vld [vmem:[%s4695 + $0x20] sm:$0xf]
      %v4705 = vld [vmem:[%s4695 + $0x24] sm:$0xf]
      %v4706 = vld [vmem:[%s4695 + $0x28] sm:$0xf]
      %v4707 = vld [vmem:[%s4695 + $0x2c] sm:$0xf]
      %v4708 = vld [vmem:[%s4695 + $0x30] sm:$0xf]
      %v4709 = vld [vmem:[%s4695 + $0x34] sm:$0xf]
      %v4710 = vld [vmem:[%s4695 + $0x38] sm:$0xf]
      %v4711 = vld [vmem:[%s4695 + $0x3c] sm:$0xf]
      %vm4712 = vsmask.f32 5376
      %v4714 = vshrl.u32 %v4640, 16
      %v4716 = vrot.slane %v4714, 2
      %v4717 = vshll.u32 %v4640, 16
      %v4719 = vrot.slane %v4717, 3
      %v4720 = vor.u32 %v4716, %v4719
      %v4722 = vshrl.u32 %v4641, 16
      %v4724 = vrot.slane %v4722, 2
      %v4725 = vshll.u32 %v4641, 16
      %v4727 = vrot.slane %v4725, 3
      %v4728 = vor.u32 %v4724, %v4727
      %v4729 = vsel %vm4712, %v4720, %v4728
      %v4731 = vshrl.u32 %v4642, 16
      %v4733 = vrot.slane %v4731, 2
      %v4734 = vshll.u32 %v4642, 16
      %v4736 = vrot.slane %v4734, 3
      %v4737 = vor.u32 %v4733, %v4736
      %v4738 = vsel %vm4712, %v4728, %v4737
      %v4740 = vshrl.u32 %v4643, 16
      %v4742 = vrot.slane %v4740, 2
      %v4743 = vshll.u32 %v4643, 16
      %v4745 = vrot.slane %v4743, 3
      %v4746 = vor.u32 %v4742, %v4745
      %v4747 = vsel %vm4712, %v4737, %v4746
      %v4749 = vshrl.u32 %v4644, 16
      %v4751 = vrot.slane %v4749, 2
      %v4752 = vshll.u32 %v4644, 16
      %v4754 = vrot.slane %v4752, 3
      %v4755 = vor.u32 %v4751, %v4754
      %v4756 = vsel %vm4712, %v4746, %v4755
      %v4758 = vshrl.u32 %v4645, 16
      %v4760 = vrot.slane %v4758, 2
      %v4761 = vshll.u32 %v4645, 16
      %v4763 = vrot.slane %v4761, 3
      %v4764 = vor.u32 %v4760, %v4763
      %v4765 = vsel %vm4712, %v4755, %v4764
      %v4767 = vshrl.u32 %v4646, 16
      %v4769 = vrot.slane %v4767, 2
      %v4770 = vshll.u32 %v4646, 16
      %v4772 = vrot.slane %v4770, 3
      %v4773 = vor.u32 %v4769, %v4772
      %v4774 = vsel %vm4712, %v4764, %v4773
      %v4776 = vshrl.u32 %v4647, 16
      %v4778 = vrot.slane %v4776, 2
      %v4779 = vshll.u32 %v4647, 16
      %v4781 = vrot.slane %v4779, 3
      %v4782 = vor.u32 %v4778, %v4781
      %v4783 = vsel %vm4712, %v4773, %v4782
      %v4785 = vshrl.u32 %v4648, 16
      %v4787 = vrot.slane %v4785, 2
      %v4788 = vshll.u32 %v4648, 16
      %v4790 = vrot.slane %v4788, 3
      %v4791 = vor.u32 %v4787, %v4790
      %v4792 = vsel %vm4712, %v4782, %v4791
      %v4794 = vshrl.u32 %v4649, 16
      %v4796 = vrot.slane %v4794, 2
      %v4797 = vshll.u32 %v4649, 16
      %v4799 = vrot.slane %v4797, 3
      %v4800 = vor.u32 %v4796, %v4799
      %v4801 = vsel %vm4712, %v4791, %v4800
      %v4803 = vshrl.u32 %v4650, 16
      %v4805 = vrot.slane %v4803, 2
      %v4806 = vshll.u32 %v4650, 16
      %v4808 = vrot.slane %v4806, 3
      %v4809 = vor.u32 %v4805, %v4808
      %v4810 = vsel %vm4712, %v4800, %v4809
      %v4812 = vshrl.u32 %v4651, 16
      %v4814 = vrot.slane %v4812, 2
      %v4815 = vshll.u32 %v4651, 16
      %v4817 = vrot.slane %v4815, 3
      %v4818 = vor.u32 %v4814, %v4817
      %v4819 = vsel %vm4712, %v4809, %v4818
      %v4821 = vshrl.u32 %v4652, 16
      %v4823 = vrot.slane %v4821, 2
      %v4824 = vshll.u32 %v4652, 16
      %v4826 = vrot.slane %v4824, 3
      %v4827 = vor.u32 %v4823, %v4826
      %v4828 = vsel %vm4712, %v4818, %v4827
      %v4830 = vshrl.u32 %v4653, 16
      %v4832 = vrot.slane %v4830, 2
      %v4833 = vshll.u32 %v4653, 16
      %v4835 = vrot.slane %v4833, 3
      %v4836 = vor.u32 %v4832, %v4835
      %v4837 = vsel %vm4712, %v4827, %v4836
      %v4839 = vshrl.u32 %v4654, 16
      %v4841 = vrot.slane %v4839, 2
      %v4842 = vshll.u32 %v4654, 16
      %v4844 = vrot.slane %v4842, 3
      %v4845 = vor.u32 %v4841, %v4844
      %v4846 = vsel %vm4712, %v4836, %v4845
      %v4848 = vshrl.u32 %v4655, 16
      %v4850 = vrot.slane %v4848, 2
      %v4851 = vshll.u32 %v4655, 16
      %v4853 = vrot.slane %v4851, 3
      %v4854 = vor.u32 %v4850, %v4853
      %v4855 = vsel %vm4712, %v4845, %v4854
      %v4857 = vshrl.u32 %v4656, 16
      %v4859 = vrot.slane %v4857, 2
      %v4860 = vshll.u32 %v4656, 16
      %v4862 = vrot.slane %v4860, 3
      %v4863 = vor.u32 %v4859, %v4862
      %v4864 = vsel %vm4712, %v4854, %v4863
      %v4866 = vshrl.u32 %v4657, 16
      %v4868 = vrot.slane %v4866, 2
      %v4869 = vshll.u32 %v4657, 16
      %v4871 = vrot.slane %v4869, 3
      %v4872 = vor.u32 %v4868, %v4871
      %v4873 = vsel %vm4712, %v4863, %v4872
      %v4875 = vshrl.u32 %v4658, 16
      %v4877 = vrot.slane %v4875, 2
      %v4878 = vshll.u32 %v4658, 16
      %v4880 = vrot.slane %v4878, 3
      %v4881 = vor.u32 %v4877, %v4880
      %v4882 = vsel %vm4712, %v4872, %v4881
      %v4917 = vunpack.c.l.b16 %v4696
      %v4918 = vunpack.c.l.b16 %v4697
      %v4919 = vunpack.c.l.b16 %v4698
      %v4920 = vunpack.c.l.b16 %v4699
      %v4921 = vunpack.c.l.b16 %v4700
      %v4922 = vunpack.c.l.b16 %v4701
      %v4923 = vunpack.c.l.b16 %v4702
      %v4924 = vunpack.c.l.b16 %v4703
      %v4925 = vunpack.c.l.b16 %v4704
      %v4926 = vunpack.c.l.b16 %v4705
      %v4927 = vunpack.c.l.b16 %v4706
      %v4928 = vunpack.c.l.b16 %v4707
      %v4929 = vunpack.c.l.b16 %v4708
      %v4930 = vunpack.c.l.b16 %v4709
      %v4931 = vunpack.c.l.b16 %v4710
      %v4932 = vunpack.c.l.b16 %v4711
      %v4933 = vpack.c.b16 %v4918, %v4917
      %v4934 = vpack.c.b16 %v4920, %v4919
      %v4935 = vpack.c.b16 %v4922, %v4921
      %v4936 = vpack.c.b16 %v4924, %v4923
      %v4937 = vpack.c.b16 %v4926, %v4925
      %v4938 = vpack.c.b16 %v4928, %v4927
      %v4939 = vpack.c.b16 %v4930, %v4929
      %v4940 = vpack.c.b16 %v4932, %v4931
      %4949 = vmatprep.subr.bf16.mxu0 0
      %4950 = vmatpush1.bf16.msra.mxu0 %v4933
      %4951 = vmatprep.subr.bf16.mxu0 0
      %4952 = vmatpush1.bf16.msra.mxu0 %v4934
      %4953 = vmatprep.subr.bf16.mxu0 0
      %4954 = vmatpush1.bf16.msra.mxu0 %v4935
      %4955 = vmatprep.subr.bf16.mxu0 0
      %4956 = vmatpush1.bf16.msra.mxu0 %v4936
      %4957 = vmatprep.subr.bf16.mxu0 0
      %4958 = vmatpush1.bf16.msra.mxu0 %v4937
      %4959 = vmatprep.subr.bf16.mxu0 0
      %4960 = vmatpush1.bf16.msra.mxu0 %v4938
      %4961 = vmatprep.subr.bf16.mxu0 0
      %4962 = vmatpush1.bf16.msra.mxu0 %v4939
      %4963 = vmatprep.subr.bf16.mxu0 0
      %4964 = vmatpush1.bf16.msra.mxu0 %v4940
      %4965 = vmatprep.subr.bf16.mxu0 0
      %4966 = vmatpush1.bf16.msra.mxu0 0
      %4967 = vmatprep.subr.bf16.mxu0 0
      %4968 = vmatpush1.bf16.msra.mxu0 0
      %4969 = vmatprep.subr.bf16.mxu0 0
      %4970 = vmatpush1.bf16.msra.mxu0 0
      %4971 = vmatprep.subr.bf16.mxu0 0
      %4972 = vmatpush1.bf16.msra.mxu0 0
      %4973 = vmatprep.subr.bf16.mxu0 0
      %4974 = vmatpush1.bf16.msra.mxu0 0
      %4975 = vmatprep.subr.bf16.mxu0 0
      %4976 = vmatpush1.bf16.msra.mxu0 0
      %4977 = vmatprep.subr.bf16.mxu0 0
      %4978 = vmatpush1.bf16.msra.mxu0 0
      %4979 = vmatprep.subr.bf16.mxu0 0
      %4980 = vmatpush1.bf16.msra.mxu0 0
      %4981 = vmatprep.mubr.bf16.mxu0 0
      %4982 = vmatmul.mubr.bf16.gmra.mrb[0].mxu0 %v4729
      %v4983 = vpop.f32.mrb[0].mxu0
      %v4984 = vadd.f32 0.0, %v4983
      %v4985 = vpop.f32.mrb[0].mxu0
      %v4986 = vpop.f32.mrb[0].mxu0
      %v4987 = vadd.f32 0.0, %v4986
      %v4988 = vpop.f32.mrb[0].mxu0
      %4989 = vmatprep.mubr.bf16.mxu0 0
      %4990 = vmatmul.mubr.bf16.gmra.mrb[0].mxu0 %v4738
      %v4991 = vpop.f32.mrb[0].mxu0
      %v4992 = vadd.f32 0.0, %v4991
      %v4993 = vpop.f32.mrb[0].mxu0
      %v4994 = vpop.f32.mrb[0].mxu0
      %v4995 = vadd.f32 0.0, %v4994
      %v4996 = vpop.f32.mrb[0].mxu0
      %4997 = vmatprep.mubr.bf16.mxu0 0
      %4998 = vmatmul.mubr.bf16.gmra.mrb[0].mxu0 %v4747
      %v4999 = vpop.f32.mrb[0].mxu0
      %v5000 = vadd.f32 0.0, %v4999
      %v5001 = vpop.f32.mrb[0].mxu0
      %v5002 = vpop.f32.mrb[0].mxu0
      %v5003 = vadd.f32 0.0, %v5002
      %v5004 = vpop.f32.mrb[0].mxu0
      %5005 = vmatprep.mubr.bf16.mxu0 0
      %5006 = vmatmul.mubr.bf16.gmra.mrb[0].mxu0 %v4756
      %v5007 = vpop.f32.mrb[0].mxu0
      %v5008 = vadd.f32 0.0, %v5007
      %v5009 = vpop.f32.mrb[0].mxu0
      %v5010 = vpop.f32.mrb[0].mxu0
      %v5011 = vadd.f32 0.0, %v5010
      %v5012 = vpop.f32.mrb[0].mxu0
      %5013 = vmatprep.mubr.bf16.mxu0 0
      %5014 = vmatmul.mubr.bf16.gmra.mrb[0].mxu0 %v4765
      %v5015 = vpop.f32.mrb[0].mxu0
      %v5016 = vadd.f32 0.0, %v5015
      %v5017 = vpop.f32.mrb[0].mxu0
      %v5018 = vpop.f32.mrb[0].mxu0
      %v5019 = vadd.f32 0.0, %v5018
      %v5020 = vpop.f32.mrb[0].mxu0
      %5021 = vmatprep.mubr.bf16.mxu0 0
      %5022 = vmatmul.mubr.bf16.gmra.mrb[0].mxu0 %v4774
      %v5023 = vpop.f32.mrb[0].mxu0
      %v5024 = vadd.f32 0.0, %v5023
      %v5025 = vpop.f32.mrb[0].mxu0
      %v5026 = vpop.f32.mrb[0].mxu0
      %v5027 = vadd.f32 0.0, %v5026
      %v5028 = vpop.f32.mrb[0].mxu0
      %5029 = vmatprep.mubr.bf16.mxu0 0
      %5030 = vmatmul.mubr.bf16.gmra.mrb[0].mxu0 %v4783
      %v5031 = vpop.f32.mrb[0].mxu0
      %v5032 = vadd.f32 0.0, %v5031
      %v5033 = vpop.f32.mrb[0].mxu0
      %v5034 = vpop.f32.mrb[0].mxu0
      %v5035 = vadd.f32 0.0, %v5034
      %v5036 = vpop.f32.mrb[0].mxu0
      %5037 = vmatprep.mubr.bf16.mxu0 0
      %5038 = vmatmul.mubr.bf16.gmra.mrb[0].mxu0 %v4792
      %v5039 = vpop.f32.mrb[0].mxu0
      %v5040 = vadd.f32 0.0, %v5039
      %v5041 = vpop.f32.mrb[0].mxu0
      %v5042 = vpop.f32.mrb[0].mxu0
      %v5043 = vadd.f32 0.0, %v5042
      %v5044 = vpop.f32.mrb[0].mxu0
      %5045 = vmatprep.mubr.bf16.mxu0 0
      %5046 = vmatmul.mubr.bf16.gmra.mrb[0].mxu0 %v4801
      %v5047 = vpop.f32.mrb[0].mxu0
      %v5048 = vadd.f32 0.0, %v5047
      %v5049 = vpop.f32.mrb[0].mxu0
      %v5050 = vpop.f32.mrb[0].mxu0
      %v5051 = vadd.f32 0.0, %v5050
      %v5052 = vpop.f32.mrb[0].mxu0
      %5053 = vmatprep.mubr.bf16.mxu0 0
      %5054 = vmatmul.mubr.bf16.gmra.mrb[0].mxu0 %v4810
      %v5055 = vpop.f32.mrb[0].mxu0
      %v5056 = vadd.f32 0.0, %v5055
      %v5057 = vpop.f32.mrb[0].mxu0
      %v5058 = vpop.f32.mrb[0].mxu0
      %v5059 = vadd.f32 0.0, %v5058
      %v5060 = vpop.f32.mrb[0].mxu0
      %5061 = vmatprep.mubr.bf16.mxu0 0
      %5062 = vmatmul.mubr.bf16.gmra.mrb[0].mxu0 %v4819
      %v5063 = vpop.f32.mrb[0].mxu0
      %v5064 = vadd.f32 0.0, %v5063
      %v5065 = vpop.f32.mrb[0].mxu0
      %v5066 = vpop.f32.mrb[0].mxu0
      %v5067 = vadd.f32 0.0, %v5066
      %v5068 = vpop.f32.mrb[0].mxu0
      %5069 = vmatprep.mubr.bf16.mxu0 0
      %5070 = vmatmul.mubr.bf16.gmra.mrb[0].mxu0 %v4828
      %v5071 = vpop.f32.mrb[0].mxu0
      %v5072 = vadd.f32 0.0, %v5071
      %v5073 = vpop.f32.mrb[0].mxu0
      %v5074 = vpop.f32.mrb[0].mxu0
      %v5075 = vadd.f32 0.0, %v5074
      %v5076 = vpop.f32.mrb[0].mxu0
      %5077 = vmatprep.mubr.bf16.mxu0 0
      %5078 = vmatmul.mubr.bf16.gmra.mrb[0].mxu0 %v4837
      %v5079 = vpop.f32.mrb[0].mxu0
      %v5080 = vadd.f32 0.0, %v5079
      %v5081 = vpop.f32.mrb[0].mxu0
      %v5082 = vpop.f32.mrb[0].mxu0
      %v5083 = vadd.f32 0.0, %v5082
      %v5084 = vpop.f32.mrb[0].mxu0
      %5085 = vmatprep.mubr.bf16.mxu0 0
      %5086 = vmatmul.mubr.bf16.gmra.mrb[0].mxu0 %v4846
      %v5087 = vpop.f32.mrb[0].mxu0
      %v5088 = vadd.f32 0.0, %v5087
      %v5089 = vpop.f32.mrb[0].mxu0
      %v5090 = vpop.f32.mrb[0].mxu0
      %v5091 = vadd.f32 0.0, %v5090
      %v5092 = vpop.f32.mrb[0].mxu0
      %5093 = vmatprep.mubr.bf16.mxu0 0
      %5094 = vmatmul.mubr.bf16.gmra.mrb[0].mxu0 %v4855
      %v5095 = vpop.f32.mrb[0].mxu0
      %v5096 = vadd.f32 0.0, %v5095
      %v5097 = vpop.f32.mrb[0].mxu0
      %v5098 = vpop.f32.mrb[0].mxu0
      %v5099 = vadd.f32 0.0, %v5098
      %v5100 = vpop.f32.mrb[0].mxu0
      %5101 = vmatprep.mubr.bf16.mxu0 0
      %5102 = vmatmul.mubr.bf16.gmra.mrb[0].mxu0 %v4864
      %v5103 = vpop.f32.mrb[0].mxu0
      %v5104 = vadd.f32 0.0, %v5103
      %v5105 = vpop.f32.mrb[0].mxu0
      %v5106 = vpop.f32.mrb[0].mxu0
      %v5107 = vadd.f32 0.0, %v5106
      %v5108 = vpop.f32.mrb[0].mxu0
      %5109 = vmatprep.mubr.bf16.mxu0 0
      %5110 = vmatmul.mubr.bf16.gmra.mrb[0].mxu0 %v4873
      %v5111 = vpop.f32.mrb[0].mxu0
      %v5112 = vadd.f32 0.0, %v5111
      %v5113 = vpop.f32.mrb[0].mxu0
      %v5114 = vpop.f32.mrb[0].mxu0
      %v5115 = vadd.f32 0.0, %v5114
      %v5116 = vpop.f32.mrb[0].mxu0
      %5117 = vmatprep.mubr.bf16.mxu0 0
      %5118 = vmatmul.mubr.bf16.gmra.mrb[0].mxu0 %v4882
      %v5119 = vpop.f32.mrb[0].mxu0
      %v5120 = vadd.f32 0.0, %v5119
      %v5121 = vpop.f32.mrb[0].mxu0
      %v5122 = vpop.f32.mrb[0].mxu0
      %v5123 = vadd.f32 0.0, %v5122
      %v5124 = vpop.f32.mrb[0].mxu0
      %5125 = vdwg.mxu0
      %v5126 = vadd.f32 %v4659, %v4984
      %v5127 = vadd.f32 %v4660, %v4987
      %v5128 = vadd.f32 %v4661, %v4992
      %v5129 = vadd.f32 %v4662, %v4995
      %v5130 = vadd.f32 %v4663, %v5000
      %v5131 = vadd.f32 %v4664, %v5003
      %v5132 = vadd.f32 %v4665, %v5008
      %v5133 = vadd.f32 %v4666, %v5011
      %v5134 = vadd.f32 %v4667, %v5016
      %v5135 = vadd.f32 %v4668, %v5019
      %v5136 = vadd.f32 %v4669, %v5024
      %v5137 = vadd.f32 %v4670, %v5027
      %v5138 = vadd.f32 %v4671, %v5032
      %v5139 = vadd.f32 %v4672, %v5035
      %v5140 = vadd.f32 %v4673, %v5040
      %v5141 = vadd.f32 %v4674, %v5043
      %v5142 = vadd.f32 %v4675, %v5048
      %v5143 = vadd.f32 %v4676, %v5051
      %v5144 = vadd.f32 %v4677, %v5056
      %v5145 = vadd.f32 %v4678, %v5059
      %v5146 = vadd.f32 %v4679, %v5064
      %v5147 = vadd.f32 %v4680, %v5067
      %v5148 = vadd.f32 %v4681, %v5072
      %v5149 = vadd.f32 %v4682, %v5075
      %v5150 = vadd.f32 %v4683, %v5080
      %v5151 = vadd.f32 %v4684, %v5083
      %v5152 = vadd.f32 %v4685, %v5088
      %v5153 = vadd.f32 %v4686, %v5091
      %v5154 = vadd.f32 %v4687, %v5096
      %v5155 = vadd.f32 %v4688, %v5099
      %v5156 = vadd.f32 %v4689, %v5104
      %v5157 = vadd.f32 %v4690, %v5107
      %v5158 = vadd.f32 %v4691, %v5112
      %v5159 = vadd.f32 %v4692, %v5115
      %v5160 = vadd.f32 %v4693, %v5120
      %v5161 = vadd.f32 %v4694, %v5123
      %5162 = vst [vmem:[#allocation3] sm:$0xff] %v5126
      %5163 = vst [vmem:[#allocation3 + $0x8] sm:$0xff] %v5127
      %5164 = vst [vmem:[#allocation3 + $0x10] sm:$0xff] %v5128
      %5165 = vst [vmem:[#allocation3 + $0x18] sm:$0xff] %v5129
      %5166 = vst [vmem:[#allocation3 + $0x20] sm:$0xff] %v5130
      %5167 = vst [vmem:[#allocation3 + $0x28] sm:$0xff] %v5131
      %5168 = vst [vmem:[#allocation3 + $0x30] sm:$0xff] %v5132
      %5169 = vst [vmem:[#allocation3 + $0x38] sm:$0xff] %v5133
      %5170 = vst [vmem:[#allocation3 + $0x40] sm:$0xff] %v5134
      %5171 = vst [vmem:[#allocation3 + $0x48] sm:$0xff] %v5135
      %5172 = vst [vmem:[#allocation3 + $0x50] sm:$0xff] %v5136
      %5173 = vst [vmem:[#allocation3 + $0x58] sm:$0xff] %v5137
      %5174 = vst [vmem:[#allocation3 + $0x60] sm:$0xff] %v5138
      %5175 = vst [vmem:[#allocation3 + $0x68] sm:$0xff] %v5139
      %5176 = vst [vmem:[#allocation3 + $0x70] sm:$0xff] %v5140
      %5177 = vst [vmem:[#allocation3 + $0x78] sm:$0xff] %v5141
      %5178 = vst [vmem:[#allocation3 + $0x80] sm:$0xff] %v5142
      %5179 = vst [vmem:[#allocation3 + $0x88] sm:$0xff] %v5143
      %5180 = vst [vmem:[#allocation3 + $0x90] sm:$0xff] %v5144
      %5181 = vst [vmem:[#allocation3 + $0x98] sm:$0xff] %v5145
      %5182 = vst [vmem:[#allocation3 + $0xa0] sm:$0xff] %v5146
      %5183 = vst [vmem:[#allocation3 + $0xa8] sm:$0xff] %v5147
      %5184 = vst [vmem:[#allocation3 + $0xb0] sm:$0xff] %v5148
      %5185 = vst [vmem:[#allocation3 + $0xb8] sm:$0xff] %v5149
      %5186 = vst [vmem:[#allocation3 + $0xc0] sm:$0xff] %v5150
      %5187 = vst [vmem:[#allocation3 + $0xc8] sm:$0xff] %v5151
      %5188 = vst [vmem:[#allocation3 + $0xd0] sm:$0xff] %v5152
      %5189 = vst [vmem:[#allocation3 + $0xd8] sm:$0xff] %v5153
      %5190 = vst [vmem:[#allocation3 + $0xe0] sm:$0xff] %v5154
      %5191 = vst [vmem:[#allocation3 + $0xe8] sm:$0xff] %v5155
      %5192 = vst [vmem:[#allocation3 + $0xf0] sm:$0xff] %v5156
      %5193 = vst [vmem:[#allocation3 + $0xf8] sm:$0xff] %v5157
      %5194 = vst [vmem:[#allocation3 + $0x100] sm:$0xff] %v5158
      %5195 = vst [vmem:[#allocation3 + $0x108] sm:$0xff] %v5159
      %5196 = vst [vmem:[#allocation3 + $0x110] sm:$0xff] %v5160
      %5197 = vst [vmem:[#allocation3 + $0x118] sm:$0xff] %v5161
      %v5198 = vld [vmem:[%s4] sm:$0xff]
      %v5199 = vld [vmem:[%s4 + $0x8] sm:$0xff]
      %v5200 = vld [vmem:[%s4 + $0x10] sm:$0xff]
      %v5201 = vld [vmem:[%s4 + $0x18] sm:$0xff]
      %v5202 = vld [vmem:[%s4 + $0x20] sm:$0xff]
      %v5203 = vld [vmem:[%s4 + $0x28] sm:$0xff]
      %v5204 = vld [vmem:[%s4 + $0x30] sm:$0xff]
      %v5205 = vld [vmem:[%s4 + $0x38] sm:$0xff]
      %v5206 = vld [vmem:[%s4 + $0x40] sm:$0xff]
      %v5207 = vld [vmem:[%s4 + $0x48] sm:$0xff]
      %v5208 = vld [vmem:[%s4 + $0x50] sm:$0xff]
      %v5209 = vld [vmem:[%s4 + $0x58] sm:$0xff]
      %v5210 = vld [vmem:[%s4 + $0x60] sm:$0xff]
      %v5211 = vld [vmem:[%s4 + $0x68] sm:$0xff]
      %v5212 = vld [vmem:[%s4 + $0x70] sm:$0xff]
      %v5213 = vld [vmem:[%s4 + $0x78] sm:$0xff]
      %v5214 = vld [vmem:[%s4 + $0x80] sm:$0xff]
      %v5215 = vld [vmem:[%s4 + $0x88] sm:$0xff]
      %v5216 = vld [vmem:[%s4 + $0x90] sm:$0xff]
      %v5217 = vld [vmem:[%s4 + $0x98] sm:$0xff]
      %v5218 = vld [vmem:[%s4 + $0xa0] sm:$0xff]
      %v5219 = vld [vmem:[%s4 + $0xa8] sm:$0xff]
      %v5220 = vld [vmem:[%s4 + $0xb0] sm:$0xff]
      %v5221 = vld [vmem:[%s4 + $0xb8] sm:$0xff]
      %v5222 = vld [vmem:[%s4 + $0xc0] sm:$0xff]
      %v5223 = vld [vmem:[%s4 + $0xc8] sm:$0xff]
      %v5224 = vld [vmem:[%s4 + $0xd0] sm:$0xff]
      %v5225 = vld [vmem:[%s4 + $0xd8] sm:$0xff]
      %v5226 = vld [vmem:[%s4 + $0xe0] sm:$0xff]
      %v5227 = vld [vmem:[%s4 + $0xe8] sm:$0xff]
      %v5228 = vld [vmem:[%s4 + $0xf0] sm:$0xff]
      %v5229 = vld [vmem:[%s4 + $0xf8] sm:$0xff]
      %v5230 = vld [vmem:[%s4 + $0x100] sm:$0xff]
      %v5231 = vld [vmem:[%s4 + $0x108] sm:$0xff]
      %v5232 = vld [vmem:[%s4 + $0x110] sm:$0xff]
      %v5233 = vld [vmem:[%s4 + $0x118] sm:$0xff]
      %vm5234 = vcmp.gt.f32.partialorder %v5198, 0.0
      %vm5235 = vcmp.gt.f32.partialorder %v5199, 0.0
      %vm5236 = vcmp.gt.f32.partialorder %v5200, 0.0
      %vm5237 = vcmp.gt.f32.partialorder %v5201, 0.0
      %vm5238 = vcmp.gt.f32.partialorder %v5202, 0.0
      %vm5239 = vcmp.gt.f32.partialorder %v5203, 0.0
      %vm5240 = vcmp.gt.f32.partialorder %v5204, 0.0
      %vm5241 = vcmp.gt.f32.partialorder %v5205, 0.0
      %vm5242 = vcmp.gt.f32.partialorder %v5206, 0.0
      %vm5243 = vcmp.gt.f32.partialorder %v5207, 0.0
      %vm5244 = vcmp.gt.f32.partialorder %v5208, 0.0
      %vm5245 = vcmp.gt.f32.partialorder %v5209, 0.0
      %vm5246 = vcmp.gt.f32.partialorder %v5210, 0.0
      %vm5247 = vcmp.gt.f32.partialorder %v5211, 0.0
      %vm5248 = vcmp.gt.f32.partialorder %v5212, 0.0
      %vm5249 = vcmp.gt.f32.partialorder %v5213, 0.0
      %vm5250 = vcmp.gt.f32.partialorder %v5214, 0.0
      %vm5251 = vcmp.gt.f32.partialorder %v5215, 0.0
      %vm5252 = vcmp.gt.f32.partialorder %v5216, 0.0
      %vm5253 = vcmp.gt.f32.partialorder %v5217, 0.0
      %vm5254 = vcmp.gt.f32.partialorder %v5218, 0.0
      %vm5255 = vcmp.gt.f32.partialorder %v5219, 0.0
      %vm5256 = vcmp.gt.f32.partialorder %v5220, 0.0
      %vm5257 = vcmp.gt.f32.partialorder %v5221, 0.0
      %vm5258 = vcmp.gt.f32.partialorder %v5222, 0.0
      %vm5259 = vcmp.gt.f32.partialorder %v5223, 0.0
      %vm5260 = vcmp.gt.f32.partialorder %v5224, 0.0
      %vm5261 = vcmp.gt.f32.partialorder %v5225, 0.0
      %vm5262 = vcmp.gt.f32.partialorder %v5226, 0.0
      %vm5263 = vcmp.gt.f32.partialorder %v5227, 0.0
      %vm5264 = vcmp.gt.f32.partialorder %v5228, 0.0
      %vm5265 = vcmp.gt.f32.partialorder %v5229, 0.0
      %vm5266 = vcmp.gt.f32.partialorder %v5230, 0.0
      %vm5267 = vcmp.gt.f32.partialorder %v5231, 0.0
      %vm5268 = vcmp.gt.f32.partialorder %v5232, 0.0
      %vm5269 = vcmp.gt.f32.partialorder %v5233, 0.0
      %v5270 = vld [vmem:[#allocation3] sm:$0xff]
      %v5271 = vld [vmem:[#allocation3 + $0x8] sm:$0xff]
      %v5272 = vld [vmem:[#allocation3 + $0x10] sm:$0xff]
      %v5273 = vld [vmem:[#allocation3 + $0x18] sm:$0xff]
      %v5274 = vld [vmem:[#allocation3 + $0x20] sm:$0xff]
      %v5275 = vld [vmem:[#allocation3 + $0x28] sm:$0xff]
      %v5276 = vld [vmem:[#allocation3 + $0x30] sm:$0xff]
      %v5277 = vld [vmem:[#allocation3 + $0x38] sm:$0xff]
      %v5278 = vld [vmem:[#allocation3 + $0x40] sm:$0xff]
      %v5279 = vld [vmem:[#allocation3 + $0x48] sm:$0xff]
      %v5280 = vld [vmem:[#allocation3 + $0x50] sm:$0xff]
      %v5281 = vld [vmem:[#allocation3 + $0x58] sm:$0xff]
      %v5282 = vld [vmem:[#allocation3 + $0x60] sm:$0xff]
      %v5283 = vld [vmem:[#allocation3 + $0x68] sm:$0xff]
      %v5284 = vld [vmem:[#allocation3 + $0x70] sm:$0xff]
      %v5285 = vld [vmem:[#allocation3 + $0x78] sm:$0xff]
      %v5286 = vld [vmem:[#allocation3 + $0x80] sm:$0xff]
      %v5287 = vld [vmem:[#allocation3 + $0x88] sm:$0xff]
      %v5288 = vld [vmem:[#allocation3 + $0x90] sm:$0xff]
      %v5289 = vld [vmem:[#allocation3 + $0x98] sm:$0xff]
      %v5290 = vld [vmem:[#allocation3 + $0xa0] sm:$0xff]
      %v5291 = vld [vmem:[#allocation3 + $0xa8] sm:$0xff]
      %v5292 = vld [vmem:[#allocation3 + $0xb0] sm:$0xff]
      %v5293 = vld [vmem:[#allocation3 + $0xb8] sm:$0xff]
      %v5294 = vld [vmem:[#allocation3 + $0xc0] sm:$0xff]
      %v5295 = vld [vmem:[#allocation3 + $0xc8] sm:$0xff]
      %v5296 = vld [vmem:[#allocation3 + $0xd0] sm:$0xff]
      %v5297 = vld [vmem:[#allocation3 + $0xd8] sm:$0xff]
      %v5298 = vld [vmem:[#allocation3 + $0xe0] sm:$0xff]
      %v5299 = vld [vmem:[#allocation3 + $0xe8] sm:$0xff]
      %v5300 = vld [vmem:[#allocation3 + $0xf0] sm:$0xff]
      %v5301 = vld [vmem:[#allocation3 + $0xf8] sm:$0xff]
      %v5302 = vld [vmem:[#allocation3 + $0x100] sm:$0xff]
      %v5303 = vld [vmem:[#allocation3 + $0x108] sm:$0xff]
      %v5304 = vld [vmem:[#allocation3 + $0x110] sm:$0xff]
      %v5305 = vld [vmem:[#allocation3 + $0x118] sm:$0xff]
      %v5306 = vsel %vm5234, 1, 0
      %v5307 = vsel %vm5235, 1, 0
      %v5308 = vsel %vm5236, 1, 0
      %v5309 = vsel %vm5237, 1, 0
      %v5310 = vsel %vm5238, 1, 0
      %v5311 = vsel %vm5239, 1, 0
      %v5312 = vsel %vm5240, 1, 0
      %v5313 = vsel %vm5241, 1, 0
      %v5314 = vsel %vm5242, 1, 0
      %v5315 = vsel %vm5243, 1, 0
      %v5316 = vsel %vm5244, 1, 0
      %v5317 = vsel %vm5245, 1, 0
      %v5318 = vsel %vm5246, 1, 0
      %v5319 = vsel %vm5247, 1, 0
      %v5320 = vsel %vm5248, 1, 0
      %v5321 = vsel %vm5249, 1, 0
      %v5322 = vsel %vm5250, 1, 0
      %v5323 = vsel %vm5251, 1, 0
      %v5324 = vsel %vm5252, 1, 0
      %v5325 = vsel %vm5253, 1, 0
      %v5326 = vsel %vm5254, 1, 0
      %v5327 = vsel %vm5255, 1, 0
      %v5328 = vsel %vm5256, 1, 0
      %v5329 = vsel %vm5257, 1, 0
      %v5330 = vsel %vm5258, 1, 0
      %v5331 = vsel %vm5259, 1, 0
      %v5332 = vsel %vm5260, 1, 0
      %v5333 = vsel %vm5261, 1, 0
      %v5334 = vsel %vm5262, 1, 0
      %v5335 = vsel %vm5263, 1, 0
      %v5336 = vsel %vm5264, 1, 0
      %v5337 = vsel %vm5265, 1, 0
      %v5338 = vsel %vm5266, 1, 0
      %v5339 = vsel %vm5267, 1, 0
      %v5340 = vsel %vm5268, 1, 0
      %v5341 = vsel %vm5269, 1, 0
      %5342 = vset.pattern.permute.xlu0 0
      %5343 = vperm.xlu0 %5342, %v5306
      %v5344 = vpop.permute.xlu0 %5343
      %5345 = vset.pattern.permute.xlu0 0
      %5346 = vperm.xlu0 %5345, %v5307
      %v5347 = vpop.permute.xlu0 %5346
      %5348 = vset.pattern.permute.xlu0 0
      %5349 = vperm.xlu0 %5348, %v5308
      %v5350 = vpop.permute.xlu0 %5349
      %5351 = vset.pattern.permute.xlu0 0
      %5352 = vperm.xlu0 %5351, %v5309
      %v5353 = vpop.permute.xlu0 %5352
      %5354 = vset.pattern.permute.xlu0 0
      %5355 = vperm.xlu0 %5354, %v5310
      %v5356 = vpop.permute.xlu0 %5355
      %5357 = vset.pattern.permute.xlu0 0
      %5358 = vperm.xlu0 %5357, %v5311
      %v5359 = vpop.permute.xlu0 %5358
      %5360 = vset.pattern.permute.xlu0 0
      %5361 = vperm.xlu0 %5360, %v5312
      %v5362 = vpop.permute.xlu0 %5361
      %5363 = vset.pattern.permute.xlu0 0
      %5364 = vperm.xlu0 %5363, %v5313
      %v5365 = vpop.permute.xlu0 %5364
      %5366 = vset.pattern.permute.xlu0 0
      %5367 = vperm.xlu0 %5366, %v5314
      %v5368 = vpop.permute.xlu0 %5367
      %5369 = vset.pattern.permute.xlu0 0
      %5370 = vperm.xlu0 %5369, %v5315
      %v5371 = vpop.permute.xlu0 %5370
      %5372 = vset.pattern.permute.xlu0 0
      %5373 = vperm.xlu0 %5372, %v5316
      %v5374 = vpop.permute.xlu0 %5373
      %5375 = vset.pattern.permute.xlu0 0
      %5376 = vperm.xlu0 %5375, %v5317
      %v5377 = vpop.permute.xlu0 %5376
      %5378 = vset.pattern.permute.xlu0 0
      %5379 = vperm.xlu0 %5378, %v5318
      %v5380 = vpop.permute.xlu0 %5379
      %5381 = vset.pattern.permute.xlu0 0
      %5382 = vperm.xlu0 %5381, %v5319
      %v5383 = vpop.permute.xlu0 %5382
      %5384 = vset.pattern.permute.xlu0 0
      %5385 = vperm.xlu0 %5384, %v5320
      %v5386 = vpop.permute.xlu0 %5385
      %5387 = vset.pattern.permute.xlu0 0
      %5388 = vperm.xlu0 %5387, %v5321
      %v5389 = vpop.permute.xlu0 %5388
      %5390 = vset.pattern.permute.xlu0 0
      %5391 = vperm.xlu0 %5390, %v5322
      %v5392 = vpop.permute.xlu0 %5391
      %5393 = vset.pattern.permute.xlu0 0
      %5394 = vperm.xlu0 %5393, %v5323
      %v5395 = vpop.permute.xlu0 %5394
      %5396 = vset.pattern.permute.xlu0 0
      %5397 = vperm.xlu0 %5396, %v5324
      %v5398 = vpop.permute.xlu0 %5397
      %5399 = vset.pattern.permute.xlu0 0
      %5400 = vperm.xlu0 %5399, %v5325
      %v5401 = vpop.permute.xlu0 %5400
      %5402 = vset.pattern.permute.xlu0 0
      %5403 = vperm.xlu0 %5402, %v5326
      %v5404 = vpop.permute.xlu0 %5403
      %5405 = vset.pattern.permute.xlu0 0
      %5406 = vperm.xlu0 %5405, %v5327
      %v5407 = vpop.permute.xlu0 %5406
      %5408 = vset.pattern.permute.xlu0 0
      %5409 = vperm.xlu0 %5408, %v5328
      %v5410 = vpop.permute.xlu0 %5409
      %5411 = vset.pattern.permute.xlu0 0
      %5412 = vperm.xlu0 %5411, %v5329
      %v5413 = vpop.permute.xlu0 %5412
      %5414 = vset.pattern.permute.xlu0 0
      %5415 = vperm.xlu0 %5414, %v5330
      %v5416 = vpop.permute.xlu0 %5415
      %5417 = vset.pattern.permute.xlu0 0
      %5418 = vperm.xlu0 %5417, %v5331
      %v5419 = vpop.permute.xlu0 %5418
      %5420 = vset.pattern.permute.xlu0 0
      %5421 = vperm.xlu0 %5420, %v5332
      %v5422 = vpop.permute.xlu0 %5421
      %5423 = vset.pattern.permute.xlu0 0
      %5424 = vperm.xlu0 %5423, %v5333
      %v5425 = vpop.permute.xlu0 %5424
      %5426 = vset.pattern.permute.xlu0 0
      %5427 = vperm.xlu0 %5426, %v5334
      %v5428 = vpop.permute.xlu0 %5427
      %5429 = vset.pattern.permute.xlu0 0
      %5430 = vperm.xlu0 %5429, %v5335
      %v5431 = vpop.permute.xlu0 %5430
      %5432 = vset.pattern.permute.xlu0 0
      %5433 = vperm.xlu0 %5432, %v5336
      %v5434 = vpop.permute.xlu0 %5433
      %5435 = vset.pattern.permute.xlu0 0
      %5436 = vperm.xlu0 %5435, %v5337
      %v5437 = vpop.permute.xlu0 %5436
      %5438 = vset.pattern.permute.xlu0 0
      %5439 = vperm.xlu0 %5438, %v5338
      %v5440 = vpop.permute.xlu0 %5439
      %5441 = vset.pattern.permute.xlu0 0
      %5442 = vperm.xlu0 %5441, %v5339
      %v5443 = vpop.permute.xlu0 %5442
      %5444 = vset.pattern.permute.xlu0 0
      %5445 = vperm.xlu0 %5444, %v5340
      %v5446 = vpop.permute.xlu0 %5445
      %5447 = vset.pattern.permute.xlu0 0
      %5448 = vperm.xlu0 %5447, %v5341
      %v5449 = vpop.permute.xlu0 %5448
      %vm5450 = vcmp.eq.s32.totalorder %v5344, 1
      %vm5451 = vcmp.eq.s32.totalorder %v5347, 1
      %vm5452 = vcmp.eq.s32.totalorder %v5350, 1
      %vm5453 = vcmp.eq.s32.totalorder %v5353, 1
      %vm5454 = vcmp.eq.s32.totalorder %v5356, 1
      %vm5455 = vcmp.eq.s32.totalorder %v5359, 1
      %vm5456 = vcmp.eq.s32.totalorder %v5362, 1
      %vm5457 = vcmp.eq.s32.totalorder %v5365, 1
      %vm5458 = vcmp.eq.s32.totalorder %v5368, 1
      %vm5459 = vcmp.eq.s32.totalorder %v5371, 1
      %vm5460 = vcmp.eq.s32.totalorder %v5374, 1
      %vm5461 = vcmp.eq.s32.totalorder %v5377, 1
      %vm5462 = vcmp.eq.s32.totalorder %v5380, 1
      %vm5463 = vcmp.eq.s32.totalorder %v5383, 1
      %vm5464 = vcmp.eq.s32.totalorder %v5386, 1
      %vm5465 = vcmp.eq.s32.totalorder %v5389, 1
      %vm5466 = vcmp.eq.s32.totalorder %v5392, 1
      %vm5467 = vcmp.eq.s32.totalorder %v5395, 1
      %vm5468 = vcmp.eq.s32.totalorder %v5398, 1
      %vm5469 = vcmp.eq.s32.totalorder %v5401, 1
      %vm5470 = vcmp.eq.s32.totalorder %v5404, 1
      %vm5471 = vcmp.eq.s32.totalorder %v5407, 1
      %vm5472 = vcmp.eq.s32.totalorder %v5410, 1
      %vm5473 = vcmp.eq.s32.totalorder %v5413, 1
      %vm5474 = vcmp.eq.s32.totalorder %v5416, 1
      %vm5475 = vcmp.eq.s32.totalorder %v5419, 1
      %vm5476 = vcmp.eq.s32.totalorder %v5422, 1
      %vm5477 = vcmp.eq.s32.totalorder %v5425, 1
      %vm5478 = vcmp.eq.s32.totalorder %v5428, 1
      %vm5479 = vcmp.eq.s32.totalorder %v5431, 1
      %vm5480 = vcmp.eq.s32.totalorder %v5434, 1
      %vm5481 = vcmp.eq.s32.totalorder %v5437, 1
      %vm5482 = vcmp.eq.s32.totalorder %v5440, 1
      %vm5483 = vcmp.eq.s32.totalorder %v5443, 1
      %vm5484 = vcmp.eq.s32.totalorder %v5446, 1
      %vm5485 = vcmp.eq.s32.totalorder %v5449, 1
      %v5486 = vsel %vm5450, %v5270, 0.0
      %v5487 = vsel %vm5451, %v5271, 0.0
      %v5488 = vsel %vm5452, %v5272, 0.0
      %v5489 = vsel %vm5453, %v5273, 0.0
      %v5490 = vsel %vm5454, %v5274, 0.0
      %v5491 = vsel %vm5455, %v5275, 0.0
      %v5492 = vsel %vm5456, %v5276, 0.0
      %v5493 = vsel %vm5457, %v5277, 0.0
      %v5494 = vsel %vm5458, %v5278, 0.0
      %v5495 = vsel %vm5459, %v5279, 0.0
      %v5496 = vsel %vm5460, %v5280, 0.0
      %v5497 = vsel %vm5461, %v5281, 0.0
      %v5498 = vsel %vm5462, %v5282, 0.0
      %v5499 = vsel %vm5463, %v5283, 0.0
      %v5500 = vsel %vm5464, %v5284, 0.0
      %v5501 = vsel %vm5465, %v5285, 0.0
      %v5502 = vsel %vm5466, %v5286, 0.0
      %v5503 = vsel %vm5467, %v5287, 0.0
      %v5504 = vsel %vm5468, %v5288, 0.0
      %v5505 = vsel %vm5469, %v5289, 0.0
      %v5506 = vsel %vm5470, %v5290, 0.0
      %v5507 = vsel %vm5471, %v5291, 0.0
      %v5508 = vsel %vm5472, %v5292, 0.0
      %v5509 = vsel %vm5473, %v5293, 0.0
      %v5510 = vsel %vm5474, %v5294, 0.0
      %v5511 = vsel %vm5475, %v5295, 0.0
      %v5512 = vsel %vm5476, %v5296, 0.0
      %v5513 = vsel %vm5477, %v5297, 0.0
      %v5514 = vsel %vm5478, %v5298, 0.0
      %v5515 = vsel %vm5479, %v5299, 0.0
      %v5516 = vsel %vm5480, %v5300, 0.0
      %v5517 = vsel %vm5481, %v5301, 0.0
      %v5518 = vsel %vm5482, %v5302, 0.0
      %v5519 = vsel %vm5483, %v5303, 0.0
      %v5520 = vsel %vm5484, %v5304, 0.0
      %v5521 = vsel %vm5485, %v5305, 0.0
      %v5522 = vpack.c.bf16 %v5487, %v5486
      %v5523 = vpack.c.bf16 %v5489, %v5488
      %v5524 = vpack.c.bf16 %v5491, %v5490
      %v5525 = vpack.c.bf16 %v5493, %v5492
      %v5526 = vpack.c.bf16 %v5495, %v5494
      %v5527 = vpack.c.bf16 %v5497, %v5496
      %v5528 = vpack.c.bf16 %v5499, %v5498
      %v5529 = vpack.c.bf16 %v5501, %v5500
      %v5530 = vpack.c.bf16 %v5503, %v5502
      %v5531 = vpack.c.bf16 %v5505, %v5504
      %v5532 = vpack.c.bf16 %v5507, %v5506
      %v5533 = vpack.c.bf16 %v5509, %v5508
      %v5534 = vpack.c.bf16 %v5511, %v5510
      %v5535 = vpack.c.bf16 %v5513, %v5512
      %v5536 = vpack.c.bf16 %v5515, %v5514
      %v5537 = vpack.c.bf16 %v5517, %v5516
      %v5538 = vpack.c.bf16 %v5519, %v5518
      %v5539 = vpack.c.bf16 %v5521, %v5520
      %v5558 = vunpack.c.l.b16 %v5522
      %v5559 = vunpack.c.h.b16 %v5522
      %v5560 = vunpack.c.l.b16 %v5523
      %v5561 = vunpack.c.h.b16 %v5523
      %v5562 = vunpack.c.l.b16 %v5524
      %v5563 = vunpack.c.h.b16 %v5524
      %v5564 = vunpack.c.l.b16 %v5525
      %v5565 = vunpack.c.h.b16 %v5525
      %v5566 = vunpack.c.l.b16 %v5526
      %v5567 = vunpack.c.h.b16 %v5526
      %v5568 = vunpack.c.l.b16 %v5527
      %v5569 = vunpack.c.h.b16 %v5527
      %v5570 = vunpack.c.l.b16 %v5528
      %v5571 = vunpack.c.h.b16 %v5528
      %v5572 = vunpack.c.l.b16 %v5529
      %v5573 = vunpack.c.h.b16 %v5529
      %v5574 = vunpack.c.l.b16 %v5530
      %v5575 = vunpack.c.h.b16 %v5530
      %v5576 = vunpack.c.l.b16 %v5531
      %v5577 = vunpack.c.h.b16 %v5531
      %v5578 = vunpack.c.l.b16 %v5532
      %v5579 = vunpack.c.h.b16 %v5532
      %v5580 = vunpack.c.l.b16 %v5533
      %v5581 = vunpack.c.h.b16 %v5533
      %v5582 = vunpack.c.l.b16 %v5534
      %v5583 = vunpack.c.h.b16 %v5534
      %v5584 = vunpack.c.l.b16 %v5535
      %v5585 = vunpack.c.h.b16 %v5535
      %v5586 = vunpack.c.l.b16 %v5536
      %v5587 = vunpack.c.h.b16 %v5536
      %v5588 = vunpack.c.l.b16 %v5537
      %v5589 = vunpack.c.h.b16 %v5537
      %v5590 = vunpack.c.l.b16 %v5538
      %v5591 = vunpack.c.h.b16 %v5538
      %v5592 = vunpack.c.l.b16 %v5539
      %v5593 = vunpack.c.h.b16 %v5539
      %v5594 = vpack.c.b16 %v5558, %v5558
      %v5595 = vpack.c.b16 %v5559, %v5559
      %v5596 = vpack.c.b16 %v5560, %v5560
      %v5597 = vpack.c.b16 %v5561, %v5561
      %v5598 = vpack.c.b16 %v5562, %v5562
      %v5599 = vpack.c.b16 %v5563, %v5563
      %v5600 = vpack.c.b16 %v5564, %v5564
      %v5601 = vpack.c.b16 %v5565, %v5565
      %v5602 = vpack.c.b16 %v5566, %v5566
      %v5603 = vpack.c.b16 %v5567, %v5567
      %v5604 = vpack.c.b16 %v5568, %v5568
      %v5605 = vpack.c.b16 %v5569, %v5569
      %v5606 = vpack.c.b16 %v5570, %v5570
      %v5607 = vpack.c.b16 %v5571, %v5571
      %v5608 = vpack.c.b16 %v5572, %v5572
      %v5609 = vpack.c.b16 %v5573, %v5573
      %v5610 = vpack.c.b16 %v5574, %v5574
      %v5611 = vpack.c.b16 %v5575, %v5575
      %v5612 = vpack.c.b16 %v5576, %v5576
      %v5613 = vpack.c.b16 %v5577, %v5577
      %v5614 = vpack.c.b16 %v5578, %v5578
      %v5615 = vpack.c.b16 %v5579, %v5579
      %v5616 = vpack.c.b16 %v5580, %v5580
      %v5617 = vpack.c.b16 %v5581, %v5581
      %v5618 = vpack.c.b16 %v5582, %v5582
      %v5619 = vpack.c.b16 %v5583, %v5583
      %v5620 = vpack.c.b16 %v5584, %v5584
      %v5621 = vpack.c.b16 %v5585, %v5585
      %v5622 = vpack.c.b16 %v5586, %v5586
      %v5623 = vpack.c.b16 %v5587, %v5587
      %v5624 = vpack.c.b16 %v5588, %v5588
      %v5625 = vpack.c.b16 %v5589, %v5589
      %v5626 = vpack.c.b16 %v5590, %v5590
      %v5627 = vpack.c.b16 %v5591, %v5591
      %v5628 = vpack.c.b16 %v5592, %v5592
      %v5629 = vpack.c.b16 %v5593, %v5593
      %5666 = vst [vmem:[%s419] sm:$0xf] %v5594
      %5667 = vst [vmem:[%s419 + $0x4] sm:$0xf] %v5595
      %5668 = vst [vmem:[%s419 + $0x8] sm:$0xf] %v5596
      %5669 = vst [vmem:[%s419 + $0xc] sm:$0xf] %v5597
      %5670 = vst [vmem:[%s419 + $0x10] sm:$0xf] %v5598
      %5671 = vst [vmem:[%s419 + $0x14] sm:$0xf] %v5599
      %5672 = vst [vmem:[%s419 + $0x18] sm:$0xf] %v5600
      %5673 = vst [vmem:[%s419 + $0x1c] sm:$0xf] %v5601
      %5674 = vst [vmem:[%s419 + $0x20] sm:$0xf] %v5602
      %5675 = vst [vmem:[%s419 + $0x24] sm:$0xf] %v5603
      %5676 = vst [vmem:[%s419 + $0x28] sm:$0xf] %v5604
      %5677 = vst [vmem:[%s419 + $0x2c] sm:$0xf] %v5605
      %5678 = vst [vmem:[%s419 + $0x30] sm:$0xf] %v5606
      %5679 = vst [vmem:[%s419 + $0x34] sm:$0xf] %v5607
      %5680 = vst [vmem:[%s419 + $0x38] sm:$0xf] %v5608
      %5681 = vst [vmem:[%s419 + $0x3c] sm:$0xf] %v5609
      %5682 = vst [vmem:[%s419 + $0x40] sm:$0xf] %v5610
      %5683 = vst [vmem:[%s419 + $0x44] sm:$0xf] %v5611
      %5684 = vst [vmem:[%s419 + $0x48] sm:$0xf] %v5612
      %5685 = vst [vmem:[%s419 + $0x4c] sm:$0xf] %v5613
      %5686 = vst [vmem:[%s419 + $0x50] sm:$0xf] %v5614
      %5687 = vst [vmem:[%s419 + $0x54] sm:$0xf] %v5615
      %5688 = vst [vmem:[%s419 + $0x58] sm:$0xf] %v5616
      %5689 = vst [vmem:[%s419 + $0x5c] sm:$0xf] %v5617
      %5690 = vst [vmem:[%s419 + $0x60] sm:$0xf] %v5618
      %5691 = vst [vmem:[%s419 + $0x64] sm:$0xf] %v5619
      %5692 = vst [vmem:[%s419 + $0x68] sm:$0xf] %v5620
      %5693 = vst [vmem:[%s419 + $0x6c] sm:$0xf] %v5621
      %5694 = vst [vmem:[%s419 + $0x70] sm:$0xf] %v5622
      %5695 = vst [vmem:[%s419 + $0x74] sm:$0xf] %v5623
      %5696 = vst [vmem:[%s419 + $0x78] sm:$0xf] %v5624
      %5697 = vst [vmem:[%s419 + $0x7c] sm:$0xf] %v5625
      %5698 = vst [vmem:[%s419 + $0x80] sm:$0xf] %v5626
      %5699 = vst [vmem:[%s419 + $0x84] sm:$0xf] %v5627
      %5700 = vst [vmem:[%s419 + $0x88] sm:$0xf] %v5628
      %5701 = vst [vmem:[%s419 + $0x8c] sm:$0xf] %v5629
      %v5702 = vld [vmem:[#allocation4] sm:$0x1]
      %v5703 = vadd.f32 %v5486, %v5487
      %v5704 = vadd.f32 %v5703, %v5488
      %v5705 = vadd.f32 %v5704, %v5489
      %v5706 = vadd.f32 %v5705, %v5490
      %v5707 = vadd.f32 %v5706, %v5491
      %v5708 = vadd.f32 %v5707, %v5492
      %v5709 = vadd.f32 %v5708, %v5493
      %v5710 = vadd.f32 %v5709, %v5494
      %v5711 = vadd.f32 %v5710, %v5495
      %v5712 = vadd.f32 %v5711, %v5496
      %v5713 = vadd.f32 %v5712, %v5497
      %v5714 = vadd.f32 %v5713, %v5498
      %v5715 = vadd.f32 %v5714, %v5499
      %v5716 = vadd.f32 %v5715, %v5500
      %v5717 = vadd.f32 %v5716, %v5501
      %v5718 = vadd.f32 %v5717, %v5502
      %v5719 = vadd.f32 %v5718, %v5503
      %v5720 = vadd.f32 %v5719, %v5504
      %v5721 = vadd.f32 %v5720, %v5505
      %v5722 = vadd.f32 %v5721, %v5506
      %v5723 = vadd.f32 %v5722, %v5507
      %v5724 = vadd.f32 %v5723, %v5508
      %v5725 = vadd.f32 %v5724, %v5509
      %v5726 = vadd.f32 %v5725, %v5510
      %v5727 = vadd.f32 %v5726, %v5511
      %v5728 = vadd.f32 %v5727, %v5512
      %v5729 = vadd.f32 %v5728, %v5513
      %v5730 = vadd.f32 %v5729, %v5514
      %v5731 = vadd.f32 %v5730, %v5515
      %v5732 = vadd.f32 %v5731, %v5516
      %v5733 = vadd.f32 %v5732, %v5517
      %v5734 = vadd.f32 %v5733, %v5518
      %v5735 = vadd.f32 %v5734, %v5519
      %v5736 = vadd.f32 %v5735, %v5520
      %v5737 = vadd.f32 %v5736, %v5521
      %v5738 = vrot.slane %v5737, 4
      %v5739 = vadd.f32 %v5737, %v5738
      %v5740 = vrot.slane %v5739, 2
      %v5741 = vadd.f32 %v5739, %v5740
      %v5742 = vrot.slane %v5741, 1
      %v5743 = vadd.f32 %v5741, %v5742
      %v5744 = vadd.f32 %v5702, %v5743
      %5745 = vst [vmem:[#allocation4] sm:$0x1] %v5744
      %v5746 = vld [vmem:[#allocation4 + $0x1] sm:$0x1]
      %v5747 = vmul.f32 %v5486, %v5486
      %v5748 = vmul.f32 %v5487, %v5487
      %v5749 = vmul.f32 %v5488, %v5488
      %v5750 = vmul.f32 %v5489, %v5489
      %v5751 = vmul.f32 %v5490, %v5490
      %v5752 = vmul.f32 %v5491, %v5491
      %v5753 = vmul.f32 %v5492, %v5492
      %v5754 = vmul.f32 %v5493, %v5493
      %v5755 = vmul.f32 %v5494, %v5494
      %v5756 = vmul.f32 %v5495, %v5495
      %v5757 = vmul.f32 %v5496, %v5496
      %v5758 = vmul.f32 %v5497, %v5497
      %v5759 = vmul.f32 %v5498, %v5498
      %v5760 = vmul.f32 %v5499, %v5499
      %v5761 = vmul.f32 %v5500, %v5500
      %v5762 = vmul.f32 %v5501, %v5501
      %v5763 = vmul.f32 %v5502, %v5502
      %v5764 = vmul.f32 %v5503, %v5503
      %v5765 = vmul.f32 %v5504, %v5504
      %v5766 = vmul.f32 %v5505, %v5505
      %v5767 = vmul.f32 %v5506, %v5506
      %v5768 = vmul.f32 %v5507, %v5507
      %v5769 = vmul.f32 %v5508, %v5508
      %v5770 = vmul.f32 %v5509, %v5509
      %v5771 = vmul.f32 %v5510, %v5510
      %v5772 = vmul.f32 %v5511, %v5511
      %v5773 = vmul.f32 %v5512, %v5512
      %v5774 = vmul.f32 %v5513, %v5513
      %v5775 = vmul.f32 %v5514, %v5514
      %v5776 = vmul.f32 %v5515, %v5515
      %v5777 = vmul.f32 %v5516, %v5516
      %v5778 = vmul.f32 %v5517, %v5517
      %v5779 = vmul.f32 %v5518, %v5518
      %v5780 = vmul.f32 %v5519, %v5519
      %v5781 = vmul.f32 %v5520, %v5520
      %v5782 = vmul.f32 %v5521, %v5521
      %v5783 = vadd.f32 %v5747, %v5748
      %v5784 = vadd.f32 %v5783, %v5749
      %v5785 = vadd.f32 %v5784, %v5750
      %v5786 = vadd.f32 %v5785, %v5751
      %v5787 = vadd.f32 %v5786, %v5752
      %v5788 = vadd.f32 %v5787, %v5753
      %v5789 = vadd.f32 %v5788, %v5754
      %v5790 = vadd.f32 %v5789, %v5755
      %v5791 = vadd.f32 %v5790, %v5756
      %v5792 = vadd.f32 %v5791, %v5757
      %v5793 = vadd.f32 %v5792, %v5758
      %v5794 = vadd.f32 %v5793, %v5759
      %v5795 = vadd.f32 %v5794, %v5760
      %v5796 = vadd.f32 %v5795, %v5761
      %v5797 = vadd.f32 %v5796, %v5762
      %v5798 = vadd.f32 %v5797, %v5763
      %v5799 = vadd.f32 %v5798, %v5764
      %v5800 = vadd.f32 %v5799, %v5765
      %v5801 = vadd.f32 %v5800, %v5766
      %v5802 = vadd.f32 %v5801, %v5767
      %v5803 = vadd.f32 %v5802, %v5768
      %v5804 = vadd.f32 %v5803, %v5769
      %v5805 = vadd.f32 %v5804, %v5770
      %v5806 = vadd.f32 %v5805, %v5771
      %v5807 = vadd.f32 %v5806, %v5772
      %v5808 = vadd.f32 %v5807, %v5773
      %v5809 = vadd.f32 %v5808, %v5774
      %v5810 = vadd.f32 %v5809, %v5775
      %v5811 = vadd.f32 %v5810, %v5776
      %v5812 = vadd.f32 %v5811, %v5777
      %v5813 = vadd.f32 %v5812, %v5778
      %v5814 = vadd.f32 %v5813, %v5779
      %v5815 = vadd.f32 %v5814, %v5780
      %v5816 = vadd.f32 %v5815, %v5781
      %v5817 = vadd.f32 %v5816, %v5782
      %v5818 = vrot.slane %v5817, 4
      %v5819 = vadd.f32 %v5817, %v5818
      %v5820 = vrot.slane %v5819, 2
      %v5821 = vadd.f32 %v5819, %v5820
      %v5822 = vrot.slane %v5821, 1
      %v5823 = vadd.f32 %v5821, %v5822
      %v5824 = vadd.f32 %v5746, %v5823
      %5825 = vst [vmem:[#allocation4 + $0x1] sm:$0x1] %v5824
      // Predicated region
      $region45: #{resblock_forward.4} parent=39 // pred_check
        %p5826 = pneg %p426
      $region46: #{resblock_forward.4} parent=39 // pred_check_branch
        %5828 = sbr.rel (%p5826) target = $region48
      $region47: #{resblock_forward.4} parent=39 // pred_region
        %v5829 = vld [vmem:[#allocation4] sm:$0x3]
        %5830 = vst [vmem:[%s424] sm:$0x3] %v5829
      $region48: #{resblock_forward.4} parent=39 // pred_fallthru
        _
      %s5831 = smul.u32 36, %s23
      %p5832 = scmp.lt.s32.totalorder %s22, 1
      %s5833 = scalar_select %p5832, %s22, 1
      %p5834 = scmp.lt.s32.totalorder %s5831, 35
      %s5835 = scalar_select %p5834, %s5831, 35
      %s5836 = smul.addr %s5833, 36
      %s5837 = sadd.s32 %s5835, %s5836
      %s5838 = smul.addr %s5837, 4
      %s5839 = scalar_lea.vmem %s5, %s5838
      %p5840 = scmp.lt.s32.totalorder %s22, 1
      %s5841 = scalar_select %p5840, %s22, 1
      %s5842 = smul.addr %s5841, 2
      %s5843 = scalar_lea.vmem %s6, %s5842
      // Predicated region
      $region49: #{resblock_forward.4} parent=39 // pred_check
        %p5844 = pneg %p186
      $region50: #{resblock_forward.4} parent=39 // pred_check_branch
        %5846 = sbr.rel (%p5844) target = $region52
      $region51: #{resblock_forward.4} parent=39 // pred_region
        %s5847 = smul.u32 36, %s23
      $region52: #{resblock_forward.4} parent=39 // pred_fallthru
        _
      // Predicated region
      $region53: #{resblock_forward.4} parent=39 // pred_check
        %p5848 = pneg %p212
      $region54: #{resblock_forward.4} parent=39 // pred_check_branch
        %5850 = sbr.rel (%p5848) target = $region56
      $region55: #{resblock_forward.4} parent=39 // pred_region
        _
      $region56: #{resblock_forward.4} parent=39 // pred_fallthru
        _
    $region40: #{resblock_forward.4} parent=5 // pred_fallthru
      _
    %p5851 = scmp.le.s32.totalorder 2, %s13
    // Predicated region
    $region57: #{resblock_forward.4} parent=5 // pred_check
      %p5852 = pneg %p5851
    $region58: #{resblock_forward.4} parent=5 // pred_check_branch
      %5854 = sbr.rel (%p5852) target = $region60
    $region59: #{resblock_forward.4} parent=5 // pred_region
      %s5855 = ssub.s32 %s13, 2
      // Predicated region
      $region61: #{resblock_forward.4} parent=59 // pred_check
        %p5856 = pneg %p192
      $region62: #{resblock_forward.4} parent=59 // pred_check_branch
        %5858 = sbr.rel (%p5856) target = $region64
      $region63: #{resblock_forward.4} parent=59 // pred_region
        %s5859 = smul.u32 36, %s25
        %p5860 = scmp.lt.s32.totalorder %s24, 1
        %s5861 = scalar_select %p5860, %s24, 1
        %p5862 = scmp.lt.s32.totalorder %s5859, 35
        %s5863 = scalar_select %p5862, %s5859, 35
        %s5864 = smul.addr %s5861, 36
        %s5865 = sadd.s32 %s5863, %s5864
        %s5866 = smul.addr %s5865, 4
        %s5867 = scalar_lea.vmem %s5, %s5866
      $region64: #{resblock_forward.4} parent=59 // pred_fallthru
        _
      // Predicated region
      $region65: #{resblock_forward.4} parent=59 // pred_check
        %p5868 = pneg %p218
      $region66: #{resblock_forward.4} parent=59 // pred_check_branch
        %5870 = sbr.rel (%p5868) target = $region68
      $region67: #{resblock_forward.4} parent=59 // pred_region
        %p5871 = scmp.lt.s32.totalorder %s24, 1
        %s5872 = scalar_select %p5871, %s24, 1
        %s5873 = smul.addr %s5872, 2
        %s5874 = scalar_lea.vmem %s6, %s5873
      $region68: #{resblock_forward.4} parent=59 // pred_fallthru
        _
    $region60: #{resblock_forward.4} parent=5 // pred_fallthru
      _
  $region6: #{resblock_forward.4} parent=0 // loop_footer
    %s17 = sadd.s32 1, %s13
  $region7: #{resblock_forward.4} parent=0 // loop_footer_branch
    %12 = sbr.rel target = $region3
  $region8: #{resblock_forward.4} parent=0 // loop_exit
    _

</llo_original>
